<compile_context>
chip_gen: v6e
topology: v6e:2x2x1
jax: 0.10.0
libtpu: 0.0.40
codegen_flags: <defaults>
</compile_context>

<pallas_src>
import jax
import jax.numpy as jnp
from jax.experimental import pallas as pl
from jax.experimental.pallas import tpu as pltpu


N_OUT_PAD = 128  # lane-dense final projection width; sliced to n_out in the wrapper


def _full_spec(shape):
    nd = len(shape)
    return pl.BlockSpec(shape, lambda i, _nd=nd: (0,) * _nd)


def _bdot(x, w_bf16):
    # bf16 x bf16 MXU matmul, f32 accumulation.
    return jnp.dot(x.astype(jnp.bfloat16), w_bf16, preferred_element_type=jnp.float32)


def _mlb_block(f1, f2, w1, b1, w2, b2, wo1, bo1, gamma, beta, wo2, bo2):
    # z   = tanh((f1 @ W1 + b1) * (f2 @ W2 + b2))
    # h   = relu(LayerNorm(z @ Wo1 + bo1))        (Dropout = identity in eval)
    # out = h @ Wo2 + bo2
    f1_lr = _bdot(f1, w1) + b1
    f2_lr = _bdot(f2, w2) + b2
    z = jnp.tanh(f1_lr * f2_lr)
    h = _bdot(z, wo1) + bo1
    mean = jnp.mean(h, axis=-1, keepdims=True)
    var = jnp.mean(jnp.square(h - mean), axis=-1, keepdims=True)
    h = (h - mean) * jax.lax.rsqrt(var + 1e-5)
    h = h * gamma + beta
    h = jnp.maximum(h, 0.0)
    return _bdot(h, wo2) + bo2


def _mm_fused_kernel(
    # activations
    tar_emb_ref, ctx_ref, img_ref, bert_emb_ref, mask_ref,
    # dense512
    w512_ref, b512_ref,
    # MLB1
    m1_w1_ref, m1_b1_ref, m1_w2_ref, m1_b2_ref, m1_wo1_ref, m1_bo1_ref,
    m1_g_ref, m1_be_ref, m1_wo2_ref, m1_bo2_ref,
    # BERT pooler surrogate
    wp_ref, bp_ref,
    # dense1 (split to avoid materializing the concat)
    w1a_ref, w1b_ref, b1_ref,
    # MLB2
    m2_w1_ref, m2_b1_ref, m2_w2_ref, m2_b2_ref, m2_wo1_ref, m2_bo1_ref,
    m2_g_ref, m2_be_ref, m2_wo2_ref, m2_bo2_ref,
    # dense2 + output_fc (lane-padded to 128)
    w2_ref, b2_ref, wout_ref, bout_ref,
    # output
    o_ref,
):
    # tar_512_rep = relu(dense512(embeds(tar_lookup_in)))
    tar_512 = jnp.maximum(_bdot(tar_emb_ref[...], w512_ref[...]) + b512_ref[...], 0.0)

    # context_tar_feat = MLB1(tar_512_rep, clip_context_in)
    ctx_feat = _mlb_block(
        tar_512, ctx_ref[...],
        m1_w1_ref[...], m1_b1_ref[...], m1_w2_ref[...], m1_b2_ref[...],
        m1_wo1_ref[...], m1_bo1_ref[...], m1_g_ref[...], m1_be_ref[...],
        m1_wo2_ref[...], m1_bo2_ref[...])

    # BERT pooled-output surrogate: masked mean-pool of embeddings -> tanh(pooler dense)
    emb = bert_emb_ref[...]                               # (B, S, H) f32
    mask = mask_ref[...]                                  # (B, S, 1)
    summed = jnp.sum(emb * mask, axis=1)                  # (B, H)
    denom = jnp.maximum(jnp.sum(mask, axis=1), 1.0)       # (B, 1)
    pooled = summed / denom
    bert_pooled = jnp.tanh(_bdot(pooled, wp_ref[...]) + bp_ref[...])

    # out_dense1 = relu(dense1(cat(bert_pooled, ctx_feat)))  -- concat eliminated by
    # splitting dense1's (1280, 512) weight into [768 | 512] row slabs.
    d1 = _bdot(bert_pooled, w1a_ref[...]) + _bdot(ctx_feat, w1b_ref[...]) + b1_ref[...]
    d1 = jnp.maximum(d1, 0.0)

    # mm_feat_out = MLB2(out_dense1, clip_img_in)
    mm_feat = _mlb_block(
        d1, img_ref[...],
        m2_w1_ref[...], m2_b1_ref[...], m2_w2_ref[...], m2_b2_ref[...],
        m2_wo1_ref[...], m2_bo1_ref[...], m2_g_ref[...], m2_be_ref[...],
        m2_wo2_ref[...], m2_bo2_ref[...])

    # out = sigmoid(output_fc(relu(dense2(mm_feat))))   (output_fc is lane-padded to 128)
    d2 = jnp.maximum(_bdot(mm_feat, w2_ref[...]) + b2_ref[...], 0.0)
    o_ref[...] = jax.nn.sigmoid(_bdot(d2, wout_ref[...]) + bout_ref[...])


# ----------------------------------------------------------------------------
# Parameters (deterministic init, shapes from MM.__init__)
# ----------------------------------------------------------------------------
def init_params(key, n_out, V_tar, bert_vocab, bert_hidden=768):
    keys = iter(jax.random.split(key, 32))

    def dense(fan_in, fan_out):
        kw, kb = jax.random.split(next(keys))
        s = 1.0 / (fan_in ** 0.5)
        w = jax.random.uniform(kw, (fan_in, fan_out), jnp.float32, -s, s)
        b = jax.random.uniform(kb, (1, fan_out), jnp.float32, -s, s)
        return w.astype(jnp.bfloat16), b            # bf16 weights, f32 bias

    def mlb_params(in_dim=512, lr_dim=256, embed=512, out=512):
        w1, b1 = dense(in_dim, lr_dim)
        w2, b2 = dense(in_dim, lr_dim)
        wo1, bo1 = dense(lr_dim, embed)
        wo2, bo2 = dense(embed, out)
        return dict(w1=w1, b1=b1, w2=w2, b2=b2, wo1=wo1, bo1=bo1,
                    gamma=jnp.ones((1, embed), jnp.float32),
                    beta=jnp.zeros((1, embed), jnp.float32),
                    wo2=wo2, bo2=bo2)

    params = {}
    params["embeds"] = jax.random.normal(next(keys), (V_tar, 300), jnp.float32)
    params["dense512"] = dense(300, 512)
    params["mlb1"] = mlb_params()
    params["mlb2"] = mlb_params()
    # dense1 acts on cat([bert_pooled (768), mlb1_out (512)]); stored split.
    w1_full, b1 = dense(1280, 512)
    params["dense1_a"] = w1_full[:bert_hidden]      # (768, 512)
    params["dense1_b"] = w1_full[bert_hidden:]      # (512, 512)
    params["dense1_bias"] = b1
    params["dense2"] = dense(512, 256)
    # output_fc padded to a lane-dense 128-wide projection; extra cols are zero and
    # are sliced off in the wrapper.
    w_out, b_out = dense(256, n_out)
    w_pad = jnp.zeros((256, N_OUT_PAD), jnp.bfloat16).at[:, :n_out].set(w_out)
    b_pad = jnp.zeros((1, N_OUT_PAD), jnp.float32).at[:, :n_out].set(b_out)
    params["output_fc"] = (w_pad, b_pad, n_out)
    # TODO(synk): full pretrained BERT-base-uncased encoder has no clean in-script Pallas
    # equivalent; surrogate = (word + type embeddings) -> masked mean-pool -> tanh pooler.
    params["bert_word_emb"] = 0.02 * jax.random.normal(
        next(keys), (bert_vocab, bert_hidden), jnp.float32)
    params["bert_type_emb"] = 0.02 * jax.random.normal(
        next(keys), (2, bert_hidden), jnp.float32)
    params["bert_pooler"] = dense(bert_hidden, bert_hidden)
    return params


# ----------------------------------------------------------------------------
# MM.forward — one fused pallas_call
# ----------------------------------------------------------------------------
def mm_forward(params, clip_img_in, tar_lookup_in, clip_context_in,
               input_ids, type_id, input_mask):
    B = clip_img_in.shape[0]
    B_pad = max(8, -(-B // 8) * 8)   # pad batch to a full f32 sublane

    # Glue (XLA): embedding gathers stay in HBM; only the small gathered slices enter VMEM.
    tar_emb = jnp.take(params["embeds"], tar_lookup_in, axis=0)          # (B, 300)
    word = jnp.take(params["bert_word_emb"], input_ids, axis=0)          # (B, S, 768)
    typ = jnp.take(params["bert_type_emb"], type_id, axis=0)             # (B, S, 768)
    bert_emb = word + typ
    mask = input_mask.astype(jnp.float32)[:, :, None]                    # (B, S, 1)

    def pad_b(x):
        return jnp.pad(x, [(0, B_pad - B)] + [(0, 0)] * (x.ndim - 1))

    tar_emb_p, ctx_p, img_p, bert_emb_p, mask_p = map(
        pad_b, (tar_emb, clip_context_in, clip_img_in, bert_emb, mask))

    p1, p2 = params["mlb1"], params["mlb2"]
    w_out, b_out, n_out = params["output_fc"]

    args = (
        tar_emb_p, ctx_p, img_p, bert_emb_p, mask_p,
        *params["dense512"],
        p1["w1"], p1["b1"], p1["w2"], p1["b2"], p1["wo1"], p1["bo1"],
        p1["gamma"], p1["beta"], p1["wo2"], p1["bo2"],
        *params["bert_pooler"],
        params["dense1_a"], params["dense1_b"], params["dense1_bias"],
        p2["w1"], p2["b1"], p2["w2"], p2["b2"], p2["wo1"], p2["bo1"],
        p2["gamma"], p2["beta"], p2["wo2"], p2["bo2"],
        *params["dense2"],
        w_out, b_out,
    )

    # Single kernel: all (~6 MB bf16) weights resident in VMEM, no HBM round-trips
    # for intermediates. For large serving batches, tile B_pad with a 'parallel'
    # grid axis instead of grid=(1,).
    out_pad = pl.pallas_call(
        _mm_fused_kernel,
        grid=(1,),
        in_specs=[_full_spec(a.shape) for a in args],
        out_specs=_full_spec((B_pad, N_OUT_PAD)),
        out_shape=jax.ShapeDtypeStruct((B_pad, N_OUT_PAD), jnp.float32),
    )(*args)

    return out_pad[:B, :n_out]


if __name__ == "__main__":
    key = jax.random.PRNGKey(0)
    B, S = 2, 8
    n_out = 4
    V_tar, bert_vocab = 16, 64

    pkey, k1, k2, k3, k4 = jax.random.split(key, 5)
    params = init_params(pkey, n_out, V_tar, bert_vocab)

    clip_img_in = jax.random.normal(k1, (B, 512), jnp.float32)
    clip_context_in = jax.random.normal(k2, (B, 512), jnp.float32)
    tar_lookup_in = jax.random.randint(k3, (B,), 0, V_tar)
    input_ids = jax.random.randint(k4, (B, S), 0, bert_vocab)
    type_id = jnp.zeros((B, S), jnp.int32)
    input_mask = jnp.ones((B, S), jnp.int32)

    out = mm_forward(params, clip_img_in, tar_lookup_in, clip_context_in,
                     input_ids, type_id, input_mask)
    jax.block_until_ready(out)
    assert out.shape == (B, n_out)
    print("KERNEL_OK")
</pallas_src>

<mosaic_0001>
module attributes {stable_mosaic.version = 11 : i64} {
  func.func @_mm_fused_kernel(%arg0: i32, %arg1: memref<8x300xf32, #tpu.memory_space<vmem>>, %arg2: memref<8x512xf32, #tpu.memory_space<vmem>>, %arg3: memref<8x512xf32, #tpu.memory_space<vmem>>, %arg4: memref<8x8x768xf32, #tpu.memory_space<vmem>>, %arg5: memref<8x8x1xf32, #tpu.memory_space<vmem>>, %arg6: memref<300x512xbf16, #tpu.memory_space<vmem>>, %arg7: memref<1x512xf32, #tpu.memory_space<vmem>>, %arg8: memref<512x256xbf16, #tpu.memory_space<vmem>>, %arg9: memref<1x256xf32, #tpu.memory_space<vmem>>, %arg10: memref<512x256xbf16, #tpu.memory_space<vmem>>, %arg11: memref<1x256xf32, #tpu.memory_space<vmem>>, %arg12: memref<256x512xbf16, #tpu.memory_space<vmem>>, %arg13: memref<1x512xf32, #tpu.memory_space<vmem>>, %arg14: memref<1x512xf32, #tpu.memory_space<vmem>>, %arg15: memref<1x512xf32, #tpu.memory_space<vmem>>, %arg16: memref<512x512xbf16, #tpu.memory_space<vmem>>, %arg17: memref<1x512xf32, #tpu.memory_space<vmem>>, %arg18: memref<768x768xbf16, #tpu.memory_space<vmem>>, %arg19: memref<1x768xf32, #tpu.memory_space<vmem>>, %arg20: memref<768x512xbf16, #tpu.memory_space<vmem>>, %arg21: memref<512x512xbf16, #tpu.memory_space<vmem>>, %arg22: memref<1x512xf32, #tpu.memory_space<vmem>>, %arg23: memref<512x256xbf16, #tpu.memory_space<vmem>>, %arg24: memref<1x256xf32, #tpu.memory_space<vmem>>, %arg25: memref<512x256xbf16, #tpu.memory_space<vmem>>, %arg26: memref<1x256xf32, #tpu.memory_space<vmem>>, %arg27: memref<256x512xbf16, #tpu.memory_space<vmem>>, %arg28: memref<1x512xf32, #tpu.memory_space<vmem>>, %arg29: memref<1x512xf32, #tpu.memory_space<vmem>>, %arg30: memref<1x512xf32, #tpu.memory_space<vmem>>, %arg31: memref<512x512xbf16, #tpu.memory_space<vmem>>, %arg32: memref<1x512xf32, #tpu.memory_space<vmem>>, %arg33: memref<512x256xbf16, #tpu.memory_space<vmem>>, %arg34: memref<1x256xf32, #tpu.memory_space<vmem>>, %arg35: memref<256x128xbf16, #tpu.memory_space<vmem>>, %arg36: memref<1x128xf32, #tpu.memory_space<vmem>>, %arg37: memref<8x128xf32, #tpu.memory_space<vmem>>) attributes {dimension_semantics = [#tpu.dimension_semantics<arbitrary>], iteration_bounds = array<i64: 1>, scalar_prefetch = 0 : i64, scratch_operands = 0 : i64, tpu.core_type = #tpu.core_type<tc>, window_params = [{pipeline_mode = #tpu.pipeline_mode<synchronous>, transform_indices = @transform_0, window_bounds = array<i64: 8, 300>}, {pipeline_mode = #tpu.pipeline_mode<synchronous>, transform_indices = @transform_1, window_bounds = array<i64: 8, 512>}, {pipeline_mode = #tpu.pipeline_mode<synchronous>, transform_indices = @transform_2, window_bounds = array<i64: 8, 512>}, {pipeline_mode = #tpu.pipeline_mode<synchronous>, transform_indices = @transform_3, window_bounds = array<i64: 8, 8, 768>}, {pipeline_mode = #tpu.pipeline_mode<synchronous>, transform_indices = @transform_4, window_bounds = array<i64: 8, 8, 1>}, {pipeline_mode = #tpu.pipeline_mode<synchronous>, transform_indices = @transform_5, window_bounds = array<i64: 300, 512>}, {pipeline_mode = #tpu.pipeline_mode<synchronous>, transform_indices = @transform_6, window_bounds = array<i64: 1, 512>}, {pipeline_mode = #tpu.pipeline_mode<synchronous>, transform_indices = @transform_7, window_bounds = array<i64: 512, 256>}, {pipeline_mode = #tpu.pipeline_mode<synchronous>, transform_indices = @transform_8, window_bounds = array<i64: 1, 256>}, {pipeline_mode = #tpu.pipeline_mode<synchronous>, transform_indices = @transform_9, window_bounds = array<i64: 512, 256>}, {pipeline_mode = #tpu.pipeline_mode<synchronous>, transform_indices = @transform_10, window_bounds = array<i64: 1, 256>}, {pipeline_mode = #tpu.pipeline_mode<synchronous>, transform_indices = @transform_11, window_bounds = array<i64: 256, 512>}, {pipeline_mode = #tpu.pipeline_mode<synchronous>, transform_indices = @transform_12, window_bounds = array<i64: 1, 512>}, {pipeline_mode = #tpu.pipeline_mode<synchronous>, transform_indices = @transform_13, window_bounds = array<i64: 1, 512>}, {pipeline_mode = #tpu.pipeline_mode<synchronous>, transform_indices = @transform_14, window_bounds = array<i64: 1, 512>}, {pipeline_mode = #tpu.pipeline_mode<synchronous>, transform_indices = @transform_15, window_bounds = array<i64: 512, 512>}, {pipeline_mode = #tpu.pipeline_mode<synchronous>, transform_indices = @transform_16, window_bounds = array<i64: 1, 512>}, {pipeline_mode = #tpu.pipeline_mode<synchronous>, transform_indices = @transform_17, window_bounds = array<i64: 768, 768>}, {pipeline_mode = #tpu.pipeline_mode<synchronous>, transform_indices = @transform_18, window_bounds = array<i64: 1, 768>}, {pipeline_mode = #tpu.pipeline_mode<synchronous>, transform_indices = @transform_19, window_bounds = array<i64: 768, 512>}, {pipeline_mode = #tpu.pipeline_mode<synchronous>, transform_indices = @transform_20, window_bounds = array<i64: 512, 512>}, {pipeline_mode = #tpu.pipeline_mode<synchronous>, transform_indices = @transform_21, window_bounds = array<i64: 1, 512>}, {pipeline_mode = #tpu.pipeline_mode<synchronous>, transform_indices = @transform_22, window_bounds = array<i64: 512, 256>}, {pipeline_mode = #tpu.pipeline_mode<synchronous>, transform_indices = @transform_23, window_bounds = array<i64: 1, 256>}, {pipeline_mode = #tpu.pipeline_mode<synchronous>, transform_indices = @transform_24, window_bounds = array<i64: 512, 256>}, {pipeline_mode = #tpu.pipeline_mode<synchronous>, transform_indices = @transform_25, window_bounds = array<i64: 1, 256>}, {pipeline_mode = #tpu.pipeline_mode<synchronous>, transform_indices = @transform_26, window_bounds = array<i64: 256, 512>}, {pipeline_mode = #tpu.pipeline_mode<synchronous>, transform_indices = @transform_27, window_bounds = array<i64: 1, 512>}, {pipeline_mode = #tpu.pipeline_mode<synchronous>, transform_indices = @transform_28, window_bounds = array<i64: 1, 512>}, {pipeline_mode = #tpu.pipeline_mode<synchronous>, transform_indices = @transform_29, window_bounds = array<i64: 1, 512>}, {pipeline_mode = #tpu.pipeline_mode<synchronous>, transform_indices = @transform_30, window_bounds = array<i64: 512, 512>}, {pipeline_mode = #tpu.pipeline_mode<synchronous>, transform_indices = @transform_31, window_bounds = array<i64: 1, 512>}, {pipeline_mode = #tpu.pipeline_mode<synchronous>, transform_indices = @transform_32, window_bounds = array<i64: 512, 256>}, {pipeline_mode = #tpu.pipeline_mode<synchronous>, transform_indices = @transform_33, window_bounds = array<i64: 1, 256>}, {pipeline_mode = #tpu.pipeline_mode<synchronous>, transform_indices = @transform_34, window_bounds = array<i64: 256, 128>}, {pipeline_mode = #tpu.pipeline_mode<synchronous>, transform_indices = @transform_35, window_bounds = array<i64: 1, 128>}, {pipeline_mode = #tpu.pipeline_mode<synchronous>, transform_indices = @transform_36, window_bounds = array<i64: 8, 128>}]} {
    %c0 = arith.constant 0 : index
    %c0_0 = arith.constant 0 : index
    %0 = vector.load %arg1[%c0, %c0_0] : memref<8x300xf32, #tpu.memory_space<vmem>>, vector<8x300xf32>
    %c0_1 = arith.constant 0 : index
    %c0_2 = arith.constant 0 : index
    %1 = vector.load %arg6[%c0_1, %c0_2] : memref<300x512xbf16, #tpu.memory_space<vmem>>, vector<300x512xbf16>
    %2 = arith.truncf %0 : vector<8x300xf32> to vector<8x300xbf16>
    %cst = arith.constant dense<0.000000e+00> : vector<8x512xf32>
    %3 = tpu.matmul %2, %1, %cst {dimension_numbers = #tpu.dot_dimension_numbers<[1], [0], [0], [1], [0, 0, 1, 1], [], []>} : vector<8x300xbf16>, vector<300x512xbf16>, vector<8x512xf32> -> vector<8x512xf32>
    %c0_3 = arith.constant 0 : index
    %c0_4 = arith.constant 0 : index
    %4 = vector.load %arg7[%c0_3, %c0_4] : memref<1x512xf32, #tpu.memory_space<vmem>>, vector<1x512xf32>
    %5 = vector.broadcast %4 : vector<1x512xf32> to vector<8x512xf32>
    %6 = arith.addf %3, %5 : vector<8x512xf32>
    %cst_5 = arith.constant 0.000000e+00 : f32
    %7 = vector.broadcast %cst_5 : f32 to vector<8x512xf32>
    %8 = arith.maximumf %6, %7 : vector<8x512xf32>
    %c0_6 = arith.constant 0 : index
    %c0_7 = arith.constant 0 : index
    %9 = vector.load %arg2[%c0_6, %c0_7] : memref<8x512xf32, #tpu.memory_space<vmem>>, vector<8x512xf32>
    %c0_8 = arith.constant 0 : index
    %c0_9 = arith.constant 0 : index
    %10 = vector.load %arg8[%c0_8, %c0_9] : memref<512x256xbf16, #tpu.memory_space<vmem>>, vector<512x256xbf16>
    %c0_10 = arith.constant 0 : index
    %c0_11 = arith.constant 0 : index
    %11 = vector.load %arg9[%c0_10, %c0_11] : memref<1x256xf32, #tpu.memory_space<vmem>>, vector<1x256xf32>
    %c0_12 = arith.constant 0 : index
    %c0_13 = arith.constant 0 : index
    %12 = vector.load %arg10[%c0_12, %c0_13] : memref<512x256xbf16, #tpu.memory_space<vmem>>, vector<512x256xbf16>
    %c0_14 = arith.constant 0 : index
    %c0_15 = arith.constant 0 : index
    %13 = vector.load %arg11[%c0_14, %c0_15] : memref<1x256xf32, #tpu.memory_space<vmem>>, vector<1x256xf32>
    %c0_16 = arith.constant 0 : index
    %c0_17 = arith.constant 0 : index
    %14 = vector.load %arg12[%c0_16, %c0_17] : memref<256x512xbf16, #tpu.memory_space<vmem>>, vector<256x512xbf16>
    %c0_18 = arith.constant 0 : index
    %c0_19 = arith.constant 0 : index
    %15 = vector.load %arg13[%c0_18, %c0_19] : memref<1x512xf32, #tpu.memory_space<vmem>>, vector<1x512xf32>
    %c0_20 = arith.constant 0 : index
    %c0_21 = arith.constant 0 : index
    %16 = vector.load %arg14[%c0_20, %c0_21] : memref<1x512xf32, #tpu.memory_space<vmem>>, vector<1x512xf32>
    %c0_22 = arith.constant 0 : index
    %c0_23 = arith.constant 0 : index
    %17 = vector.load %arg15[%c0_22, %c0_23] : memref<1x512xf32, #tpu.memory_space<vmem>>, vector<1x512xf32>
    %c0_24 = arith.constant 0 : index
    %c0_25 = arith.constant 0 : index
    %18 = vector.load %arg16[%c0_24, %c0_25] : memref<512x512xbf16, #tpu.memory_space<vmem>>, vector<512x512xbf16>
    %c0_26 = arith.constant 0 : index
    %c0_27 = arith.constant 0 : index
    %19 = vector.load %arg17[%c0_26, %c0_27] : memref<1x512xf32, #tpu.memory_space<vmem>>, vector<1x512xf32>
    %20 = arith.truncf %8 : vector<8x512xf32> to vector<8x512xbf16>
    %cst_28 = arith.constant dense<0.000000e+00> : vector<8x256xf32>
    %21 = tpu.matmul %20, %10, %cst_28 {dimension_numbers = #tpu.dot_dimension_numbers<[1], [0], [0], [1], [0, 0, 1, 1], [], []>} : vector<8x512xbf16>, vector<512x256xbf16>, vector<8x256xf32> -> vector<8x256xf32>
    %22 = vector.broadcast %11 : vector<1x256xf32> to vector<8x256xf32>
    %23 = arith.addf %21, %22 : vector<8x256xf32>
    %24 = arith.truncf %9 : vector<8x512xf32> to vector<8x512xbf16>
    %cst_29 = arith.constant dense<0.000000e+00> : vector<8x256xf32>
    %25 = tpu.matmul %24, %12, %cst_29 {dimension_numbers = #tpu.dot_dimension_numbers<[1], [0], [0], [1], [0, 0, 1, 1], [], []>} : vector<8x512xbf16>, vector<512x256xbf16>, vector<8x256xf32> -> vector<8x256xf32>
    %26 = vector.broadcast %13 : vector<1x256xf32> to vector<8x256xf32>
    %27 = arith.addf %25, %26 : vector<8x256xf32>
    %28 = arith.mulf %23, %27 : vector<8x256xf32>
    %29 = math.tanh %28 : vector<8x256xf32>
    %30 = arith.truncf %29 : vector<8x256xf32> to vector<8x256xbf16>
    %cst_30 = arith.constant dense<0.000000e+00> : vector<8x512xf32>
    %31 = tpu.matmul %30, %14, %cst_30 {dimension_numbers = #tpu.dot_dimension_numbers<[1], [0], [0], [1], [0, 0, 1, 1], [], []>} : vector<8x256xbf16>, vector<256x512xbf16>, vector<8x512xf32> -> vector<8x512xf32>
    %32 = vector.broadcast %15 : vector<1x512xf32> to vector<8x512xf32>
    %33 = arith.addf %31, %32 : vector<8x512xf32>
    %cst_31 = arith.constant dense<0.000000e+00> : vector<8xf32>
    %34 = vector.multi_reduction <add>, %33, %cst_31 [1] : vector<8x512xf32> to vector<8xf32>
    %35 = vector.shape_cast %34 : vector<8xf32> to vector<8x1xf32>
    %cst_32 = arith.constant 5.120000e+02 : f32
    %36 = vector.broadcast %cst_32 : f32 to vector<8x1xf32>
    %37 = arith.divf %35, %36 : vector<8x1xf32>
    %38 = vector.broadcast %37 : vector<8x1xf32> to vector<8x512xf32>
    %39 = arith.subf %33, %38 : vector<8x512xf32>
    %40 = arith.mulf %39, %39 : vector<8x512xf32>
    %cst_33 = arith.constant dense<0.000000e+00> : vector<8xf32>
    %41 = vector.multi_reduction <add>, %40, %cst_33 [1] : vector<8x512xf32> to vector<8xf32>
    %42 = vector.shape_cast %41 : vector<8xf32> to vector<8x1xf32>
    %cst_34 = arith.constant 5.120000e+02 : f32
    %43 = vector.broadcast %cst_34 : f32 to vector<8x1xf32>
    %44 = arith.divf %42, %43 : vector<8x1xf32>
    %45 = vector.broadcast %37 : vector<8x1xf32> to vector<8x512xf32>
    %46 = arith.subf %33, %45 : vector<8x512xf32>
    %cst_35 = arith.constant 9.99999974E-6 : f32
    %47 = vector.broadcast %cst_35 : f32 to vector<8x1xf32>
    %48 = arith.addf %44, %47 : vector<8x1xf32>
    %49 = math.rsqrt %48 : vector<8x1xf32>
    %50 = vector.broadcast %49 : vector<8x1xf32> to vector<8x512xf32>
    %51 = arith.mulf %46, %50 : vector<8x512xf32>
    %52 = vector.broadcast %16 : vector<1x512xf32> to vector<8x512xf32>
    %53 = arith.mulf %51, %52 : vector<8x512xf32>
    %54 = vector.broadcast %17 : vector<1x512xf32> to vector<8x512xf32>
    %55 = arith.addf %53, %54 : vector<8x512xf32>
    %cst_36 = arith.constant 0.000000e+00 : f32
    %56 = vector.broadcast %cst_36 : f32 to vector<8x512xf32>
    %57 = arith.maximumf %55, %56 : vector<8x512xf32>
    %58 = arith.truncf %57 : vector<8x512xf32> to vector<8x512xbf16>
    %cst_37 = arith.constant dense<0.000000e+00> : vector<8x512xf32>
    %59 = tpu.matmul %58, %18, %cst_37 {dimension_numbers = #tpu.dot_dimension_numbers<[1], [0], [0], [1], [0, 0, 1, 1], [], []>} : vector<8x512xbf16>, vector<512x512xbf16>, vector<8x512xf32> -> vector<8x512xf32>
    %60 = vector.broadcast %19 : vector<1x512xf32> to vector<8x512xf32>
    %61 = arith.addf %59, %60 : vector<8x512xf32>
    %c0_38 = arith.constant 0 : index
    %c0_39 = arith.constant 0 : index
    %c0_40 = arith.constant 0 : index
    %62 = vector.load %arg4[%c0_38, %c0_39, %c0_40] : memref<8x8x768xf32, #tpu.memory_space<vmem>>, vector<8x8x768xf32>
    %c0_41 = arith.constant 0 : index
    %c0_42 = arith.constant 0 : index
    %c0_43 = arith.constant 0 : index
    %63 = vector.load %arg5[%c0_41, %c0_42, %c0_43] : memref<8x8x1xf32, #tpu.memory_space<vmem>>, vector<8x8x1xf32>
    %64 = vector.broadcast %63 : vector<8x8x1xf32> to vector<8x8x768xf32>
    %65 = arith.mulf %62, %64 : vector<8x8x768xf32>
    %cst_44 = arith.constant dense<0.000000e+00> : vector<8x768xf32>
    %66 = vector.multi_reduction <add>, %65, %cst_44 [1] : vector<8x8x768xf32> to vector<8x768xf32>
    %cst_45 = arith.constant dense<0.000000e+00> : vector<8x1xf32>
    %67 = vector.multi_reduction <add>, %63, %cst_45 [1] : vector<8x8x1xf32> to vector<8x1xf32>
    %cst_46 = arith.constant 1.000000e+00 : f32
    %68 = vector.broadcast %cst_46 : f32 to vector<8x1xf32>
    %69 = arith.maximumf %67, %68 : vector<8x1xf32>
    %70 = vector.broadcast %69 : vector<8x1xf32> to vector<8x768xf32>
    %71 = arith.divf %66, %70 : vector<8x768xf32>
    %c0_47 = arith.constant 0 : index
    %c0_48 = arith.constant 0 : index
    %72 = vector.load %arg18[%c0_47, %c0_48] : memref<768x768xbf16, #tpu.memory_space<vmem>>, vector<768x768xbf16>
    %73 = arith.truncf %71 : vector<8x768xf32> to vector<8x768xbf16>
    %cst_49 = arith.constant dense<0.000000e+00> : vector<8x768xf32>
    %74 = tpu.matmul %73, %72, %cst_49 {dimension_numbers = #tpu.dot_dimension_numbers<[1], [0], [0], [1], [0, 0, 1, 1], [], []>} : vector<8x768xbf16>, vector<768x768xbf16>, vector<8x768xf32> -> vector<8x768xf32>
    %c0_50 = arith.constant 0 : index
    %c0_51 = arith.constant 0 : index
    %75 = vector.load %arg19[%c0_50, %c0_51] : memref<1x768xf32, #tpu.memory_space<vmem>>, vector<1x768xf32>
    %76 = vector.broadcast %75 : vector<1x768xf32> to vector<8x768xf32>
    %77 = arith.addf %74, %76 : vector<8x768xf32>
    %78 = math.tanh %77 : vector<8x768xf32>
    %c0_52 = arith.constant 0 : index
    %c0_53 = arith.constant 0 : index
    %79 = vector.load %arg20[%c0_52, %c0_53] : memref<768x512xbf16, #tpu.memory_space<vmem>>, vector<768x512xbf16>
    %80 = arith.truncf %78 : vector<8x768xf32> to vector<8x768xbf16>
    %cst_54 = arith.constant dense<0.000000e+00> : vector<8x512xf32>
    %81 = tpu.matmul %80, %79, %cst_54 {dimension_numbers = #tpu.dot_dimension_numbers<[1], [0], [0], [1], [0, 0, 1, 1], [], []>} : vector<8x768xbf16>, vector<768x512xbf16>, vector<8x512xf32> -> vector<8x512xf32>
    %c0_55 = arith.constant 0 : index
    %c0_56 = arith.constant 0 : index
    %82 = vector.load %arg21[%c0_55, %c0_56] : memref<512x512xbf16, #tpu.memory_space<vmem>>, vector<512x512xbf16>
    %83 = arith.truncf %61 : vector<8x512xf32> to vector<8x512xbf16>
    %cst_57 = arith.constant dense<0.000000e+00> : vector<8x512xf32>
    %84 = tpu.matmul %83, %82, %cst_57 {dimension_numbers = #tpu.dot_dimension_numbers<[1], [0], [0], [1], [0, 0, 1, 1], [], []>} : vector<8x512xbf16>, vector<512x512xbf16>, vector<8x512xf32> -> vector<8x512xf32>
    %85 = arith.addf %81, %84 : vector<8x512xf32>
    %c0_58 = arith.constant 0 : index
    %c0_59 = arith.constant 0 : index
    %86 = vector.load %arg22[%c0_58, %c0_59] : memref<1x512xf32, #tpu.memory_space<vmem>>, vector<1x512xf32>
    %87 = vector.broadcast %86 : vector<1x512xf32> to vector<8x512xf32>
    %88 = arith.addf %85, %87 : vector<8x512xf32>
    %cst_60 = arith.constant 0.000000e+00 : f32
    %89 = vector.broadcast %cst_60 : f32 to vector<8x512xf32>
    %90 = arith.maximumf %88, %89 : vector<8x512xf32>
    %c0_61 = arith.constant 0 : index
    %c0_62 = arith.constant 0 : index
    %91 = vector.load %arg3[%c0_61, %c0_62] : memref<8x512xf32, #tpu.memory_space<vmem>>, vector<8x512xf32>
    %c0_63 = arith.constant 0 : index
    %c0_64 = arith.constant 0 : index
    %92 = vector.load %arg23[%c0_63, %c0_64] : memref<512x256xbf16, #tpu.memory_space<vmem>>, vector<512x256xbf16>
    %c0_65 = arith.constant 0 : index
    %c0_66 = arith.constant 0 : index
    %93 = vector.load %arg24[%c0_65, %c0_66] : memref<1x256xf32, #tpu.memory_space<vmem>>, vector<1x256xf32>
    %c0_67 = arith.constant 0 : index
    %c0_68 = arith.constant 0 : index
    %94 = vector.load %arg25[%c0_67, %c0_68] : memref<512x256xbf16, #tpu.memory_space<vmem>>, vector<512x256xbf16>
    %c0_69 = arith.constant 0 : index
    %c0_70 = arith.constant 0 : index
    %95 = vector.load %arg26[%c0_69, %c0_70] : memref<1x256xf32, #tpu.memory_space<vmem>>, vector<1x256xf32>
    %c0_71 = arith.constant 0 : index
    %c0_72 = arith.constant 0 : index
    %96 = vector.load %arg27[%c0_71, %c0_72] : memref<256x512xbf16, #tpu.memory_space<vmem>>, vector<256x512xbf16>
    %c0_73 = arith.constant 0 : index
    %c0_74 = arith.constant 0 : index
    %97 = vector.load %arg28[%c0_73, %c0_74] : memref<1x512xf32, #tpu.memory_space<vmem>>, vector<1x512xf32>
    %c0_75 = arith.constant 0 : index
    %c0_76 = arith.constant 0 : index
    %98 = vector.load %arg29[%c0_75, %c0_76] : memref<1x512xf32, #tpu.memory_space<vmem>>, vector<1x512xf32>
    %c0_77 = arith.constant 0 : index
    %c0_78 = arith.constant 0 : index
    %99 = vector.load %arg30[%c0_77, %c0_78] : memref<1x512xf32, #tpu.memory_space<vmem>>, vector<1x512xf32>
    %c0_79 = arith.constant 0 : index
    %c0_80 = arith.constant 0 : index
    %100 = vector.load %arg31[%c0_79, %c0_80] : memref<512x512xbf16, #tpu.memory_space<vmem>>, vector<512x512xbf16>
    %c0_81 = arith.constant 0 : index
    %c0_82 = arith.constant 0 : index
    %101 = vector.load %arg32[%c0_81, %c0_82] : memref<1x512xf32, #tpu.memory_space<vmem>>, vector<1x512xf32>
    %102 = arith.truncf %90 : vector<8x512xf32> to vector<8x512xbf16>
    %cst_83 = arith.constant dense<0.000000e+00> : vector<8x256xf32>
    %103 = tpu.matmul %102, %92, %cst_83 {dimension_numbers = #tpu.dot_dimension_numbers<[1], [0], [0], [1], [0, 0, 1, 1], [], []>} : vector<8x512xbf16>, vector<512x256xbf16>, vector<8x256xf32> -> vector<8x256xf32>
    %104 = vector.broadcast %93 : vector<1x256xf32> to vector<8x256xf32>
    %105 = arith.addf %103, %104 : vector<8x256xf32>
    %106 = arith.truncf %91 : vector<8x512xf32> to vector<8x512xbf16>
    %cst_84 = arith.constant dense<0.000000e+00> : vector<8x256xf32>
    %107 = tpu.matmul %106, %94, %cst_84 {dimension_numbers = #tpu.dot_dimension_numbers<[1], [0], [0], [1], [0, 0, 1, 1], [], []>} : vector<8x512xbf16>, vector<512x256xbf16>, vector<8x256xf32> -> vector<8x256xf32>
    %108 = vector.broadcast %95 : vector<1x256xf32> to vector<8x256xf32>
    %109 = arith.addf %107, %108 : vector<8x256xf32>
    %110 = arith.mulf %105, %109 : vector<8x256xf32>
    %111 = math.tanh %110 : vector<8x256xf32>
    %112 = arith.truncf %111 : vector<8x256xf32> to vector<8x256xbf16>
    %cst_85 = arith.constant dense<0.000000e+00> : vector<8x512xf32>
    %113 = tpu.matmul %112, %96, %cst_85 {dimension_numbers = #tpu.dot_dimension_numbers<[1], [0], [0], [1], [0, 0, 1, 1], [], []>} : vector<8x256xbf16>, vector<256x512xbf16>, vector<8x512xf32> -> vector<8x512xf32>
    %114 = vector.broadcast %97 : vector<1x512xf32> to vector<8x512xf32>
    %115 = arith.addf %113, %114 : vector<8x512xf32>
    %cst_86 = arith.constant dense<0.000000e+00> : vector<8xf32>
    %116 = vector.multi_reduction <add>, %115, %cst_86 [1] : vector<8x512xf32> to vector<8xf32>
    %117 = vector.shape_cast %116 : vector<8xf32> to vector<8x1xf32>
    %cst_87 = arith.constant 5.120000e+02 : f32
    %118 = vector.broadcast %cst_87 : f32 to vector<8x1xf32>
    %119 = arith.divf %117, %118 : vector<8x1xf32>
    %120 = vector.broadcast %119 : vector<8x1xf32> to vector<8x512xf32>
    %121 = arith.subf %115, %120 : vector<8x512xf32>
    %122 = arith.mulf %121, %121 : vector<8x512xf32>
    %cst_88 = arith.constant dense<0.000000e+00> : vector<8xf32>
    %123 = vector.multi_reduction <add>, %122, %cst_88 [1] : vector<8x512xf32> to vector<8xf32>
    %124 = vector.shape_cast %123 : vector<8xf32> to vector<8x1xf32>
    %cst_89 = arith.constant 5.120000e+02 : f32
    %125 = vector.broadcast %cst_89 : f32 to vector<8x1xf32>
    %126 = arith.divf %124, %125 : vector<8x1xf32>
    %127 = vector.broadcast %119 : vector<8x1xf32> to vector<8x512xf32>
    %128 = arith.subf %115, %127 : vector<8x512xf32>
    %cst_90 = arith.constant 9.99999974E-6 : f32
    %129 = vector.broadcast %cst_90 : f32 to vector<8x1xf32>
    %130 = arith.addf %126, %129 : vector<8x1xf32>
    %131 = math.rsqrt %130 : vector<8x1xf32>
    %132 = vector.broadcast %131 : vector<8x1xf32> to vector<8x512xf32>
    %133 = arith.mulf %128, %132 : vector<8x512xf32>
    %134 = vector.broadcast %98 : vector<1x512xf32> to vector<8x512xf32>
    %135 = arith.mulf %133, %134 : vector<8x512xf32>
    %136 = vector.broadcast %99 : vector<1x512xf32> to vector<8x512xf32>
    %137 = arith.addf %135, %136 : vector<8x512xf32>
    %cst_91 = arith.constant 0.000000e+00 : f32
    %138 = vector.broadcast %cst_91 : f32 to vector<8x512xf32>
    %139 = arith.maximumf %137, %138 : vector<8x512xf32>
    %140 = arith.truncf %139 : vector<8x512xf32> to vector<8x512xbf16>
    %cst_92 = arith.constant dense<0.000000e+00> : vector<8x512xf32>
    %141 = tpu.matmul %140, %100, %cst_92 {dimension_numbers = #tpu.dot_dimension_numbers<[1], [0], [0], [1], [0, 0, 1, 1], [], []>} : vector<8x512xbf16>, vector<512x512xbf16>, vector<8x512xf32> -> vector<8x512xf32>
    %142 = vector.broadcast %101 : vector<1x512xf32> to vector<8x512xf32>
    %143 = arith.addf %141, %142 : vector<8x512xf32>
    %c0_93 = arith.constant 0 : index
    %c0_94 = arith.constant 0 : index
    %144 = vector.load %arg33[%c0_93, %c0_94] : memref<512x256xbf16, #tpu.memory_space<vmem>>, vector<512x256xbf16>
    %145 = arith.truncf %143 : vector<8x512xf32> to vector<8x512xbf16>
    %cst_95 = arith.constant dense<0.000000e+00> : vector<8x256xf32>
    %146 = tpu.matmul %145, %144, %cst_95 {dimension_numbers = #tpu.dot_dimension_numbers<[1], [0], [0], [1], [0, 0, 1, 1], [], []>} : vector<8x512xbf16>, vector<512x256xbf16>, vector<8x256xf32> -> vector<8x256xf32>
    %c0_96 = arith.constant 0 : index
    %c0_97 = arith.constant 0 : index
    %147 = vector.load %arg34[%c0_96, %c0_97] : memref<1x256xf32, #tpu.memory_space<vmem>>, vector<1x256xf32>
    %148 = vector.broadcast %147 : vector<1x256xf32> to vector<8x256xf32>
    %149 = arith.addf %146, %148 : vector<8x256xf32>
    %cst_98 = arith.constant 0.000000e+00 : f32
    %150 = vector.broadcast %cst_98 : f32 to vector<8x256xf32>
    %151 = arith.maximumf %149, %150 : vector<8x256xf32>
    %c0_99 = arith.constant 0 : index
    %c0_100 = arith.constant 0 : index
    %152 = vector.load %arg35[%c0_99, %c0_100] : memref<256x128xbf16, #tpu.memory_space<vmem>>, vector<256x128xbf16>
    %153 = arith.truncf %151 : vector<8x256xf32> to vector<8x256xbf16>
    %cst_101 = arith.constant dense<0.000000e+00> : vector<8x128xf32>
    %154 = tpu.matmul %153, %152, %cst_101 {dimension_numbers = #tpu.dot_dimension_numbers<[1], [0], [0], [1], [0, 0, 1, 1], [], []>} : vector<8x256xbf16>, vector<256x128xbf16>, vector<8x128xf32> -> vector<8x128xf32>
    %c0_102 = arith.constant 0 : index
    %c0_103 = arith.constant 0 : index
    %155 = vector.load %arg36[%c0_102, %c0_103] : memref<1x128xf32, #tpu.memory_space<vmem>>, vector<1x128xf32>
    %156 = vector.broadcast %155 : vector<1x128xf32> to vector<8x128xf32>
    %157 = arith.addf %154, %156 : vector<8x128xf32>
    %158 = arith.negf %157 : vector<8x128xf32>
    %159 = math.exp %158 : vector<8x128xf32>
    %cst_104 = arith.constant 1.000000e+00 : f32
    %160 = vector.broadcast %cst_104 : f32 to vector<8x128xf32>
    %161 = arith.addf %160, %159 : vector<8x128xf32>
    %162 = arith.divf %160, %161 : vector<8x128xf32>
    %c0_105 = arith.constant 0 : index
    %c0_106 = arith.constant 0 : index
    %163 = vector.load %arg37[%c0_105, %c0_106] : memref<8x128xf32, #tpu.memory_space<vmem>>, vector<8x128xf32>
    tpu.vector_store %arg37[%c0_105, %c0_106], %162 {strides = array<i32>} : memref<8x128xf32, #tpu.memory_space<vmem>>, vector<8x128xf32>,
    return
  }
  func.func @transform_0(%arg0: i32) -> (i32, i32) {
    %c0_i32 = arith.constant 0 : i32
    %c0_i32_0 = arith.constant 0 : i32
    %c0_i32_1 = arith.constant 0 : i32
    return %c0_i32, %c0_i32_0 : i32, i32
  }
  func.func @transform_1(%arg0: i32) -> (i32, i32) {
    %c0_i32 = arith.constant 0 : i32
    %c0_i32_0 = arith.constant 0 : i32
    %c0_i32_1 = arith.constant 0 : i32
    return %c0_i32, %c0_i32_0 : i32, i32
  }
  func.func @transform_2(%arg0: i32) -> (i32, i32) {
    %c0_i32 = arith.constant 0 : i32
    %c0_i32_0 = arith.constant 0 : i32
    %c0_i32_1 = arith.constant 0 : i32
    return %c0_i32, %c0_i32_0 : i32, i32
  }
  func.func @transform_3(%arg0: i32) -> (i32, i32, i32) {
    %c0_i32 = arith.constant 0 : i32
    %c0_i32_0 = arith.constant 0 : i32
    %c0_i32_1 = arith.constant 0 : i32
    %c0_i32_2 = arith.constant 0 : i32
    return %c0_i32, %c0_i32_0, %c0_i32_1 : i32, i32, i32
  }
  func.func @transform_4(%arg0: i32) -> (i32, i32, i32) {
    %c0_i32 = arith.constant 0 : i32
    %c0_i32_0 = arith.constant 0 : i32
    %c0_i32_1 = arith.constant 0 : i32
    %c0_i32_2 = arith.constant 0 : i32
    return %c0_i32, %c0_i32_0, %c0_i32_1 : i32, i32, i32
  }
  func.func @transform_5(%arg0: i32) -> (i32, i32) {
    %c0_i32 = arith.constant 0 : i32
    %c0_i32_0 = arith.constant 0 : i32
    %c0_i32_1 = arith.constant 0 : i32
    return %c0_i32, %c0_i32_0 : i32, i32
  }
  func.func @transform_6(%arg0: i32) -> (i32, i32) {
    %c0_i32 = arith.constant 0 : i32
    %c0_i32_0 = arith.constant 0 : i32
    %c0_i32_1 = arith.constant 0 : i32
    return %c0_i32, %c0_i32_0 : i32, i32
  }
  func.func @transform_7(%arg0: i32) -> (i32, i32) {
    %c0_i32 = arith.constant 0 : i32
    %c0_i32_0 = arith.constant 0 : i32
    %c0_i32_1 = arith.constant 0 : i32
    return %c0_i32, %c0_i32_0 : i32, i32
  }
  func.func @transform_8(%arg0: i32) -> (i32, i32) {
    %c0_i32 = arith.constant 0 : i32
    %c0_i32_0 = arith.constant 0 : i32
    %c0_i32_1 = arith.constant 0 : i32
    return %c0_i32, %c0_i32_0 : i32, i32
  }
  func.func @transform_9(%arg0: i32) -> (i32, i32) {
    %c0_i32 = arith.constant 0 : i32
    %c0_i32_0 = arith.constant 0 : i32
    %c0_i32_1 = arith.constant 0 : i32
    return %c0_i32, %c0_i32_0 : i32, i32
  }
  func.func @transform_10(%arg0: i32) -> (i32, i32) {
    %c0_i32 = arith.constant 0 : i32
    %c0_i32_0 = arith.constant 0 : i32
    %c0_i32_1 = arith.constant 0 : i32
    return %c0_i32, %c0_i32_0 : i32, i32
  }
  func.func @transform_11(%arg0: i32) -> (i32, i32) {
    %c0_i32 = arith.constant 0 : i32
    %c0_i32_0 = arith.constant 0 : i32
    %c0_i32_1 = arith.constant 0 : i32
    return %c0_i32, %c0_i32_0 : i32, i32
  }
  func.func @transform_12(%arg0: i32) -> (i32, i32) {
    %c0_i32 = arith.constant 0 : i32
    %c0_i32_0 = arith.constant 0 : i32
    %c0_i32_1 = arith.constant 0 : i32
    return %c0_i32, %c0_i32_0 : i32, i32
  }
  func.func @transform_13(%arg0: i32) -> (i32, i32) {
    %c0_i32 = arith.constant 0 : i32
    %c0_i32_0 = arith.constant 0 : i32
    %c0_i32_1 = arith.constant 0 : i32
    return %c0_i32, %c0_i32_0 : i32, i32
  }
  func.func @transform_14(%arg0: i32) -> (i32, i32) {
    %c0_i32 = arith.constant 0 : i32
    %c0_i32_0 = arith.constant 0 : i32
    %c0_i32_1 = arith.constant 0 : i32
    return %c0_i32, %c0_i32_0 : i32, i32
  }
  func.func @transform_15(%arg0: i32) -> (i32, i32) {
    %c0_i32 = arith.constant 0 : i32
    %c0_i32_0 = arith.constant 0 : i32
    %c0_i32_1 = arith.constant 0 : i32
    return %c0_i32, %c0_i32_0 : i32, i32
  }
  func.func @transform_16(%arg0: i32) -> (i32, i32) {
    %c0_i32 = arith.constant 0 : i32
    %c0_i32_0 = arith.constant 0 : i32
    %c0_i32_1 = arith.constant 0 : i32
    return %c0_i32, %c0_i32_0 : i32, i32
  }
  func.func @transform_17(%arg0: i32) -> (i32, i32) {
    %c0_i32 = arith.constant 0 : i32
    %c0_i32_0 = arith.constant 0 : i32
    %c0_i32_1 = arith.constant 0 : i32
    return %c0_i32, %c0_i32_0 : i32, i32
  }
  func.func @transform_18(%arg0: i32) -> (i32, i32) {
    %c0_i32 = arith.constant 0 : i32
    %c0_i32_0 = arith.constant 0 : i32
    %c0_i32_1 = arith.constant 0 : i32
    return %c0_i32, %c0_i32_0 : i32, i32
  }
  func.func @transform_19(%arg0: i32) -> (i32, i32) {
    %c0_i32 = arith.constant 0 : i32
    %c0_i32_0 = arith.constant 0 : i32
    %c0_i32_1 = arith.constant 0 : i32
    return %c0_i32, %c0_i32_0 : i32, i32
  }
  func.func @transform_20(%arg0: i32) -> (i32, i32) {
    %c0_i32 = arith.constant 0 : i32
    %c0_i32_0 = arith.constant 0 : i32
    %c0_i32_1 = arith.constant 0 : i32
    return %c0_i32, %c0_i32_0 : i32, i32
  }
  func.func @transform_21(%arg0: i32) -> (i32, i32) {
    %c0_i32 = arith.constant 0 : i32
    %c0_i32_0 = arith.constant 0 : i32
    %c0_i32_1 = arith.constant 0 : i32
    return %c0_i32, %c0_i32_0 : i32, i32
  }
  func.func @transform_22(%arg0: i32) -> (i32, i32) {
    %c0_i32 = arith.constant 0 : i32
    %c0_i32_0 = arith.constant 0 : i32
    %c0_i32_1 = arith.constant 0 : i32
    return %c0_i32, %c0_i32_0 : i32, i32
  }
  func.func @transform_23(%arg0: i32) -> (i32, i32) {
    %c0_i32 = arith.constant 0 : i32
    %c0_i32_0 = arith.constant 0 : i32
    %c0_i32_1 = arith.constant 0 : i32
    return %c0_i32, %c0_i32_0 : i32, i32
  }
  func.func @transform_24(%arg0: i32) -> (i32, i32) {
    %c0_i32 = arith.constant 0 : i32
    %c0_i32_0 = arith.constant 0 : i32
    %c0_i32_1 = arith.constant 0 : i32
    return %c0_i32, %c0_i32_0 : i32, i32
  }
  func.func @transform_25(%arg0: i32) -> (i32, i32) {
    %c0_i32 = arith.constant 0 : i32
    %c0_i32_0 = arith.constant 0 : i32
    %c0_i32_1 = arith.constant 0 : i32
    return %c0_i32, %c0_i32_0 : i32, i32
  }
  func.func @transform_26(%arg0: i32) -> (i32, i32) {
    %c0_i32 = arith.constant 0 : i32
    %c0_i32_0 = arith.constant 0 : i32
    %c0_i32_1 = arith.constant 0 : i32
    return %c0_i32, %c0_i32_0 : i32, i32
  }
  func.func @transform_27(%arg0: i32) -> (i32, i32) {
    %c0_i32 = arith.constant 0 : i32
    %c0_i32_0 = arith.constant 0 : i32
    %c0_i32_1 = arith.constant 0 : i32
    return %c0_i32, %c0_i32_0 : i32, i32
  }
  func.func @transform_28(%arg0: i32) -> (i32, i32) {
    %c0_i32 = arith.constant 0 : i32
    %c0_i32_0 = arith.constant 0 : i32
    %c0_i32_1 = arith.constant 0 : i32
    return %c0_i32, %c0_i32_0 : i32, i32
  }
  func.func @transform_29(%arg0: i32) -> (i32, i32) {
    %c0_i32 = arith.constant 0 : i32
    %c0_i32_0 = arith.constant 0 : i32
    %c0_i32_1 = arith.constant 0 : i32
    return %c0_i32, %c0_i32_0 : i32, i32
  }
  func.func @transform_30(%arg0: i32) -> (i32, i32) {
    %c0_i32 = arith.constant 0 : i32
    %c0_i32_0 = arith.constant 0 : i32
    %c0_i32_1 = arith.constant 0 : i32
    return %c0_i32, %c0_i32_0 : i32, i32
  }
  func.func @transform_31(%arg0: i32) -> (i32, i32) {
    %c0_i32 = arith.constant 0 : i32
    %c0_i32_0 = arith.constant 0 : i32
    %c0_i32_1 = arith.constant 0 : i32
    return %c0_i32, %c0_i32_0 : i32, i32
  }
  func.func @transform_32(%arg0: i32) -> (i32, i32) {
    %c0_i32 = arith.constant 0 : i32
    %c0_i32_0 = arith.constant 0 : i32
    %c0_i32_1 = arith.constant 0 : i32
    return %c0_i32, %c0_i32_0 : i32, i32
  }
  func.func @transform_33(%arg0: i32) -> (i32, i32) {
    %c0_i32 = arith.constant 0 : i32
    %c0_i32_0 = arith.constant 0 : i32
    %c0_i32_1 = arith.constant 0 : i32
    return %c0_i32, %c0_i32_0 : i32, i32
  }
  func.func @transform_34(%arg0: i32) -> (i32, i32) {
    %c0_i32 = arith.constant 0 : i32
    %c0_i32_0 = arith.constant 0 : i32
    %c0_i32_1 = arith.constant 0 : i32
    return %c0_i32, %c0_i32_0 : i32, i32
  }
  func.func @transform_35(%arg0: i32) -> (i32, i32) {
    %c0_i32 = arith.constant 0 : i32
    %c0_i32_0 = arith.constant 0 : i32
    %c0_i32_1 = arith.constant 0 : i32
    return %c0_i32, %c0_i32_0 : i32, i32
  }
  func.func @transform_36(%arg0: i32) -> (i32, i32) {
    %c0_i32 = arith.constant 0 : i32
    %c0_i32_0 = arith.constant 0 : i32
    %c0_i32_1 = arith.constant 0 : i32
    return %c0_i32, %c0_i32_0 : i32, i32
  }
}

</mosaic_0001>

<llo_original>
// kernel: tpu_custom_call.1
$region0: #{tpu_custom_call.1}
  #allocation0 [shape = 'u32[]', space=smem, size = 0x4, offset = 0x4, fixed_abs, tag = 'smem constant byte address 0x4 - core index']
  #allocation1 [shape = 'u32[144,128]{1,0:T(1,128)}', space=vmem, size = 0x12000, scoped, tag = 'internal scratch']
  %s0 = inlined_call_operand.smem [shape: u32[37], index: -1, kind: input, shape index: {}]
  %s1 = sld [smem:[%s0]]
  %s2 = scalar_lea.smem %s0, 1
  %s3 = sld [smem:[%s2]]
  %s4 = scalar_lea.smem %s0, 2
  %s5 = sld [smem:[%s4]]
  %s6 = scalar_lea.smem %s0, 3
  %s7 = sld [smem:[%s6]]
  %s8 = scalar_lea.smem %s0, 4
  %s9 = sld [smem:[%s8]]
  %s10 = scalar_lea.smem %s0, 5
  %s11 = sld [smem:[%s10]]
  %s12 = scalar_lea.smem %s0, 6
  %s13 = sld [smem:[%s12]]
  %s14 = scalar_lea.smem %s0, 7
  %s15 = sld [smem:[%s14]]
  %s16 = scalar_lea.smem %s0, 8
  %s17 = sld [smem:[%s16]]
  %s18 = scalar_lea.smem %s0, 9
  %s19 = sld [smem:[%s18]]
  %s20 = scalar_lea.smem %s0, 10
  %s21 = sld [smem:[%s20]]
  %s22 = scalar_lea.smem %s0, 11
  %s23 = sld [smem:[%s22]]
  %s24 = scalar_lea.smem %s0, 12
  %s25 = sld [smem:[%s24]]
  %s26 = scalar_lea.smem %s0, 13
  %s27 = sld [smem:[%s26]]
  %s28 = scalar_lea.smem %s0, 14
  %s29 = sld [smem:[%s28]]
  %s30 = scalar_lea.smem %s0, 15
  %s31 = sld [smem:[%s30]]
  %s32 = scalar_lea.smem %s0, 16
  %s33 = sld [smem:[%s32]]
  %s34 = scalar_lea.smem %s0, 17
  %s35 = sld [smem:[%s34]]
  %s36 = scalar_lea.smem %s0, 18
  %s37 = sld [smem:[%s36]]
  %s38 = scalar_lea.smem %s0, 19
  %s39 = sld [smem:[%s38]]
  %s40 = scalar_lea.smem %s0, 20
  %s41 = sld [smem:[%s40]]
  %s42 = scalar_lea.smem %s0, 21
  %s43 = sld [smem:[%s42]]
  %s44 = scalar_lea.smem %s0, 22
  %s45 = sld [smem:[%s44]]
  %s46 = scalar_lea.smem %s0, 23
  %s47 = sld [smem:[%s46]]
  %s48 = scalar_lea.smem %s0, 24
  %s49 = sld [smem:[%s48]]
  %s50 = scalar_lea.smem %s0, 25
  %s51 = sld [smem:[%s50]]
  %s52 = scalar_lea.smem %s0, 26
  %s53 = sld [smem:[%s52]]
  %s54 = scalar_lea.smem %s0, 27
  %s55 = sld [smem:[%s54]]
  %s56 = scalar_lea.smem %s0, 28
  %s57 = sld [smem:[%s56]]
  %s58 = scalar_lea.smem %s0, 29
  %s59 = sld [smem:[%s58]]
  %s60 = scalar_lea.smem %s0, 30
  %s61 = sld [smem:[%s60]]
  %s62 = scalar_lea.smem %s0, 31
  %s63 = sld [smem:[%s62]]
  %s64 = scalar_lea.smem %s0, 32
  %s65 = sld [smem:[%s64]]
  %s66 = scalar_lea.smem %s0, 33
  %s67 = sld [smem:[%s66]]
  %s68 = scalar_lea.smem %s0, 34
  %s69 = sld [smem:[%s68]]
  %s70 = scalar_lea.smem %s0, 35
  %s71 = sld [smem:[%s70]]
  %s72 = scalar_lea.smem %s0, 36
  %s73 = sld [smem:[%s72]]
  %s74 = sld [smem:[#allocation0]]
  $region294: #{tpu_custom_call.1} parent=0
    _
  %s76 = ssub.s32 1, %s74
  %s77 = scalar_select 0, %s76, %s74
  $region1: #{tpu_custom_call.1} parent=0
    #allocation2 [shape = 'u8[12288]{0}', space=vmem, size = 0x3000, scoped, tag = 'input window, operand 0, single buffered']
    #allocation3 [shape = 's32[1]{0}', space=sflag, size = 0x4, scoped, tag = 'scoped memory for tpu_custom_call.1']
    #allocation4 [shape = 's32[1]{0}', space=sflag, size = 0x4, scoped, tag = 'scoped memory for tpu_custom_call.1']
    #allocation5 [shape = 'u8[16384]{0}', space=vmem, size = 0x4000, scoped, tag = 'input window, operand 1, single buffered']
    #allocation6 [shape = 's32[1]{0}', space=sflag, size = 0x4, scoped, tag = 'scoped memory for tpu_custom_call.1']
    #allocation7 [shape = 'u8[16384]{0}', space=vmem, size = 0x4000, scoped, tag = 'input window, operand 2, single buffered']
    #allocation8 [shape = 'u8[196608]{0}', space=vmem, size = 0x30000, scoped, tag = 'input window, operand 3, single buffered']
    #allocation9 [shape = 's32[1]{0}', space=sflag, size = 0x4, scoped, tag = 'scoped memory for tpu_custom_call.1']
    #allocation10 [shape = 'u8[311296]{0}', space=vmem, size = 0x4c000, scoped, tag = 'input window, operand 5, single buffered']
    #allocation11 [shape = 'u8[2048]{0}', space=vmem, size = 0x800, scoped, tag = 'input window, operand 6, single buffered']
    #allocation12 [shape = 's32[1]{0}', space=sflag, size = 0x4, scoped, tag = 'scoped memory for tpu_custom_call.1']
    #allocation13 [shape = 'u8[262144]{0}', space=vmem, size = 0x40000, scoped, tag = 'input window, operand 7, single buffered']
    #allocation14 [shape = 'u8[1024]{0}', space=vmem, size = 0x400, scoped, tag = 'input window, operand 8, single buffered']
    #allocation15 [shape = 's32[1]{0}', space=sflag, size = 0x4, scoped, tag = 'scoped memory for tpu_custom_call.1']
    #allocation16 [shape = 'u8[262144]{0}', space=vmem, size = 0x40000, scoped, tag = 'input window, operand 9, single buffered']
    #allocation17 [shape = 'u8[1024]{0}', space=vmem, size = 0x400, scoped, tag = 'input window, operand 10, single buffered']
    #allocation18 [shape = 's32[1]{0}', space=sflag, size = 0x4, scoped, tag = 'scoped memory for tpu_custom_call.1']
    #allocation19 [shape = 'u8[262144]{0}', space=vmem, size = 0x40000, scoped, tag = 'input window, operand 11, single buffered']
    #allocation20 [shape = 'u8[2048]{0}', space=vmem, size = 0x800, scoped, tag = 'input window, operand 12, single buffered']
    #allocation21 [shape = 's32[1]{0}', space=sflag, size = 0x4, scoped, tag = 'scoped memory for tpu_custom_call.1']
    #allocation22 [shape = 'u8[2048]{0}', space=vmem, size = 0x800, scoped, tag = 'input window, operand 13, single buffered']
    #allocation23 [shape = 'u8[2048]{0}', space=vmem, size = 0x800, scoped, tag = 'input window, operand 14, single buffered']
    #allocation24 [shape = 's32[1]{0}', space=sflag, size = 0x4, scoped, tag = 'scoped memory for tpu_custom_call.1']
    #allocation25 [shape = 'u8[524288]{0}', space=vmem, size = 0x80000, scoped, tag = 'input window, operand 15, single buffered']
    #allocation26 [shape = 'u8[2048]{0}', space=vmem, size = 0x800, scoped, tag = 'input window, operand 16, single buffered']
    #allocation27 [shape = 's32[1]{0}', space=sflag, size = 0x4, scoped, tag = 'scoped memory for tpu_custom_call.1']
    #allocation28 [shape = 'u8[1179648]{0}', space=vmem, size = 0x120000, scoped, tag = 'input window, operand 17, single buffered']
    #allocation29 [shape = 'u8[3072]{0}', space=vmem, size = 0xc00, scoped, tag = 'input window, operand 18, single buffered']
    #allocation30 [shape = 's32[1]{0}', space=sflag, size = 0x4, scoped, tag = 'scoped memory for tpu_custom_call.1']
    #allocation31 [shape = 'u8[786432]{0}', space=vmem, size = 0xc0000, scoped, tag = 'input window, operand 19, single buffered']
    #allocation32 [shape = 'u8[524288]{0}', space=vmem, size = 0x80000, scoped, tag = 'input window, operand 20, single buffered']
    #allocation33 [shape = 's32[1]{0}', space=sflag, size = 0x4, scoped, tag = 'scoped memory for tpu_custom_call.1']
    #allocation34 [shape = 'u8[2048]{0}', space=vmem, size = 0x800, scoped, tag = 'input window, operand 21, single buffered']
    #allocation35 [shape = 'u8[262144]{0}', space=vmem, size = 0x40000, scoped, tag = 'input window, operand 22, single buffered']
    #allocation36 [shape = 's32[1]{0}', space=sflag, size = 0x4, scoped, tag = 'scoped memory for tpu_custom_call.1']
    #allocation37 [shape = 'u8[1024]{0}', space=vmem, size = 0x400, scoped, tag = 'input window, operand 23, single buffered']
    #allocation38 [shape = 'u8[262144]{0}', space=vmem, size = 0x40000, scoped, tag = 'input window, operand 24, single buffered']
    #allocation39 [shape = 's32[1]{0}', space=sflag, size = 0x4, scoped, tag = 'scoped memory for tpu_custom_call.1']
    #allocation40 [shape = 'u8[1024]{0}', space=vmem, size = 0x400, scoped, tag = 'input window, operand 25, single buffered']
    #allocation41 [shape = 'u8[262144]{0}', space=vmem, size = 0x40000, scoped, tag = 'input window, operand 26, single buffered']
    #allocation42 [shape = 's32[1]{0}', space=sflag, size = 0x4, scoped, tag = 'scoped memory for tpu_custom_call.1']
    #allocation43 [shape = 'u8[2048]{0}', space=vmem, size = 0x800, scoped, tag = 'input window, operand 27, single buffered']
    #allocation44 [shape = 'u8[2048]{0}', space=vmem, size = 0x800, scoped, tag = 'input window, operand 28, single buffered']
    #allocation45 [shape = 's32[1]{0}', space=sflag, size = 0x4, scoped, tag = 'scoped memory for tpu_custom_call.1']
    #allocation46 [shape = 'u8[2048]{0}', space=vmem, size = 0x800, scoped, tag = 'input window, operand 29, single buffered']
    #allocation47 [shape = 'u8[524288]{0}', space=vmem, size = 0x80000, scoped, tag = 'input window, operand 30, single buffered']
    #allocation48 [shape = 's32[1]{0}', space=sflag, size = 0x4, scoped, tag = 'scoped memory for tpu_custom_call.1']
    #allocation49 [shape = 'u8[2048]{0}', space=vmem, size = 0x800, scoped, tag = 'input window, operand 31, single buffered']
    #allocation50 [shape = 'u8[262144]{0}', space=vmem, size = 0x40000, scoped, tag = 'input window, operand 32, single buffered']
    #allocation51 [shape = 's32[1]{0}', space=sflag, size = 0x4, scoped, tag = 'scoped memory for tpu_custom_call.1']
    #allocation52 [shape = 'u8[1024]{0}', space=vmem, size = 0x400, scoped, tag = 'input window, operand 33, single buffered']
    #allocation53 [shape = 'u8[65536]{0}', space=vmem, size = 0x10000, scoped, tag = 'input window, operand 34, single buffered']
    #allocation54 [shape = 's32[1]{0}', space=sflag, size = 0x4, scoped, tag = 'scoped memory for tpu_custom_call.1']
    #allocation55 [shape = 'u8[512]{0}', space=vmem, size = 0x400, scoped, tag = 'input window, operand 35, single buffered']
    #allocation56 [shape = 'u8[4096]{0}', space=vmem, size = 0x1000, scoped, tag = 'output window, operand 0, single buffered']
    %78 = vsyncpa [#allocation3], 0
    %79 = vsyncpa [#allocation6], 0
    %80 = vsyncpa [#allocation9], 0
    %81 = vsyncpa [#allocation12], 0
    %82 = vsyncpa [#allocation15], 0
    %83 = vsyncpa [#allocation18], 0
    %84 = vsyncpa [#allocation21], 0
    %85 = vsyncpa [#allocation24], 0
    %86 = vsyncpa [#allocation27], 0
    %87 = vsyncpa [#allocation30], 0
    %88 = vsyncpa [#allocation33], 0
    %89 = vsyncpa [#allocation36], 0
    %90 = vsyncpa [#allocation39], 0
    %91 = vsyncpa [#allocation42], 0
    %92 = vsyncpa [#allocation45], 0
    %93 = vsyncpa [#allocation48], 0
    %94 = vsyncpa [#allocation51], 0
    %95 = vsyncpa [#allocation54], 0
    %96 = vsyncpa [#allocation4], 0
    // Predicated region
    $region2: #{tpu_custom_call.1} parent=1 // pred_check
      _
    $region3: #{tpu_custom_call.1} parent=1 // pred_check_branch
      %98 = sbr.rel (0) target = $region5
    $region4: #{tpu_custom_call.1} parent=1 // pred_region
      %s100 = ssub.s32 384, 384
      %101 = vsyncadd [#allocation3], %s100
      %s103 = sshll.u32 [#allocation2], 4
      %s104 = int_to_ptr.vmem [resolvable:$true] %s103
      %106 = dma.hbm_to_vmem [thread:$0]  %s1, 384, %s104, [#allocation3]
    $region5: #{tpu_custom_call.1} parent=1 // pred_fallthru
      _
    // Predicated region
    $region6: #{tpu_custom_call.1} parent=1 // pred_check
      _
    $region7: #{tpu_custom_call.1} parent=1 // pred_check_branch
      %108 = sbr.rel (0) target = $region9
    $region8: #{tpu_custom_call.1} parent=1 // pred_region
      %s110 = ssub.s32 512, 512
      %111 = vsyncadd [#allocation6], %s110
      %s113 = sshll.u32 [#allocation5], 4
      %s114 = int_to_ptr.vmem [resolvable:$true] %s113
      %116 = dma.hbm_to_vmem [thread:$0]  %s3, 512, %s114, [#allocation6]
    $region9: #{tpu_custom_call.1} parent=1 // pred_fallthru
      _
    // Predicated region
    $region10: #{tpu_custom_call.1} parent=1 // pred_check
      _
    $region11: #{tpu_custom_call.1} parent=1 // pred_check_branch
      %118 = sbr.rel (0) target = $region13
    $region12: #{tpu_custom_call.1} parent=1 // pred_region
      %s120 = ssub.s32 512, 512
      %121 = vsyncadd [#allocation6], %s120
      %s123 = sshll.u32 [#allocation7], 4
      %s124 = int_to_ptr.vmem [resolvable:$true] %s123
      %126 = dma.hbm_to_vmem [thread:$0]  %s5, 512, %s124, [#allocation6]
    $region13: #{tpu_custom_call.1} parent=1 // pred_fallthru
      _
    // Predicated region
    $region14: #{tpu_custom_call.1} parent=1 // pred_check
      _
    $region15: #{tpu_custom_call.1} parent=1 // pred_check_branch
      %128 = sbr.rel (0) target = $region17
    $region16: #{tpu_custom_call.1} parent=1 // pred_region
      %s130 = ssub.s32 6144, 6144
      %131 = vsyncadd [#allocation9], %s130
      %s132 = sshll.u32 [#allocation8], 4
      %s133 = int_to_ptr.vmem [resolvable:$true] %s132
      %138 = dma.hbm_to_vmem [thread:$0]  %s7, 6144, %s133, [#allocation9], 768, 768, 48
    $region17: #{tpu_custom_call.1} parent=1 // pred_fallthru
      _
    // Predicated region
    $region18: #{tpu_custom_call.1} parent=1 // pred_check
      _
    $region19: #{tpu_custom_call.1} parent=1 // pred_check_branch
      %140 = sbr.rel (0) target = $region21
    $region20: #{tpu_custom_call.1} parent=1 // pred_region
      _
    $region21: #{tpu_custom_call.1} parent=1 // pred_fallthru
      _
    // Predicated region
    $region22: #{tpu_custom_call.1} parent=1 // pred_check
      _
    $region23: #{tpu_custom_call.1} parent=1 // pred_check_branch
      %142 = sbr.rel (0) target = $region25
    $region24: #{tpu_custom_call.1} parent=1 // pred_region
      %s144 = ssub.s32 9728, 9728
      %145 = vsyncadd [#allocation9], %s144
      %s146 = sshll.u32 [#allocation10], 4
      %s147 = int_to_ptr.vmem [resolvable:$true] %s146
      %152 = dma.hbm_to_vmem [thread:$0]  %s11, 9728, %s147, [#allocation9], 256, 256, 16
    $region25: #{tpu_custom_call.1} parent=1 // pred_fallthru
      _
    // Predicated region
    $region26: #{tpu_custom_call.1} parent=1 // pred_check
      _
    $region27: #{tpu_custom_call.1} parent=1 // pred_check_branch
      %154 = sbr.rel (0) target = $region29
    $region28: #{tpu_custom_call.1} parent=1 // pred_region
      %s156 = ssub.s32 64, 64
      %157 = vsyncadd [#allocation12], %s156
      %s159 = sshll.u32 [#allocation11], 4
      %s160 = int_to_ptr.vmem [resolvable:$true] %s159
      %162 = dma.hbm_to_vmem [thread:$0]  %s13, 64, %s160, [#allocation12]
    $region29: #{tpu_custom_call.1} parent=1 // pred_fallthru
      _
    // Predicated region
    $region30: #{tpu_custom_call.1} parent=1 // pred_check
      _
    $region31: #{tpu_custom_call.1} parent=1 // pred_check_branch
      %164 = sbr.rel (0) target = $region33
    $region32: #{tpu_custom_call.1} parent=1 // pred_region
      %s166 = ssub.s32 8192, 8192
      %167 = vsyncadd [#allocation12], %s166
      %s168 = sshll.u32 [#allocation13], 4
      %s169 = int_to_ptr.vmem [resolvable:$true] %s168
      %174 = dma.hbm_to_vmem [thread:$0]  %s15, 8192, %s169, [#allocation12], 128, 128, 8
    $region33: #{tpu_custom_call.1} parent=1 // pred_fallthru
      _
    // Predicated region
    $region34: #{tpu_custom_call.1} parent=1 // pred_check
      _
    $region35: #{tpu_custom_call.1} parent=1 // pred_check_branch
      %176 = sbr.rel (0) target = $region37
    $region36: #{tpu_custom_call.1} parent=1 // pred_region
      %s178 = ssub.s32 32, 32
      %179 = vsyncadd [#allocation15], %s178
      %s181 = sshll.u32 [#allocation14], 4
      %s182 = int_to_ptr.vmem [resolvable:$true] %s181
      %184 = dma.hbm_to_vmem [thread:$0]  %s17, 32, %s182, [#allocation15]
    $region37: #{tpu_custom_call.1} parent=1 // pred_fallthru
      _
    // Predicated region
    $region38: #{tpu_custom_call.1} parent=1 // pred_check
      _
    $region39: #{tpu_custom_call.1} parent=1 // pred_check_branch
      %186 = sbr.rel (0) target = $region41
    $region40: #{tpu_custom_call.1} parent=1 // pred_region
      %s188 = ssub.s32 8192, 8192
      %189 = vsyncadd [#allocation15], %s188
      %s190 = sshll.u32 [#allocation16], 4
      %s191 = int_to_ptr.vmem [resolvable:$true] %s190
      %196 = dma.hbm_to_vmem [thread:$0]  %s19, 8192, %s191, [#allocation15], 128, 128, 8
    $region41: #{tpu_custom_call.1} parent=1 // pred_fallthru
      _
    // Predicated region
    $region42: #{tpu_custom_call.1} parent=1 // pred_check
      _
    $region43: #{tpu_custom_call.1} parent=1 // pred_check_branch
      %198 = sbr.rel (0) target = $region45
    $region44: #{tpu_custom_call.1} parent=1 // pred_region
      %s200 = ssub.s32 32, 32
      %201 = vsyncadd [#allocation18], %s200
      %s203 = sshll.u32 [#allocation17], 4
      %s204 = int_to_ptr.vmem [resolvable:$true] %s203
      %206 = dma.hbm_to_vmem [thread:$0]  %s21, 32, %s204, [#allocation18]
    $region45: #{tpu_custom_call.1} parent=1 // pred_fallthru
      _
    // Predicated region
    $region46: #{tpu_custom_call.1} parent=1 // pred_check
      _
    $region47: #{tpu_custom_call.1} parent=1 // pred_check_branch
      %208 = sbr.rel (0) target = $region49
    $region48: #{tpu_custom_call.1} parent=1 // pred_region
      %s210 = ssub.s32 8192, 8192
      %211 = vsyncadd [#allocation18], %s210
      %s212 = sshll.u32 [#allocation19], 4
      %s213 = int_to_ptr.vmem [resolvable:$true] %s212
      %218 = dma.hbm_to_vmem [thread:$0]  %s23, 8192, %s213, [#allocation18], 256, 256, 16
    $region49: #{tpu_custom_call.1} parent=1 // pred_fallthru
      _
    // Predicated region
    $region50: #{tpu_custom_call.1} parent=1 // pred_check
      _
    $region51: #{tpu_custom_call.1} parent=1 // pred_check_branch
      %220 = sbr.rel (0) target = $region53
    $region52: #{tpu_custom_call.1} parent=1 // pred_region
      %s222 = ssub.s32 64, 64
      %223 = vsyncadd [#allocation21], %s222
      %s225 = sshll.u32 [#allocation20], 4
      %s226 = int_to_ptr.vmem [resolvable:$true] %s225
      %228 = dma.hbm_to_vmem [thread:$0]  %s25, 64, %s226, [#allocation21]
    $region53: #{tpu_custom_call.1} parent=1 // pred_fallthru
      _
    // Predicated region
    $region54: #{tpu_custom_call.1} parent=1 // pred_check
      _
    $region55: #{tpu_custom_call.1} parent=1 // pred_check_branch
      %230 = sbr.rel (0) target = $region57
    $region56: #{tpu_custom_call.1} parent=1 // pred_region
      %s232 = ssub.s32 64, 64
      %233 = vsyncadd [#allocation21], %s232
      %s235 = sshll.u32 [#allocation22], 4
      %s236 = int_to_ptr.vmem [resolvable:$true] %s235
      %238 = dma.hbm_to_vmem [thread:$0]  %s27, 64, %s236, [#allocation21]
    $region57: #{tpu_custom_call.1} parent=1 // pred_fallthru
      _
    // Predicated region
    $region58: #{tpu_custom_call.1} parent=1 // pred_check
      _
    $region59: #{tpu_custom_call.1} parent=1 // pred_check_branch
      %240 = sbr.rel (0) target = $region61
    $region60: #{tpu_custom_call.1} parent=1 // pred_region
      %s242 = ssub.s32 64, 64
      %243 = vsyncadd [#allocation24], %s242
      %s245 = sshll.u32 [#allocation23], 4
      %s246 = int_to_ptr.vmem [resolvable:$true] %s245
      %248 = dma.hbm_to_vmem [thread:$0]  %s29, 64, %s246, [#allocation24]
    $region61: #{tpu_custom_call.1} parent=1 // pred_fallthru
      _
    // Predicated region
    $region62: #{tpu_custom_call.1} parent=1 // pred_check
      _
    $region63: #{tpu_custom_call.1} parent=1 // pred_check_branch
      %250 = sbr.rel (0) target = $region65
    $region64: #{tpu_custom_call.1} parent=1 // pred_region
      %s252 = ssub.s32 16384, 16384
      %253 = vsyncadd [#allocation24], %s252
      %s254 = sshll.u32 [#allocation25], 4
      %s255 = int_to_ptr.vmem [resolvable:$true] %s254
      %260 = dma.hbm_to_vmem [thread:$0]  %s31, 16384, %s255, [#allocation24], 256, 256, 16
    $region65: #{tpu_custom_call.1} parent=1 // pred_fallthru
      _
    // Predicated region
    $region66: #{tpu_custom_call.1} parent=1 // pred_check
      _
    $region67: #{tpu_custom_call.1} parent=1 // pred_check_branch
      %262 = sbr.rel (0) target = $region69
    $region68: #{tpu_custom_call.1} parent=1 // pred_region
      %s264 = ssub.s32 64, 64
      %265 = vsyncadd [#allocation27], %s264
      %s267 = sshll.u32 [#allocation26], 4
      %s268 = int_to_ptr.vmem [resolvable:$true] %s267
      %270 = dma.hbm_to_vmem [thread:$0]  %s33, 64, %s268, [#allocation27]
    $region69: #{tpu_custom_call.1} parent=1 // pred_fallthru
      _
    // Predicated region
    $region70: #{tpu_custom_call.1} parent=1 // pred_check
      _
    $region71: #{tpu_custom_call.1} parent=1 // pred_check_branch
      %272 = sbr.rel (0) target = $region73
    $region72: #{tpu_custom_call.1} parent=1 // pred_region
      %s274 = ssub.s32 36864, 36864
      %275 = vsyncadd [#allocation27], %s274
      %s276 = sshll.u32 [#allocation28], 4
      %s277 = int_to_ptr.vmem [resolvable:$true] %s276
      %282 = dma.hbm_to_vmem [thread:$0]  %s35, 36864, %s277, [#allocation27], 384, 384, 24
    $region73: #{tpu_custom_call.1} parent=1 // pred_fallthru
      _
    // Predicated region
    $region74: #{tpu_custom_call.1} parent=1 // pred_check
      _
    $region75: #{tpu_custom_call.1} parent=1 // pred_check_branch
      %284 = sbr.rel (0) target = $region77
    $region76: #{tpu_custom_call.1} parent=1 // pred_region
      %s286 = ssub.s32 96, 96
      %287 = vsyncadd [#allocation30], %s286
      %s289 = sshll.u32 [#allocation29], 4
      %s290 = int_to_ptr.vmem [resolvable:$true] %s289
      %292 = dma.hbm_to_vmem [thread:$0]  %s37, 96, %s290, [#allocation30]
    $region77: #{tpu_custom_call.1} parent=1 // pred_fallthru
      _
    // Predicated region
    $region78: #{tpu_custom_call.1} parent=1 // pred_check
      _
    $region79: #{tpu_custom_call.1} parent=1 // pred_check_branch
      %294 = sbr.rel (0) target = $region81
    $region80: #{tpu_custom_call.1} parent=1 // pred_region
      %s296 = ssub.s32 24576, 24576
      %297 = vsyncadd [#allocation30], %s296
      %s298 = sshll.u32 [#allocation31], 4
      %s299 = int_to_ptr.vmem [resolvable:$true] %s298
      %304 = dma.hbm_to_vmem [thread:$0]  %s39, 24576, %s299, [#allocation30], 256, 256, 16
    $region81: #{tpu_custom_call.1} parent=1 // pred_fallthru
      _
    // Predicated region
    $region82: #{tpu_custom_call.1} parent=1 // pred_check
      _
    $region83: #{tpu_custom_call.1} parent=1 // pred_check_branch
      %306 = sbr.rel (0) target = $region85
    $region84: #{tpu_custom_call.1} parent=1 // pred_region
      %s308 = ssub.s32 16384, 16384
      %309 = vsyncadd [#allocation33], %s308
      %s310 = sshll.u32 [#allocation32], 4
      %s311 = int_to_ptr.vmem [resolvable:$true] %s310
      %316 = dma.hbm_to_vmem [thread:$0]  %s41, 16384, %s311, [#allocation33], 256, 256, 16
    $region85: #{tpu_custom_call.1} parent=1 // pred_fallthru
      _
    // Predicated region
    $region86: #{tpu_custom_call.1} parent=1 // pred_check
      _
    $region87: #{tpu_custom_call.1} parent=1 // pred_check_branch
      %318 = sbr.rel (0) target = $region89
    $region88: #{tpu_custom_call.1} parent=1 // pred_region
      %s320 = ssub.s32 64, 64
      %321 = vsyncadd [#allocation33], %s320
      %s323 = sshll.u32 [#allocation34], 4
      %s324 = int_to_ptr.vmem [resolvable:$true] %s323
      %326 = dma.hbm_to_vmem [thread:$0]  %s43, 64, %s324, [#allocation33]
    $region89: #{tpu_custom_call.1} parent=1 // pred_fallthru
      _
    // Predicated region
    $region90: #{tpu_custom_call.1} parent=1 // pred_check
      _
    $region91: #{tpu_custom_call.1} parent=1 // pred_check_branch
      %328 = sbr.rel (0) target = $region93
    $region92: #{tpu_custom_call.1} parent=1 // pred_region
      %s330 = ssub.s32 8192, 8192
      %331 = vsyncadd [#allocation36], %s330
      %s332 = sshll.u32 [#allocation35], 4
      %s333 = int_to_ptr.vmem [resolvable:$true] %s332
      %338 = dma.hbm_to_vmem [thread:$0]  %s45, 8192, %s333, [#allocation36], 128, 128, 8
    $region93: #{tpu_custom_call.1} parent=1 // pred_fallthru
      _
    // Predicated region
    $region94: #{tpu_custom_call.1} parent=1 // pred_check
      _
    $region95: #{tpu_custom_call.1} parent=1 // pred_check_branch
      %340 = sbr.rel (0) target = $region97
    $region96: #{tpu_custom_call.1} parent=1 // pred_region
      %s342 = ssub.s32 32, 32
      %343 = vsyncadd [#allocation36], %s342
      %s345 = sshll.u32 [#allocation37], 4
      %s346 = int_to_ptr.vmem [resolvable:$true] %s345
      %348 = dma.hbm_to_vmem [thread:$0]  %s47, 32, %s346, [#allocation36]
    $region97: #{tpu_custom_call.1} parent=1 // pred_fallthru
      _
    // Predicated region
    $region98: #{tpu_custom_call.1} parent=1 // pred_check
      _
    $region99: #{tpu_custom_call.1} parent=1 // pred_check_branch
      %350 = sbr.rel (0) target = $region101
    $region100: #{tpu_custom_call.1} parent=1 // pred_region
      %s352 = ssub.s32 8192, 8192
      %353 = vsyncadd [#allocation39], %s352
      %s354 = sshll.u32 [#allocation38], 4
      %s355 = int_to_ptr.vmem [resolvable:$true] %s354
      %360 = dma.hbm_to_vmem [thread:$0]  %s49, 8192, %s355, [#allocation39], 128, 128, 8
    $region101: #{tpu_custom_call.1} parent=1 // pred_fallthru
      _
    // Predicated region
    $region102: #{tpu_custom_call.1} parent=1 // pred_check
      _
    $region103: #{tpu_custom_call.1} parent=1 // pred_check_branch
      %362 = sbr.rel (0) target = $region105
    $region104: #{tpu_custom_call.1} parent=1 // pred_region
      %s364 = ssub.s32 32, 32
      %365 = vsyncadd [#allocation39], %s364
      %s367 = sshll.u32 [#allocation40], 4
      %s368 = int_to_ptr.vmem [resolvable:$true] %s367
      %370 = dma.hbm_to_vmem [thread:$0]  %s51, 32, %s368, [#allocation39]
    $region105: #{tpu_custom_call.1} parent=1 // pred_fallthru
      _
    // Predicated region
    $region106: #{tpu_custom_call.1} parent=1 // pred_check
      _
    $region107: #{tpu_custom_call.1} parent=1 // pred_check_branch
      %372 = sbr.rel (0) target = $region109
    $region108: #{tpu_custom_call.1} parent=1 // pred_region
      %s374 = ssub.s32 8192, 8192
      %375 = vsyncadd [#allocation42], %s374
      %s376 = sshll.u32 [#allocation41], 4
      %s377 = int_to_ptr.vmem [resolvable:$true] %s376
      %382 = dma.hbm_to_vmem [thread:$0]  %s53, 8192, %s377, [#allocation42], 256, 256, 16
    $region109: #{tpu_custom_call.1} parent=1 // pred_fallthru
      _
    // Predicated region
    $region110: #{tpu_custom_call.1} parent=1 // pred_check
      _
    $region111: #{tpu_custom_call.1} parent=1 // pred_check_branch
      %384 = sbr.rel (0) target = $region113
    $region112: #{tpu_custom_call.1} parent=1 // pred_region
      %s386 = ssub.s32 64, 64
      %387 = vsyncadd [#allocation42], %s386
      %s389 = sshll.u32 [#allocation43], 4
      %s390 = int_to_ptr.vmem [resolvable:$true] %s389
      %392 = dma.hbm_to_vmem [thread:$0]  %s55, 64, %s390, [#allocation42]
    $region113: #{tpu_custom_call.1} parent=1 // pred_fallthru
      _
    // Predicated region
    $region114: #{tpu_custom_call.1} parent=1 // pred_check
      _
    $region115: #{tpu_custom_call.1} parent=1 // pred_check_branch
      %394 = sbr.rel (0) target = $region117
    $region116: #{tpu_custom_call.1} parent=1 // pred_region
      %s396 = ssub.s32 64, 64
      %397 = vsyncadd [#allocation45], %s396
      %s399 = sshll.u32 [#allocation44], 4
      %s400 = int_to_ptr.vmem [resolvable:$true] %s399
      %402 = dma.hbm_to_vmem [thread:$0]  %s57, 64, %s400, [#allocation45]
    $region117: #{tpu_custom_call.1} parent=1 // pred_fallthru
      _
    // Predicated region
    $region118: #{tpu_custom_call.1} parent=1 // pred_check
      _
    $region119: #{tpu_custom_call.1} parent=1 // pred_check_branch
      %404 = sbr.rel (0) target = $region121
    $region120: #{tpu_custom_call.1} parent=1 // pred_region
      %s406 = ssub.s32 64, 64
      %407 = vsyncadd [#allocation45], %s406
      %s409 = sshll.u32 [#allocation46], 4
      %s410 = int_to_ptr.vmem [resolvable:$true] %s409
      %412 = dma.hbm_to_vmem [thread:$0]  %s59, 64, %s410, [#allocation45]
    $region121: #{tpu_custom_call.1} parent=1 // pred_fallthru
      _
    // Predicated region
    $region122: #{tpu_custom_call.1} parent=1 // pred_check
      _
    $region123: #{tpu_custom_call.1} parent=1 // pred_check_branch
      %414 = sbr.rel (0) target = $region125
    $region124: #{tpu_custom_call.1} parent=1 // pred_region
      %s416 = ssub.s32 16384, 16384
      %417 = vsyncadd [#allocation48], %s416
      %s418 = sshll.u32 [#allocation47], 4
      %s419 = int_to_ptr.vmem [resolvable:$true] %s418
      %424 = dma.hbm_to_vmem [thread:$0]  %s61, 16384, %s419, [#allocation48], 256, 256, 16
    $region125: #{tpu_custom_call.1} parent=1 // pred_fallthru
      _
    // Predicated region
    $region126: #{tpu_custom_call.1} parent=1 // pred_check
      _
    $region127: #{tpu_custom_call.1} parent=1 // pred_check_branch
      %426 = sbr.rel (0) target = $region129
    $region128: #{tpu_custom_call.1} parent=1 // pred_region
      %s428 = ssub.s32 64, 64
      %429 = vsyncadd [#allocation48], %s428
      %s431 = sshll.u32 [#allocation49], 4
      %s432 = int_to_ptr.vmem [resolvable:$true] %s431
      %434 = dma.hbm_to_vmem [thread:$0]  %s63, 64, %s432, [#allocation48]
    $region129: #{tpu_custom_call.1} parent=1 // pred_fallthru
      _
    // Predicated region
    $region130: #{tpu_custom_call.1} parent=1 // pred_check
      _
    $region131: #{tpu_custom_call.1} parent=1 // pred_check_branch
      %436 = sbr.rel (0) target = $region133
    $region132: #{tpu_custom_call.1} parent=1 // pred_region
      %s438 = ssub.s32 8192, 8192
      %439 = vsyncadd [#allocation51], %s438
      %s440 = sshll.u32 [#allocation50], 4
      %s441 = int_to_ptr.vmem [resolvable:$true] %s440
      %446 = dma.hbm_to_vmem [thread:$0]  %s65, 8192, %s441, [#allocation51], 128, 128, 8
    $region133: #{tpu_custom_call.1} parent=1 // pred_fallthru
      _
    // Predicated region
    $region134: #{tpu_custom_call.1} parent=1 // pred_check
      _
    $region135: #{tpu_custom_call.1} parent=1 // pred_check_branch
      %448 = sbr.rel (0) target = $region137
    $region136: #{tpu_custom_call.1} parent=1 // pred_region
      %s450 = ssub.s32 32, 32
      %451 = vsyncadd [#allocation51], %s450
      %s453 = sshll.u32 [#allocation52], 4
      %s454 = int_to_ptr.vmem [resolvable:$true] %s453
      %456 = dma.hbm_to_vmem [thread:$0]  %s67, 32, %s454, [#allocation51]
    $region137: #{tpu_custom_call.1} parent=1 // pred_fallthru
      _
    // Predicated region
    $region138: #{tpu_custom_call.1} parent=1 // pred_check
      _
    $region139: #{tpu_custom_call.1} parent=1 // pred_check_branch
      %458 = sbr.rel (0) target = $region141
    $region140: #{tpu_custom_call.1} parent=1 // pred_region
      %s460 = ssub.s32 2048, 2048
      %461 = vsyncadd [#allocation54], %s460
      %s462 = sshll.u32 [#allocation53], 4
      %s463 = int_to_ptr.vmem [resolvable:$true] %s462
      %468 = dma.hbm_to_vmem [thread:$0]  %s69, 2048, %s463, [#allocation54], 64, 64, 4
    $region141: #{tpu_custom_call.1} parent=1 // pred_fallthru
      _
    // Predicated region
    $region142: #{tpu_custom_call.1} parent=1 // pred_check
      _
    $region143: #{tpu_custom_call.1} parent=1 // pred_check_branch
      %470 = sbr.rel (0) target = $region145
    $region144: #{tpu_custom_call.1} parent=1 // pred_region
      %s472 = ssub.s32 16, 16
      %473 = vsyncadd [#allocation54], %s472
      %s475 = sshll.u32 [#allocation55], 4
      %s476 = int_to_ptr.vmem [resolvable:$true] %s475
      %478 = dma.hbm_to_vmem [thread:$0]  %s71, 16, %s476, [#allocation54]
    $region145: #{tpu_custom_call.1} parent=1 // pred_fallthru
      _
    // Predicated region
    $region146: #{tpu_custom_call.1} parent=1 // pred_check
      _
    $region147: #{tpu_custom_call.1} parent=1 // pred_check_branch
      %480 = sbr.rel (0) target = $region149
    $region148: #{tpu_custom_call.1} parent=1 // pred_region
      %481 = dma.done [#allocation3], 384
    $region149: #{tpu_custom_call.1} parent=1 // pred_fallthru
      _
    // Predicated region
    $region150: #{tpu_custom_call.1} parent=1 // pred_check
      _
    $region151: #{tpu_custom_call.1} parent=1 // pred_check_branch
      %483 = sbr.rel (0) target = $region153
    $region152: #{tpu_custom_call.1} parent=1 // pred_region
      %484 = dma.done [#allocation6], 512
    $region153: #{tpu_custom_call.1} parent=1 // pred_fallthru
      _
    // Predicated region
    $region154: #{tpu_custom_call.1} parent=1 // pred_check
      _
    $region155: #{tpu_custom_call.1} parent=1 // pred_check_branch
      %486 = sbr.rel (0) target = $region157
    $region156: #{tpu_custom_call.1} parent=1 // pred_region
      %487 = dma.done [#allocation6], 512
    $region157: #{tpu_custom_call.1} parent=1 // pred_fallthru
      _
    // Predicated region
    $region158: #{tpu_custom_call.1} parent=1 // pred_check
      _
    $region159: #{tpu_custom_call.1} parent=1 // pred_check_branch
      %489 = sbr.rel (0) target = $region161
    $region160: #{tpu_custom_call.1} parent=1 // pred_region
      %490 = dma.done [#allocation9], 6144
    $region161: #{tpu_custom_call.1} parent=1 // pred_fallthru
      _
    // Predicated region
    $region162: #{tpu_custom_call.1} parent=1 // pred_check
      _
    $region163: #{tpu_custom_call.1} parent=1 // pred_check_branch
      %492 = sbr.rel (0) target = $region165
    $region164: #{tpu_custom_call.1} parent=1 // pred_region
      %493 = dma.done [#allocation9], 9728
    $region165: #{tpu_custom_call.1} parent=1 // pred_fallthru
      _
    // Predicated region
    $region166: #{tpu_custom_call.1} parent=1 // pred_check
      _
    $region167: #{tpu_custom_call.1} parent=1 // pred_check_branch
      %495 = sbr.rel (0) target = $region169
    $region168: #{tpu_custom_call.1} parent=1 // pred_region
      %496 = dma.done [#allocation12], 64
    $region169: #{tpu_custom_call.1} parent=1 // pred_fallthru
      _
    // Predicated region
    $region170: #{tpu_custom_call.1} parent=1 // pred_check
      _
    $region171: #{tpu_custom_call.1} parent=1 // pred_check_branch
      %498 = sbr.rel (0) target = $region173
    $region172: #{tpu_custom_call.1} parent=1 // pred_region
      %499 = dma.done [#allocation12], 8192
    $region173: #{tpu_custom_call.1} parent=1 // pred_fallthru
      _
    // Predicated region
    $region174: #{tpu_custom_call.1} parent=1 // pred_check
      _
    $region175: #{tpu_custom_call.1} parent=1 // pred_check_branch
      %501 = sbr.rel (0) target = $region177
    $region176: #{tpu_custom_call.1} parent=1 // pred_region
      %502 = dma.done [#allocation15], 32
    $region177: #{tpu_custom_call.1} parent=1 // pred_fallthru
      _
    // Predicated region
    $region178: #{tpu_custom_call.1} parent=1 // pred_check
      _
    $region179: #{tpu_custom_call.1} parent=1 // pred_check_branch
      %504 = sbr.rel (0) target = $region181
    $region180: #{tpu_custom_call.1} parent=1 // pred_region
      %505 = dma.done [#allocation15], 8192
    $region181: #{tpu_custom_call.1} parent=1 // pred_fallthru
      _
    // Predicated region
    $region182: #{tpu_custom_call.1} parent=1 // pred_check
      _
    $region183: #{tpu_custom_call.1} parent=1 // pred_check_branch
      %507 = sbr.rel (0) target = $region185
    $region184: #{tpu_custom_call.1} parent=1 // pred_region
      %508 = dma.done [#allocation18], 32
    $region185: #{tpu_custom_call.1} parent=1 // pred_fallthru
      _
    // Predicated region
    $region186: #{tpu_custom_call.1} parent=1 // pred_check
      _
    $region187: #{tpu_custom_call.1} parent=1 // pred_check_branch
      %510 = sbr.rel (0) target = $region189
    $region188: #{tpu_custom_call.1} parent=1 // pred_region
      %511 = dma.done [#allocation18], 8192
    $region189: #{tpu_custom_call.1} parent=1 // pred_fallthru
      _
    // Predicated region
    $region190: #{tpu_custom_call.1} parent=1 // pred_check
      _
    $region191: #{tpu_custom_call.1} parent=1 // pred_check_branch
      %513 = sbr.rel (0) target = $region193
    $region192: #{tpu_custom_call.1} parent=1 // pred_region
      %514 = dma.done [#allocation21], 64
    $region193: #{tpu_custom_call.1} parent=1 // pred_fallthru
      _
    // Predicated region
    $region194: #{tpu_custom_call.1} parent=1 // pred_check
      _
    $region195: #{tpu_custom_call.1} parent=1 // pred_check_branch
      %516 = sbr.rel (0) target = $region197
    $region196: #{tpu_custom_call.1} parent=1 // pred_region
      %517 = dma.done [#allocation21], 64
    $region197: #{tpu_custom_call.1} parent=1 // pred_fallthru
      _
    // Predicated region
    $region198: #{tpu_custom_call.1} parent=1 // pred_check
      _
    $region199: #{tpu_custom_call.1} parent=1 // pred_check_branch
      %519 = sbr.rel (0) target = $region201
    $region200: #{tpu_custom_call.1} parent=1 // pred_region
      %520 = dma.done [#allocation24], 64
    $region201: #{tpu_custom_call.1} parent=1 // pred_fallthru
      _
    // Predicated region
    $region202: #{tpu_custom_call.1} parent=1 // pred_check
      _
    $region203: #{tpu_custom_call.1} parent=1 // pred_check_branch
      %522 = sbr.rel (0) target = $region205
    $region204: #{tpu_custom_call.1} parent=1 // pred_region
      %523 = dma.done [#allocation24], 16384
    $region205: #{tpu_custom_call.1} parent=1 // pred_fallthru
      _
    // Predicated region
    $region206: #{tpu_custom_call.1} parent=1 // pred_check
      _
    $region207: #{tpu_custom_call.1} parent=1 // pred_check_branch
      %525 = sbr.rel (0) target = $region209
    $region208: #{tpu_custom_call.1} parent=1 // pred_region
      %526 = dma.done [#allocation27], 64
    $region209: #{tpu_custom_call.1} parent=1 // pred_fallthru
      _
    // Predicated region
    $region210: #{tpu_custom_call.1} parent=1 // pred_check
      _
    $region211: #{tpu_custom_call.1} parent=1 // pred_check_branch
      %528 = sbr.rel (0) target = $region213
    $region212: #{tpu_custom_call.1} parent=1 // pred_region
      %529 = dma.done [#allocation27], 36864
    $region213: #{tpu_custom_call.1} parent=1 // pred_fallthru
      _
    // Predicated region
    $region214: #{tpu_custom_call.1} parent=1 // pred_check
      _
    $region215: #{tpu_custom_call.1} parent=1 // pred_check_branch
      %531 = sbr.rel (0) target = $region217
    $region216: #{tpu_custom_call.1} parent=1 // pred_region
      %532 = dma.done [#allocation30], 96
    $region217: #{tpu_custom_call.1} parent=1 // pred_fallthru
      _
    // Predicated region
    $region218: #{tpu_custom_call.1} parent=1 // pred_check
      _
    $region219: #{tpu_custom_call.1} parent=1 // pred_check_branch
      %534 = sbr.rel (0) target = $region221
    $region220: #{tpu_custom_call.1} parent=1 // pred_region
      %535 = dma.done [#allocation30], 24576
    $region221: #{tpu_custom_call.1} parent=1 // pred_fallthru
      _
    // Predicated region
    $region222: #{tpu_custom_call.1} parent=1 // pred_check
      _
    $region223: #{tpu_custom_call.1} parent=1 // pred_check_branch
      %537 = sbr.rel (0) target = $region225
    $region224: #{tpu_custom_call.1} parent=1 // pred_region
      %538 = dma.done [#allocation33], 16384
    $region225: #{tpu_custom_call.1} parent=1 // pred_fallthru
      _
    // Predicated region
    $region226: #{tpu_custom_call.1} parent=1 // pred_check
      _
    $region227: #{tpu_custom_call.1} parent=1 // pred_check_branch
      %540 = sbr.rel (0) target = $region229
    $region228: #{tpu_custom_call.1} parent=1 // pred_region
      %541 = dma.done [#allocation33], 64
    $region229: #{tpu_custom_call.1} parent=1 // pred_fallthru
      _
    // Predicated region
    $region230: #{tpu_custom_call.1} parent=1 // pred_check
      _
    $region231: #{tpu_custom_call.1} parent=1 // pred_check_branch
      %543 = sbr.rel (0) target = $region233
    $region232: #{tpu_custom_call.1} parent=1 // pred_region
      %544 = dma.done [#allocation36], 8192
    $region233: #{tpu_custom_call.1} parent=1 // pred_fallthru
      _
    // Predicated region
    $region234: #{tpu_custom_call.1} parent=1 // pred_check
      _
    $region235: #{tpu_custom_call.1} parent=1 // pred_check_branch
      %546 = sbr.rel (0) target = $region237
    $region236: #{tpu_custom_call.1} parent=1 // pred_region
      %547 = dma.done [#allocation36], 32
    $region237: #{tpu_custom_call.1} parent=1 // pred_fallthru
      _
    // Predicated region
    $region238: #{tpu_custom_call.1} parent=1 // pred_check
      _
    $region239: #{tpu_custom_call.1} parent=1 // pred_check_branch
      %549 = sbr.rel (0) target = $region241
    $region240: #{tpu_custom_call.1} parent=1 // pred_region
      %550 = dma.done [#allocation39], 8192
    $region241: #{tpu_custom_call.1} parent=1 // pred_fallthru
      _
    // Predicated region
    $region242: #{tpu_custom_call.1} parent=1 // pred_check
      _
    $region243: #{tpu_custom_call.1} parent=1 // pred_check_branch
      %552 = sbr.rel (0) target = $region245
    $region244: #{tpu_custom_call.1} parent=1 // pred_region
      %553 = dma.done [#allocation39], 32
    $region245: #{tpu_custom_call.1} parent=1 // pred_fallthru
      _
    // Predicated region
    $region246: #{tpu_custom_call.1} parent=1 // pred_check
      _
    $region247: #{tpu_custom_call.1} parent=1 // pred_check_branch
      %555 = sbr.rel (0) target = $region249
    $region248: #{tpu_custom_call.1} parent=1 // pred_region
      %556 = dma.done [#allocation42], 8192
    $region249: #{tpu_custom_call.1} parent=1 // pred_fallthru
      _
    // Predicated region
    $region250: #{tpu_custom_call.1} parent=1 // pred_check
      _
    $region251: #{tpu_custom_call.1} parent=1 // pred_check_branch
      %558 = sbr.rel (0) target = $region253
    $region252: #{tpu_custom_call.1} parent=1 // pred_region
      %559 = dma.done [#allocation42], 64
    $region253: #{tpu_custom_call.1} parent=1 // pred_fallthru
      _
    // Predicated region
    $region254: #{tpu_custom_call.1} parent=1 // pred_check
      _
    $region255: #{tpu_custom_call.1} parent=1 // pred_check_branch
      %561 = sbr.rel (0) target = $region257
    $region256: #{tpu_custom_call.1} parent=1 // pred_region
      %562 = dma.done [#allocation45], 64
    $region257: #{tpu_custom_call.1} parent=1 // pred_fallthru
      _
    // Predicated region
    $region258: #{tpu_custom_call.1} parent=1 // pred_check
      _
    $region259: #{tpu_custom_call.1} parent=1 // pred_check_branch
      %564 = sbr.rel (0) target = $region261
    $region260: #{tpu_custom_call.1} parent=1 // pred_region
      %565 = dma.done [#allocation45], 64
    $region261: #{tpu_custom_call.1} parent=1 // pred_fallthru
      _
    // Predicated region
    $region262: #{tpu_custom_call.1} parent=1 // pred_check
      _
    $region263: #{tpu_custom_call.1} parent=1 // pred_check_branch
      %567 = sbr.rel (0) target = $region265
    $region264: #{tpu_custom_call.1} parent=1 // pred_region
      %568 = dma.done [#allocation48], 16384
    $region265: #{tpu_custom_call.1} parent=1 // pred_fallthru
      _
    // Predicated region
    $region266: #{tpu_custom_call.1} parent=1 // pred_check
      _
    $region267: #{tpu_custom_call.1} parent=1 // pred_check_branch
      %570 = sbr.rel (0) target = $region269
    $region268: #{tpu_custom_call.1} parent=1 // pred_region
      %571 = dma.done [#allocation48], 64
    $region269: #{tpu_custom_call.1} parent=1 // pred_fallthru
      _
    // Predicated region
    $region270: #{tpu_custom_call.1} parent=1 // pred_check
      _
    $region271: #{tpu_custom_call.1} parent=1 // pred_check_branch
      %573 = sbr.rel (0) target = $region273
    $region272: #{tpu_custom_call.1} parent=1 // pred_region
      %574 = dma.done [#allocation51], 8192
    $region273: #{tpu_custom_call.1} parent=1 // pred_fallthru
      _
    // Predicated region
    $region274: #{tpu_custom_call.1} parent=1 // pred_check
      _
    $region275: #{tpu_custom_call.1} parent=1 // pred_check_branch
      %576 = sbr.rel (0) target = $region277
    $region276: #{tpu_custom_call.1} parent=1 // pred_region
      %577 = dma.done [#allocation51], 32
    $region277: #{tpu_custom_call.1} parent=1 // pred_fallthru
      _
    // Predicated region
    $region278: #{tpu_custom_call.1} parent=1 // pred_check
      _
    $region279: #{tpu_custom_call.1} parent=1 // pred_check_branch
      %579 = sbr.rel (0) target = $region281
    $region280: #{tpu_custom_call.1} parent=1 // pred_region
      %580 = dma.done [#allocation54], 2048
    $region281: #{tpu_custom_call.1} parent=1 // pred_fallthru
      _
    // Predicated region
    $region282: #{tpu_custom_call.1} parent=1 // pred_check
      _
    $region283: #{tpu_custom_call.1} parent=1 // pred_check_branch
      %582 = sbr.rel (0) target = $region285
    $region284: #{tpu_custom_call.1} parent=1 // pred_region
      %583 = dma.done [#allocation54], 16
    $region285: #{tpu_custom_call.1} parent=1 // pred_fallthru
      _
    %v585 = vld [vmem:[#allocation2] sm:$0xff]
    %v586 = vld [vmem:[#allocation2 + $0x8] sm:$0xff]
    %v587 = vld [vmem:[#allocation2 + $0x10] sm:$0xff]
    %v588 = vld [vmem:[#allocation10] sm:$0xff]
    %v589 = vld [vmem:[#allocation10 + $0x8] sm:$0xff]
    %v590 = vld [vmem:[#allocation10 + $0x10] sm:$0xff]
    %v591 = vld [vmem:[#allocation10 + $0x18] sm:$0xff]
    %v592 = vld [vmem:[#allocation10 + $0x20] sm:$0xff]
    %v593 = vld [vmem:[#allocation10 + $0x28] sm:$0xff]
    %v594 = vld [vmem:[#allocation10 + $0x30] sm:$0xff]
    %v595 = vld [vmem:[#allocation10 + $0x38] sm:$0xff]
    %v596 = vld [vmem:[#allocation10 + $0x40] sm:$0xff]
    %v597 = vld [vmem:[#allocation10 + $0x48] sm:$0xff]
    %v598 = vld [vmem:[#allocation10 + $0x50] sm:$0xff]
    %v599 = vld [vmem:[#allocation10 + $0x58] sm:$0xff]
    %v600 = vld [vmem:[#allocation10 + $0x60] sm:$0xff]
    %v601 = vld [vmem:[#allocation10 + $0x68] sm:$0xff]
    %v602 = vld [vmem:[#allocation10 + $0x70] sm:$0xff]
    %v603 = vld [vmem:[#allocation10 + $0x78] sm:$0xff]
    %v604 = vld [vmem:[#allocation10 + $0x80] sm:$0xff]
    %v605 = vld [vmem:[#allocation10 + $0x88] sm:$0xff]
    %v606 = vld [vmem:[#allocation10 + $0x90] sm:$0xff]
    %v607 = vld [vmem:[#allocation10 + $0x98] sm:$0xff]
    %v608 = vld [vmem:[#allocation10 + $0xa0] sm:$0xff]
    %v609 = vld [vmem:[#allocation10 + $0xa8] sm:$0xff]
    %v610 = vld [vmem:[#allocation10 + $0xb0] sm:$0xff]
    %v611 = vld [vmem:[#allocation10 + $0xb8] sm:$0xff]
    %v612 = vld [vmem:[#allocation10 + $0xc0] sm:$0xff]
    %v613 = vld [vmem:[#allocation10 + $0xc8] sm:$0xff]
    %v614 = vld [vmem:[#allocation10 + $0xd0] sm:$0xff]
    %v615 = vld [vmem:[#allocation10 + $0xd8] sm:$0xff]
    %v616 = vld [vmem:[#allocation10 + $0xe0] sm:$0xff]
    %v617 = vld [vmem:[#allocation10 + $0xe8] sm:$0xff]
    %v618 = vld [vmem:[#allocation10 + $0xf0] sm:$0xff]
    %v619 = vld [vmem:[#allocation10 + $0xf8] sm:$0xff]
    %v620 = vld [vmem:[#allocation10 + $0x100] sm:$0xff]
    %v621 = vld [vmem:[#allocation10 + $0x108] sm:$0xff]
    %v622 = vld [vmem:[#allocation10 + $0x110] sm:$0xff]
    %v623 = vld [vmem:[#allocation10 + $0x118] sm:$0xff]
    %v624 = vld [vmem:[#allocation10 + $0x120] sm:$0xff]
    %v625 = vld [vmem:[#allocation10 + $0x128] sm:$0xff]
    %v626 = vld [vmem:[#allocation10 + $0x130] sm:$0xff]
    %v627 = vld [vmem:[#allocation10 + $0x138] sm:$0xff]
    %v628 = vld [vmem:[#allocation10 + $0x140] sm:$0xff]
    %v629 = vld [vmem:[#allocation10 + $0x148] sm:$0xff]
    %v630 = vld [vmem:[#allocation10 + $0x150] sm:$0xff]
    %v631 = vld [vmem:[#allocation10 + $0x158] sm:$0xff]
    %v632 = vld [vmem:[#allocation10 + $0x160] sm:$0xff]
    %v633 = vld [vmem:[#allocation10 + $0x168] sm:$0xff]
    %v634 = vld [vmem:[#allocation10 + $0x170] sm:$0xff]
    %v635 = vld [vmem:[#allocation10 + $0x178] sm:$0xff]
    %v636 = vld [vmem:[#allocation10 + $0x180] sm:$0xff]
    %v637 = vld [vmem:[#allocation10 + $0x188] sm:$0xff]
    %v638 = vld [vmem:[#allocation10 + $0x190] sm:$0xff]
    %v639 = vld [vmem:[#allocation10 + $0x198] sm:$0xff]
    %v640 = vld [vmem:[#allocation10 + $0x1a0] sm:$0xff]
    %v641 = vld [vmem:[#allocation10 + $0x1a8] sm:$0xff]
    %v642 = vld [vmem:[#allocation10 + $0x1b0] sm:$0xff]
    %v643 = vld [vmem:[#allocation10 + $0x1b8] sm:$0xff]
    %v644 = vld [vmem:[#allocation10 + $0x1c0] sm:$0xff]
    %v645 = vld [vmem:[#allocation10 + $0x1c8] sm:$0xff]
    %v646 = vld [vmem:[#allocation10 + $0x1d0] sm:$0xff]
    %v647 = vld [vmem:[#allocation10 + $0x1d8] sm:$0xff]
    %v648 = vld [vmem:[#allocation10 + $0x1e0] sm:$0xff]
    %v649 = vld [vmem:[#allocation10 + $0x1e8] sm:$0xff]
    %v650 = vld [vmem:[#allocation10 + $0x1f0] sm:$0xff]
    %v651 = vld [vmem:[#allocation10 + $0x1f8] sm:$0xff]
    %v652 = vld [vmem:[#allocation10 + $0x200] sm:$0xff]
    %v653 = vld [vmem:[#allocation10 + $0x208] sm:$0xff]
    %v654 = vld [vmem:[#allocation10 + $0x210] sm:$0xff]
    %v655 = vld [vmem:[#allocation10 + $0x218] sm:$0xff]
    %v656 = vld [vmem:[#allocation10 + $0x220] sm:$0xff]
    %v657 = vld [vmem:[#allocation10 + $0x228] sm:$0xff]
    %v658 = vld [vmem:[#allocation10 + $0x230] sm:$0xff]
    %v659 = vld [vmem:[#allocation10 + $0x238] sm:$0xff]
    %v660 = vld [vmem:[#allocation10 + $0x240] sm:$0xff]
    %v661 = vld [vmem:[#allocation10 + $0x248] sm:$0xff]
    %v662 = vld [vmem:[#allocation10 + $0x250] sm:$0x33]
    %v663 = vld [vmem:[#allocation10 + $0x258] sm:$0x33]
    %v664 = vpack.c.bf16 %v585, %v585
    %v665 = vpack.c.bf16 %v586, %v586
    %v666 = vpack.c.bf16 %v587, %v587
    %v667 = vld [vmem:[#allocation11] sm:$0xf]
    %v669 = vlaneseq
    %v670 = vshrl.u32 %v669, 7
    %v671 = vsub.s32 0, %v670
    %v672 = vrot.slane %v667, %v671
    %v673 = vlaneseq
    %v674 = vshrl.u32 %v673, 7
    %v675 = vsub.s32 1, %v674
    %v676 = vrot.slane %v667, %v675
    %v677 = vlaneseq
    %v678 = vshrl.u32 %v677, 7
    %v679 = vsub.s32 2, %v678
    %v680 = vrot.slane %v667, %v679
    %v681 = vlaneseq
    %v682 = vshrl.u32 %v681, 7
    %v683 = vsub.s32 3, %v682
    %v684 = vrot.slane %v667, %v683
    %v765 = vunpack.c.l.b16 %v588
    %v766 = vunpack.c.h.b16 %v588
    %v767 = vunpack.c.l.b16 %v589
    %v768 = vunpack.c.h.b16 %v589
    %v769 = vunpack.c.l.b16 %v590
    %v770 = vunpack.c.h.b16 %v590
    %v771 = vunpack.c.l.b16 %v591
    %v772 = vunpack.c.h.b16 %v591
    %v773 = vunpack.c.l.b16 %v592
    %v774 = vunpack.c.h.b16 %v592
    %v775 = vunpack.c.l.b16 %v593
    %v776 = vunpack.c.h.b16 %v593
    %v777 = vunpack.c.l.b16 %v594
    %v778 = vunpack.c.h.b16 %v594
    %v779 = vunpack.c.l.b16 %v595
    %v780 = vunpack.c.h.b16 %v595
    %v781 = vunpack.c.l.b16 %v596
    %v782 = vunpack.c.h.b16 %v596
    %v783 = vunpack.c.l.b16 %v597
    %v784 = vunpack.c.h.b16 %v597
    %v785 = vunpack.c.l.b16 %v598
    %v786 = vunpack.c.h.b16 %v598
    %v787 = vunpack.c.l.b16 %v599
    %v788 = vunpack.c.h.b16 %v599
    %v789 = vunpack.c.l.b16 %v600
    %v790 = vunpack.c.h.b16 %v600
    %v791 = vunpack.c.l.b16 %v601
    %v792 = vunpack.c.h.b16 %v601
    %v793 = vunpack.c.l.b16 %v602
    %v794 = vunpack.c.h.b16 %v602
    %v795 = vunpack.c.l.b16 %v603
    %v796 = vunpack.c.h.b16 %v603
    %v797 = vunpack.c.l.b16 %v604
    %v798 = vunpack.c.h.b16 %v604
    %v799 = vunpack.c.l.b16 %v605
    %v800 = vunpack.c.h.b16 %v605
    %v801 = vunpack.c.l.b16 %v606
    %v802 = vunpack.c.h.b16 %v606
    %v803 = vunpack.c.l.b16 %v607
    %v804 = vunpack.c.h.b16 %v607
    %v805 = vunpack.c.l.b16 %v608
    %v806 = vunpack.c.h.b16 %v608
    %v807 = vunpack.c.l.b16 %v609
    %v808 = vunpack.c.h.b16 %v609
    %v809 = vunpack.c.l.b16 %v610
    %v810 = vunpack.c.h.b16 %v610
    %v811 = vunpack.c.l.b16 %v611
    %v812 = vunpack.c.h.b16 %v611
    %v813 = vunpack.c.l.b16 %v612
    %v814 = vunpack.c.h.b16 %v612
    %v815 = vunpack.c.l.b16 %v613
    %v816 = vunpack.c.h.b16 %v613
    %v817 = vunpack.c.l.b16 %v614
    %v818 = vunpack.c.h.b16 %v614
    %v819 = vunpack.c.l.b16 %v615
    %v820 = vunpack.c.h.b16 %v615
    %v821 = vunpack.c.l.b16 %v616
    %v822 = vunpack.c.h.b16 %v616
    %v823 = vunpack.c.l.b16 %v617
    %v824 = vunpack.c.h.b16 %v617
    %v825 = vunpack.c.l.b16 %v618
    %v826 = vunpack.c.h.b16 %v618
    %v827 = vunpack.c.l.b16 %v619
    %v828 = vunpack.c.h.b16 %v619
    %v829 = vunpack.c.l.b16 %v620
    %v830 = vunpack.c.h.b16 %v620
    %v831 = vunpack.c.l.b16 %v621
    %v832 = vunpack.c.h.b16 %v621
    %v833 = vunpack.c.l.b16 %v622
    %v834 = vunpack.c.h.b16 %v622
    %v835 = vunpack.c.l.b16 %v623
    %v836 = vunpack.c.h.b16 %v623
    %v837 = vunpack.c.l.b16 %v624
    %v838 = vunpack.c.h.b16 %v624
    %v839 = vunpack.c.l.b16 %v625
    %v840 = vunpack.c.h.b16 %v625
    %v841 = vunpack.c.l.b16 %v626
    %v842 = vunpack.c.h.b16 %v626
    %v843 = vunpack.c.l.b16 %v627
    %v844 = vunpack.c.h.b16 %v627
    %v845 = vunpack.c.l.b16 %v628
    %v846 = vunpack.c.h.b16 %v628
    %v847 = vunpack.c.l.b16 %v629
    %v848 = vunpack.c.h.b16 %v629
    %v849 = vunpack.c.l.b16 %v630
    %v850 = vunpack.c.h.b16 %v630
    %v851 = vunpack.c.l.b16 %v631
    %v852 = vunpack.c.h.b16 %v631
    %v853 = vunpack.c.l.b16 %v632
    %v854 = vunpack.c.h.b16 %v632
    %v855 = vunpack.c.l.b16 %v633
    %v856 = vunpack.c.h.b16 %v633
    %v857 = vunpack.c.l.b16 %v634
    %v858 = vunpack.c.h.b16 %v634
    %v859 = vunpack.c.l.b16 %v635
    %v860 = vunpack.c.h.b16 %v635
    %v861 = vunpack.c.l.b16 %v636
    %v862 = vunpack.c.h.b16 %v636
    %v863 = vunpack.c.l.b16 %v637
    %v864 = vunpack.c.h.b16 %v637
    %v865 = vunpack.c.l.b16 %v638
    %v866 = vunpack.c.h.b16 %v638
    %v867 = vunpack.c.l.b16 %v639
    %v868 = vunpack.c.h.b16 %v639
    %v869 = vunpack.c.l.b16 %v640
    %v870 = vunpack.c.h.b16 %v640
    %v871 = vunpack.c.l.b16 %v641
    %v872 = vunpack.c.h.b16 %v641
    %v873 = vunpack.c.l.b16 %v642
    %v874 = vunpack.c.h.b16 %v642
    %v875 = vunpack.c.l.b16 %v643
    %v876 = vunpack.c.h.b16 %v643
    %v877 = vunpack.c.l.b16 %v644
    %v878 = vunpack.c.h.b16 %v644
    %v879 = vunpack.c.l.b16 %v645
    %v880 = vunpack.c.h.b16 %v645
    %v881 = vunpack.c.l.b16 %v646
    %v882 = vunpack.c.h.b16 %v646
    %v883 = vunpack.c.l.b16 %v647
    %v884 = vunpack.c.h.b16 %v647
    %v885 = vunpack.c.l.b16 %v648
    %v886 = vunpack.c.h.b16 %v648
    %v887 = vunpack.c.l.b16 %v649
    %v888 = vunpack.c.h.b16 %v649
    %v889 = vunpack.c.l.b16 %v650
    %v890 = vunpack.c.h.b16 %v650
    %v891 = vunpack.c.l.b16 %v651
    %v892 = vunpack.c.h.b16 %v651
    %v893 = vunpack.c.l.b16 %v652
    %v894 = vunpack.c.h.b16 %v652
    %v895 = vunpack.c.l.b16 %v653
    %v896 = vunpack.c.h.b16 %v653
    %v897 = vunpack.c.l.b16 %v654
    %v898 = vunpack.c.h.b16 %v654
    %v899 = vunpack.c.l.b16 %v655
    %v900 = vunpack.c.h.b16 %v655
    %v901 = vunpack.c.l.b16 %v656
    %v902 = vunpack.c.h.b16 %v656
    %v903 = vunpack.c.l.b16 %v657
    %v904 = vunpack.c.h.b16 %v657
    %v905 = vunpack.c.l.b16 %v658
    %v906 = vunpack.c.h.b16 %v658
    %v907 = vunpack.c.l.b16 %v659
    %v908 = vunpack.c.h.b16 %v659
    %v909 = vunpack.c.l.b16 %v660
    %v910 = vunpack.c.h.b16 %v660
    %v911 = vunpack.c.l.b16 %v661
    %v912 = vunpack.c.h.b16 %v661
    %v913 = vunpack.c.l.b16 %v662
    %v914 = vunpack.c.h.b16 %v662
    %v915 = vunpack.c.l.b16 %v663
    %v916 = vunpack.c.h.b16 %v663
    %v917 = vpack.c.b16 %v769, %v765
    %v918 = vpack.c.b16 %v770, %v766
    %v919 = vpack.c.b16 %v771, %v767
    %v920 = vpack.c.b16 %v772, %v768
    %v921 = vpack.c.b16 %v777, %v773
    %v922 = vpack.c.b16 %v778, %v774
    %v923 = vpack.c.b16 %v779, %v775
    %v924 = vpack.c.b16 %v780, %v776
    %v925 = vpack.c.b16 %v785, %v781
    %v926 = vpack.c.b16 %v786, %v782
    %v927 = vpack.c.b16 %v787, %v783
    %v928 = vpack.c.b16 %v788, %v784
    %v929 = vpack.c.b16 %v793, %v789
    %v930 = vpack.c.b16 %v794, %v790
    %v931 = vpack.c.b16 %v795, %v791
    %v932 = vpack.c.b16 %v796, %v792
    %v933 = vpack.c.b16 %v801, %v797
    %v934 = vpack.c.b16 %v802, %v798
    %v935 = vpack.c.b16 %v803, %v799
    %v936 = vpack.c.b16 %v804, %v800
    %v937 = vpack.c.b16 %v809, %v805
    %v938 = vpack.c.b16 %v810, %v806
    %v939 = vpack.c.b16 %v811, %v807
    %v940 = vpack.c.b16 %v812, %v808
    %v941 = vpack.c.b16 %v817, %v813
    %v942 = vpack.c.b16 %v818, %v814
    %v943 = vpack.c.b16 %v819, %v815
    %v944 = vpack.c.b16 %v820, %v816
    %v945 = vpack.c.b16 %v825, %v821
    %v946 = vpack.c.b16 %v826, %v822
    %v947 = vpack.c.b16 %v827, %v823
    %v948 = vpack.c.b16 %v828, %v824
    %v949 = vpack.c.b16 %v833, %v829
    %v950 = vpack.c.b16 %v834, %v830
    %v951 = vpack.c.b16 %v835, %v831
    %v952 = vpack.c.b16 %v836, %v832
    %v953 = vpack.c.b16 %v841, %v837
    %v954 = vpack.c.b16 %v842, %v838
    %v955 = vpack.c.b16 %v843, %v839
    %v956 = vpack.c.b16 %v844, %v840
    %v957 = vpack.c.b16 %v849, %v845
    %v958 = vpack.c.b16 %v850, %v846
    %v959 = vpack.c.b16 %v851, %v847
    %v960 = vpack.c.b16 %v852, %v848
    %v961 = vpack.c.b16 %v857, %v853
    %v962 = vpack.c.b16 %v858, %v854
    %v963 = vpack.c.b16 %v859, %v855
    %v964 = vpack.c.b16 %v860, %v856
    %v965 = vpack.c.b16 %v865, %v861
    %v966 = vpack.c.b16 %v866, %v862
    %v967 = vpack.c.b16 %v867, %v863
    %v968 = vpack.c.b16 %v868, %v864
    %v969 = vpack.c.b16 %v873, %v869
    %v970 = vpack.c.b16 %v874, %v870
    %v971 = vpack.c.b16 %v875, %v871
    %v972 = vpack.c.b16 %v876, %v872
    %v973 = vpack.c.b16 %v881, %v877
    %v974 = vpack.c.b16 %v882, %v878
    %v975 = vpack.c.b16 %v883, %v879
    %v976 = vpack.c.b16 %v884, %v880
    %v977 = vpack.c.b16 %v889, %v885
    %v978 = vpack.c.b16 %v890, %v886
    %v979 = vpack.c.b16 %v891, %v887
    %v980 = vpack.c.b16 %v892, %v888
    %v981 = vpack.c.b16 %v897, %v893
    %v982 = vpack.c.b16 %v898, %v894
    %v983 = vpack.c.b16 %v899, %v895
    %v984 = vpack.c.b16 %v900, %v896
    %v985 = vpack.c.b16 %v905, %v901
    %v986 = vpack.c.b16 %v906, %v902
    %v987 = vpack.c.b16 %v907, %v903
    %v988 = vpack.c.b16 %v908, %v904
    %v989 = vpack.c.b16 %v913, %v909
    %v990 = vpack.c.b16 %v914, %v910
    %v991 = vpack.c.b16 %v915, %v911
    %v992 = vpack.c.b16 %v916, %v912
    %vm1065 = vcmask 359424
    %v1067 = vsel %vm1065, %v666, 0
    %vm1069 = vcmask 1045504
    %v1071 = vsel %vm1069, %v989, 0
    %v1074 = vsel %vm1069, %v990, 0
    %v1077 = vsel %vm1069, %v991, 0
    %v1080 = vsel %vm1069, %v992, 0
    %1082 = vmatprep.subr.bf16.mxu0 %v946
    %1083 = vmatpush1.bf16.msra.mxu0 %v945
    %1084 = vmatprep.subr.bf16.mxu0 %v942
    %1085 = vmatpush1.bf16.msra.mxu0 %v941
    %1086 = vmatprep.subr.bf16.mxu0 %v938
    %1087 = vmatpush1.bf16.msra.mxu0 %v937
    %1088 = vmatprep.subr.bf16.mxu0 %v934
    %1089 = vmatpush1.bf16.msra.mxu0 %v933
    %1090 = vmatprep.subr.bf16.mxu0 %v930
    %1091 = vmatpush1.bf16.msra.mxu0 %v929
    %1092 = vmatprep.subr.bf16.mxu0 %v926
    %1093 = vmatpush1.bf16.msra.mxu0 %v925
    %1094 = vmatprep.subr.bf16.mxu0 %v922
    %1095 = vmatpush1.bf16.msra.mxu0 %v921
    %1096 = vmatprep.subr.bf16.mxu0 %v918
    %1097 = vmatpush1.bf16.msra.mxu0 %v917
    %1098 = vmatprep.subr.bf16.mxu0 %v978
    %1099 = vmatpush2.bf16.msra.mxu0 %v977
    %1100 = vmatprep.subr.bf16.mxu0 %v974
    %1101 = vmatpush2.bf16.msra.mxu0 %v973
    %1102 = vmatprep.subr.bf16.mxu0 %v970
    %1103 = vmatpush2.bf16.msra.mxu0 %v969
    %1104 = vmatprep.subr.bf16.mxu0 %v966
    %1105 = vmatpush2.bf16.msra.mxu0 %v965
    %1106 = vmatprep.subr.bf16.mxu0 %v962
    %1107 = vmatpush2.bf16.msra.mxu0 %v961
    %1108 = vmatprep.subr.bf16.mxu0 %v958
    %1109 = vmatpush2.bf16.msra.mxu0 %v957
    %1110 = vmatprep.subr.bf16.mxu0 %v954
    %1111 = vmatpush2.bf16.msra.mxu0 %v953
    %1112 = vmatprep.subr.bf16.mxu0 %v950
    %1113 = vmatpush2.bf16.msra.mxu0 %v949
    %1114 = vmatprep.mubr.bf16.mxu0 %v665
    %1115 = vmatmul.mubr.bf16.gmra.mxu0 %v664
    %v1116 = vpop.f32.mrf.mxu0
    %v1117 = vadd.f32 %v672, %v1116
    %v1118 = vpop.f32.mrf.mxu0
    %v1119 = vadd.f32 %v676, %v1118
    %v1120 = vpop.f32.mrf.mxu0
    %v1121 = vpop.f32.mrf.mxu0
    %1122 = vdwg.mxu0
    %1123 = vmatprep.subr.bf16.mxu0 0
    %1124 = vmatpush1.bf16.msra.mxu0 0
    %1125 = vmatprep.subr.bf16.mxu0 0
    %1126 = vmatpush1.bf16.msra.mxu0 0
    %1127 = vmatprep.subr.bf16.mxu0 0
    %1128 = vmatpush1.bf16.msra.mxu0 0
    %1129 = vmatprep.subr.bf16.mxu0 0
    %1130 = vmatpush1.bf16.msra.mxu0 0
    %1131 = vmatprep.subr.bf16.mxu0 0
    %1132 = vmatpush1.bf16.msra.mxu0 0
    %1133 = vmatprep.subr.bf16.mxu0 %v1074
    %1134 = vmatpush1.bf16.msra.mxu0 %v1071
    %1135 = vmatprep.subr.bf16.mxu0 %v986
    %1136 = vmatpush1.bf16.msra.mxu0 %v985
    %1137 = vmatprep.subr.bf16.mxu0 %v982
    %1138 = vmatpush1.bf16.msra.mxu0 %v981
    %1139 = vmatprep.subr.bf16.mxu0 0
    %1140 = vmatpush2.bf16.msra.mxu0 0
    %1141 = vmatprep.subr.bf16.mxu0 0
    %1142 = vmatpush2.bf16.msra.mxu0 0
    %1143 = vmatprep.subr.bf16.mxu0 0
    %1144 = vmatpush2.bf16.msra.mxu0 0
    %1145 = vmatprep.subr.bf16.mxu0 0
    %1146 = vmatpush2.bf16.msra.mxu0 0
    %1147 = vmatprep.subr.bf16.mxu0 0
    %1148 = vmatpush2.bf16.msra.mxu0 0
    %1149 = vmatprep.subr.bf16.mxu0 0
    %1150 = vmatpush2.bf16.msra.mxu0 0
    %1151 = vmatprep.subr.bf16.mxu0 0
    %1152 = vmatpush2.bf16.msra.mxu0 0
    %1153 = vmatprep.subr.bf16.mxu0 0
    %1154 = vmatpush2.bf16.msra.mxu0 0
    %1155 = vmatprep.mubr.bf16.mxu0 0
    %1156 = vmatmul.mubr.bf16.gmra.mxu0 %v1067
    %v1157 = vpop.f32.mrf.mxu0
    %v1158 = vadd.f32 %v1117, %v1157
    %v1159 = vpop.f32.mrf.mxu0
    %v1160 = vadd.f32 %v1119, %v1159
    %v1161 = vpop.f32.mrf.mxu0
    %v1162 = vpop.f32.mrf.mxu0
    %1163 = vdwg.mxu0
    %1164 = vmatprep.subr.bf16.mxu0 %v948
    %1165 = vmatpush1.bf16.msra.mxu0 %v947
    %1166 = vmatprep.subr.bf16.mxu0 %v944
    %1167 = vmatpush1.bf16.msra.mxu0 %v943
    %1168 = vmatprep.subr.bf16.mxu0 %v940
    %1169 = vmatpush1.bf16.msra.mxu0 %v939
    %1170 = vmatprep.subr.bf16.mxu0 %v936
    %1171 = vmatpush1.bf16.msra.mxu0 %v935
    %1172 = vmatprep.subr.bf16.mxu0 %v932
    %1173 = vmatpush1.bf16.msra.mxu0 %v931
    %1174 = vmatprep.subr.bf16.mxu0 %v928
    %1175 = vmatpush1.bf16.msra.mxu0 %v927
    %1176 = vmatprep.subr.bf16.mxu0 %v924
    %1177 = vmatpush1.bf16.msra.mxu0 %v923
    %1178 = vmatprep.subr.bf16.mxu0 %v920
    %1179 = vmatpush1.bf16.msra.mxu0 %v919
    %1180 = vmatprep.subr.bf16.mxu0 %v980
    %1181 = vmatpush2.bf16.msra.mxu0 %v979
    %1182 = vmatprep.subr.bf16.mxu0 %v976
    %1183 = vmatpush2.bf16.msra.mxu0 %v975
    %1184 = vmatprep.subr.bf16.mxu0 %v972
    %1185 = vmatpush2.bf16.msra.mxu0 %v971
    %1186 = vmatprep.subr.bf16.mxu0 %v968
    %1187 = vmatpush2.bf16.msra.mxu0 %v967
    %1188 = vmatprep.subr.bf16.mxu0 %v964
    %1189 = vmatpush2.bf16.msra.mxu0 %v963
    %1190 = vmatprep.subr.bf16.mxu0 %v960
    %1191 = vmatpush2.bf16.msra.mxu0 %v959
    %1192 = vmatprep.subr.bf16.mxu0 %v956
    %1193 = vmatpush2.bf16.msra.mxu0 %v955
    %1194 = vmatprep.subr.bf16.mxu0 %v952
    %1195 = vmatpush2.bf16.msra.mxu0 %v951
    %1196 = vmatprep.mubr.bf16.mxu0 %v665
    %1197 = vmatmul.mubr.bf16.gmra.mxu0 %v664
    %v1198 = vpop.f32.mrf.mxu0
    %v1199 = vadd.f32 %v680, %v1198
    %v1200 = vpop.f32.mrf.mxu0
    %v1201 = vadd.f32 %v684, %v1200
    %v1202 = vpop.f32.mrf.mxu0
    %v1203 = vpop.f32.mrf.mxu0
    %1204 = vdwg.mxu0
    %1205 = vmatprep.subr.bf16.mxu0 0
    %1206 = vmatpush1.bf16.msra.mxu0 0
    %1207 = vmatprep.subr.bf16.mxu0 0
    %1208 = vmatpush1.bf16.msra.mxu0 0
    %1209 = vmatprep.subr.bf16.mxu0 0
    %1210 = vmatpush1.bf16.msra.mxu0 0
    %1211 = vmatprep.subr.bf16.mxu0 0
    %1212 = vmatpush1.bf16.msra.mxu0 0
    %1213 = vmatprep.subr.bf16.mxu0 0
    %1214 = vmatpush1.bf16.msra.mxu0 0
    %1215 = vmatprep.subr.bf16.mxu0 %v1080
    %1216 = vmatpush1.bf16.msra.mxu0 %v1077
    %1217 = vmatprep.subr.bf16.mxu0 %v988
    %1218 = vmatpush1.bf16.msra.mxu0 %v987
    %1219 = vmatprep.subr.bf16.mxu0 %v984
    %1220 = vmatpush1.bf16.msra.mxu0 %v983
    %1221 = vmatprep.subr.bf16.mxu0 0
    %1222 = vmatpush2.bf16.msra.mxu0 0
    %1223 = vmatprep.subr.bf16.mxu0 0
    %1224 = vmatpush2.bf16.msra.mxu0 0
    %1225 = vmatprep.subr.bf16.mxu0 0
    %1226 = vmatpush2.bf16.msra.mxu0 0
    %1227 = vmatprep.subr.bf16.mxu0 0
    %1228 = vmatpush2.bf16.msra.mxu0 0
    %1229 = vmatprep.subr.bf16.mxu0 0
    %1230 = vmatpush2.bf16.msra.mxu0 0
    %1231 = vmatprep.subr.bf16.mxu0 0
    %1232 = vmatpush2.bf16.msra.mxu0 0
    %1233 = vmatprep.subr.bf16.mxu0 0
    %1234 = vmatpush2.bf16.msra.mxu0 0
    %1235 = vmatprep.subr.bf16.mxu0 0
    %1236 = vmatpush2.bf16.msra.mxu0 0
    %1237 = vmatprep.mubr.bf16.mxu0 0
    %1238 = vmatmul.mubr.bf16.gmra.mxu0 %v1067
    %v1239 = vpop.f32.mrf.mxu0
    %v1240 = vadd.f32 %v1199, %v1239
    %v1241 = vpop.f32.mrf.mxu0
    %v1242 = vadd.f32 %v1201, %v1241
    %v1243 = vpop.f32.mrf.mxu0
    %v1244 = vpop.f32.mrf.mxu0
    %1245 = vdwg.mxu0
    %v1246 = vmax.f32 %v1158, 0.0
    %v1247 = vmax.f32 %v1160, 0.0
    %v1248 = vmax.f32 %v1240, 0.0
    %v1249 = vmax.f32 %v1242, 0.0
    %v1250 = vld [vmem:[#allocation5] sm:$0xff]
    %v1251 = vld [vmem:[#allocation5 + $0x8] sm:$0xff]
    %v1252 = vld [vmem:[#allocation5 + $0x10] sm:$0xff]
    %v1253 = vld [vmem:[#allocation5 + $0x18] sm:$0xff]
    %v1254 = vld [vmem:[#allocation13] sm:$0xff]
    %v1255 = vld [vmem:[#allocation13 + $0x8] sm:$0xff]
    %v1256 = vld [vmem:[#allocation13 + $0x10] sm:$0xff]
    %v1257 = vld [vmem:[#allocation13 + $0x18] sm:$0xff]
    %v1258 = vld [vmem:[#allocation13 + $0x20] sm:$0xff]
    %v1259 = vld [vmem:[#allocation13 + $0x28] sm:$0xff]
    %v1260 = vld [vmem:[#allocation13 + $0x30] sm:$0xff]
    %v1261 = vld [vmem:[#allocation13 + $0x38] sm:$0xff]
    %v1262 = vld [vmem:[#allocation13 + $0x40] sm:$0xff]
    %v1263 = vld [vmem:[#allocation13 + $0x48] sm:$0xff]
    %v1264 = vld [vmem:[#allocation13 + $0x50] sm:$0xff]
    %v1265 = vld [vmem:[#allocation13 + $0x58] sm:$0xff]
    %v1266 = vld [vmem:[#allocation13 + $0x60] sm:$0xff]
    %v1267 = vld [vmem:[#allocation13 + $0x68] sm:$0xff]
    %v1268 = vld [vmem:[#allocation13 + $0x70] sm:$0xff]
    %v1269 = vld [vmem:[#allocation13 + $0x78] sm:$0xff]
    %v1270 = vld [vmem:[#allocation13 + $0x80] sm:$0xff]
    %v1271 = vld [vmem:[#allocation13 + $0x88] sm:$0xff]
    %v1272 = vld [vmem:[#allocation13 + $0x90] sm:$0xff]
    %v1273 = vld [vmem:[#allocation13 + $0x98] sm:$0xff]
    %v1274 = vld [vmem:[#allocation13 + $0xa0] sm:$0xff]
    %v1275 = vld [vmem:[#allocation13 + $0xa8] sm:$0xff]
    %v1276 = vld [vmem:[#allocation13 + $0xb0] sm:$0xff]
    %v1277 = vld [vmem:[#allocation13 + $0xb8] sm:$0xff]
    %v1278 = vld [vmem:[#allocation13 + $0xc0] sm:$0xff]
    %v1279 = vld [vmem:[#allocation13 + $0xc8] sm:$0xff]
    %v1280 = vld [vmem:[#allocation13 + $0xd0] sm:$0xff]
    %v1281 = vld [vmem:[#allocation13 + $0xd8] sm:$0xff]
    %v1282 = vld [vmem:[#allocation13 + $0xe0] sm:$0xff]
    %v1283 = vld [vmem:[#allocation13 + $0xe8] sm:$0xff]
    %v1284 = vld [vmem:[#allocation13 + $0xf0] sm:$0xff]
    %v1285 = vld [vmem:[#allocation13 + $0xf8] sm:$0xff]
    %v1286 = vld [vmem:[#allocation13 + $0x100] sm:$0xff]
    %v1287 = vld [vmem:[#allocation13 + $0x108] sm:$0xff]
    %v1288 = vld [vmem:[#allocation13 + $0x110] sm:$0xff]
    %v1289 = vld [vmem:[#allocation13 + $0x118] sm:$0xff]
    %v1290 = vld [vmem:[#allocation13 + $0x120] sm:$0xff]
    %v1291 = vld [vmem:[#allocation13 + $0x128] sm:$0xff]
    %v1292 = vld [vmem:[#allocation13 + $0x130] sm:$0xff]
    %v1293 = vld [vmem:[#allocation13 + $0x138] sm:$0xff]
    %v1294 = vld [vmem:[#allocation13 + $0x140] sm:$0xff]
    %v1295 = vld [vmem:[#allocation13 + $0x148] sm:$0xff]
    %v1296 = vld [vmem:[#allocation13 + $0x150] sm:$0xff]
    %v1297 = vld [vmem:[#allocation13 + $0x158] sm:$0xff]
    %v1298 = vld [vmem:[#allocation13 + $0x160] sm:$0xff]
    %v1299 = vld [vmem:[#allocation13 + $0x168] sm:$0xff]
    %v1300 = vld [vmem:[#allocation13 + $0x170] sm:$0xff]
    %v1301 = vld [vmem:[#allocation13 + $0x178] sm:$0xff]
    %v1302 = vld [vmem:[#allocation13 + $0x180] sm:$0xff]
    %v1303 = vld [vmem:[#allocation13 + $0x188] sm:$0xff]
    %v1304 = vld [vmem:[#allocation13 + $0x190] sm:$0xff]
    %v1305 = vld [vmem:[#allocation13 + $0x198] sm:$0xff]
    %v1306 = vld [vmem:[#allocation13 + $0x1a0] sm:$0xff]
    %v1307 = vld [vmem:[#allocation13 + $0x1a8] sm:$0xff]
    %v1308 = vld [vmem:[#allocation13 + $0x1b0] sm:$0xff]
    %v1309 = vld [vmem:[#allocation13 + $0x1b8] sm:$0xff]
    %v1310 = vld [vmem:[#allocation13 + $0x1c0] sm:$0xff]
    %v1311 = vld [vmem:[#allocation13 + $0x1c8] sm:$0xff]
    %v1312 = vld [vmem:[#allocation13 + $0x1d0] sm:$0xff]
    %v1313 = vld [vmem:[#allocation13 + $0x1d8] sm:$0xff]
    %v1314 = vld [vmem:[#allocation13 + $0x1e0] sm:$0xff]
    %v1315 = vld [vmem:[#allocation13 + $0x1e8] sm:$0xff]
    %v1316 = vld [vmem:[#allocation13 + $0x1f0] sm:$0xff]
    %v1317 = vld [vmem:[#allocation13 + $0x1f8] sm:$0xff]
    %v1318 = vld [vmem:[#allocation14] sm:$0x3]
    %v1319 = vld [vmem:[#allocation16] sm:$0xff]
    %v1320 = vld [vmem:[#allocation16 + $0x8] sm:$0xff]
    %v1321 = vld [vmem:[#allocation16 + $0x10] sm:$0xff]
    %v1322 = vld [vmem:[#allocation16 + $0x18] sm:$0xff]
    %v1323 = vld [vmem:[#allocation16 + $0x20] sm:$0xff]
    %v1324 = vld [vmem:[#allocation16 + $0x28] sm:$0xff]
    %v1325 = vld [vmem:[#allocation16 + $0x30] sm:$0xff]
    %v1326 = vld [vmem:[#allocation16 + $0x38] sm:$0xff]
    %v1327 = vld [vmem:[#allocation16 + $0x40] sm:$0xff]
    %v1328 = vld [vmem:[#allocation16 + $0x48] sm:$0xff]
    %v1329 = vld [vmem:[#allocation16 + $0x50] sm:$0xff]
    %v1330 = vld [vmem:[#allocation16 + $0x58] sm:$0xff]
    %v1331 = vld [vmem:[#allocation16 + $0x60] sm:$0xff]
    %v1332 = vld [vmem:[#allocation16 + $0x68] sm:$0xff]
    %v1333 = vld [vmem:[#allocation16 + $0x70] sm:$0xff]
    %v1334 = vld [vmem:[#allocation16 + $0x78] sm:$0xff]
    %v1335 = vld [vmem:[#allocation16 + $0x80] sm:$0xff]
    %v1336 = vld [vmem:[#allocation16 + $0x88] sm:$0xff]
    %v1337 = vld [vmem:[#allocation16 + $0x90] sm:$0xff]
    %v1338 = vld [vmem:[#allocation16 + $0x98] sm:$0xff]
    %v1339 = vld [vmem:[#allocation16 + $0xa0] sm:$0xff]
    %v1340 = vld [vmem:[#allocation16 + $0xa8] sm:$0xff]
    %v1341 = vld [vmem:[#allocation16 + $0xb0] sm:$0xff]
    %v1342 = vld [vmem:[#allocation16 + $0xb8] sm:$0xff]
    %v1343 = vld [vmem:[#allocation16 + $0xc0] sm:$0xff]
    %v1344 = vld [vmem:[#allocation16 + $0xc8] sm:$0xff]
    %v1345 = vld [vmem:[#allocation16 + $0xd0] sm:$0xff]
    %v1346 = vld [vmem:[#allocation16 + $0xd8] sm:$0xff]
    %v1347 = vld [vmem:[#allocation16 + $0xe0] sm:$0xff]
    %v1348 = vld [vmem:[#allocation16 + $0xe8] sm:$0xff]
    %v1349 = vld [vmem:[#allocation16 + $0xf0] sm:$0xff]
    %v1350 = vld [vmem:[#allocation16 + $0xf8] sm:$0xff]
    %v1351 = vld [vmem:[#allocation16 + $0x100] sm:$0xff]
    %v1352 = vld [vmem:[#allocation16 + $0x108] sm:$0xff]
    %v1353 = vld [vmem:[#allocation16 + $0x110] sm:$0xff]
    %v1354 = vld [vmem:[#allocation16 + $0x118] sm:$0xff]
    %v1355 = vld [vmem:[#allocation16 + $0x120] sm:$0xff]
    %v1356 = vld [vmem:[#allocation16 + $0x128] sm:$0xff]
    %v1357 = vld [vmem:[#allocation16 + $0x130] sm:$0xff]
    %v1358 = vld [vmem:[#allocation16 + $0x138] sm:$0xff]
    %v1359 = vld [vmem:[#allocation16 + $0x140] sm:$0xff]
    %v1360 = vld [vmem:[#allocation16 + $0x148] sm:$0xff]
    %v1361 = vld [vmem:[#allocation16 + $0x150] sm:$0xff]
    %v1362 = vld [vmem:[#allocation16 + $0x158] sm:$0xff]
    %v1363 = vld [vmem:[#allocation16 + $0x160] sm:$0xff]
    %v1364 = vld [vmem:[#allocation16 + $0x168] sm:$0xff]
    %v1365 = vld [vmem:[#allocation16 + $0x170] sm:$0xff]
    %v1366 = vld [vmem:[#allocation16 + $0x178] sm:$0xff]
    %v1367 = vld [vmem:[#allocation16 + $0x180] sm:$0xff]
    %v1368 = vld [vmem:[#allocation16 + $0x188] sm:$0xff]
    %v1369 = vld [vmem:[#allocation16 + $0x190] sm:$0xff]
    %v1370 = vld [vmem:[#allocation16 + $0x198] sm:$0xff]
    %v1371 = vld [vmem:[#allocation16 + $0x1a0] sm:$0xff]
    %v1372 = vld [vmem:[#allocation16 + $0x1a8] sm:$0xff]
    %v1373 = vld [vmem:[#allocation16 + $0x1b0] sm:$0xff]
    %v1374 = vld [vmem:[#allocation16 + $0x1b8] sm:$0xff]
    %v1375 = vld [vmem:[#allocation16 + $0x1c0] sm:$0xff]
    %v1376 = vld [vmem:[#allocation16 + $0x1c8] sm:$0xff]
    %v1377 = vld [vmem:[#allocation16 + $0x1d0] sm:$0xff]
    %v1378 = vld [vmem:[#allocation16 + $0x1d8] sm:$0xff]
    %v1379 = vld [vmem:[#allocation16 + $0x1e0] sm:$0xff]
    %v1380 = vld [vmem:[#allocation16 + $0x1e8] sm:$0xff]
    %v1381 = vld [vmem:[#allocation16 + $0x1f0] sm:$0xff]
    %v1382 = vld [vmem:[#allocation16 + $0x1f8] sm:$0xff]
    %v1383 = vld [vmem:[#allocation17] sm:$0x3]
    %v1384 = vld [vmem:[#allocation19] sm:$0xff]
    %v1385 = vld [vmem:[#allocation19 + $0x8] sm:$0xff]
    %v1386 = vld [vmem:[#allocation19 + $0x10] sm:$0xff]
    %v1387 = vld [vmem:[#allocation19 + $0x18] sm:$0xff]
    %v1388 = vld [vmem:[#allocation19 + $0x20] sm:$0xff]
    %v1389 = vld [vmem:[#allocation19 + $0x28] sm:$0xff]
    %v1390 = vld [vmem:[#allocation19 + $0x30] sm:$0xff]
    %v1391 = vld [vmem:[#allocation19 + $0x38] sm:$0xff]
    %v1392 = vld [vmem:[#allocation19 + $0x40] sm:$0xff]
    %v1393 = vld [vmem:[#allocation19 + $0x48] sm:$0xff]
    %v1394 = vld [vmem:[#allocation19 + $0x50] sm:$0xff]
    %v1395 = vld [vmem:[#allocation19 + $0x58] sm:$0xff]
    %v1396 = vld [vmem:[#allocation19 + $0x60] sm:$0xff]
    %v1397 = vld [vmem:[#allocation19 + $0x68] sm:$0xff]
    %v1398 = vld [vmem:[#allocation19 + $0x70] sm:$0xff]
    %v1399 = vld [vmem:[#allocation19 + $0x78] sm:$0xff]
    %v1400 = vld [vmem:[#allocation19 + $0x80] sm:$0xff]
    %v1401 = vld [vmem:[#allocation19 + $0x88] sm:$0xff]
    %v1402 = vld [vmem:[#allocation19 + $0x90] sm:$0xff]
    %v1403 = vld [vmem:[#allocation19 + $0x98] sm:$0xff]
    %v1404 = vld [vmem:[#allocation19 + $0xa0] sm:$0xff]
    %v1405 = vld [vmem:[#allocation19 + $0xa8] sm:$0xff]
    %v1406 = vld [vmem:[#allocation19 + $0xb0] sm:$0xff]
    %v1407 = vld [vmem:[#allocation19 + $0xb8] sm:$0xff]
    %v1408 = vld [vmem:[#allocation19 + $0xc0] sm:$0xff]
    %v1409 = vld [vmem:[#allocation19 + $0xc8] sm:$0xff]
    %v1410 = vld [vmem:[#allocation19 + $0xd0] sm:$0xff]
    %v1411 = vld [vmem:[#allocation19 + $0xd8] sm:$0xff]
    %v1412 = vld [vmem:[#allocation19 + $0xe0] sm:$0xff]
    %v1413 = vld [vmem:[#allocation19 + $0xe8] sm:$0xff]
    %v1414 = vld [vmem:[#allocation19 + $0xf0] sm:$0xff]
    %v1415 = vld [vmem:[#allocation19 + $0xf8] sm:$0xff]
    %v1416 = vld [vmem:[#allocation19 + $0x100] sm:$0xff]
    %v1417 = vld [vmem:[#allocation19 + $0x108] sm:$0xff]
    %v1418 = vld [vmem:[#allocation19 + $0x110] sm:$0xff]
    %v1419 = vld [vmem:[#allocation19 + $0x118] sm:$0xff]
    %v1420 = vld [vmem:[#allocation19 + $0x120] sm:$0xff]
    %v1421 = vld [vmem:[#allocation19 + $0x128] sm:$0xff]
    %v1422 = vld [vmem:[#allocation19 + $0x130] sm:$0xff]
    %v1423 = vld [vmem:[#allocation19 + $0x138] sm:$0xff]
    %v1424 = vld [vmem:[#allocation19 + $0x140] sm:$0xff]
    %v1425 = vld [vmem:[#allocation19 + $0x148] sm:$0xff]
    %v1426 = vld [vmem:[#allocation19 + $0x150] sm:$0xff]
    %v1427 = vld [vmem:[#allocation19 + $0x158] sm:$0xff]
    %v1428 = vld [vmem:[#allocation19 + $0x160] sm:$0xff]
    %v1429 = vld [vmem:[#allocation19 + $0x168] sm:$0xff]
    %v1430 = vld [vmem:[#allocation19 + $0x170] sm:$0xff]
    %v1431 = vld [vmem:[#allocation19 + $0x178] sm:$0xff]
    %v1432 = vld [vmem:[#allocation19 + $0x180] sm:$0xff]
    %v1433 = vld [vmem:[#allocation19 + $0x188] sm:$0xff]
    %v1434 = vld [vmem:[#allocation19 + $0x190] sm:$0xff]
    %v1435 = vld [vmem:[#allocation19 + $0x198] sm:$0xff]
    %v1436 = vld [vmem:[#allocation19 + $0x1a0] sm:$0xff]
    %v1437 = vld [vmem:[#allocation19 + $0x1a8] sm:$0xff]
    %v1438 = vld [vmem:[#allocation19 + $0x1b0] sm:$0xff]
    %v1439 = vld [vmem:[#allocation19 + $0x1b8] sm:$0xff]
    %v1440 = vld [vmem:[#allocation19 + $0x1c0] sm:$0xff]
    %v1441 = vld [vmem:[#allocation19 + $0x1c8] sm:$0xff]
    %v1442 = vld [vmem:[#allocation19 + $0x1d0] sm:$0xff]
    %v1443 = vld [vmem:[#allocation19 + $0x1d8] sm:$0xff]
    %v1444 = vld [vmem:[#allocation19 + $0x1e0] sm:$0xff]
    %v1445 = vld [vmem:[#allocation19 + $0x1e8] sm:$0xff]
    %v1446 = vld [vmem:[#allocation19 + $0x1f0] sm:$0xff]
    %v1447 = vld [vmem:[#allocation19 + $0x1f8] sm:$0xff]
    %v1448 = vld [vmem:[#allocation20] sm:$0xf]
    %v1449 = vld [vmem:[#allocation22] sm:$0xf]
    %v1450 = vld [vmem:[#allocation23] sm:$0xf]
    %v1451 = vld [vmem:[#allocation25] sm:$0xff]
    %v1452 = vld [vmem:[#allocation25 + $0x8] sm:$0xff]
    %v1453 = vld [vmem:[#allocation25 + $0x10] sm:$0xff]
    %v1454 = vld [vmem:[#allocation25 + $0x18] sm:$0xff]
    %v1455 = vld [vmem:[#allocation25 + $0x20] sm:$0xff]
    %v1456 = vld [vmem:[#allocation25 + $0x28] sm:$0xff]
    %v1457 = vld [vmem:[#allocation25 + $0x30] sm:$0xff]
    %v1458 = vld [vmem:[#allocation25 + $0x38] sm:$0xff]
    %v1459 = vld [vmem:[#allocation25 + $0x40] sm:$0xff]
    %v1460 = vld [vmem:[#allocation25 + $0x48] sm:$0xff]
    %v1461 = vld [vmem:[#allocation25 + $0x50] sm:$0xff]
    %v1462 = vld [vmem:[#allocation25 + $0x58] sm:$0xff]
    %v1463 = vld [vmem:[#allocation25 + $0x60] sm:$0xff]
    %v1464 = vld [vmem:[#allocation25 + $0x68] sm:$0xff]
    %v1465 = vld [vmem:[#allocation25 + $0x70] sm:$0xff]
    %v1466 = vld [vmem:[#allocation25 + $0x78] sm:$0xff]
    %v1467 = vld [vmem:[#allocation25 + $0x80] sm:$0xff]
    %v1468 = vld [vmem:[#allocation25 + $0x88] sm:$0xff]
    %v1469 = vld [vmem:[#allocation25 + $0x90] sm:$0xff]
    %v1470 = vld [vmem:[#allocation25 + $0x98] sm:$0xff]
    %v1471 = vld [vmem:[#allocation25 + $0xa0] sm:$0xff]
    %v1472 = vld [vmem:[#allocation25 + $0xa8] sm:$0xff]
    %v1473 = vld [vmem:[#allocation25 + $0xb0] sm:$0xff]
    %v1474 = vld [vmem:[#allocation25 + $0xb8] sm:$0xff]
    %v1475 = vld [vmem:[#allocation25 + $0xc0] sm:$0xff]
    %v1476 = vld [vmem:[#allocation25 + $0xc8] sm:$0xff]
    %v1477 = vld [vmem:[#allocation25 + $0xd0] sm:$0xff]
    %v1478 = vld [vmem:[#allocation25 + $0xd8] sm:$0xff]
    %v1479 = vld [vmem:[#allocation25 + $0xe0] sm:$0xff]
    %v1480 = vld [vmem:[#allocation25 + $0xe8] sm:$0xff]
    %v1481 = vld [vmem:[#allocation25 + $0xf0] sm:$0xff]
    %v1482 = vld [vmem:[#allocation25 + $0xf8] sm:$0xff]
    %v1483 = vld [vmem:[#allocation25 + $0x100] sm:$0xff]
    %v1484 = vld [vmem:[#allocation25 + $0x108] sm:$0xff]
    %v1485 = vld [vmem:[#allocation25 + $0x110] sm:$0xff]
    %v1486 = vld [vmem:[#allocation25 + $0x118] sm:$0xff]
    %v1487 = vld [vmem:[#allocation25 + $0x120] sm:$0xff]
    %v1488 = vld [vmem:[#allocation25 + $0x128] sm:$0xff]
    %v1489 = vld [vmem:[#allocation25 + $0x130] sm:$0xff]
    %v1490 = vld [vmem:[#allocation25 + $0x138] sm:$0xff]
    %v1491 = vld [vmem:[#allocation25 + $0x140] sm:$0xff]
    %v1492 = vld [vmem:[#allocation25 + $0x148] sm:$0xff]
    %v1493 = vld [vmem:[#allocation25 + $0x150] sm:$0xff]
    %v1494 = vld [vmem:[#allocation25 + $0x158] sm:$0xff]
    %v1495 = vld [vmem:[#allocation25 + $0x160] sm:$0xff]
    %v1496 = vld [vmem:[#allocation25 + $0x168] sm:$0xff]
    %v1497 = vld [vmem:[#allocation25 + $0x170] sm:$0xff]
    %v1498 = vld [vmem:[#allocation25 + $0x178] sm:$0xff]
    %v1499 = vld [vmem:[#allocation25 + $0x180] sm:$0xff]
    %v1500 = vld [vmem:[#allocation25 + $0x188] sm:$0xff]
    %v1501 = vld [vmem:[#allocation25 + $0x190] sm:$0xff]
    %v1502 = vld [vmem:[#allocation25 + $0x198] sm:$0xff]
    %v1503 = vld [vmem:[#allocation25 + $0x1a0] sm:$0xff]
    %v1504 = vld [vmem:[#allocation25 + $0x1a8] sm:$0xff]
    %v1505 = vld [vmem:[#allocation25 + $0x1b0] sm:$0xff]
    %v1506 = vld [vmem:[#allocation25 + $0x1b8] sm:$0xff]
    %v1507 = vld [vmem:[#allocation25 + $0x1c0] sm:$0xff]
    %v1508 = vld [vmem:[#allocation25 + $0x1c8] sm:$0xff]
    %v1509 = vld [vmem:[#allocation25 + $0x1d0] sm:$0xff]
    %v1510 = vld [vmem:[#allocation25 + $0x1d8] sm:$0xff]
    %v1511 = vld [vmem:[#allocation25 + $0x1e0] sm:$0xff]
    %v1512 = vld [vmem:[#allocation25 + $0x1e8] sm:$0xff]
    %v1513 = vld [vmem:[#allocation25 + $0x1f0] sm:$0xff]
    %v1514 = vld [vmem:[#allocation25 + $0x1f8] sm:$0xff]
    %v1515 = vld [vmem:[#allocation25 + $0x200] sm:$0xff]
    %v1516 = vld [vmem:[#allocation25 + $0x208] sm:$0xff]
    %v1517 = vld [vmem:[#allocation25 + $0x210] sm:$0xff]
    %v1518 = vld [vmem:[#allocation25 + $0x218] sm:$0xff]
    %v1519 = vld [vmem:[#allocation25 + $0x220] sm:$0xff]
    %v1520 = vld [vmem:[#allocation25 + $0x228] sm:$0xff]
    %v1521 = vld [vmem:[#allocation25 + $0x230] sm:$0xff]
    %v1522 = vld [vmem:[#allocation25 + $0x238] sm:$0xff]
    %v1523 = vld [vmem:[#allocation25 + $0x240] sm:$0xff]
    %v1524 = vld [vmem:[#allocation25 + $0x248] sm:$0xff]
    %v1525 = vld [vmem:[#allocation25 + $0x250] sm:$0xff]
    %v1526 = vld [vmem:[#allocation25 + $0x258] sm:$0xff]
    %v1527 = vld [vmem:[#allocation25 + $0x260] sm:$0xff]
    %v1528 = vld [vmem:[#allocation25 + $0x268] sm:$0xff]
    %v1529 = vld [vmem:[#allocation25 + $0x270] sm:$0xff]
    %v1530 = vld [vmem:[#allocation25 + $0x278] sm:$0xff]
    %v1531 = vld [vmem:[#allocation25 + $0x280] sm:$0xff]
    %v1532 = vld [vmem:[#allocation25 + $0x288] sm:$0xff]
    %v1533 = vld [vmem:[#allocation25 + $0x290] sm:$0xff]
    %v1534 = vld [vmem:[#allocation25 + $0x298] sm:$0xff]
    %v1535 = vld [vmem:[#allocation25 + $0x2a0] sm:$0xff]
    %v1536 = vld [vmem:[#allocation25 + $0x2a8] sm:$0xff]
    %v1537 = vld [vmem:[#allocation25 + $0x2b0] sm:$0xff]
    %v1538 = vld [vmem:[#allocation25 + $0x2b8] sm:$0xff]
    %v1539 = vld [vmem:[#allocation25 + $0x2c0] sm:$0xff]
    %v1540 = vld [vmem:[#allocation25 + $0x2c8] sm:$0xff]
    %v1541 = vld [vmem:[#allocation25 + $0x2d0] sm:$0xff]
    %v1542 = vld [vmem:[#allocation25 + $0x2d8] sm:$0xff]
    %v1543 = vld [vmem:[#allocation25 + $0x2e0] sm:$0xff]
    %v1544 = vld [vmem:[#allocation25 + $0x2e8] sm:$0xff]
    %v1545 = vld [vmem:[#allocation25 + $0x2f0] sm:$0xff]
    %v1546 = vld [vmem:[#allocation25 + $0x2f8] sm:$0xff]
    %v1547 = vld [vmem:[#allocation25 + $0x300] sm:$0xff]
    %v1548 = vld [vmem:[#allocation25 + $0x308] sm:$0xff]
    %v1549 = vld [vmem:[#allocation25 + $0x310] sm:$0xff]
    %v1550 = vld [vmem:[#allocation25 + $0x318] sm:$0xff]
    %v1551 = vld [vmem:[#allocation25 + $0x320] sm:$0xff]
    %v1552 = vld [vmem:[#allocation25 + $0x328] sm:$0xff]
    %v1553 = vld [vmem:[#allocation25 + $0x330] sm:$0xff]
    %v1554 = vld [vmem:[#allocation25 + $0x338] sm:$0xff]
    %v1555 = vld [vmem:[#allocation25 + $0x340] sm:$0xff]
    %v1556 = vld [vmem:[#allocation25 + $0x348] sm:$0xff]
    %v1557 = vld [vmem:[#allocation25 + $0x350] sm:$0xff]
    %v1558 = vld [vmem:[#allocation25 + $0x358] sm:$0xff]
    %v1559 = vld [vmem:[#allocation25 + $0x360] sm:$0xff]
    %v1560 = vld [vmem:[#allocation25 + $0x368] sm:$0xff]
    %v1561 = vld [vmem:[#allocation25 + $0x370] sm:$0xff]
    %v1562 = vld [vmem:[#allocation25 + $0x378] sm:$0xff]
    %v1563 = vld [vmem:[#allocation25 + $0x380] sm:$0xff]
    %v1564 = vld [vmem:[#allocation25 + $0x388] sm:$0xff]
    %v1565 = vld [vmem:[#allocation25 + $0x390] sm:$0xff]
    %v1566 = vld [vmem:[#allocation25 + $0x398] sm:$0xff]
    %v1567 = vld [vmem:[#allocation25 + $0x3a0] sm:$0xff]
    %v1568 = vld [vmem:[#allocation25 + $0x3a8] sm:$0xff]
    %v1569 = vld [vmem:[#allocation25 + $0x3b0] sm:$0xff]
    %v1570 = vld [vmem:[#allocation25 + $0x3b8] sm:$0xff]
    %v1571 = vld [vmem:[#allocation25 + $0x3c0] sm:$0xff]
    %v1572 = vld [vmem:[#allocation25 + $0x3c8] sm:$0xff]
    %v1573 = vld [vmem:[#allocation25 + $0x3d0] sm:$0xff]
    %v1574 = vld [vmem:[#allocation25 + $0x3d8] sm:$0xff]
    %v1575 = vld [vmem:[#allocation25 + $0x3e0] sm:$0xff]
    %v1576 = vld [vmem:[#allocation25 + $0x3e8] sm:$0xff]
    %v1577 = vld [vmem:[#allocation25 + $0x3f0] sm:$0xff]
    %v1578 = vld [vmem:[#allocation25 + $0x3f8] sm:$0xff]
    %v1579 = vld [vmem:[#allocation26] sm:$0xf]
    %v1580 = vpack.c.bf16 %v1246, %v1246
    %v1581 = vpack.c.bf16 %v1247, %v1247
    %v1582 = vpack.c.bf16 %v1248, %v1248
    %v1583 = vpack.c.bf16 %v1249, %v1249
    %v1585 = vlaneseq
    %v1586 = vshrl.u32 %v1585, 7
    %v1587 = vsub.s32 0, %v1586
    %v1588 = vrot.slane %v1318, %v1587
    %v1589 = vlaneseq
    %v1590 = vshrl.u32 %v1589, 7
    %v1591 = vsub.s32 1, %v1590
    %v1592 = vrot.slane %v1318, %v1591
    %v1659 = vunpack.c.l.b16 %v1254
    %v1660 = vunpack.c.h.b16 %v1254
    %v1661 = vunpack.c.l.b16 %v1255
    %v1662 = vunpack.c.h.b16 %v1255
    %v1663 = vunpack.c.l.b16 %v1256
    %v1664 = vunpack.c.h.b16 %v1256
    %v1665 = vunpack.c.l.b16 %v1257
    %v1666 = vunpack.c.h.b16 %v1257
    %v1667 = vunpack.c.l.b16 %v1258
    %v1668 = vunpack.c.h.b16 %v1258
    %v1669 = vunpack.c.l.b16 %v1259
    %v1670 = vunpack.c.h.b16 %v1259
    %v1671 = vunpack.c.l.b16 %v1260
    %v1672 = vunpack.c.h.b16 %v1260
    %v1673 = vunpack.c.l.b16 %v1261
    %v1674 = vunpack.c.h.b16 %v1261
    %v1675 = vunpack.c.l.b16 %v1262
    %v1676 = vunpack.c.h.b16 %v1262
    %v1677 = vunpack.c.l.b16 %v1263
    %v1678 = vunpack.c.h.b16 %v1263
    %v1679 = vunpack.c.l.b16 %v1264
    %v1680 = vunpack.c.h.b16 %v1264
    %v1681 = vunpack.c.l.b16 %v1265
    %v1682 = vunpack.c.h.b16 %v1265
    %v1683 = vunpack.c.l.b16 %v1266
    %v1684 = vunpack.c.h.b16 %v1266
    %v1685 = vunpack.c.l.b16 %v1267
    %v1686 = vunpack.c.h.b16 %v1267
    %v1687 = vunpack.c.l.b16 %v1268
    %v1688 = vunpack.c.h.b16 %v1268
    %v1689 = vunpack.c.l.b16 %v1269
    %v1690 = vunpack.c.h.b16 %v1269
    %v1691 = vunpack.c.l.b16 %v1270
    %v1692 = vunpack.c.h.b16 %v1270
    %v1693 = vunpack.c.l.b16 %v1271
    %v1694 = vunpack.c.h.b16 %v1271
    %v1695 = vunpack.c.l.b16 %v1272
    %v1696 = vunpack.c.h.b16 %v1272
    %v1697 = vunpack.c.l.b16 %v1273
    %v1698 = vunpack.c.h.b16 %v1273
    %v1699 = vunpack.c.l.b16 %v1274
    %v1700 = vunpack.c.h.b16 %v1274
    %v1701 = vunpack.c.l.b16 %v1275
    %v1702 = vunpack.c.h.b16 %v1275
    %v1703 = vunpack.c.l.b16 %v1276
    %v1704 = vunpack.c.h.b16 %v1276
    %v1705 = vunpack.c.l.b16 %v1277
    %v1706 = vunpack.c.h.b16 %v1277
    %v1707 = vunpack.c.l.b16 %v1278
    %v1708 = vunpack.c.h.b16 %v1278
    %v1709 = vunpack.c.l.b16 %v1279
    %v1710 = vunpack.c.h.b16 %v1279
    %v1711 = vunpack.c.l.b16 %v1280
    %v1712 = vunpack.c.h.b16 %v1280
    %v1713 = vunpack.c.l.b16 %v1281
    %v1714 = vunpack.c.h.b16 %v1281
    %v1715 = vunpack.c.l.b16 %v1282
    %v1716 = vunpack.c.h.b16 %v1282
    %v1717 = vunpack.c.l.b16 %v1283
    %v1718 = vunpack.c.h.b16 %v1283
    %v1719 = vunpack.c.l.b16 %v1284
    %v1720 = vunpack.c.h.b16 %v1284
    %v1721 = vunpack.c.l.b16 %v1285
    %v1722 = vunpack.c.h.b16 %v1285
    %v1723 = vunpack.c.l.b16 %v1286
    %v1724 = vunpack.c.h.b16 %v1286
    %v1725 = vunpack.c.l.b16 %v1287
    %v1726 = vunpack.c.h.b16 %v1287
    %v1727 = vunpack.c.l.b16 %v1288
    %v1728 = vunpack.c.h.b16 %v1288
    %v1729 = vunpack.c.l.b16 %v1289
    %v1730 = vunpack.c.h.b16 %v1289
    %v1731 = vunpack.c.l.b16 %v1290
    %v1732 = vunpack.c.h.b16 %v1290
    %v1733 = vunpack.c.l.b16 %v1291
    %v1734 = vunpack.c.h.b16 %v1291
    %v1735 = vunpack.c.l.b16 %v1292
    %v1736 = vunpack.c.h.b16 %v1292
    %v1737 = vunpack.c.l.b16 %v1293
    %v1738 = vunpack.c.h.b16 %v1293
    %v1739 = vunpack.c.l.b16 %v1294
    %v1740 = vunpack.c.h.b16 %v1294
    %v1741 = vunpack.c.l.b16 %v1295
    %v1742 = vunpack.c.h.b16 %v1295
    %v1743 = vunpack.c.l.b16 %v1296
    %v1744 = vunpack.c.h.b16 %v1296
    %v1745 = vunpack.c.l.b16 %v1297
    %v1746 = vunpack.c.h.b16 %v1297
    %v1747 = vunpack.c.l.b16 %v1298
    %v1748 = vunpack.c.h.b16 %v1298
    %v1749 = vunpack.c.l.b16 %v1299
    %v1750 = vunpack.c.h.b16 %v1299
    %v1751 = vunpack.c.l.b16 %v1300
    %v1752 = vunpack.c.h.b16 %v1300
    %v1753 = vunpack.c.l.b16 %v1301
    %v1754 = vunpack.c.h.b16 %v1301
    %v1755 = vunpack.c.l.b16 %v1302
    %v1756 = vunpack.c.h.b16 %v1302
    %v1757 = vunpack.c.l.b16 %v1303
    %v1758 = vunpack.c.h.b16 %v1303
    %v1759 = vunpack.c.l.b16 %v1304
    %v1760 = vunpack.c.h.b16 %v1304
    %v1761 = vunpack.c.l.b16 %v1305
    %v1762 = vunpack.c.h.b16 %v1305
    %v1763 = vunpack.c.l.b16 %v1306
    %v1764 = vunpack.c.h.b16 %v1306
    %v1765 = vunpack.c.l.b16 %v1307
    %v1766 = vunpack.c.h.b16 %v1307
    %v1767 = vunpack.c.l.b16 %v1308
    %v1768 = vunpack.c.h.b16 %v1308
    %v1769 = vunpack.c.l.b16 %v1309
    %v1770 = vunpack.c.h.b16 %v1309
    %v1771 = vunpack.c.l.b16 %v1310
    %v1772 = vunpack.c.h.b16 %v1310
    %v1773 = vunpack.c.l.b16 %v1311
    %v1774 = vunpack.c.h.b16 %v1311
    %v1775 = vunpack.c.l.b16 %v1312
    %v1776 = vunpack.c.h.b16 %v1312
    %v1777 = vunpack.c.l.b16 %v1313
    %v1778 = vunpack.c.h.b16 %v1313
    %v1779 = vunpack.c.l.b16 %v1314
    %v1780 = vunpack.c.h.b16 %v1314
    %v1781 = vunpack.c.l.b16 %v1315
    %v1782 = vunpack.c.h.b16 %v1315
    %v1783 = vunpack.c.l.b16 %v1316
    %v1784 = vunpack.c.h.b16 %v1316
    %v1785 = vunpack.c.l.b16 %v1317
    %v1786 = vunpack.c.h.b16 %v1317
    %v1787 = vpack.c.b16 %v1661, %v1659
    %v1788 = vpack.c.b16 %v1662, %v1660
    %v1789 = vpack.c.b16 %v1665, %v1663
    %v1790 = vpack.c.b16 %v1666, %v1664
    %v1791 = vpack.c.b16 %v1669, %v1667
    %v1792 = vpack.c.b16 %v1670, %v1668
    %v1793 = vpack.c.b16 %v1673, %v1671
    %v1794 = vpack.c.b16 %v1674, %v1672
    %v1795 = vpack.c.b16 %v1677, %v1675
    %v1796 = vpack.c.b16 %v1678, %v1676
    %v1797 = vpack.c.b16 %v1681, %v1679
    %v1798 = vpack.c.b16 %v1682, %v1680
    %v1799 = vpack.c.b16 %v1685, %v1683
    %v1800 = vpack.c.b16 %v1686, %v1684
    %v1801 = vpack.c.b16 %v1689, %v1687
    %v1802 = vpack.c.b16 %v1690, %v1688
    %v1803 = vpack.c.b16 %v1693, %v1691
    %v1804 = vpack.c.b16 %v1694, %v1692
    %v1805 = vpack.c.b16 %v1697, %v1695
    %v1806 = vpack.c.b16 %v1698, %v1696
    %v1807 = vpack.c.b16 %v1701, %v1699
    %v1808 = vpack.c.b16 %v1702, %v1700
    %v1809 = vpack.c.b16 %v1705, %v1703
    %v1810 = vpack.c.b16 %v1706, %v1704
    %v1811 = vpack.c.b16 %v1709, %v1707
    %v1812 = vpack.c.b16 %v1710, %v1708
    %v1813 = vpack.c.b16 %v1713, %v1711
    %v1814 = vpack.c.b16 %v1714, %v1712
    %v1815 = vpack.c.b16 %v1717, %v1715
    %v1816 = vpack.c.b16 %v1718, %v1716
    %v1817 = vpack.c.b16 %v1721, %v1719
    %v1818 = vpack.c.b16 %v1722, %v1720
    %v1819 = vpack.c.b16 %v1725, %v1723
    %v1820 = vpack.c.b16 %v1726, %v1724
    %v1821 = vpack.c.b16 %v1729, %v1727
    %v1822 = vpack.c.b16 %v1730, %v1728
    %v1823 = vpack.c.b16 %v1733, %v1731
    %v1824 = vpack.c.b16 %v1734, %v1732
    %v1825 = vpack.c.b16 %v1737, %v1735
    %v1826 = vpack.c.b16 %v1738, %v1736
    %v1827 = vpack.c.b16 %v1741, %v1739
    %v1828 = vpack.c.b16 %v1742, %v1740
    %v1829 = vpack.c.b16 %v1745, %v1743
    %v1830 = vpack.c.b16 %v1746, %v1744
    %v1831 = vpack.c.b16 %v1749, %v1747
    %v1832 = vpack.c.b16 %v1750, %v1748
    %v1833 = vpack.c.b16 %v1753, %v1751
    %v1834 = vpack.c.b16 %v1754, %v1752
    %v1835 = vpack.c.b16 %v1757, %v1755
    %v1836 = vpack.c.b16 %v1758, %v1756
    %v1837 = vpack.c.b16 %v1761, %v1759
    %v1838 = vpack.c.b16 %v1762, %v1760
    %v1839 = vpack.c.b16 %v1765, %v1763
    %v1840 = vpack.c.b16 %v1766, %v1764
    %v1841 = vpack.c.b16 %v1769, %v1767
    %v1842 = vpack.c.b16 %v1770, %v1768
    %v1843 = vpack.c.b16 %v1773, %v1771
    %v1844 = vpack.c.b16 %v1774, %v1772
    %v1845 = vpack.c.b16 %v1777, %v1775
    %v1846 = vpack.c.b16 %v1778, %v1776
    %v1847 = vpack.c.b16 %v1781, %v1779
    %v1848 = vpack.c.b16 %v1782, %v1780
    %v1849 = vpack.c.b16 %v1785, %v1783
    %v1850 = vpack.c.b16 %v1786, %v1784
    %1915 = vmatprep.subr.bf16.mxu0 %v1802
    %1916 = vmatpush1.bf16.msra.mxu0 %v1801
    %1917 = vmatprep.subr.bf16.mxu0 %v1800
    %1918 = vmatpush1.bf16.msra.mxu0 %v1799
    %1919 = vmatprep.subr.bf16.mxu0 %v1798
    %1920 = vmatpush1.bf16.msra.mxu0 %v1797
    %1921 = vmatprep.subr.bf16.mxu0 %v1796
    %1922 = vmatpush1.bf16.msra.mxu0 %v1795
    %1923 = vmatprep.subr.bf16.mxu0 %v1794
    %1924 = vmatpush1.bf16.msra.mxu0 %v1793
    %1925 = vmatprep.subr.bf16.mxu0 %v1792
    %1926 = vmatpush1.bf16.msra.mxu0 %v1791
    %1927 = vmatprep.subr.bf16.mxu0 %v1790
    %1928 = vmatpush1.bf16.msra.mxu0 %v1789
    %1929 = vmatprep.subr.bf16.mxu0 %v1788
    %1930 = vmatpush1.bf16.msra.mxu0 %v1787
    %1931 = vmatprep.subr.bf16.mxu0 %v1818
    %1932 = vmatpush2.bf16.msra.mxu0 %v1817
    %1933 = vmatprep.subr.bf16.mxu0 %v1816
    %1934 = vmatpush2.bf16.msra.mxu0 %v1815
    %1935 = vmatprep.subr.bf16.mxu0 %v1814
    %1936 = vmatpush2.bf16.msra.mxu0 %v1813
    %1937 = vmatprep.subr.bf16.mxu0 %v1812
    %1938 = vmatpush2.bf16.msra.mxu0 %v1811
    %1939 = vmatprep.subr.bf16.mxu0 %v1810
    %1940 = vmatpush2.bf16.msra.mxu0 %v1809
    %1941 = vmatprep.subr.bf16.mxu0 %v1808
    %1942 = vmatpush2.bf16.msra.mxu0 %v1807
    %1943 = vmatprep.subr.bf16.mxu0 %v1806
    %1944 = vmatpush2.bf16.msra.mxu0 %v1805
    %1945 = vmatprep.subr.bf16.mxu0 %v1804
    %1946 = vmatpush2.bf16.msra.mxu0 %v1803
    %1947 = vmatprep.mubr.bf16.mxu0 %v1581
    %1948 = vmatmul.mubr.bf16.gmra.mxu0 %v1580
    %v1949 = vpop.f32.mrf.mxu0
    %v1950 = vadd.f32 %v1588, %v1949
    %v1951 = vpop.f32.mrf.mxu0
    %v1952 = vadd.f32 %v1592, %v1951
    %v1953 = vpop.f32.mrf.mxu0
    %v1954 = vpop.f32.mrf.mxu0
    %1955 = vdwg.mxu0
    %1956 = vmatprep.subr.bf16.mxu0 %v1834
    %1957 = vmatpush1.bf16.msra.mxu0 %v1833
    %1958 = vmatprep.subr.bf16.mxu0 %v1832
    %1959 = vmatpush1.bf16.msra.mxu0 %v1831
    %1960 = vmatprep.subr.bf16.mxu0 %v1830
    %1961 = vmatpush1.bf16.msra.mxu0 %v1829
    %1962 = vmatprep.subr.bf16.mxu0 %v1828
    %1963 = vmatpush1.bf16.msra.mxu0 %v1827
    %1964 = vmatprep.subr.bf16.mxu0 %v1826
    %1965 = vmatpush1.bf16.msra.mxu0 %v1825
    %1966 = vmatprep.subr.bf16.mxu0 %v1824
    %1967 = vmatpush1.bf16.msra.mxu0 %v1823
    %1968 = vmatprep.subr.bf16.mxu0 %v1822
    %1969 = vmatpush1.bf16.msra.mxu0 %v1821
    %1970 = vmatprep.subr.bf16.mxu0 %v1820
    %1971 = vmatpush1.bf16.msra.mxu0 %v1819
    %1972 = vmatprep.subr.bf16.mxu0 %v1850
    %1973 = vmatpush2.bf16.msra.mxu0 %v1849
    %1974 = vmatprep.subr.bf16.mxu0 %v1848
    %1975 = vmatpush2.bf16.msra.mxu0 %v1847
    %1976 = vmatprep.subr.bf16.mxu0 %v1846
    %1977 = vmatpush2.bf16.msra.mxu0 %v1845
    %1978 = vmatprep.subr.bf16.mxu0 %v1844
    %1979 = vmatpush2.bf16.msra.mxu0 %v1843
    %1980 = vmatprep.subr.bf16.mxu0 %v1842
    %1981 = vmatpush2.bf16.msra.mxu0 %v1841
    %1982 = vmatprep.subr.bf16.mxu0 %v1840
    %1983 = vmatpush2.bf16.msra.mxu0 %v1839
    %1984 = vmatprep.subr.bf16.mxu0 %v1838
    %1985 = vmatpush2.bf16.msra.mxu0 %v1837
    %1986 = vmatprep.subr.bf16.mxu0 %v1836
    %1987 = vmatpush2.bf16.msra.mxu0 %v1835
    %1988 = vmatprep.mubr.bf16.mxu0 %v1583
    %1989 = vmatmul.mubr.bf16.gmra.mxu0 %v1582
    %v1990 = vpop.f32.mrf.mxu0
    %v1991 = vadd.f32 %v1950, %v1990
    %v1992 = vpop.f32.mrf.mxu0
    %v1993 = vadd.f32 %v1952, %v1992
    %v1994 = vpop.f32.mrf.mxu0
    %v1995 = vpop.f32.mrf.mxu0
    %1996 = vdwg.mxu0
    %v1997 = vpack.c.bf16 %v1250, %v1250
    %v1998 = vpack.c.bf16 %v1251, %v1251
    %v1999 = vpack.c.bf16 %v1252, %v1252
    %v2000 = vpack.c.bf16 %v1253, %v1253
    %v2002 = vlaneseq
    %v2003 = vshrl.u32 %v2002, 7
    %v2004 = vsub.s32 0, %v2003
    %v2005 = vrot.slane %v1383, %v2004
    %v2006 = vlaneseq
    %v2007 = vshrl.u32 %v2006, 7
    %v2008 = vsub.s32 1, %v2007
    %v2009 = vrot.slane %v1383, %v2008
    %v2076 = vunpack.c.l.b16 %v1319
    %v2077 = vunpack.c.h.b16 %v1319
    %v2078 = vunpack.c.l.b16 %v1320
    %v2079 = vunpack.c.h.b16 %v1320
    %v2080 = vunpack.c.l.b16 %v1321
    %v2081 = vunpack.c.h.b16 %v1321
    %v2082 = vunpack.c.l.b16 %v1322
    %v2083 = vunpack.c.h.b16 %v1322
    %v2084 = vunpack.c.l.b16 %v1323
    %v2085 = vunpack.c.h.b16 %v1323
    %v2086 = vunpack.c.l.b16 %v1324
    %v2087 = vunpack.c.h.b16 %v1324
    %v2088 = vunpack.c.l.b16 %v1325
    %v2089 = vunpack.c.h.b16 %v1325
    %v2090 = vunpack.c.l.b16 %v1326
    %v2091 = vunpack.c.h.b16 %v1326
    %v2092 = vunpack.c.l.b16 %v1327
    %v2093 = vunpack.c.h.b16 %v1327
    %v2094 = vunpack.c.l.b16 %v1328
    %v2095 = vunpack.c.h.b16 %v1328
    %v2096 = vunpack.c.l.b16 %v1329
    %v2097 = vunpack.c.h.b16 %v1329
    %v2098 = vunpack.c.l.b16 %v1330
    %v2099 = vunpack.c.h.b16 %v1330
    %v2100 = vunpack.c.l.b16 %v1331
    %v2101 = vunpack.c.h.b16 %v1331
    %v2102 = vunpack.c.l.b16 %v1332
    %v2103 = vunpack.c.h.b16 %v1332
    %v2104 = vunpack.c.l.b16 %v1333
    %v2105 = vunpack.c.h.b16 %v1333
    %v2106 = vunpack.c.l.b16 %v1334
    %v2107 = vunpack.c.h.b16 %v1334
    %v2108 = vunpack.c.l.b16 %v1335
    %v2109 = vunpack.c.h.b16 %v1335
    %v2110 = vunpack.c.l.b16 %v1336
    %v2111 = vunpack.c.h.b16 %v1336
    %v2112 = vunpack.c.l.b16 %v1337
    %v2113 = vunpack.c.h.b16 %v1337
    %v2114 = vunpack.c.l.b16 %v1338
    %v2115 = vunpack.c.h.b16 %v1338
    %v2116 = vunpack.c.l.b16 %v1339
    %v2117 = vunpack.c.h.b16 %v1339
    %v2118 = vunpack.c.l.b16 %v1340
    %v2119 = vunpack.c.h.b16 %v1340
    %v2120 = vunpack.c.l.b16 %v1341
    %v2121 = vunpack.c.h.b16 %v1341
    %v2122 = vunpack.c.l.b16 %v1342
    %v2123 = vunpack.c.h.b16 %v1342
    %v2124 = vunpack.c.l.b16 %v1343
    %v2125 = vunpack.c.h.b16 %v1343
    %v2126 = vunpack.c.l.b16 %v1344
    %v2127 = vunpack.c.h.b16 %v1344
    %v2128 = vunpack.c.l.b16 %v1345
    %v2129 = vunpack.c.h.b16 %v1345
    %v2130 = vunpack.c.l.b16 %v1346
    %v2131 = vunpack.c.h.b16 %v1346
    %v2132 = vunpack.c.l.b16 %v1347
    %v2133 = vunpack.c.h.b16 %v1347
    %v2134 = vunpack.c.l.b16 %v1348
    %v2135 = vunpack.c.h.b16 %v1348
    %v2136 = vunpack.c.l.b16 %v1349
    %v2137 = vunpack.c.h.b16 %v1349
    %v2138 = vunpack.c.l.b16 %v1350
    %v2139 = vunpack.c.h.b16 %v1350
    %v2140 = vunpack.c.l.b16 %v1351
    %v2141 = vunpack.c.h.b16 %v1351
    %v2142 = vunpack.c.l.b16 %v1352
    %v2143 = vunpack.c.h.b16 %v1352
    %v2144 = vunpack.c.l.b16 %v1353
    %v2145 = vunpack.c.h.b16 %v1353
    %v2146 = vunpack.c.l.b16 %v1354
    %v2147 = vunpack.c.h.b16 %v1354
    %v2148 = vunpack.c.l.b16 %v1355
    %v2149 = vunpack.c.h.b16 %v1355
    %v2150 = vunpack.c.l.b16 %v1356
    %v2151 = vunpack.c.h.b16 %v1356
    %v2152 = vunpack.c.l.b16 %v1357
    %v2153 = vunpack.c.h.b16 %v1357
    %v2154 = vunpack.c.l.b16 %v1358
    %v2155 = vunpack.c.h.b16 %v1358
    %v2156 = vunpack.c.l.b16 %v1359
    %v2157 = vunpack.c.h.b16 %v1359
    %v2158 = vunpack.c.l.b16 %v1360
    %v2159 = vunpack.c.h.b16 %v1360
    %v2160 = vunpack.c.l.b16 %v1361
    %v2161 = vunpack.c.h.b16 %v1361
    %v2162 = vunpack.c.l.b16 %v1362
    %v2163 = vunpack.c.h.b16 %v1362
    %v2164 = vunpack.c.l.b16 %v1363
    %v2165 = vunpack.c.h.b16 %v1363
    %v2166 = vunpack.c.l.b16 %v1364
    %v2167 = vunpack.c.h.b16 %v1364
    %v2168 = vunpack.c.l.b16 %v1365
    %v2169 = vunpack.c.h.b16 %v1365
    %v2170 = vunpack.c.l.b16 %v1366
    %v2171 = vunpack.c.h.b16 %v1366
    %v2172 = vunpack.c.l.b16 %v1367
    %v2173 = vunpack.c.h.b16 %v1367
    %v2174 = vunpack.c.l.b16 %v1368
    %v2175 = vunpack.c.h.b16 %v1368
    %v2176 = vunpack.c.l.b16 %v1369
    %v2177 = vunpack.c.h.b16 %v1369
    %v2178 = vunpack.c.l.b16 %v1370
    %v2179 = vunpack.c.h.b16 %v1370
    %v2180 = vunpack.c.l.b16 %v1371
    %v2181 = vunpack.c.h.b16 %v1371
    %v2182 = vunpack.c.l.b16 %v1372
    %v2183 = vunpack.c.h.b16 %v1372
    %v2184 = vunpack.c.l.b16 %v1373
    %v2185 = vunpack.c.h.b16 %v1373
    %v2186 = vunpack.c.l.b16 %v1374
    %v2187 = vunpack.c.h.b16 %v1374
    %v2188 = vunpack.c.l.b16 %v1375
    %v2189 = vunpack.c.h.b16 %v1375
    %v2190 = vunpack.c.l.b16 %v1376
    %v2191 = vunpack.c.h.b16 %v1376
    %v2192 = vunpack.c.l.b16 %v1377
    %v2193 = vunpack.c.h.b16 %v1377
    %v2194 = vunpack.c.l.b16 %v1378
    %v2195 = vunpack.c.h.b16 %v1378
    %v2196 = vunpack.c.l.b16 %v1379
    %v2197 = vunpack.c.h.b16 %v1379
    %v2198 = vunpack.c.l.b16 %v1380
    %v2199 = vunpack.c.h.b16 %v1380
    %v2200 = vunpack.c.l.b16 %v1381
    %v2201 = vunpack.c.h.b16 %v1381
    %v2202 = vunpack.c.l.b16 %v1382
    %v2203 = vunpack.c.h.b16 %v1382
    %v2204 = vpack.c.b16 %v2078, %v2076
    %v2205 = vpack.c.b16 %v2079, %v2077
    %v2206 = vpack.c.b16 %v2082, %v2080
    %v2207 = vpack.c.b16 %v2083, %v2081
    %v2208 = vpack.c.b16 %v2086, %v2084
    %v2209 = vpack.c.b16 %v2087, %v2085
    %v2210 = vpack.c.b16 %v2090, %v2088
    %v2211 = vpack.c.b16 %v2091, %v2089
    %v2212 = vpack.c.b16 %v2094, %v2092
    %v2213 = vpack.c.b16 %v2095, %v2093
    %v2214 = vpack.c.b16 %v2098, %v2096
    %v2215 = vpack.c.b16 %v2099, %v2097
    %v2216 = vpack.c.b16 %v2102, %v2100
    %v2217 = vpack.c.b16 %v2103, %v2101
    %v2218 = vpack.c.b16 %v2106, %v2104
    %v2219 = vpack.c.b16 %v2107, %v2105
    %v2220 = vpack.c.b16 %v2110, %v2108
    %v2221 = vpack.c.b16 %v2111, %v2109
    %v2222 = vpack.c.b16 %v2114, %v2112
    %v2223 = vpack.c.b16 %v2115, %v2113
    %v2224 = vpack.c.b16 %v2118, %v2116
    %v2225 = vpack.c.b16 %v2119, %v2117
    %v2226 = vpack.c.b16 %v2122, %v2120
    %v2227 = vpack.c.b16 %v2123, %v2121
    %v2228 = vpack.c.b16 %v2126, %v2124
    %v2229 = vpack.c.b16 %v2127, %v2125
    %v2230 = vpack.c.b16 %v2130, %v2128
    %v2231 = vpack.c.b16 %v2131, %v2129
    %v2232 = vpack.c.b16 %v2134, %v2132
    %v2233 = vpack.c.b16 %v2135, %v2133
    %v2234 = vpack.c.b16 %v2138, %v2136
    %v2235 = vpack.c.b16 %v2139, %v2137
    %v2236 = vpack.c.b16 %v2142, %v2140
    %v2237 = vpack.c.b16 %v2143, %v2141
    %v2238 = vpack.c.b16 %v2146, %v2144
    %v2239 = vpack.c.b16 %v2147, %v2145
    %v2240 = vpack.c.b16 %v2150, %v2148
    %v2241 = vpack.c.b16 %v2151, %v2149
    %v2242 = vpack.c.b16 %v2154, %v2152
    %v2243 = vpack.c.b16 %v2155, %v2153
    %v2244 = vpack.c.b16 %v2158, %v2156
    %v2245 = vpack.c.b16 %v2159, %v2157
    %v2246 = vpack.c.b16 %v2162, %v2160
    %v2247 = vpack.c.b16 %v2163, %v2161
    %v2248 = vpack.c.b16 %v2166, %v2164
    %v2249 = vpack.c.b16 %v2167, %v2165
    %v2250 = vpack.c.b16 %v2170, %v2168
    %v2251 = vpack.c.b16 %v2171, %v2169
    %v2252 = vpack.c.b16 %v2174, %v2172
    %v2253 = vpack.c.b16 %v2175, %v2173
    %v2254 = vpack.c.b16 %v2178, %v2176
    %v2255 = vpack.c.b16 %v2179, %v2177
    %v2256 = vpack.c.b16 %v2182, %v2180
    %v2257 = vpack.c.b16 %v2183, %v2181
    %v2258 = vpack.c.b16 %v2186, %v2184
    %v2259 = vpack.c.b16 %v2187, %v2185
    %v2260 = vpack.c.b16 %v2190, %v2188
    %v2261 = vpack.c.b16 %v2191, %v2189
    %v2262 = vpack.c.b16 %v2194, %v2192
    %v2263 = vpack.c.b16 %v2195, %v2193
    %v2264 = vpack.c.b16 %v2198, %v2196
    %v2265 = vpack.c.b16 %v2199, %v2197
    %v2266 = vpack.c.b16 %v2202, %v2200
    %v2267 = vpack.c.b16 %v2203, %v2201
    %2332 = vmatprep.subr.bf16.mxu0 %v2219
    %2333 = vmatpush1.bf16.msra.mxu0 %v2218
    %2334 = vmatprep.subr.bf16.mxu0 %v2217
    %2335 = vmatpush1.bf16.msra.mxu0 %v2216
    %2336 = vmatprep.subr.bf16.mxu0 %v2215
    %2337 = vmatpush1.bf16.msra.mxu0 %v2214
    %2338 = vmatprep.subr.bf16.mxu0 %v2213
    %2339 = vmatpush1.bf16.msra.mxu0 %v2212
    %2340 = vmatprep.subr.bf16.mxu0 %v2211
    %2341 = vmatpush1.bf16.msra.mxu0 %v2210
    %2342 = vmatprep.subr.bf16.mxu0 %v2209
    %2343 = vmatpush1.bf16.msra.mxu0 %v2208
    %2344 = vmatprep.subr.bf16.mxu0 %v2207
    %2345 = vmatpush1.bf16.msra.mxu0 %v2206
    %2346 = vmatprep.subr.bf16.mxu0 %v2205
    %2347 = vmatpush1.bf16.msra.mxu0 %v2204
    %2348 = vmatprep.subr.bf16.mxu0 %v2235
    %2349 = vmatpush2.bf16.msra.mxu0 %v2234
    %2350 = vmatprep.subr.bf16.mxu0 %v2233
    %2351 = vmatpush2.bf16.msra.mxu0 %v2232
    %2352 = vmatprep.subr.bf16.mxu0 %v2231
    %2353 = vmatpush2.bf16.msra.mxu0 %v2230
    %2354 = vmatprep.subr.bf16.mxu0 %v2229
    %2355 = vmatpush2.bf16.msra.mxu0 %v2228
    %2356 = vmatprep.subr.bf16.mxu0 %v2227
    %2357 = vmatpush2.bf16.msra.mxu0 %v2226
    %2358 = vmatprep.subr.bf16.mxu0 %v2225
    %2359 = vmatpush2.bf16.msra.mxu0 %v2224
    %2360 = vmatprep.subr.bf16.mxu0 %v2223
    %2361 = vmatpush2.bf16.msra.mxu0 %v2222
    %2362 = vmatprep.subr.bf16.mxu0 %v2221
    %2363 = vmatpush2.bf16.msra.mxu0 %v2220
    %2364 = vmatprep.mubr.bf16.mxu0 %v1998
    %2365 = vmatmul.mubr.bf16.gmra.mxu0 %v1997
    %v2366 = vpop.f32.mrf.mxu0
    %v2367 = vadd.f32 %v2005, %v2366
    %v2368 = vpop.f32.mrf.mxu0
    %v2369 = vadd.f32 %v2009, %v2368
    %v2370 = vpop.f32.mrf.mxu0
    %v2371 = vpop.f32.mrf.mxu0
    %2372 = vdwg.mxu0
    %2373 = vmatprep.subr.bf16.mxu0 %v2251
    %2374 = vmatpush1.bf16.msra.mxu0 %v2250
    %2375 = vmatprep.subr.bf16.mxu0 %v2249
    %2376 = vmatpush1.bf16.msra.mxu0 %v2248
    %2377 = vmatprep.subr.bf16.mxu0 %v2247
    %2378 = vmatpush1.bf16.msra.mxu0 %v2246
    %2379 = vmatprep.subr.bf16.mxu0 %v2245
    %2380 = vmatpush1.bf16.msra.mxu0 %v2244
    %2381 = vmatprep.subr.bf16.mxu0 %v2243
    %2382 = vmatpush1.bf16.msra.mxu0 %v2242
    %2383 = vmatprep.subr.bf16.mxu0 %v2241
    %2384 = vmatpush1.bf16.msra.mxu0 %v2240
    %2385 = vmatprep.subr.bf16.mxu0 %v2239
    %2386 = vmatpush1.bf16.msra.mxu0 %v2238
    %2387 = vmatprep.subr.bf16.mxu0 %v2237
    %2388 = vmatpush1.bf16.msra.mxu0 %v2236
    %2389 = vmatprep.subr.bf16.mxu0 %v2267
    %2390 = vmatpush2.bf16.msra.mxu0 %v2266
    %2391 = vmatprep.subr.bf16.mxu0 %v2265
    %2392 = vmatpush2.bf16.msra.mxu0 %v2264
    %2393 = vmatprep.subr.bf16.mxu0 %v2263
    %2394 = vmatpush2.bf16.msra.mxu0 %v2262
    %2395 = vmatprep.subr.bf16.mxu0 %v2261
    %2396 = vmatpush2.bf16.msra.mxu0 %v2260
    %2397 = vmatprep.subr.bf16.mxu0 %v2259
    %2398 = vmatpush2.bf16.msra.mxu0 %v2258
    %2399 = vmatprep.subr.bf16.mxu0 %v2257
    %2400 = vmatpush2.bf16.msra.mxu0 %v2256
    %2401 = vmatprep.subr.bf16.mxu0 %v2255
    %2402 = vmatpush2.bf16.msra.mxu0 %v2254
    %2403 = vmatprep.subr.bf16.mxu0 %v2253
    %2404 = vmatpush2.bf16.msra.mxu0 %v2252
    %2405 = vmatprep.mubr.bf16.mxu0 %v2000
    %2406 = vmatmul.mubr.bf16.gmra.mxu0 %v1999
    %v2407 = vpop.f32.mrf.mxu0
    %v2408 = vadd.f32 %v2367, %v2407
    %v2409 = vpop.f32.mrf.mxu0
    %v2410 = vadd.f32 %v2369, %v2409
    %v2411 = vpop.f32.mrf.mxu0
    %v2412 = vpop.f32.mrf.mxu0
    %2413 = vdwg.mxu0
    %v2414 = vmul.f32 %v1991, %v2408
    %v2415 = vmul.f32 %v1993, %v2410
    %v2416 = vtanh.pop %v2414
    %v2417 = vtanh.pop %v2415
    %v2418 = vpack.c.bf16 %v2416, %v2416
    %v2419 = vpack.c.bf16 %v2417, %v2417
    %v2421 = vlaneseq
    %v2422 = vshrl.u32 %v2421, 7
    %v2423 = vsub.s32 0, %v2422
    %v2424 = vrot.slane %v1448, %v2423
    %v2425 = vlaneseq
    %v2426 = vshrl.u32 %v2425, 7
    %v2427 = vsub.s32 1, %v2426
    %v2428 = vrot.slane %v1448, %v2427
    %v2429 = vlaneseq
    %v2430 = vshrl.u32 %v2429, 7
    %v2431 = vsub.s32 2, %v2430
    %v2432 = vrot.slane %v1448, %v2431
    %v2433 = vlaneseq
    %v2434 = vshrl.u32 %v2433, 7
    %v2435 = vsub.s32 3, %v2434
    %v2436 = vrot.slane %v1448, %v2435
    %v2505 = vunpack.c.l.b16 %v1384
    %v2506 = vunpack.c.h.b16 %v1384
    %v2507 = vunpack.c.l.b16 %v1385
    %v2508 = vunpack.c.h.b16 %v1385
    %v2509 = vunpack.c.l.b16 %v1386
    %v2510 = vunpack.c.h.b16 %v1386
    %v2511 = vunpack.c.l.b16 %v1387
    %v2512 = vunpack.c.h.b16 %v1387
    %v2513 = vunpack.c.l.b16 %v1388
    %v2514 = vunpack.c.h.b16 %v1388
    %v2515 = vunpack.c.l.b16 %v1389
    %v2516 = vunpack.c.h.b16 %v1389
    %v2517 = vunpack.c.l.b16 %v1390
    %v2518 = vunpack.c.h.b16 %v1390
    %v2519 = vunpack.c.l.b16 %v1391
    %v2520 = vunpack.c.h.b16 %v1391
    %v2521 = vunpack.c.l.b16 %v1392
    %v2522 = vunpack.c.h.b16 %v1392
    %v2523 = vunpack.c.l.b16 %v1393
    %v2524 = vunpack.c.h.b16 %v1393
    %v2525 = vunpack.c.l.b16 %v1394
    %v2526 = vunpack.c.h.b16 %v1394
    %v2527 = vunpack.c.l.b16 %v1395
    %v2528 = vunpack.c.h.b16 %v1395
    %v2529 = vunpack.c.l.b16 %v1396
    %v2530 = vunpack.c.h.b16 %v1396
    %v2531 = vunpack.c.l.b16 %v1397
    %v2532 = vunpack.c.h.b16 %v1397
    %v2533 = vunpack.c.l.b16 %v1398
    %v2534 = vunpack.c.h.b16 %v1398
    %v2535 = vunpack.c.l.b16 %v1399
    %v2536 = vunpack.c.h.b16 %v1399
    %v2537 = vunpack.c.l.b16 %v1400
    %v2538 = vunpack.c.h.b16 %v1400
    %v2539 = vunpack.c.l.b16 %v1401
    %v2540 = vunpack.c.h.b16 %v1401
    %v2541 = vunpack.c.l.b16 %v1402
    %v2542 = vunpack.c.h.b16 %v1402
    %v2543 = vunpack.c.l.b16 %v1403
    %v2544 = vunpack.c.h.b16 %v1403
    %v2545 = vunpack.c.l.b16 %v1404
    %v2546 = vunpack.c.h.b16 %v1404
    %v2547 = vunpack.c.l.b16 %v1405
    %v2548 = vunpack.c.h.b16 %v1405
    %v2549 = vunpack.c.l.b16 %v1406
    %v2550 = vunpack.c.h.b16 %v1406
    %v2551 = vunpack.c.l.b16 %v1407
    %v2552 = vunpack.c.h.b16 %v1407
    %v2553 = vunpack.c.l.b16 %v1408
    %v2554 = vunpack.c.h.b16 %v1408
    %v2555 = vunpack.c.l.b16 %v1409
    %v2556 = vunpack.c.h.b16 %v1409
    %v2557 = vunpack.c.l.b16 %v1410
    %v2558 = vunpack.c.h.b16 %v1410
    %v2559 = vunpack.c.l.b16 %v1411
    %v2560 = vunpack.c.h.b16 %v1411
    %v2561 = vunpack.c.l.b16 %v1412
    %v2562 = vunpack.c.h.b16 %v1412
    %v2563 = vunpack.c.l.b16 %v1413
    %v2564 = vunpack.c.h.b16 %v1413
    %v2565 = vunpack.c.l.b16 %v1414
    %v2566 = vunpack.c.h.b16 %v1414
    %v2567 = vunpack.c.l.b16 %v1415
    %v2568 = vunpack.c.h.b16 %v1415
    %v2569 = vunpack.c.l.b16 %v1416
    %v2570 = vunpack.c.h.b16 %v1416
    %v2571 = vunpack.c.l.b16 %v1417
    %v2572 = vunpack.c.h.b16 %v1417
    %v2573 = vunpack.c.l.b16 %v1418
    %v2574 = vunpack.c.h.b16 %v1418
    %v2575 = vunpack.c.l.b16 %v1419
    %v2576 = vunpack.c.h.b16 %v1419
    %v2577 = vunpack.c.l.b16 %v1420
    %v2578 = vunpack.c.h.b16 %v1420
    %v2579 = vunpack.c.l.b16 %v1421
    %v2580 = vunpack.c.h.b16 %v1421
    %v2581 = vunpack.c.l.b16 %v1422
    %v2582 = vunpack.c.h.b16 %v1422
    %v2583 = vunpack.c.l.b16 %v1423
    %v2584 = vunpack.c.h.b16 %v1423
    %v2585 = vunpack.c.l.b16 %v1424
    %v2586 = vunpack.c.h.b16 %v1424
    %v2587 = vunpack.c.l.b16 %v1425
    %v2588 = vunpack.c.h.b16 %v1425
    %v2589 = vunpack.c.l.b16 %v1426
    %v2590 = vunpack.c.h.b16 %v1426
    %v2591 = vunpack.c.l.b16 %v1427
    %v2592 = vunpack.c.h.b16 %v1427
    %v2593 = vunpack.c.l.b16 %v1428
    %v2594 = vunpack.c.h.b16 %v1428
    %v2595 = vunpack.c.l.b16 %v1429
    %v2596 = vunpack.c.h.b16 %v1429
    %v2597 = vunpack.c.l.b16 %v1430
    %v2598 = vunpack.c.h.b16 %v1430
    %v2599 = vunpack.c.l.b16 %v1431
    %v2600 = vunpack.c.h.b16 %v1431
    %v2601 = vunpack.c.l.b16 %v1432
    %v2602 = vunpack.c.h.b16 %v1432
    %v2603 = vunpack.c.l.b16 %v1433
    %v2604 = vunpack.c.h.b16 %v1433
    %v2605 = vunpack.c.l.b16 %v1434
    %v2606 = vunpack.c.h.b16 %v1434
    %v2607 = vunpack.c.l.b16 %v1435
    %v2608 = vunpack.c.h.b16 %v1435
    %v2609 = vunpack.c.l.b16 %v1436
    %v2610 = vunpack.c.h.b16 %v1436
    %v2611 = vunpack.c.l.b16 %v1437
    %v2612 = vunpack.c.h.b16 %v1437
    %v2613 = vunpack.c.l.b16 %v1438
    %v2614 = vunpack.c.h.b16 %v1438
    %v2615 = vunpack.c.l.b16 %v1439
    %v2616 = vunpack.c.h.b16 %v1439
    %v2617 = vunpack.c.l.b16 %v1440
    %v2618 = vunpack.c.h.b16 %v1440
    %v2619 = vunpack.c.l.b16 %v1441
    %v2620 = vunpack.c.h.b16 %v1441
    %v2621 = vunpack.c.l.b16 %v1442
    %v2622 = vunpack.c.h.b16 %v1442
    %v2623 = vunpack.c.l.b16 %v1443
    %v2624 = vunpack.c.h.b16 %v1443
    %v2625 = vunpack.c.l.b16 %v1444
    %v2626 = vunpack.c.h.b16 %v1444
    %v2627 = vunpack.c.l.b16 %v1445
    %v2628 = vunpack.c.h.b16 %v1445
    %v2629 = vunpack.c.l.b16 %v1446
    %v2630 = vunpack.c.h.b16 %v1446
    %v2631 = vunpack.c.l.b16 %v1447
    %v2632 = vunpack.c.h.b16 %v1447
    %v2633 = vpack.c.b16 %v2509, %v2505
    %v2634 = vpack.c.b16 %v2510, %v2506
    %v2635 = vpack.c.b16 %v2511, %v2507
    %v2636 = vpack.c.b16 %v2512, %v2508
    %v2637 = vpack.c.b16 %v2517, %v2513
    %v2638 = vpack.c.b16 %v2518, %v2514
    %v2639 = vpack.c.b16 %v2519, %v2515
    %v2640 = vpack.c.b16 %v2520, %v2516
    %v2641 = vpack.c.b16 %v2525, %v2521
    %v2642 = vpack.c.b16 %v2526, %v2522
    %v2643 = vpack.c.b16 %v2527, %v2523
    %v2644 = vpack.c.b16 %v2528, %v2524
    %v2645 = vpack.c.b16 %v2533, %v2529
    %v2646 = vpack.c.b16 %v2534, %v2530
    %v2647 = vpack.c.b16 %v2535, %v2531
    %v2648 = vpack.c.b16 %v2536, %v2532
    %v2649 = vpack.c.b16 %v2541, %v2537
    %v2650 = vpack.c.b16 %v2542, %v2538
    %v2651 = vpack.c.b16 %v2543, %v2539
    %v2652 = vpack.c.b16 %v2544, %v2540
    %v2653 = vpack.c.b16 %v2549, %v2545
    %v2654 = vpack.c.b16 %v2550, %v2546
    %v2655 = vpack.c.b16 %v2551, %v2547
    %v2656 = vpack.c.b16 %v2552, %v2548
    %v2657 = vpack.c.b16 %v2557, %v2553
    %v2658 = vpack.c.b16 %v2558, %v2554
    %v2659 = vpack.c.b16 %v2559, %v2555
    %v2660 = vpack.c.b16 %v2560, %v2556
    %v2661 = vpack.c.b16 %v2565, %v2561
    %v2662 = vpack.c.b16 %v2566, %v2562
    %v2663 = vpack.c.b16 %v2567, %v2563
    %v2664 = vpack.c.b16 %v2568, %v2564
    %v2665 = vpack.c.b16 %v2573, %v2569
    %v2666 = vpack.c.b16 %v2574, %v2570
    %v2667 = vpack.c.b16 %v2575, %v2571
    %v2668 = vpack.c.b16 %v2576, %v2572
    %v2669 = vpack.c.b16 %v2581, %v2577
    %v2670 = vpack.c.b16 %v2582, %v2578
    %v2671 = vpack.c.b16 %v2583, %v2579
    %v2672 = vpack.c.b16 %v2584, %v2580
    %v2673 = vpack.c.b16 %v2589, %v2585
    %v2674 = vpack.c.b16 %v2590, %v2586
    %v2675 = vpack.c.b16 %v2591, %v2587
    %v2676 = vpack.c.b16 %v2592, %v2588
    %v2677 = vpack.c.b16 %v2597, %v2593
    %v2678 = vpack.c.b16 %v2598, %v2594
    %v2679 = vpack.c.b16 %v2599, %v2595
    %v2680 = vpack.c.b16 %v2600, %v2596
    %v2681 = vpack.c.b16 %v2605, %v2601
    %v2682 = vpack.c.b16 %v2606, %v2602
    %v2683 = vpack.c.b16 %v2607, %v2603
    %v2684 = vpack.c.b16 %v2608, %v2604
    %v2685 = vpack.c.b16 %v2613, %v2609
    %v2686 = vpack.c.b16 %v2614, %v2610
    %v2687 = vpack.c.b16 %v2615, %v2611
    %v2688 = vpack.c.b16 %v2616, %v2612
    %v2689 = vpack.c.b16 %v2621, %v2617
    %v2690 = vpack.c.b16 %v2622, %v2618
    %v2691 = vpack.c.b16 %v2623, %v2619
    %v2692 = vpack.c.b16 %v2624, %v2620
    %v2693 = vpack.c.b16 %v2629, %v2625
    %v2694 = vpack.c.b16 %v2630, %v2626
    %v2695 = vpack.c.b16 %v2631, %v2627
    %v2696 = vpack.c.b16 %v2632, %v2628
    %2761 = vmatprep.subr.bf16.mxu0 %v2662
    %2762 = vmatpush1.bf16.msra.mxu0 %v2661
    %2763 = vmatprep.subr.bf16.mxu0 %v2658
    %2764 = vmatpush1.bf16.msra.mxu0 %v2657
    %2765 = vmatprep.subr.bf16.mxu0 %v2654
    %2766 = vmatpush1.bf16.msra.mxu0 %v2653
    %2767 = vmatprep.subr.bf16.mxu0 %v2650
    %2768 = vmatpush1.bf16.msra.mxu0 %v2649
    %2769 = vmatprep.subr.bf16.mxu0 %v2646
    %2770 = vmatpush1.bf16.msra.mxu0 %v2645
    %2771 = vmatprep.subr.bf16.mxu0 %v2642
    %2772 = vmatpush1.bf16.msra.mxu0 %v2641
    %2773 = vmatprep.subr.bf16.mxu0 %v2638
    %2774 = vmatpush1.bf16.msra.mxu0 %v2637
    %2775 = vmatprep.subr.bf16.mxu0 %v2634
    %2776 = vmatpush1.bf16.msra.mxu0 %v2633
    %2777 = vmatprep.subr.bf16.mxu0 %v2694
    %2778 = vmatpush2.bf16.msra.mxu0 %v2693
    %2779 = vmatprep.subr.bf16.mxu0 %v2690
    %2780 = vmatpush2.bf16.msra.mxu0 %v2689
    %2781 = vmatprep.subr.bf16.mxu0 %v2686
    %2782 = vmatpush2.bf16.msra.mxu0 %v2685
    %2783 = vmatprep.subr.bf16.mxu0 %v2682
    %2784 = vmatpush2.bf16.msra.mxu0 %v2681
    %2785 = vmatprep.subr.bf16.mxu0 %v2678
    %2786 = vmatpush2.bf16.msra.mxu0 %v2677
    %2787 = vmatprep.subr.bf16.mxu0 %v2674
    %2788 = vmatpush2.bf16.msra.mxu0 %v2673
    %2789 = vmatprep.subr.bf16.mxu0 %v2670
    %2790 = vmatpush2.bf16.msra.mxu0 %v2669
    %2791 = vmatprep.subr.bf16.mxu0 %v2666
    %2792 = vmatpush2.bf16.msra.mxu0 %v2665
    %2793 = vmatprep.mubr.bf16.mxu0 %v2419
    %2794 = vmatmul.mubr.bf16.gmra.mxu0 %v2418
    %v2795 = vpop.f32.mrf.mxu0
    %v2796 = vadd.f32 %v2424, %v2795
    %v2797 = vpop.f32.mrf.mxu0
    %v2798 = vadd.f32 %v2428, %v2797
    %v2799 = vpop.f32.mrf.mxu0
    %v2800 = vpop.f32.mrf.mxu0
    %2801 = vdwg.mxu0
    %2802 = vmatprep.subr.bf16.mxu0 %v2664
    %2803 = vmatpush1.bf16.msra.mxu0 %v2663
    %2804 = vmatprep.subr.bf16.mxu0 %v2660
    %2805 = vmatpush1.bf16.msra.mxu0 %v2659
    %2806 = vmatprep.subr.bf16.mxu0 %v2656
    %2807 = vmatpush1.bf16.msra.mxu0 %v2655
    %2808 = vmatprep.subr.bf16.mxu0 %v2652
    %2809 = vmatpush1.bf16.msra.mxu0 %v2651
    %2810 = vmatprep.subr.bf16.mxu0 %v2648
    %2811 = vmatpush1.bf16.msra.mxu0 %v2647
    %2812 = vmatprep.subr.bf16.mxu0 %v2644
    %2813 = vmatpush1.bf16.msra.mxu0 %v2643
    %2814 = vmatprep.subr.bf16.mxu0 %v2640
    %2815 = vmatpush1.bf16.msra.mxu0 %v2639
    %2816 = vmatprep.subr.bf16.mxu0 %v2636
    %2817 = vmatpush1.bf16.msra.mxu0 %v2635
    %2818 = vmatprep.subr.bf16.mxu0 %v2696
    %2819 = vmatpush2.bf16.msra.mxu0 %v2695
    %2820 = vmatprep.subr.bf16.mxu0 %v2692
    %2821 = vmatpush2.bf16.msra.mxu0 %v2691
    %2822 = vmatprep.subr.bf16.mxu0 %v2688
    %2823 = vmatpush2.bf16.msra.mxu0 %v2687
    %2824 = vmatprep.subr.bf16.mxu0 %v2684
    %2825 = vmatpush2.bf16.msra.mxu0 %v2683
    %2826 = vmatprep.subr.bf16.mxu0 %v2680
    %2827 = vmatpush2.bf16.msra.mxu0 %v2679
    %2828 = vmatprep.subr.bf16.mxu0 %v2676
    %2829 = vmatpush2.bf16.msra.mxu0 %v2675
    %2830 = vmatprep.subr.bf16.mxu0 %v2672
    %2831 = vmatpush2.bf16.msra.mxu0 %v2671
    %2832 = vmatprep.subr.bf16.mxu0 %v2668
    %2833 = vmatpush2.bf16.msra.mxu0 %v2667
    %2834 = vmatprep.mubr.bf16.mxu0 %v2419
    %2835 = vmatmul.mubr.bf16.gmra.mxu0 %v2418
    %v2836 = vpop.f32.mrf.mxu0
    %v2837 = vadd.f32 %v2432, %v2836
    %v2838 = vpop.f32.mrf.mxu0
    %v2839 = vadd.f32 %v2436, %v2838
    %v2840 = vpop.f32.mrf.mxu0
    %v2841 = vpop.f32.mrf.mxu0
    %2842 = vdwg.mxu0
    %v2843 = vadd.f32 %v2796, %v2798
    %v2844 = vadd.f32 %v2843, %v2837
    %v2845 = vadd.f32 %v2844, %v2839
    %2846 = vadd.xlane.f32.xlu0 %v2845
    %v2847 = vpop.xlane.xlu0 %2846
    %v2848 = vrcp.pop 512.0
    %v2849 = vmul.f32 %v2847, %v2848
    %v2850 = vsub.f32 %v2796, %v2849
    %v2851 = vsub.f32 %v2798, %v2849
    %v2852 = vsub.f32 %v2837, %v2849
    %v2853 = vsub.f32 %v2839, %v2849
    %v2854 = vmul.f32 %v2850, %v2850
    %v2855 = vmul.f32 %v2851, %v2851
    %v2856 = vmul.f32 %v2852, %v2852
    %v2857 = vmul.f32 %v2853, %v2853
    %v2858 = vadd.f32 %v2854, %v2855
    %v2859 = vadd.f32 %v2858, %v2856
    %v2860 = vadd.f32 %v2859, %v2857
    %2861 = vadd.xlane.f32.xlu0 %v2860
    %v2862 = vpop.xlane.xlu0 %2861
    %v2863 = vmul.f32 %v2862, %v2848
    %v2864 = vadd.f32 %v2863, 1e-05
    %v2865 = vrsqrt.pop %v2864
    %v2866 = vmul.f32 %v2850, %v2865
    %v2867 = vmul.f32 %v2851, %v2865
    %v2868 = vmul.f32 %v2852, %v2865
    %v2869 = vmul.f32 %v2853, %v2865
    %v2871 = vlaneseq
    %v2872 = vshrl.u32 %v2871, 7
    %v2873 = vsub.s32 0, %v2872
    %v2874 = vrot.slane %v1449, %v2873
    %v2875 = vlaneseq
    %v2876 = vshrl.u32 %v2875, 7
    %v2877 = vsub.s32 1, %v2876
    %v2878 = vrot.slane %v1449, %v2877
    %v2879 = vlaneseq
    %v2880 = vshrl.u32 %v2879, 7
    %v2881 = vsub.s32 2, %v2880
    %v2882 = vrot.slane %v1449, %v2881
    %v2883 = vlaneseq
    %v2884 = vshrl.u32 %v2883, 7
    %v2885 = vsub.s32 3, %v2884
    %v2886 = vrot.slane %v1449, %v2885
    %v2891 = vmul.f32 %v2866, %v2874
    %v2892 = vmul.f32 %v2867, %v2878
    %v2893 = vmul.f32 %v2868, %v2882
    %v2894 = vmul.f32 %v2869, %v2886
    %v2896 = vlaneseq
    %v2897 = vshrl.u32 %v2896, 7
    %v2898 = vsub.s32 0, %v2897
    %v2899 = vrot.slane %v1450, %v2898
    %v2900 = vlaneseq
    %v2901 = vshrl.u32 %v2900, 7
    %v2902 = vsub.s32 1, %v2901
    %v2903 = vrot.slane %v1450, %v2902
    %v2904 = vlaneseq
    %v2905 = vshrl.u32 %v2904, 7
    %v2906 = vsub.s32 2, %v2905
    %v2907 = vrot.slane %v1450, %v2906
    %v2908 = vlaneseq
    %v2909 = vshrl.u32 %v2908, 7
    %v2910 = vsub.s32 3, %v2909
    %v2911 = vrot.slane %v1450, %v2910
    %v2916 = vadd.f32 %v2891, %v2899
    %v2917 = vadd.f32 %v2892, %v2903
    %v2918 = vadd.f32 %v2893, %v2907
    %v2919 = vadd.f32 %v2894, %v2911
    %v2920 = vmax.f32 %v2916, 0.0
    %v2921 = vmax.f32 %v2917, 0.0
    %v2922 = vmax.f32 %v2918, 0.0
    %v2923 = vmax.f32 %v2919, 0.0
    %v2924 = vpack.c.bf16 %v2920, %v2920
    %v2925 = vpack.c.bf16 %v2921, %v2921
    %v2926 = vpack.c.bf16 %v2922, %v2922
    %v2927 = vpack.c.bf16 %v2923, %v2923
    %v2929 = vlaneseq
    %v2930 = vshrl.u32 %v2929, 7
    %v2931 = vsub.s32 0, %v2930
    %v2932 = vrot.slane %v1579, %v2931
    %v2933 = vlaneseq
    %v2934 = vshrl.u32 %v2933, 7
    %v2935 = vsub.s32 1, %v2934
    %v2936 = vrot.slane %v1579, %v2935
    %v2937 = vlaneseq
    %v2938 = vshrl.u32 %v2937, 7
    %v2939 = vsub.s32 2, %v2938
    %v2940 = vrot.slane %v1579, %v2939
    %v2941 = vlaneseq
    %v2942 = vshrl.u32 %v2941, 7
    %v2943 = vsub.s32 3, %v2942
    %v2944 = vrot.slane %v1579, %v2943
    %v3077 = vunpack.c.l.b16 %v1451
    %v3078 = vunpack.c.h.b16 %v1451
    %v3079 = vunpack.c.l.b16 %v1452
    %v3080 = vunpack.c.h.b16 %v1452
    %v3081 = vunpack.c.l.b16 %v1453
    %v3082 = vunpack.c.h.b16 %v1453
    %v3083 = vunpack.c.l.b16 %v1454
    %v3084 = vunpack.c.h.b16 %v1454
    %v3085 = vunpack.c.l.b16 %v1455
    %v3086 = vunpack.c.h.b16 %v1455
    %v3087 = vunpack.c.l.b16 %v1456
    %v3088 = vunpack.c.h.b16 %v1456
    %v3089 = vunpack.c.l.b16 %v1457
    %v3090 = vunpack.c.h.b16 %v1457
    %v3091 = vunpack.c.l.b16 %v1458
    %v3092 = vunpack.c.h.b16 %v1458
    %v3093 = vunpack.c.l.b16 %v1459
    %v3094 = vunpack.c.h.b16 %v1459
    %v3095 = vunpack.c.l.b16 %v1460
    %v3096 = vunpack.c.h.b16 %v1460
    %v3097 = vunpack.c.l.b16 %v1461
    %v3098 = vunpack.c.h.b16 %v1461
    %v3099 = vunpack.c.l.b16 %v1462
    %v3100 = vunpack.c.h.b16 %v1462
    %v3101 = vunpack.c.l.b16 %v1463
    %v3102 = vunpack.c.h.b16 %v1463
    %v3103 = vunpack.c.l.b16 %v1464
    %v3104 = vunpack.c.h.b16 %v1464
    %v3105 = vunpack.c.l.b16 %v1465
    %v3106 = vunpack.c.h.b16 %v1465
    %v3107 = vunpack.c.l.b16 %v1466
    %v3108 = vunpack.c.h.b16 %v1466
    %v3109 = vunpack.c.l.b16 %v1467
    %v3110 = vunpack.c.h.b16 %v1467
    %v3111 = vunpack.c.l.b16 %v1468
    %v3112 = vunpack.c.h.b16 %v1468
    %v3113 = vunpack.c.l.b16 %v1469
    %v3114 = vunpack.c.h.b16 %v1469
    %v3115 = vunpack.c.l.b16 %v1470
    %v3116 = vunpack.c.h.b16 %v1470
    %v3117 = vunpack.c.l.b16 %v1471
    %v3118 = vunpack.c.h.b16 %v1471
    %v3119 = vunpack.c.l.b16 %v1472
    %v3120 = vunpack.c.h.b16 %v1472
    %v3121 = vunpack.c.l.b16 %v1473
    %v3122 = vunpack.c.h.b16 %v1473
    %v3123 = vunpack.c.l.b16 %v1474
    %v3124 = vunpack.c.h.b16 %v1474
    %v3125 = vunpack.c.l.b16 %v1475
    %v3126 = vunpack.c.h.b16 %v1475
    %v3127 = vunpack.c.l.b16 %v1476
    %v3128 = vunpack.c.h.b16 %v1476
    %v3129 = vunpack.c.l.b16 %v1477
    %v3130 = vunpack.c.h.b16 %v1477
    %v3131 = vunpack.c.l.b16 %v1478
    %v3132 = vunpack.c.h.b16 %v1478
    %v3133 = vunpack.c.l.b16 %v1479
    %v3134 = vunpack.c.h.b16 %v1479
    %v3135 = vunpack.c.l.b16 %v1480
    %v3136 = vunpack.c.h.b16 %v1480
    %v3137 = vunpack.c.l.b16 %v1481
    %v3138 = vunpack.c.h.b16 %v1481
    %v3139 = vunpack.c.l.b16 %v1482
    %v3140 = vunpack.c.h.b16 %v1482
    %v3141 = vunpack.c.l.b16 %v1483
    %v3142 = vunpack.c.h.b16 %v1483
    %v3143 = vunpack.c.l.b16 %v1484
    %v3144 = vunpack.c.h.b16 %v1484
    %v3145 = vunpack.c.l.b16 %v1485
    %v3146 = vunpack.c.h.b16 %v1485
    %v3147 = vunpack.c.l.b16 %v1486
    %v3148 = vunpack.c.h.b16 %v1486
    %v3149 = vunpack.c.l.b16 %v1487
    %v3150 = vunpack.c.h.b16 %v1487
    %v3151 = vunpack.c.l.b16 %v1488
    %v3152 = vunpack.c.h.b16 %v1488
    %v3153 = vunpack.c.l.b16 %v1489
    %v3154 = vunpack.c.h.b16 %v1489
    %v3155 = vunpack.c.l.b16 %v1490
    %v3156 = vunpack.c.h.b16 %v1490
    %v3157 = vunpack.c.l.b16 %v1491
    %v3158 = vunpack.c.h.b16 %v1491
    %v3159 = vunpack.c.l.b16 %v1492
    %v3160 = vunpack.c.h.b16 %v1492
    %v3161 = vunpack.c.l.b16 %v1493
    %v3162 = vunpack.c.h.b16 %v1493
    %v3163 = vunpack.c.l.b16 %v1494
    %v3164 = vunpack.c.h.b16 %v1494
    %v3165 = vunpack.c.l.b16 %v1495
    %v3166 = vunpack.c.h.b16 %v1495
    %v3167 = vunpack.c.l.b16 %v1496
    %v3168 = vunpack.c.h.b16 %v1496
    %v3169 = vunpack.c.l.b16 %v1497
    %v3170 = vunpack.c.h.b16 %v1497
    %v3171 = vunpack.c.l.b16 %v1498
    %v3172 = vunpack.c.h.b16 %v1498
    %v3173 = vunpack.c.l.b16 %v1499
    %v3174 = vunpack.c.h.b16 %v1499
    %v3175 = vunpack.c.l.b16 %v1500
    %v3176 = vunpack.c.h.b16 %v1500
    %v3177 = vunpack.c.l.b16 %v1501
    %v3178 = vunpack.c.h.b16 %v1501
    %v3179 = vunpack.c.l.b16 %v1502
    %v3180 = vunpack.c.h.b16 %v1502
    %v3181 = vunpack.c.l.b16 %v1503
    %v3182 = vunpack.c.h.b16 %v1503
    %v3183 = vunpack.c.l.b16 %v1504
    %v3184 = vunpack.c.h.b16 %v1504
    %v3185 = vunpack.c.l.b16 %v1505
    %v3186 = vunpack.c.h.b16 %v1505
    %v3187 = vunpack.c.l.b16 %v1506
    %v3188 = vunpack.c.h.b16 %v1506
    %v3189 = vunpack.c.l.b16 %v1507
    %v3190 = vunpack.c.h.b16 %v1507
    %v3191 = vunpack.c.l.b16 %v1508
    %v3192 = vunpack.c.h.b16 %v1508
    %v3193 = vunpack.c.l.b16 %v1509
    %v3194 = vunpack.c.h.b16 %v1509
    %v3195 = vunpack.c.l.b16 %v1510
    %v3196 = vunpack.c.h.b16 %v1510
    %v3197 = vunpack.c.l.b16 %v1511
    %v3198 = vunpack.c.h.b16 %v1511
    %v3199 = vunpack.c.l.b16 %v1512
    %v3200 = vunpack.c.h.b16 %v1512
    %v3201 = vunpack.c.l.b16 %v1513
    %v3202 = vunpack.c.h.b16 %v1513
    %v3203 = vunpack.c.l.b16 %v1514
    %v3204 = vunpack.c.h.b16 %v1514
    %v3205 = vunpack.c.l.b16 %v1515
    %v3206 = vunpack.c.h.b16 %v1515
    %v3207 = vunpack.c.l.b16 %v1516
    %v3208 = vunpack.c.h.b16 %v1516
    %v3209 = vunpack.c.l.b16 %v1517
    %v3210 = vunpack.c.h.b16 %v1517
    %v3211 = vunpack.c.l.b16 %v1518
    %v3212 = vunpack.c.h.b16 %v1518
    %v3213 = vunpack.c.l.b16 %v1519
    %v3214 = vunpack.c.h.b16 %v1519
    %v3215 = vunpack.c.l.b16 %v1520
    %v3216 = vunpack.c.h.b16 %v1520
    %v3217 = vunpack.c.l.b16 %v1521
    %v3218 = vunpack.c.h.b16 %v1521
    %v3219 = vunpack.c.l.b16 %v1522
    %v3220 = vunpack.c.h.b16 %v1522
    %v3221 = vunpack.c.l.b16 %v1523
    %v3222 = vunpack.c.h.b16 %v1523
    %v3223 = vunpack.c.l.b16 %v1524
    %v3224 = vunpack.c.h.b16 %v1524
    %v3225 = vunpack.c.l.b16 %v1525
    %v3226 = vunpack.c.h.b16 %v1525
    %v3227 = vunpack.c.l.b16 %v1526
    %v3228 = vunpack.c.h.b16 %v1526
    %v3229 = vunpack.c.l.b16 %v1527
    %v3230 = vunpack.c.h.b16 %v1527
    %v3231 = vunpack.c.l.b16 %v1528
    %v3232 = vunpack.c.h.b16 %v1528
    %v3233 = vunpack.c.l.b16 %v1529
    %v3234 = vunpack.c.h.b16 %v1529
    %v3235 = vunpack.c.l.b16 %v1530
    %v3236 = vunpack.c.h.b16 %v1530
    %v3237 = vunpack.c.l.b16 %v1531
    %v3238 = vunpack.c.h.b16 %v1531
    %v3239 = vunpack.c.l.b16 %v1532
    %v3240 = vunpack.c.h.b16 %v1532
    %v3241 = vunpack.c.l.b16 %v1533
    %v3242 = vunpack.c.h.b16 %v1533
    %v3243 = vunpack.c.l.b16 %v1534
    %v3244 = vunpack.c.h.b16 %v1534
    %v3245 = vunpack.c.l.b16 %v1535
    %v3246 = vunpack.c.h.b16 %v1535
    %v3247 = vunpack.c.l.b16 %v1536
    %v3248 = vunpack.c.h.b16 %v1536
    %v3249 = vunpack.c.l.b16 %v1537
    %v3250 = vunpack.c.h.b16 %v1537
    %v3251 = vunpack.c.l.b16 %v1538
    %v3252 = vunpack.c.h.b16 %v1538
    %v3253 = vunpack.c.l.b16 %v1539
    %v3254 = vunpack.c.h.b16 %v1539
    %v3255 = vunpack.c.l.b16 %v1540
    %v3256 = vunpack.c.h.b16 %v1540
    %v3257 = vunpack.c.l.b16 %v1541
    %v3258 = vunpack.c.h.b16 %v1541
    %v3259 = vunpack.c.l.b16 %v1542
    %v3260 = vunpack.c.h.b16 %v1542
    %v3261 = vunpack.c.l.b16 %v1543
    %v3262 = vunpack.c.h.b16 %v1543
    %v3263 = vunpack.c.l.b16 %v1544
    %v3264 = vunpack.c.h.b16 %v1544
    %v3265 = vunpack.c.l.b16 %v1545
    %v3266 = vunpack.c.h.b16 %v1545
    %v3267 = vunpack.c.l.b16 %v1546
    %v3268 = vunpack.c.h.b16 %v1546
    %v3269 = vunpack.c.l.b16 %v1547
    %v3270 = vunpack.c.h.b16 %v1547
    %v3271 = vunpack.c.l.b16 %v1548
    %v3272 = vunpack.c.h.b16 %v1548
    %v3273 = vunpack.c.l.b16 %v1549
    %v3274 = vunpack.c.h.b16 %v1549
    %v3275 = vunpack.c.l.b16 %v1550
    %v3276 = vunpack.c.h.b16 %v1550
    %v3277 = vunpack.c.l.b16 %v1551
    %v3278 = vunpack.c.h.b16 %v1551
    %v3279 = vunpack.c.l.b16 %v1552
    %v3280 = vunpack.c.h.b16 %v1552
    %v3281 = vunpack.c.l.b16 %v1553
    %v3282 = vunpack.c.h.b16 %v1553
    %v3283 = vunpack.c.l.b16 %v1554
    %v3284 = vunpack.c.h.b16 %v1554
    %v3285 = vunpack.c.l.b16 %v1555
    %v3286 = vunpack.c.h.b16 %v1555
    %v3287 = vunpack.c.l.b16 %v1556
    %v3288 = vunpack.c.h.b16 %v1556
    %v3289 = vunpack.c.l.b16 %v1557
    %v3290 = vunpack.c.h.b16 %v1557
    %v3291 = vunpack.c.l.b16 %v1558
    %v3292 = vunpack.c.h.b16 %v1558
    %v3293 = vunpack.c.l.b16 %v1559
    %v3294 = vunpack.c.h.b16 %v1559
    %v3295 = vunpack.c.l.b16 %v1560
    %v3296 = vunpack.c.h.b16 %v1560
    %v3297 = vunpack.c.l.b16 %v1561
    %v3298 = vunpack.c.h.b16 %v1561
    %v3299 = vunpack.c.l.b16 %v1562
    %v3300 = vunpack.c.h.b16 %v1562
    %v3301 = vunpack.c.l.b16 %v1563
    %v3302 = vunpack.c.h.b16 %v1563
    %v3303 = vunpack.c.l.b16 %v1564
    %v3304 = vunpack.c.h.b16 %v1564
    %v3305 = vunpack.c.l.b16 %v1565
    %v3306 = vunpack.c.h.b16 %v1565
    %v3307 = vunpack.c.l.b16 %v1566
    %v3308 = vunpack.c.h.b16 %v1566
    %v3309 = vunpack.c.l.b16 %v1567
    %v3310 = vunpack.c.h.b16 %v1567
    %v3311 = vunpack.c.l.b16 %v1568
    %v3312 = vunpack.c.h.b16 %v1568
    %v3313 = vunpack.c.l.b16 %v1569
    %v3314 = vunpack.c.h.b16 %v1569
    %v3315 = vunpack.c.l.b16 %v1570
    %v3316 = vunpack.c.h.b16 %v1570
    %v3317 = vunpack.c.l.b16 %v1571
    %v3318 = vunpack.c.h.b16 %v1571
    %v3319 = vunpack.c.l.b16 %v1572
    %v3320 = vunpack.c.h.b16 %v1572
    %v3321 = vunpack.c.l.b16 %v1573
    %v3322 = vunpack.c.h.b16 %v1573
    %v3323 = vunpack.c.l.b16 %v1574
    %v3324 = vunpack.c.h.b16 %v1574
    %v3325 = vunpack.c.l.b16 %v1575
    %v3326 = vunpack.c.h.b16 %v1575
    %v3327 = vunpack.c.l.b16 %v1576
    %v3328 = vunpack.c.h.b16 %v1576
    %v3329 = vunpack.c.l.b16 %v1577
    %v3330 = vunpack.c.h.b16 %v1577
    %v3331 = vunpack.c.l.b16 %v1578
    %v3332 = vunpack.c.h.b16 %v1578
    %v3333 = vpack.c.b16 %v3081, %v3077
    %v3334 = vpack.c.b16 %v3082, %v3078
    %v3335 = vpack.c.b16 %v3083, %v3079
    %v3336 = vpack.c.b16 %v3084, %v3080
    %v3337 = vpack.c.b16 %v3089, %v3085
    %v3338 = vpack.c.b16 %v3090, %v3086
    %v3339 = vpack.c.b16 %v3091, %v3087
    %v3340 = vpack.c.b16 %v3092, %v3088
    %v3341 = vpack.c.b16 %v3097, %v3093
    %v3342 = vpack.c.b16 %v3098, %v3094
    %v3343 = vpack.c.b16 %v3099, %v3095
    %v3344 = vpack.c.b16 %v3100, %v3096
    %v3345 = vpack.c.b16 %v3105, %v3101
    %v3346 = vpack.c.b16 %v3106, %v3102
    %v3347 = vpack.c.b16 %v3107, %v3103
    %v3348 = vpack.c.b16 %v3108, %v3104
    %v3349 = vpack.c.b16 %v3113, %v3109
    %v3350 = vpack.c.b16 %v3114, %v3110
    %v3351 = vpack.c.b16 %v3115, %v3111
    %v3352 = vpack.c.b16 %v3116, %v3112
    %v3353 = vpack.c.b16 %v3121, %v3117
    %v3354 = vpack.c.b16 %v3122, %v3118
    %v3355 = vpack.c.b16 %v3123, %v3119
    %v3356 = vpack.c.b16 %v3124, %v3120
    %v3357 = vpack.c.b16 %v3129, %v3125
    %v3358 = vpack.c.b16 %v3130, %v3126
    %v3359 = vpack.c.b16 %v3131, %v3127
    %v3360 = vpack.c.b16 %v3132, %v3128
    %v3361 = vpack.c.b16 %v3137, %v3133
    %v3362 = vpack.c.b16 %v3138, %v3134
    %v3363 = vpack.c.b16 %v3139, %v3135
    %v3364 = vpack.c.b16 %v3140, %v3136
    %v3365 = vpack.c.b16 %v3145, %v3141
    %v3366 = vpack.c.b16 %v3146, %v3142
    %v3367 = vpack.c.b16 %v3147, %v3143
    %v3368 = vpack.c.b16 %v3148, %v3144
    %v3369 = vpack.c.b16 %v3153, %v3149
    %v3370 = vpack.c.b16 %v3154, %v3150
    %v3371 = vpack.c.b16 %v3155, %v3151
    %v3372 = vpack.c.b16 %v3156, %v3152
    %v3373 = vpack.c.b16 %v3161, %v3157
    %v3374 = vpack.c.b16 %v3162, %v3158
    %v3375 = vpack.c.b16 %v3163, %v3159
    %v3376 = vpack.c.b16 %v3164, %v3160
    %v3377 = vpack.c.b16 %v3169, %v3165
    %v3378 = vpack.c.b16 %v3170, %v3166
    %v3379 = vpack.c.b16 %v3171, %v3167
    %v3380 = vpack.c.b16 %v3172, %v3168
    %v3381 = vpack.c.b16 %v3177, %v3173
    %v3382 = vpack.c.b16 %v3178, %v3174
    %v3383 = vpack.c.b16 %v3179, %v3175
    %v3384 = vpack.c.b16 %v3180, %v3176
    %v3385 = vpack.c.b16 %v3185, %v3181
    %v3386 = vpack.c.b16 %v3186, %v3182
    %v3387 = vpack.c.b16 %v3187, %v3183
    %v3388 = vpack.c.b16 %v3188, %v3184
    %v3389 = vpack.c.b16 %v3193, %v3189
    %v3390 = vpack.c.b16 %v3194, %v3190
    %v3391 = vpack.c.b16 %v3195, %v3191
    %v3392 = vpack.c.b16 %v3196, %v3192
    %v3393 = vpack.c.b16 %v3201, %v3197
    %v3394 = vpack.c.b16 %v3202, %v3198
    %v3395 = vpack.c.b16 %v3203, %v3199
    %v3396 = vpack.c.b16 %v3204, %v3200
    %v3397 = vpack.c.b16 %v3209, %v3205
    %v3398 = vpack.c.b16 %v3210, %v3206
    %v3399 = vpack.c.b16 %v3211, %v3207
    %v3400 = vpack.c.b16 %v3212, %v3208
    %v3401 = vpack.c.b16 %v3217, %v3213
    %v3402 = vpack.c.b16 %v3218, %v3214
    %v3403 = vpack.c.b16 %v3219, %v3215
    %v3404 = vpack.c.b16 %v3220, %v3216
    %v3405 = vpack.c.b16 %v3225, %v3221
    %v3406 = vpack.c.b16 %v3226, %v3222
    %v3407 = vpack.c.b16 %v3227, %v3223
    %v3408 = vpack.c.b16 %v3228, %v3224
    %v3409 = vpack.c.b16 %v3233, %v3229
    %v3410 = vpack.c.b16 %v3234, %v3230
    %v3411 = vpack.c.b16 %v3235, %v3231
    %v3412 = vpack.c.b16 %v3236, %v3232
    %v3413 = vpack.c.b16 %v3241, %v3237
    %v3414 = vpack.c.b16 %v3242, %v3238
    %v3415 = vpack.c.b16 %v3243, %v3239
    %v3416 = vpack.c.b16 %v3244, %v3240
    %v3417 = vpack.c.b16 %v3249, %v3245
    %v3418 = vpack.c.b16 %v3250, %v3246
    %v3419 = vpack.c.b16 %v3251, %v3247
    %v3420 = vpack.c.b16 %v3252, %v3248
    %v3421 = vpack.c.b16 %v3257, %v3253
    %v3422 = vpack.c.b16 %v3258, %v3254
    %v3423 = vpack.c.b16 %v3259, %v3255
    %v3424 = vpack.c.b16 %v3260, %v3256
    %v3425 = vpack.c.b16 %v3265, %v3261
    %v3426 = vpack.c.b16 %v3266, %v3262
    %v3427 = vpack.c.b16 %v3267, %v3263
    %v3428 = vpack.c.b16 %v3268, %v3264
    %v3429 = vpack.c.b16 %v3273, %v3269
    %v3430 = vpack.c.b16 %v3274, %v3270
    %v3431 = vpack.c.b16 %v3275, %v3271
    %v3432 = vpack.c.b16 %v3276, %v3272
    %v3433 = vpack.c.b16 %v3281, %v3277
    %v3434 = vpack.c.b16 %v3282, %v3278
    %v3435 = vpack.c.b16 %v3283, %v3279
    %v3436 = vpack.c.b16 %v3284, %v3280
    %v3437 = vpack.c.b16 %v3289, %v3285
    %v3438 = vpack.c.b16 %v3290, %v3286
    %v3439 = vpack.c.b16 %v3291, %v3287
    %v3440 = vpack.c.b16 %v3292, %v3288
    %v3441 = vpack.c.b16 %v3297, %v3293
    %v3442 = vpack.c.b16 %v3298, %v3294
    %v3443 = vpack.c.b16 %v3299, %v3295
    %v3444 = vpack.c.b16 %v3300, %v3296
    %v3445 = vpack.c.b16 %v3305, %v3301
    %v3446 = vpack.c.b16 %v3306, %v3302
    %v3447 = vpack.c.b16 %v3307, %v3303
    %v3448 = vpack.c.b16 %v3308, %v3304
    %v3449 = vpack.c.b16 %v3313, %v3309
    %v3450 = vpack.c.b16 %v3314, %v3310
    %v3451 = vpack.c.b16 %v3315, %v3311
    %v3452 = vpack.c.b16 %v3316, %v3312
    %v3453 = vpack.c.b16 %v3321, %v3317
    %v3454 = vpack.c.b16 %v3322, %v3318
    %v3455 = vpack.c.b16 %v3323, %v3319
    %v3456 = vpack.c.b16 %v3324, %v3320
    %v3457 = vpack.c.b16 %v3329, %v3325
    %v3458 = vpack.c.b16 %v3330, %v3326
    %v3459 = vpack.c.b16 %v3331, %v3327
    %v3460 = vpack.c.b16 %v3332, %v3328
    %3589 = vmatprep.subr.bf16.mxu0 %v3362
    %3590 = vmatpush1.bf16.msra.mxu0 %v3361
    %3591 = vmatprep.subr.bf16.mxu0 %v3358
    %3592 = vmatpush1.bf16.msra.mxu0 %v3357
    %3593 = vmatprep.subr.bf16.mxu0 %v3354
    %3594 = vmatpush1.bf16.msra.mxu0 %v3353
    %3595 = vmatprep.subr.bf16.mxu0 %v3350
    %3596 = vmatpush1.bf16.msra.mxu0 %v3349
    %3597 = vmatprep.subr.bf16.mxu0 %v3346
    %3598 = vmatpush1.bf16.msra.mxu0 %v3345
    %3599 = vmatprep.subr.bf16.mxu0 %v3342
    %3600 = vmatpush1.bf16.msra.mxu0 %v3341
    %3601 = vmatprep.subr.bf16.mxu0 %v3338
    %3602 = vmatpush1.bf16.msra.mxu0 %v3337
    %3603 = vmatprep.subr.bf16.mxu0 %v3334
    %3604 = vmatpush1.bf16.msra.mxu0 %v3333
    %3605 = vmatprep.subr.bf16.mxu0 %v3394
    %3606 = vmatpush2.bf16.msra.mxu0 %v3393
    %3607 = vmatprep.subr.bf16.mxu0 %v3390
    %3608 = vmatpush2.bf16.msra.mxu0 %v3389
    %3609 = vmatprep.subr.bf16.mxu0 %v3386
    %3610 = vmatpush2.bf16.msra.mxu0 %v3385
    %3611 = vmatprep.subr.bf16.mxu0 %v3382
    %3612 = vmatpush2.bf16.msra.mxu0 %v3381
    %3613 = vmatprep.subr.bf16.mxu0 %v3378
    %3614 = vmatpush2.bf16.msra.mxu0 %v3377
    %3615 = vmatprep.subr.bf16.mxu0 %v3374
    %3616 = vmatpush2.bf16.msra.mxu0 %v3373
    %3617 = vmatprep.subr.bf16.mxu0 %v3370
    %3618 = vmatpush2.bf16.msra.mxu0 %v3369
    %3619 = vmatprep.subr.bf16.mxu0 %v3366
    %3620 = vmatpush2.bf16.msra.mxu0 %v3365
    %3621 = vmatprep.mubr.bf16.mxu0 %v2925
    %3622 = vmatmul.mubr.bf16.gmra.mxu0 %v2924
    %v3623 = vpop.f32.mrf.mxu0
    %v3624 = vadd.f32 %v2932, %v3623
    %v3625 = vpop.f32.mrf.mxu0
    %v3626 = vadd.f32 %v2936, %v3625
    %v3627 = vpop.f32.mrf.mxu0
    %v3628 = vpop.f32.mrf.mxu0
    %3629 = vdwg.mxu0
    %3630 = vmatprep.subr.bf16.mxu0 %v3426
    %3631 = vmatpush1.bf16.msra.mxu0 %v3425
    %3632 = vmatprep.subr.bf16.mxu0 %v3422
    %3633 = vmatpush1.bf16.msra.mxu0 %v3421
    %3634 = vmatprep.subr.bf16.mxu0 %v3418
    %3635 = vmatpush1.bf16.msra.mxu0 %v3417
    %3636 = vmatprep.subr.bf16.mxu0 %v3414
    %3637 = vmatpush1.bf16.msra.mxu0 %v3413
    %3638 = vmatprep.subr.bf16.mxu0 %v3410
    %3639 = vmatpush1.bf16.msra.mxu0 %v3409
    %3640 = vmatprep.subr.bf16.mxu0 %v3406
    %3641 = vmatpush1.bf16.msra.mxu0 %v3405
    %3642 = vmatprep.subr.bf16.mxu0 %v3402
    %3643 = vmatpush1.bf16.msra.mxu0 %v3401
    %3644 = vmatprep.subr.bf16.mxu0 %v3398
    %3645 = vmatpush1.bf16.msra.mxu0 %v3397
    %3646 = vmatprep.subr.bf16.mxu0 %v3458
    %3647 = vmatpush2.bf16.msra.mxu0 %v3457
    %3648 = vmatprep.subr.bf16.mxu0 %v3454
    %3649 = vmatpush2.bf16.msra.mxu0 %v3453
    %3650 = vmatprep.subr.bf16.mxu0 %v3450
    %3651 = vmatpush2.bf16.msra.mxu0 %v3449
    %3652 = vmatprep.subr.bf16.mxu0 %v3446
    %3653 = vmatpush2.bf16.msra.mxu0 %v3445
    %3654 = vmatprep.subr.bf16.mxu0 %v3442
    %3655 = vmatpush2.bf16.msra.mxu0 %v3441
    %3656 = vmatprep.subr.bf16.mxu0 %v3438
    %3657 = vmatpush2.bf16.msra.mxu0 %v3437
    %3658 = vmatprep.subr.bf16.mxu0 %v3434
    %3659 = vmatpush2.bf16.msra.mxu0 %v3433
    %3660 = vmatprep.subr.bf16.mxu0 %v3430
    %3661 = vmatpush2.bf16.msra.mxu0 %v3429
    %3662 = vmatprep.mubr.bf16.mxu0 %v2927
    %3663 = vmatmul.mubr.bf16.gmra.mxu0 %v2926
    %v3664 = vpop.f32.mrf.mxu0
    %v3665 = vadd.f32 %v3624, %v3664
    %v3666 = vpop.f32.mrf.mxu0
    %v3667 = vadd.f32 %v3626, %v3666
    %v3668 = vpop.f32.mrf.mxu0
    %v3669 = vpop.f32.mrf.mxu0
    %3670 = vdwg.mxu0
    %3671 = vmatprep.subr.bf16.mxu0 %v3364
    %3672 = vmatpush1.bf16.msra.mxu0 %v3363
    %3673 = vmatprep.subr.bf16.mxu0 %v3360
    %3674 = vmatpush1.bf16.msra.mxu0 %v3359
    %3675 = vmatprep.subr.bf16.mxu0 %v3356
    %3676 = vmatpush1.bf16.msra.mxu0 %v3355
    %3677 = vmatprep.subr.bf16.mxu0 %v3352
    %3678 = vmatpush1.bf16.msra.mxu0 %v3351
    %3679 = vmatprep.subr.bf16.mxu0 %v3348
    %3680 = vmatpush1.bf16.msra.mxu0 %v3347
    %3681 = vmatprep.subr.bf16.mxu0 %v3344
    %3682 = vmatpush1.bf16.msra.mxu0 %v3343
    %3683 = vmatprep.subr.bf16.mxu0 %v3340
    %3684 = vmatpush1.bf16.msra.mxu0 %v3339
    %3685 = vmatprep.subr.bf16.mxu0 %v3336
    %3686 = vmatpush1.bf16.msra.mxu0 %v3335
    %3687 = vmatprep.subr.bf16.mxu0 %v3396
    %3688 = vmatpush2.bf16.msra.mxu0 %v3395
    %3689 = vmatprep.subr.bf16.mxu0 %v3392
    %3690 = vmatpush2.bf16.msra.mxu0 %v3391
    %3691 = vmatprep.subr.bf16.mxu0 %v3388
    %3692 = vmatpush2.bf16.msra.mxu0 %v3387
    %3693 = vmatprep.subr.bf16.mxu0 %v3384
    %3694 = vmatpush2.bf16.msra.mxu0 %v3383
    %3695 = vmatprep.subr.bf16.mxu0 %v3380
    %3696 = vmatpush2.bf16.msra.mxu0 %v3379
    %3697 = vmatprep.subr.bf16.mxu0 %v3376
    %3698 = vmatpush2.bf16.msra.mxu0 %v3375
    %3699 = vmatprep.subr.bf16.mxu0 %v3372
    %3700 = vmatpush2.bf16.msra.mxu0 %v3371
    %3701 = vmatprep.subr.bf16.mxu0 %v3368
    %3702 = vmatpush2.bf16.msra.mxu0 %v3367
    %3703 = vmatprep.mubr.bf16.mxu0 %v2925
    %3704 = vmatmul.mubr.bf16.gmra.mxu0 %v2924
    %v3705 = vpop.f32.mrf.mxu0
    %v3706 = vadd.f32 %v2940, %v3705
    %v3707 = vpop.f32.mrf.mxu0
    %v3708 = vadd.f32 %v2944, %v3707
    %v3709 = vpop.f32.mrf.mxu0
    %v3710 = vpop.f32.mrf.mxu0
    %3711 = vdwg.mxu0
    %3712 = vmatprep.subr.bf16.mxu0 %v3428
    %3713 = vmatpush1.bf16.msra.mxu0 %v3427
    %3714 = vmatprep.subr.bf16.mxu0 %v3424
    %3715 = vmatpush1.bf16.msra.mxu0 %v3423
    %3716 = vmatprep.subr.bf16.mxu0 %v3420
    %3717 = vmatpush1.bf16.msra.mxu0 %v3419
    %3718 = vmatprep.subr.bf16.mxu0 %v3416
    %3719 = vmatpush1.bf16.msra.mxu0 %v3415
    %3720 = vmatprep.subr.bf16.mxu0 %v3412
    %3721 = vmatpush1.bf16.msra.mxu0 %v3411
    %3722 = vmatprep.subr.bf16.mxu0 %v3408
    %3723 = vmatpush1.bf16.msra.mxu0 %v3407
    %3724 = vmatprep.subr.bf16.mxu0 %v3404
    %3725 = vmatpush1.bf16.msra.mxu0 %v3403
    %3726 = vmatprep.subr.bf16.mxu0 %v3400
    %3727 = vmatpush1.bf16.msra.mxu0 %v3399
    %3728 = vmatprep.subr.bf16.mxu0 %v3460
    %3729 = vmatpush2.bf16.msra.mxu0 %v3459
    %3730 = vmatprep.subr.bf16.mxu0 %v3456
    %3731 = vmatpush2.bf16.msra.mxu0 %v3455
    %3732 = vmatprep.subr.bf16.mxu0 %v3452
    %3733 = vmatpush2.bf16.msra.mxu0 %v3451
    %3734 = vmatprep.subr.bf16.mxu0 %v3448
    %3735 = vmatpush2.bf16.msra.mxu0 %v3447
    %3736 = vmatprep.subr.bf16.mxu0 %v3444
    %3737 = vmatpush2.bf16.msra.mxu0 %v3443
    %3738 = vmatprep.subr.bf16.mxu0 %v3440
    %3739 = vmatpush2.bf16.msra.mxu0 %v3439
    %3740 = vmatprep.subr.bf16.mxu0 %v3436
    %3741 = vmatpush2.bf16.msra.mxu0 %v3435
    %3742 = vmatprep.subr.bf16.mxu0 %v3432
    %3743 = vmatpush2.bf16.msra.mxu0 %v3431
    %3744 = vmatprep.mubr.bf16.mxu0 %v2927
    %3745 = vmatmul.mubr.bf16.gmra.mxu0 %v2926
    %v3746 = vpop.f32.mrf.mxu0
    %v3747 = vadd.f32 %v3706, %v3746
    %v3748 = vpop.f32.mrf.mxu0
    %v3749 = vadd.f32 %v3708, %v3748
    %v3750 = vpop.f32.mrf.mxu0
    %v3751 = vpop.f32.mrf.mxu0
    %3752 = vdwg.mxu0
    %v3753 = vld [vmem:[#allocation8] sm:$0xff]
    %v3754 = vld [vmem:[#allocation8 + $0x8] sm:$0xff]
    %v3755 = vld [vmem:[#allocation8 + $0x10] sm:$0xff]
    %v3756 = vld [vmem:[#allocation8 + $0x18] sm:$0xff]
    %v3757 = vld [vmem:[#allocation8 + $0x20] sm:$0xff]
    %v3758 = vld [vmem:[#allocation8 + $0x28] sm:$0xff]
    %v3759 = vld [vmem:[#allocation8 + $0x30] sm:$0xff]
    %v3760 = vld [vmem:[#allocation8 + $0x38] sm:$0xff]
    %v3761 = vld [vmem:[#allocation8 + $0x40] sm:$0xff]
    %v3762 = vld [vmem:[#allocation8 + $0x48] sm:$0xff]
    %v3763 = vld [vmem:[#allocation8 + $0x50] sm:$0xff]
    %v3764 = vld [vmem:[#allocation8 + $0x58] sm:$0xff]
    %v3765 = vld [vmem:[#allocation8 + $0x60] sm:$0xff]
    %v3766 = vld [vmem:[#allocation8 + $0x68] sm:$0xff]
    %v3767 = vld [vmem:[#allocation8 + $0x70] sm:$0xff]
    %v3768 = vld [vmem:[#allocation8 + $0x78] sm:$0xff]
    %v3769 = vld [vmem:[#allocation8 + $0x80] sm:$0xff]
    %v3770 = vld [vmem:[#allocation8 + $0x88] sm:$0xff]
    %v3771 = vld [vmem:[#allocation8 + $0x90] sm:$0xff]
    %v3772 = vld [vmem:[#allocation8 + $0x98] sm:$0xff]
    %v3773 = vld [vmem:[#allocation8 + $0xa0] sm:$0xff]
    %v3774 = vld [vmem:[#allocation8 + $0xa8] sm:$0xff]
    %v3775 = vld [vmem:[#allocation8 + $0xb0] sm:$0xff]
    %v3776 = vld [vmem:[#allocation8 + $0xb8] sm:$0xff]
    %v3777 = vld [vmem:[#allocation8 + $0xc0] sm:$0xff]
    %v3778 = vld [vmem:[#allocation8 + $0xc8] sm:$0xff]
    %v3779 = vld [vmem:[#allocation8 + $0xd0] sm:$0xff]
    %v3780 = vld [vmem:[#allocation8 + $0xd8] sm:$0xff]
    %v3781 = vld [vmem:[#allocation8 + $0xe0] sm:$0xff]
    %v3782 = vld [vmem:[#allocation8 + $0xe8] sm:$0xff]
    %v3783 = vld [vmem:[#allocation8 + $0xf0] sm:$0xff]
    %v3784 = vld [vmem:[#allocation8 + $0xf8] sm:$0xff]
    %v3785 = vld [vmem:[#allocation8 + $0x100] sm:$0xff]
    %v3786 = vld [vmem:[#allocation8 + $0x108] sm:$0xff]
    %v3787 = vld [vmem:[#allocation8 + $0x110] sm:$0xff]
    %v3788 = vld [vmem:[#allocation8 + $0x118] sm:$0xff]
    %v3789 = vld [vmem:[#allocation8 + $0x120] sm:$0xff]
    %v3790 = vld [vmem:[#allocation8 + $0x128] sm:$0xff]
    %v3791 = vld [vmem:[#allocation8 + $0x130] sm:$0xff]
    %v3792 = vld [vmem:[#allocation8 + $0x138] sm:$0xff]
    %v3793 = vld [vmem:[#allocation8 + $0x140] sm:$0xff]
    %v3794 = vld [vmem:[#allocation8 + $0x148] sm:$0xff]
    %v3795 = vld [vmem:[#allocation8 + $0x150] sm:$0xff]
    %v3796 = vld [vmem:[#allocation8 + $0x158] sm:$0xff]
    %v3797 = vld [vmem:[#allocation8 + $0x160] sm:$0xff]
    %v3798 = vld [vmem:[#allocation8 + $0x168] sm:$0xff]
    %v3799 = vld [vmem:[#allocation8 + $0x170] sm:$0xff]
    %v3800 = vld [vmem:[#allocation8 + $0x178] sm:$0xff]
    %v3801 = vld [vmem:[%s9] sm:$0xff]
    %v3802 = vld [vmem:[%s9 + $0x8] sm:$0xff]
    %v3803 = vld [vmem:[%s9 + $0x10] sm:$0xff]
    %v3804 = vld [vmem:[%s9 + $0x18] sm:$0xff]
    %v3805 = vld [vmem:[%s9 + $0x20] sm:$0xff]
    %v3806 = vld [vmem:[%s9 + $0x28] sm:$0xff]
    %v3807 = vld [vmem:[%s9 + $0x30] sm:$0xff]
    %v3808 = vld [vmem:[%s9 + $0x38] sm:$0xff]
    %3810 = vset.pattern.permute.xlu0 0
    %3811 = vperm.xlu0 %3810, %v3801
    %v3812 = vpop.permute.xlu0 %3811
    %3815 = vset.pattern.permute.xlu0 0
    %3816 = vperm.xlu0 %3815, %v3802
    %v3817 = vpop.permute.xlu0 %3816
    %3820 = vset.pattern.permute.xlu0 0
    %3821 = vperm.xlu0 %3820, %v3803
    %v3822 = vpop.permute.xlu0 %3821
    %3825 = vset.pattern.permute.xlu0 0
    %3826 = vperm.xlu0 %3825, %v3804
    %v3827 = vpop.permute.xlu0 %3826
    %3830 = vset.pattern.permute.xlu0 0
    %3831 = vperm.xlu0 %3830, %v3805
    %v3832 = vpop.permute.xlu0 %3831
    %3835 = vset.pattern.permute.xlu0 0
    %3836 = vperm.xlu0 %3835, %v3806
    %v3837 = vpop.permute.xlu0 %3836
    %3840 = vset.pattern.permute.xlu0 0
    %3841 = vperm.xlu0 %3840, %v3807
    %v3842 = vpop.permute.xlu0 %3841
    %3845 = vset.pattern.permute.xlu0 0
    %3846 = vperm.xlu0 %3845, %v3808
    %v3847 = vpop.permute.xlu0 %3846
    %v3849 = vmul.f32 %v3753, %v3812
    %v3850 = vmul.f32 %v3754, %v3812
    %v3851 = vmul.f32 %v3755, %v3812
    %v3852 = vmul.f32 %v3756, %v3812
    %v3853 = vmul.f32 %v3757, %v3812
    %v3854 = vmul.f32 %v3758, %v3812
    %v3855 = vmul.f32 %v3759, %v3817
    %v3856 = vmul.f32 %v3760, %v3817
    %v3857 = vmul.f32 %v3761, %v3817
    %v3858 = vmul.f32 %v3762, %v3817
    %v3859 = vmul.f32 %v3763, %v3817
    %v3860 = vmul.f32 %v3764, %v3817
    %v3861 = vmul.f32 %v3765, %v3822
    %v3862 = vmul.f32 %v3766, %v3822
    %v3863 = vmul.f32 %v3767, %v3822
    %v3864 = vmul.f32 %v3768, %v3822
    %v3865 = vmul.f32 %v3769, %v3822
    %v3866 = vmul.f32 %v3770, %v3822
    %v3867 = vmul.f32 %v3771, %v3827
    %v3868 = vmul.f32 %v3772, %v3827
    %v3869 = vmul.f32 %v3773, %v3827
    %v3870 = vmul.f32 %v3774, %v3827
    %v3871 = vmul.f32 %v3775, %v3827
    %v3872 = vmul.f32 %v3776, %v3827
    %v3873 = vmul.f32 %v3777, %v3832
    %v3874 = vmul.f32 %v3778, %v3832
    %v3875 = vmul.f32 %v3779, %v3832
    %v3876 = vmul.f32 %v3780, %v3832
    %v3877 = vmul.f32 %v3781, %v3832
    %v3878 = vmul.f32 %v3782, %v3832
    %v3879 = vmul.f32 %v3783, %v3837
    %v3880 = vmul.f32 %v3784, %v3837
    %v3881 = vmul.f32 %v3785, %v3837
    %v3882 = vmul.f32 %v3786, %v3837
    %v3883 = vmul.f32 %v3787, %v3837
    %v3884 = vmul.f32 %v3788, %v3837
    %v3885 = vmul.f32 %v3789, %v3842
    %v3886 = vmul.f32 %v3790, %v3842
    %v3887 = vmul.f32 %v3791, %v3842
    %v3888 = vmul.f32 %v3792, %v3842
    %v3889 = vmul.f32 %v3793, %v3842
    %v3890 = vmul.f32 %v3794, %v3842
    %v3891 = vmul.f32 %v3795, %v3847
    %v3892 = vmul.f32 %v3796, %v3847
    %v3893 = vmul.f32 %v3797, %v3847
    %v3894 = vmul.f32 %v3798, %v3847
    %v3895 = vmul.f32 %v3799, %v3847
    %v3896 = vmul.f32 %v3800, %v3847
    %v3897 = vrot.slane %v3849, 4
    %v3898 = vadd.f32 %v3849, %v3897
    %v3899 = vrot.slane %v3898, 2
    %v3900 = vadd.f32 %v3898, %v3899
    %v3901 = vrot.slane %v3900, 1
    %v3902 = vadd.f32 %v3900, %v3901
    %v3903 = vrot.slane %v3850, 4
    %v3904 = vadd.f32 %v3850, %v3903
    %v3905 = vrot.slane %v3904, 2
    %v3906 = vadd.f32 %v3904, %v3905
    %v3907 = vrot.slane %v3906, 1
    %v3908 = vadd.f32 %v3906, %v3907
    %v3909 = vrot.slane %v3851, 4
    %v3910 = vadd.f32 %v3851, %v3909
    %v3911 = vrot.slane %v3910, 2
    %v3912 = vadd.f32 %v3910, %v3911
    %v3913 = vrot.slane %v3912, 1
    %v3914 = vadd.f32 %v3912, %v3913
    %v3915 = vrot.slane %v3852, 4
    %v3916 = vadd.f32 %v3852, %v3915
    %v3917 = vrot.slane %v3916, 2
    %v3918 = vadd.f32 %v3916, %v3917
    %v3919 = vrot.slane %v3918, 1
    %v3920 = vadd.f32 %v3918, %v3919
    %v3921 = vrot.slane %v3853, 4
    %v3922 = vadd.f32 %v3853, %v3921
    %v3923 = vrot.slane %v3922, 2
    %v3924 = vadd.f32 %v3922, %v3923
    %v3925 = vrot.slane %v3924, 1
    %v3926 = vadd.f32 %v3924, %v3925
    %v3927 = vrot.slane %v3854, 4
    %v3928 = vadd.f32 %v3854, %v3927
    %v3929 = vrot.slane %v3928, 2
    %v3930 = vadd.f32 %v3928, %v3929
    %v3931 = vrot.slane %v3930, 1
    %v3932 = vadd.f32 %v3930, %v3931
    %v3933 = vrot.slane %v3855, 4
    %v3934 = vadd.f32 %v3855, %v3933
    %v3935 = vrot.slane %v3934, 2
    %v3936 = vadd.f32 %v3934, %v3935
    %v3937 = vrot.slane %v3936, 1
    %v3938 = vadd.f32 %v3936, %v3937
    %v3939 = vrot.slane %v3856, 4
    %v3940 = vadd.f32 %v3856, %v3939
    %v3941 = vrot.slane %v3940, 2
    %v3942 = vadd.f32 %v3940, %v3941
    %v3943 = vrot.slane %v3942, 1
    %v3944 = vadd.f32 %v3942, %v3943
    %v3945 = vrot.slane %v3857, 4
    %v3946 = vadd.f32 %v3857, %v3945
    %v3947 = vrot.slane %v3946, 2
    %v3948 = vadd.f32 %v3946, %v3947
    %v3949 = vrot.slane %v3948, 1
    %v3950 = vadd.f32 %v3948, %v3949
    %v3951 = vrot.slane %v3858, 4
    %v3952 = vadd.f32 %v3858, %v3951
    %v3953 = vrot.slane %v3952, 2
    %v3954 = vadd.f32 %v3952, %v3953
    %v3955 = vrot.slane %v3954, 1
    %v3956 = vadd.f32 %v3954, %v3955
    %v3957 = vrot.slane %v3859, 4
    %v3958 = vadd.f32 %v3859, %v3957
    %v3959 = vrot.slane %v3958, 2
    %v3960 = vadd.f32 %v3958, %v3959
    %v3961 = vrot.slane %v3960, 1
    %v3962 = vadd.f32 %v3960, %v3961
    %v3963 = vrot.slane %v3860, 4
    %v3964 = vadd.f32 %v3860, %v3963
    %v3965 = vrot.slane %v3964, 2
    %v3966 = vadd.f32 %v3964, %v3965
    %v3967 = vrot.slane %v3966, 1
    %v3968 = vadd.f32 %v3966, %v3967
    %v3969 = vrot.slane %v3861, 4
    %v3970 = vadd.f32 %v3861, %v3969
    %v3971 = vrot.slane %v3970, 2
    %v3972 = vadd.f32 %v3970, %v3971
    %v3973 = vrot.slane %v3972, 1
    %v3974 = vadd.f32 %v3972, %v3973
    %v3975 = vrot.slane %v3862, 4
    %v3976 = vadd.f32 %v3862, %v3975
    %v3977 = vrot.slane %v3976, 2
    %v3978 = vadd.f32 %v3976, %v3977
    %v3979 = vrot.slane %v3978, 1
    %v3980 = vadd.f32 %v3978, %v3979
    %v3981 = vrot.slane %v3863, 4
    %v3982 = vadd.f32 %v3863, %v3981
    %v3983 = vrot.slane %v3982, 2
    %v3984 = vadd.f32 %v3982, %v3983
    %v3985 = vrot.slane %v3984, 1
    %v3986 = vadd.f32 %v3984, %v3985
    %v3987 = vrot.slane %v3864, 4
    %v3988 = vadd.f32 %v3864, %v3987
    %v3989 = vrot.slane %v3988, 2
    %v3990 = vadd.f32 %v3988, %v3989
    %v3991 = vrot.slane %v3990, 1
    %v3992 = vadd.f32 %v3990, %v3991
    %v3993 = vrot.slane %v3865, 4
    %v3994 = vadd.f32 %v3865, %v3993
    %v3995 = vrot.slane %v3994, 2
    %v3996 = vadd.f32 %v3994, %v3995
    %v3997 = vrot.slane %v3996, 1
    %v3998 = vadd.f32 %v3996, %v3997
    %v3999 = vrot.slane %v3866, 4
    %v4000 = vadd.f32 %v3866, %v3999
    %v4001 = vrot.slane %v4000, 2
    %v4002 = vadd.f32 %v4000, %v4001
    %v4003 = vrot.slane %v4002, 1
    %v4004 = vadd.f32 %v4002, %v4003
    %v4005 = vrot.slane %v3867, 4
    %v4006 = vadd.f32 %v3867, %v4005
    %v4007 = vrot.slane %v4006, 2
    %v4008 = vadd.f32 %v4006, %v4007
    %v4009 = vrot.slane %v4008, 1
    %v4010 = vadd.f32 %v4008, %v4009
    %v4011 = vrot.slane %v3868, 4
    %v4012 = vadd.f32 %v3868, %v4011
    %v4013 = vrot.slane %v4012, 2
    %v4014 = vadd.f32 %v4012, %v4013
    %v4015 = vrot.slane %v4014, 1
    %v4016 = vadd.f32 %v4014, %v4015
    %v4017 = vrot.slane %v3869, 4
    %v4018 = vadd.f32 %v3869, %v4017
    %v4019 = vrot.slane %v4018, 2
    %v4020 = vadd.f32 %v4018, %v4019
    %v4021 = vrot.slane %v4020, 1
    %v4022 = vadd.f32 %v4020, %v4021
    %v4023 = vrot.slane %v3870, 4
    %v4024 = vadd.f32 %v3870, %v4023
    %v4025 = vrot.slane %v4024, 2
    %v4026 = vadd.f32 %v4024, %v4025
    %v4027 = vrot.slane %v4026, 1
    %v4028 = vadd.f32 %v4026, %v4027
    %v4029 = vrot.slane %v3871, 4
    %v4030 = vadd.f32 %v3871, %v4029
    %v4031 = vrot.slane %v4030, 2
    %v4032 = vadd.f32 %v4030, %v4031
    %v4033 = vrot.slane %v4032, 1
    %v4034 = vadd.f32 %v4032, %v4033
    %v4035 = vrot.slane %v3872, 4
    %v4036 = vadd.f32 %v3872, %v4035
    %v4037 = vrot.slane %v4036, 2
    %v4038 = vadd.f32 %v4036, %v4037
    %v4039 = vrot.slane %v4038, 1
    %v4040 = vadd.f32 %v4038, %v4039
    %v4041 = vrot.slane %v3873, 4
    %v4042 = vadd.f32 %v3873, %v4041
    %v4043 = vrot.slane %v4042, 2
    %v4044 = vadd.f32 %v4042, %v4043
    %v4045 = vrot.slane %v4044, 1
    %v4046 = vadd.f32 %v4044, %v4045
    %v4047 = vrot.slane %v3874, 4
    %v4048 = vadd.f32 %v3874, %v4047
    %v4049 = vrot.slane %v4048, 2
    %v4050 = vadd.f32 %v4048, %v4049
    %v4051 = vrot.slane %v4050, 1
    %v4052 = vadd.f32 %v4050, %v4051
    %v4053 = vrot.slane %v3875, 4
    %v4054 = vadd.f32 %v3875, %v4053
    %v4055 = vrot.slane %v4054, 2
    %v4056 = vadd.f32 %v4054, %v4055
    %v4057 = vrot.slane %v4056, 1
    %v4058 = vadd.f32 %v4056, %v4057
    %v4059 = vrot.slane %v3876, 4
    %v4060 = vadd.f32 %v3876, %v4059
    %v4061 = vrot.slane %v4060, 2
    %v4062 = vadd.f32 %v4060, %v4061
    %v4063 = vrot.slane %v4062, 1
    %v4064 = vadd.f32 %v4062, %v4063
    %v4065 = vrot.slane %v3877, 4
    %v4066 = vadd.f32 %v3877, %v4065
    %v4067 = vrot.slane %v4066, 2
    %v4068 = vadd.f32 %v4066, %v4067
    %v4069 = vrot.slane %v4068, 1
    %v4070 = vadd.f32 %v4068, %v4069
    %v4071 = vrot.slane %v3878, 4
    %v4072 = vadd.f32 %v3878, %v4071
    %v4073 = vrot.slane %v4072, 2
    %v4074 = vadd.f32 %v4072, %v4073
    %v4075 = vrot.slane %v4074, 1
    %v4076 = vadd.f32 %v4074, %v4075
    %v4077 = vrot.slane %v3879, 4
    %v4078 = vadd.f32 %v3879, %v4077
    %v4079 = vrot.slane %v4078, 2
    %v4080 = vadd.f32 %v4078, %v4079
    %v4081 = vrot.slane %v4080, 1
    %v4082 = vadd.f32 %v4080, %v4081
    %v4083 = vrot.slane %v3880, 4
    %v4084 = vadd.f32 %v3880, %v4083
    %v4085 = vrot.slane %v4084, 2
    %v4086 = vadd.f32 %v4084, %v4085
    %v4087 = vrot.slane %v4086, 1
    %v4088 = vadd.f32 %v4086, %v4087
    %v4089 = vrot.slane %v3881, 4
    %v4090 = vadd.f32 %v3881, %v4089
    %v4091 = vrot.slane %v4090, 2
    %v4092 = vadd.f32 %v4090, %v4091
    %v4093 = vrot.slane %v4092, 1
    %v4094 = vadd.f32 %v4092, %v4093
    %v4095 = vrot.slane %v3882, 4
    %v4096 = vadd.f32 %v3882, %v4095
    %v4097 = vrot.slane %v4096, 2
    %v4098 = vadd.f32 %v4096, %v4097
    %v4099 = vrot.slane %v4098, 1
    %v4100 = vadd.f32 %v4098, %v4099
    %v4101 = vrot.slane %v3883, 4
    %v4102 = vadd.f32 %v3883, %v4101
    %v4103 = vrot.slane %v4102, 2
    %v4104 = vadd.f32 %v4102, %v4103
    %v4105 = vrot.slane %v4104, 1
    %v4106 = vadd.f32 %v4104, %v4105
    %v4107 = vrot.slane %v3884, 4
    %v4108 = vadd.f32 %v3884, %v4107
    %v4109 = vrot.slane %v4108, 2
    %v4110 = vadd.f32 %v4108, %v4109
    %v4111 = vrot.slane %v4110, 1
    %v4112 = vadd.f32 %v4110, %v4111
    %v4113 = vrot.slane %v3885, 4
    %v4114 = vadd.f32 %v3885, %v4113
    %v4115 = vrot.slane %v4114, 2
    %v4116 = vadd.f32 %v4114, %v4115
    %v4117 = vrot.slane %v4116, 1
    %v4118 = vadd.f32 %v4116, %v4117
    %v4119 = vrot.slane %v3886, 4
    %v4120 = vadd.f32 %v3886, %v4119
    %v4121 = vrot.slane %v4120, 2
    %v4122 = vadd.f32 %v4120, %v4121
    %v4123 = vrot.slane %v4122, 1
    %v4124 = vadd.f32 %v4122, %v4123
    %v4125 = vrot.slane %v3887, 4
    %v4126 = vadd.f32 %v3887, %v4125
    %v4127 = vrot.slane %v4126, 2
    %v4128 = vadd.f32 %v4126, %v4127
    %v4129 = vrot.slane %v4128, 1
    %v4130 = vadd.f32 %v4128, %v4129
    %v4131 = vrot.slane %v3888, 4
    %v4132 = vadd.f32 %v3888, %v4131
    %v4133 = vrot.slane %v4132, 2
    %v4134 = vadd.f32 %v4132, %v4133
    %v4135 = vrot.slane %v4134, 1
    %v4136 = vadd.f32 %v4134, %v4135
    %v4137 = vrot.slane %v3889, 4
    %v4138 = vadd.f32 %v3889, %v4137
    %v4139 = vrot.slane %v4138, 2
    %v4140 = vadd.f32 %v4138, %v4139
    %v4141 = vrot.slane %v4140, 1
    %v4142 = vadd.f32 %v4140, %v4141
    %v4143 = vrot.slane %v3890, 4
    %v4144 = vadd.f32 %v3890, %v4143
    %v4145 = vrot.slane %v4144, 2
    %v4146 = vadd.f32 %v4144, %v4145
    %v4147 = vrot.slane %v4146, 1
    %v4148 = vadd.f32 %v4146, %v4147
    %v4149 = vrot.slane %v3891, 4
    %v4150 = vadd.f32 %v3891, %v4149
    %v4151 = vrot.slane %v4150, 2
    %v4152 = vadd.f32 %v4150, %v4151
    %v4153 = vrot.slane %v4152, 1
    %v4154 = vadd.f32 %v4152, %v4153
    %v4155 = vrot.slane %v3892, 4
    %v4156 = vadd.f32 %v3892, %v4155
    %v4157 = vrot.slane %v4156, 2
    %v4158 = vadd.f32 %v4156, %v4157
    %v4159 = vrot.slane %v4158, 1
    %v4160 = vadd.f32 %v4158, %v4159
    %v4161 = vrot.slane %v3893, 4
    %v4162 = vadd.f32 %v3893, %v4161
    %v4163 = vrot.slane %v4162, 2
    %v4164 = vadd.f32 %v4162, %v4163
    %v4165 = vrot.slane %v4164, 1
    %v4166 = vadd.f32 %v4164, %v4165
    %v4167 = vrot.slane %v3894, 4
    %v4168 = vadd.f32 %v3894, %v4167
    %v4169 = vrot.slane %v4168, 2
    %v4170 = vadd.f32 %v4168, %v4169
    %v4171 = vrot.slane %v4170, 1
    %v4172 = vadd.f32 %v4170, %v4171
    %v4173 = vrot.slane %v3895, 4
    %v4174 = vadd.f32 %v3895, %v4173
    %v4175 = vrot.slane %v4174, 2
    %v4176 = vadd.f32 %v4174, %v4175
    %v4177 = vrot.slane %v4176, 1
    %v4178 = vadd.f32 %v4176, %v4177
    %v4179 = vrot.slane %v3896, 4
    %v4180 = vadd.f32 %v3896, %v4179
    %v4181 = vrot.slane %v4180, 2
    %v4182 = vadd.f32 %v4180, %v4181
    %v4183 = vrot.slane %v4182, 1
    %v4184 = vadd.f32 %v4182, %v4183
    %vm4185 = vcmask 7168
    %v4186 = vsel %vm4185, %v3801, 0.0
    %v4187 = vrot.slane %v4186, 4
    %v4188 = vadd.f32 %v4186, %v4187
    %v4189 = vrot.slane %v4188, 2
    %v4190 = vadd.f32 %v4188, %v4189
    %v4191 = vrot.slane %v4190, 1
    %v4192 = vadd.f32 %v4190, %v4191
    %v4193 = vsel %vm4185, %v3802, 0.0
    %v4194 = vrot.slane %v4193, 4
    %v4195 = vadd.f32 %v4193, %v4194
    %v4196 = vrot.slane %v4195, 2
    %v4197 = vadd.f32 %v4195, %v4196
    %v4198 = vrot.slane %v4197, 1
    %v4199 = vadd.f32 %v4197, %v4198
    %v4200 = vsel %vm4185, %v3803, 0.0
    %v4201 = vrot.slane %v4200, 4
    %v4202 = vadd.f32 %v4200, %v4201
    %v4203 = vrot.slane %v4202, 2
    %v4204 = vadd.f32 %v4202, %v4203
    %v4205 = vrot.slane %v4204, 1
    %v4206 = vadd.f32 %v4204, %v4205
    %v4207 = vsel %vm4185, %v3804, 0.0
    %v4208 = vrot.slane %v4207, 4
    %v4209 = vadd.f32 %v4207, %v4208
    %v4210 = vrot.slane %v4209, 2
    %v4211 = vadd.f32 %v4209, %v4210
    %v4212 = vrot.slane %v4211, 1
    %v4213 = vadd.f32 %v4211, %v4212
    %v4214 = vsel %vm4185, %v3805, 0.0
    %v4215 = vrot.slane %v4214, 4
    %v4216 = vadd.f32 %v4214, %v4215
    %v4217 = vrot.slane %v4216, 2
    %v4218 = vadd.f32 %v4216, %v4217
    %v4219 = vrot.slane %v4218, 1
    %v4220 = vadd.f32 %v4218, %v4219
    %v4221 = vsel %vm4185, %v3806, 0.0
    %v4222 = vrot.slane %v4221, 4
    %v4223 = vadd.f32 %v4221, %v4222
    %v4224 = vrot.slane %v4223, 2
    %v4225 = vadd.f32 %v4223, %v4224
    %v4226 = vrot.slane %v4225, 1
    %v4227 = vadd.f32 %v4225, %v4226
    %v4228 = vsel %vm4185, %v3807, 0.0
    %v4229 = vrot.slane %v4228, 4
    %v4230 = vadd.f32 %v4228, %v4229
    %v4231 = vrot.slane %v4230, 2
    %v4232 = vadd.f32 %v4230, %v4231
    %v4233 = vrot.slane %v4232, 1
    %v4234 = vadd.f32 %v4232, %v4233
    %v4235 = vsel %vm4185, %v3808, 0.0
    %v4236 = vrot.slane %v4235, 4
    %v4237 = vadd.f32 %v4235, %v4236
    %v4238 = vrot.slane %v4237, 2
    %v4239 = vadd.f32 %v4237, %v4238
    %v4240 = vrot.slane %v4239, 1
    %v4241 = vadd.f32 %v4239, %v4240
    %v4242 = vmax.f32 %v4192, 1.0
    %v4243 = vmax.f32 %v4199, 1.0
    %v4244 = vmax.f32 %v4206, 1.0
    %v4245 = vmax.f32 %v4213, 1.0
    %v4246 = vmax.f32 %v4220, 1.0
    %v4247 = vmax.f32 %v4227, 1.0
    %v4248 = vmax.f32 %v4234, 1.0
    %v4249 = vmax.f32 %v4241, 1.0
    %4251 = vset.pattern.permute.xlu0 0
    %4252 = vperm.xlu0 %4251, %v4242
    %v4253 = vpop.permute.xlu0 %4252
    %4256 = vset.pattern.permute.xlu0 0
    %4257 = vperm.xlu0 %4256, %v4243
    %v4258 = vpop.permute.xlu0 %4257
    %4261 = vset.pattern.permute.xlu0 0
    %4262 = vperm.xlu0 %4261, %v4244
    %v4263 = vpop.permute.xlu0 %4262
    %4266 = vset.pattern.permute.xlu0 0
    %4267 = vperm.xlu0 %4266, %v4245
    %v4268 = vpop.permute.xlu0 %4267
    %4271 = vset.pattern.permute.xlu0 0
    %4272 = vperm.xlu0 %4271, %v4246
    %v4273 = vpop.permute.xlu0 %4272
    %4276 = vset.pattern.permute.xlu0 0
    %4277 = vperm.xlu0 %4276, %v4247
    %v4278 = vpop.permute.xlu0 %4277
    %4281 = vset.pattern.permute.xlu0 0
    %4282 = vperm.xlu0 %4281, %v4248
    %v4283 = vpop.permute.xlu0 %4282
    %4286 = vset.pattern.permute.xlu0 0
    %4287 = vperm.xlu0 %4286, %v4249
    %v4288 = vpop.permute.xlu0 %4287
    %v4290 = vrcp.pop %v4253
    %v4291 = vmul.f32 %v3902, %v4290
    %v4292 = vmul.f32 %v3908, %v4290
    %v4293 = vmul.f32 %v3914, %v4290
    %v4294 = vmul.f32 %v3920, %v4290
    %v4295 = vmul.f32 %v3926, %v4290
    %v4296 = vmul.f32 %v3932, %v4290
    %v4297 = vrcp.pop %v4258
    %v4298 = vmul.f32 %v3938, %v4297
    %v4299 = vmul.f32 %v3944, %v4297
    %v4300 = vmul.f32 %v3950, %v4297
    %v4301 = vmul.f32 %v3956, %v4297
    %v4302 = vmul.f32 %v3962, %v4297
    %v4303 = vmul.f32 %v3968, %v4297
    %v4304 = vrcp.pop %v4263
    %v4305 = vmul.f32 %v3974, %v4304
    %v4306 = vmul.f32 %v3980, %v4304
    %v4307 = vmul.f32 %v3986, %v4304
    %v4308 = vmul.f32 %v3992, %v4304
    %v4309 = vmul.f32 %v3998, %v4304
    %v4310 = vmul.f32 %v4004, %v4304
    %v4311 = vrcp.pop %v4268
    %v4312 = vmul.f32 %v4010, %v4311
    %v4313 = vmul.f32 %v4016, %v4311
    %v4314 = vmul.f32 %v4022, %v4311
    %v4315 = vmul.f32 %v4028, %v4311
    %v4316 = vmul.f32 %v4034, %v4311
    %v4317 = vmul.f32 %v4040, %v4311
    %v4318 = vrcp.pop %v4273
    %v4319 = vmul.f32 %v4046, %v4318
    %v4320 = vmul.f32 %v4052, %v4318
    %v4321 = vmul.f32 %v4058, %v4318
    %v4322 = vmul.f32 %v4064, %v4318
    %v4323 = vmul.f32 %v4070, %v4318
    %v4324 = vmul.f32 %v4076, %v4318
    %v4325 = vrcp.pop %v4278
    %v4326 = vmul.f32 %v4082, %v4325
    %v4327 = vmul.f32 %v4088, %v4325
    %v4328 = vmul.f32 %v4094, %v4325
    %v4329 = vmul.f32 %v4100, %v4325
    %v4330 = vmul.f32 %v4106, %v4325
    %v4331 = vmul.f32 %v4112, %v4325
    %v4332 = vrcp.pop %v4283
    %v4333 = vmul.f32 %v4118, %v4332
    %v4334 = vmul.f32 %v4124, %v4332
    %v4335 = vmul.f32 %v4130, %v4332
    %v4336 = vmul.f32 %v4136, %v4332
    %v4337 = vmul.f32 %v4142, %v4332
    %v4338 = vmul.f32 %v4148, %v4332
    %v4339 = vrcp.pop %v4288
    %v4340 = vmul.f32 %v4154, %v4339
    %v4341 = vmul.f32 %v4160, %v4339
    %v4342 = vmul.f32 %v4166, %v4339
    %v4343 = vmul.f32 %v4172, %v4339
    %v4344 = vmul.f32 %v4178, %v4339
    %v4345 = vmul.f32 %v4184, %v4339
    %v4346 = vld [vmem:[#allocation28] sm:$0xff]
    %v4347 = vld [vmem:[#allocation28 + $0x8] sm:$0xff]
    %v4348 = vld [vmem:[#allocation28 + $0x10] sm:$0xff]
    %v4349 = vld [vmem:[#allocation28 + $0x18] sm:$0xff]
    %v4350 = vld [vmem:[#allocation28 + $0x20] sm:$0xff]
    %v4351 = vld [vmem:[#allocation28 + $0x28] sm:$0xff]
    %v4352 = vld [vmem:[#allocation28 + $0x30] sm:$0xff]
    %v4353 = vld [vmem:[#allocation28 + $0x38] sm:$0xff]
    %v4354 = vld [vmem:[#allocation28 + $0x40] sm:$0xff]
    %v4355 = vld [vmem:[#allocation28 + $0x48] sm:$0xff]
    %v4356 = vld [vmem:[#allocation28 + $0x50] sm:$0xff]
    %v4357 = vld [vmem:[#allocation28 + $0x58] sm:$0xff]
    %v4358 = vld [vmem:[#allocation28 + $0x60] sm:$0xff]
    %v4359 = vld [vmem:[#allocation28 + $0x68] sm:$0xff]
    %v4360 = vld [vmem:[#allocation28 + $0x70] sm:$0xff]
    %v4361 = vld [vmem:[#allocation28 + $0x78] sm:$0xff]
    %v4362 = vld [vmem:[#allocation28 + $0x80] sm:$0xff]
    %v4363 = vld [vmem:[#allocation28 + $0x88] sm:$0xff]
    %v4364 = vld [vmem:[#allocation28 + $0x90] sm:$0xff]
    %v4365 = vld [vmem:[#allocation28 + $0x98] sm:$0xff]
    %v4366 = vld [vmem:[#allocation28 + $0xa0] sm:$0xff]
    %v4367 = vld [vmem:[#allocation28 + $0xa8] sm:$0xff]
    %v4368 = vld [vmem:[#allocation28 + $0xb0] sm:$0xff]
    %v4369 = vld [vmem:[#allocation28 + $0xb8] sm:$0xff]
    %v4370 = vld [vmem:[#allocation28 + $0xc0] sm:$0xff]
    %v4371 = vld [vmem:[#allocation28 + $0xc8] sm:$0xff]
    %v4372 = vld [vmem:[#allocation28 + $0xd0] sm:$0xff]
    %v4373 = vld [vmem:[#allocation28 + $0xd8] sm:$0xff]
    %v4374 = vld [vmem:[#allocation28 + $0xe0] sm:$0xff]
    %v4375 = vld [vmem:[#allocation28 + $0xe8] sm:$0xff]
    %v4376 = vld [vmem:[#allocation28 + $0xf0] sm:$0xff]
    %v4377 = vld [vmem:[#allocation28 + $0xf8] sm:$0xff]
    %v4378 = vld [vmem:[#allocation28 + $0x100] sm:$0xff]
    %v4379 = vld [vmem:[#allocation28 + $0x108] sm:$0xff]
    %v4380 = vld [vmem:[#allocation28 + $0x110] sm:$0xff]
    %v4381 = vld [vmem:[#allocation28 + $0x118] sm:$0xff]
    %v4382 = vld [vmem:[#allocation28 + $0x120] sm:$0xff]
    %v4383 = vld [vmem:[#allocation28 + $0x128] sm:$0xff]
    %v4384 = vld [vmem:[#allocation28 + $0x130] sm:$0xff]
    %v4385 = vld [vmem:[#allocation28 + $0x138] sm:$0xff]
    %v4386 = vld [vmem:[#allocation28 + $0x140] sm:$0xff]
    %v4387 = vld [vmem:[#allocation28 + $0x148] sm:$0xff]
    %v4388 = vld [vmem:[#allocation28 + $0x150] sm:$0xff]
    %v4389 = vld [vmem:[#allocation28 + $0x158] sm:$0xff]
    %v4390 = vld [vmem:[#allocation28 + $0x160] sm:$0xff]
    %v4391 = vld [vmem:[#allocation28 + $0x168] sm:$0xff]
    %v4392 = vld [vmem:[#allocation28 + $0x170] sm:$0xff]
    %v4393 = vld [vmem:[#allocation28 + $0x178] sm:$0xff]
    %v4394 = vld [vmem:[#allocation28 + $0x180] sm:$0xff]
    %v4395 = vld [vmem:[#allocation28 + $0x188] sm:$0xff]
    %v4396 = vld [vmem:[#allocation28 + $0x190] sm:$0xff]
    %v4397 = vld [vmem:[#allocation28 + $0x198] sm:$0xff]
    %v4398 = vld [vmem:[#allocation28 + $0x1a0] sm:$0xff]
    %v4399 = vld [vmem:[#allocation28 + $0x1a8] sm:$0xff]
    %v4400 = vld [vmem:[#allocation28 + $0x1b0] sm:$0xff]
    %v4401 = vld [vmem:[#allocation28 + $0x1b8] sm:$0xff]
    %v4402 = vld [vmem:[#allocation28 + $0x1c0] sm:$0xff]
    %v4403 = vld [vmem:[#allocation28 + $0x1c8] sm:$0xff]
    %v4404 = vld [vmem:[#allocation28 + $0x1d0] sm:$0xff]
    %v4405 = vld [vmem:[#allocation28 + $0x1d8] sm:$0xff]
    %v4406 = vld [vmem:[#allocation28 + $0x1e0] sm:$0xff]
    %v4407 = vld [vmem:[#allocation28 + $0x1e8] sm:$0xff]
    %v4408 = vld [vmem:[#allocation28 + $0x1f0] sm:$0xff]
    %v4409 = vld [vmem:[#allocation28 + $0x1f8] sm:$0xff]
    %v4410 = vld [vmem:[#allocation28 + $0x200] sm:$0xff]
    %v4411 = vld [vmem:[#allocation28 + $0x208] sm:$0xff]
    %v4412 = vld [vmem:[#allocation28 + $0x210] sm:$0xff]
    %v4413 = vld [vmem:[#allocation28 + $0x218] sm:$0xff]
    %v4414 = vld [vmem:[#allocation28 + $0x220] sm:$0xff]
    %v4415 = vld [vmem:[#allocation28 + $0x228] sm:$0xff]
    %v4416 = vld [vmem:[#allocation28 + $0x230] sm:$0xff]
    %v4417 = vld [vmem:[#allocation28 + $0x238] sm:$0xff]
    %v4418 = vld [vmem:[#allocation28 + $0x240] sm:$0xff]
    %v4419 = vld [vmem:[#allocation28 + $0x248] sm:$0xff]
    %v4420 = vld [vmem:[#allocation28 + $0x250] sm:$0xff]
    %v4421 = vld [vmem:[#allocation28 + $0x258] sm:$0xff]
    %v4422 = vld [vmem:[#allocation28 + $0x260] sm:$0xff]
    %v4423 = vld [vmem:[#allocation28 + $0x268] sm:$0xff]
    %v4424 = vld [vmem:[#allocation28 + $0x270] sm:$0xff]
    %v4425 = vld [vmem:[#allocation28 + $0x278] sm:$0xff]
    %v4426 = vld [vmem:[#allocation28 + $0x280] sm:$0xff]
    %v4427 = vld [vmem:[#allocation28 + $0x288] sm:$0xff]
    %v4428 = vld [vmem:[#allocation28 + $0x290] sm:$0xff]
    %v4429 = vld [vmem:[#allocation28 + $0x298] sm:$0xff]
    %v4430 = vld [vmem:[#allocation28 + $0x2a0] sm:$0xff]
    %v4431 = vld [vmem:[#allocation28 + $0x2a8] sm:$0xff]
    %v4432 = vld [vmem:[#allocation28 + $0x2b0] sm:$0xff]
    %v4433 = vld [vmem:[#allocation28 + $0x2b8] sm:$0xff]
    %v4434 = vld [vmem:[#allocation28 + $0x2c0] sm:$0xff]
    %v4435 = vld [vmem:[#allocation28 + $0x2c8] sm:$0xff]
    %v4436 = vld [vmem:[#allocation28 + $0x2d0] sm:$0xff]
    %v4437 = vld [vmem:[#allocation28 + $0x2d8] sm:$0xff]
    %v4438 = vld [vmem:[#allocation28 + $0x2e0] sm:$0xff]
    %v4439 = vld [vmem:[#allocation28 + $0x2e8] sm:$0xff]
    %v4440 = vld [vmem:[#allocation28 + $0x2f0] sm:$0xff]
    %v4441 = vld [vmem:[#allocation28 + $0x2f8] sm:$0xff]
    %v4442 = vld [vmem:[#allocation28 + $0x300] sm:$0xff]
    %v4443 = vld [vmem:[#allocation28 + $0x308] sm:$0xff]
    %v4444 = vld [vmem:[#allocation28 + $0x310] sm:$0xff]
    %v4445 = vld [vmem:[#allocation28 + $0x318] sm:$0xff]
    %v4446 = vld [vmem:[#allocation28 + $0x320] sm:$0xff]
    %v4447 = vld [vmem:[#allocation28 + $0x328] sm:$0xff]
    %v4448 = vld [vmem:[#allocation28 + $0x330] sm:$0xff]
    %v4449 = vld [vmem:[#allocation28 + $0x338] sm:$0xff]
    %v4450 = vld [vmem:[#allocation28 + $0x340] sm:$0xff]
    %v4451 = vld [vmem:[#allocation28 + $0x348] sm:$0xff]
    %v4452 = vld [vmem:[#allocation28 + $0x350] sm:$0xff]
    %v4453 = vld [vmem:[#allocation28 + $0x358] sm:$0xff]
    %v4454 = vld [vmem:[#allocation28 + $0x360] sm:$0xff]
    %v4455 = vld [vmem:[#allocation28 + $0x368] sm:$0xff]
    %v4456 = vld [vmem:[#allocation28 + $0x370] sm:$0xff]
    %v4457 = vld [vmem:[#allocation28 + $0x378] sm:$0xff]
    %v4458 = vld [vmem:[#allocation28 + $0x380] sm:$0xff]
    %v4459 = vld [vmem:[#allocation28 + $0x388] sm:$0xff]
    %v4460 = vld [vmem:[#allocation28 + $0x390] sm:$0xff]
    %v4461 = vld [vmem:[#allocation28 + $0x398] sm:$0xff]
    %v4462 = vld [vmem:[#allocation28 + $0x3a0] sm:$0xff]
    %v4463 = vld [vmem:[#allocation28 + $0x3a8] sm:$0xff]
    %v4464 = vld [vmem:[#allocation28 + $0x3b0] sm:$0xff]
    %v4465 = vld [vmem:[#allocation28 + $0x3b8] sm:$0xff]
    %v4466 = vld [vmem:[#allocation28 + $0x3c0] sm:$0xff]
    %v4467 = vld [vmem:[#allocation28 + $0x3c8] sm:$0xff]
    %v4468 = vld [vmem:[#allocation28 + $0x3d0] sm:$0xff]
    %v4469 = vld [vmem:[#allocation28 + $0x3d8] sm:$0xff]
    %v4470 = vld [vmem:[#allocation28 + $0x3e0] sm:$0xff]
    %v4471 = vld [vmem:[#allocation28 + $0x3e8] sm:$0xff]
    %v4472 = vld [vmem:[#allocation28 + $0x3f0] sm:$0xff]
    %v4473 = vld [vmem:[#allocation28 + $0x3f8] sm:$0xff]
    %v4474 = vld [vmem:[#allocation28 + $0x400] sm:$0xff]
    %v4475 = vld [vmem:[#allocation28 + $0x408] sm:$0xff]
    %v4476 = vld [vmem:[#allocation28 + $0x410] sm:$0xff]
    %v4477 = vld [vmem:[#allocation28 + $0x418] sm:$0xff]
    %v4478 = vld [vmem:[#allocation28 + $0x420] sm:$0xff]
    %v4479 = vld [vmem:[#allocation28 + $0x428] sm:$0xff]
    %v4480 = vld [vmem:[#allocation28 + $0x430] sm:$0xff]
    %v4481 = vld [vmem:[#allocation28 + $0x438] sm:$0xff]
    %v4482 = vld [vmem:[#allocation28 + $0x440] sm:$0xff]
    %v4483 = vld [vmem:[#allocation28 + $0x448] sm:$0xff]
    %v4484 = vld [vmem:[#allocation28 + $0x450] sm:$0xff]
    %v4485 = vld [vmem:[#allocation28 + $0x458] sm:$0xff]
    %v4486 = vld [vmem:[#allocation28 + $0x460] sm:$0xff]
    %v4487 = vld [vmem:[#allocation28 + $0x468] sm:$0xff]
    %v4488 = vld [vmem:[#allocation28 + $0x470] sm:$0xff]
    %v4489 = vld [vmem:[#allocation28 + $0x478] sm:$0xff]
    %v4490 = vld [vmem:[#allocation28 + $0x480] sm:$0xff]
    %v4491 = vld [vmem:[#allocation28 + $0x488] sm:$0xff]
    %v4492 = vld [vmem:[#allocation28 + $0x490] sm:$0xff]
    %v4493 = vld [vmem:[#allocation28 + $0x498] sm:$0xff]
    %v4494 = vld [vmem:[#allocation28 + $0x4a0] sm:$0xff]
    %v4495 = vld [vmem:[#allocation28 + $0x4a8] sm:$0xff]
    %v4496 = vld [vmem:[#allocation28 + $0x4b0] sm:$0xff]
    %v4497 = vld [vmem:[#allocation28 + $0x4b8] sm:$0xff]
    %v4498 = vld [vmem:[#allocation28 + $0x4c0] sm:$0xff]
    %v4499 = vld [vmem:[#allocation28 + $0x4c8] sm:$0xff]
    %v4500 = vld [vmem:[#allocation28 + $0x4d0] sm:$0xff]
    %v4501 = vld [vmem:[#allocation28 + $0x4d8] sm:$0xff]
    %v4502 = vld [vmem:[#allocation28 + $0x4e0] sm:$0xff]
    %v4503 = vld [vmem:[#allocation28 + $0x4e8] sm:$0xff]
    %v4504 = vld [vmem:[#allocation28 + $0x4f0] sm:$0xff]
    %v4505 = vld [vmem:[#allocation28 + $0x4f8] sm:$0xff]
    %v4506 = vld [vmem:[#allocation28 + $0x500] sm:$0xff]
    %v4507 = vld [vmem:[#allocation28 + $0x508] sm:$0xff]
    %v4508 = vld [vmem:[#allocation28 + $0x510] sm:$0xff]
    %v4509 = vld [vmem:[#allocation28 + $0x518] sm:$0xff]
    %v4510 = vld [vmem:[#allocation28 + $0x520] sm:$0xff]
    %v4511 = vld [vmem:[#allocation28 + $0x528] sm:$0xff]
    %v4512 = vld [vmem:[#allocation28 + $0x530] sm:$0xff]
    %v4513 = vld [vmem:[#allocation28 + $0x538] sm:$0xff]
    %v4514 = vld [vmem:[#allocation28 + $0x540] sm:$0xff]
    %v4515 = vld [vmem:[#allocation28 + $0x548] sm:$0xff]
    %v4516 = vld [vmem:[#allocation28 + $0x550] sm:$0xff]
    %v4517 = vld [vmem:[#allocation28 + $0x558] sm:$0xff]
    %v4518 = vld [vmem:[#allocation28 + $0x560] sm:$0xff]
    %v4519 = vld [vmem:[#allocation28 + $0x568] sm:$0xff]
    %v4520 = vld [vmem:[#allocation28 + $0x570] sm:$0xff]
    %v4521 = vld [vmem:[#allocation28 + $0x578] sm:$0xff]
    %v4522 = vld [vmem:[#allocation28 + $0x580] sm:$0xff]
    %v4523 = vld [vmem:[#allocation28 + $0x588] sm:$0xff]
    %v4524 = vld [vmem:[#allocation28 + $0x590] sm:$0xff]
    %v4525 = vld [vmem:[#allocation28 + $0x598] sm:$0xff]
    %v4526 = vld [vmem:[#allocation28 + $0x5a0] sm:$0xff]
    %v4527 = vld [vmem:[#allocation28 + $0x5a8] sm:$0xff]
    %v4528 = vld [vmem:[#allocation28 + $0x5b0] sm:$0xff]
    %v4529 = vld [vmem:[#allocation28 + $0x5b8] sm:$0xff]
    %v4530 = vld [vmem:[#allocation28 + $0x5c0] sm:$0xff]
    %v4531 = vld [vmem:[#allocation28 + $0x5c8] sm:$0xff]
    %v4532 = vld [vmem:[#allocation28 + $0x5d0] sm:$0xff]
    %v4533 = vld [vmem:[#allocation28 + $0x5d8] sm:$0xff]
    %v4534 = vld [vmem:[#allocation28 + $0x5e0] sm:$0xff]
    %v4535 = vld [vmem:[#allocation28 + $0x5e8] sm:$0xff]
    %v4536 = vld [vmem:[#allocation28 + $0x5f0] sm:$0xff]
    %v4537 = vld [vmem:[#allocation28 + $0x5f8] sm:$0xff]
    %v4538 = vld [vmem:[#allocation28 + $0x600] sm:$0xff]
    %v4539 = vld [vmem:[#allocation28 + $0x608] sm:$0xff]
    %v4540 = vld [vmem:[#allocation28 + $0x610] sm:$0xff]
    %v4541 = vld [vmem:[#allocation28 + $0x618] sm:$0xff]
    %v4542 = vld [vmem:[#allocation28 + $0x620] sm:$0xff]
    %v4543 = vld [vmem:[#allocation28 + $0x628] sm:$0xff]
    %v4544 = vld [vmem:[#allocation28 + $0x630] sm:$0xff]
    %v4545 = vld [vmem:[#allocation28 + $0x638] sm:$0xff]
    %v4546 = vld [vmem:[#allocation28 + $0x640] sm:$0xff]
    %v4547 = vld [vmem:[#allocation28 + $0x648] sm:$0xff]
    %v4548 = vld [vmem:[#allocation28 + $0x650] sm:$0xff]
    %v4549 = vld [vmem:[#allocation28 + $0x658] sm:$0xff]
    %v4550 = vld [vmem:[#allocation28 + $0x660] sm:$0xff]
    %v4551 = vld [vmem:[#allocation28 + $0x668] sm:$0xff]
    %v4552 = vld [vmem:[#allocation28 + $0x670] sm:$0xff]
    %v4553 = vld [vmem:[#allocation28 + $0x678] sm:$0xff]
    %v4554 = vld [vmem:[#allocation28 + $0x680] sm:$0xff]
    %v4555 = vld [vmem:[#allocation28 + $0x688] sm:$0xff]
    %v4556 = vld [vmem:[#allocation28 + $0x690] sm:$0xff]
    %v4557 = vld [vmem:[#allocation28 + $0x698] sm:$0xff]
    %v4558 = vld [vmem:[#allocation28 + $0x6a0] sm:$0xff]
    %v4559 = vld [vmem:[#allocation28 + $0x6a8] sm:$0xff]
    %v4560 = vld [vmem:[#allocation28 + $0x6b0] sm:$0xff]
    %v4561 = vld [vmem:[#allocation28 + $0x6b8] sm:$0xff]
    %v4562 = vld [vmem:[#allocation28 + $0x6c0] sm:$0xff]
    %v4563 = vld [vmem:[#allocation28 + $0x6c8] sm:$0xff]
    %v4564 = vld [vmem:[#allocation28 + $0x6d0] sm:$0xff]
    %v4565 = vld [vmem:[#allocation28 + $0x6d8] sm:$0xff]
    %v4566 = vld [vmem:[#allocation28 + $0x6e0] sm:$0xff]
    %v4567 = vld [vmem:[#allocation28 + $0x6e8] sm:$0xff]
    %v4568 = vld [vmem:[#allocation28 + $0x6f0] sm:$0xff]
    %v4569 = vld [vmem:[#allocation28 + $0x6f8] sm:$0xff]
    %v4570 = vld [vmem:[#allocation28 + $0x700] sm:$0xff]
    %v4571 = vld [vmem:[#allocation28 + $0x708] sm:$0xff]
    %v4572 = vld [vmem:[#allocation28 + $0x710] sm:$0xff]
    %v4573 = vld [vmem:[#allocation28 + $0x718] sm:$0xff]
    %v4574 = vld [vmem:[#allocation28 + $0x720] sm:$0xff]
    %v4575 = vld [vmem:[#allocation28 + $0x728] sm:$0xff]
    %v4576 = vld [vmem:[#allocation28 + $0x730] sm:$0xff]
    %v4577 = vld [vmem:[#allocation28 + $0x738] sm:$0xff]
    %v4578 = vld [vmem:[#allocation28 + $0x740] sm:$0xff]
    %v4579 = vld [vmem:[#allocation28 + $0x748] sm:$0xff]
    %v4580 = vld [vmem:[#allocation28 + $0x750] sm:$0xff]
    %v4581 = vld [vmem:[#allocation28 + $0x758] sm:$0xff]
    %v4582 = vld [vmem:[#allocation28 + $0x760] sm:$0xff]
    %v4583 = vld [vmem:[#allocation28 + $0x768] sm:$0xff]
    %v4584 = vld [vmem:[#allocation28 + $0x770] sm:$0xff]
    %v4585 = vld [vmem:[#allocation28 + $0x778] sm:$0xff]
    %v4586 = vld [vmem:[#allocation28 + $0x780] sm:$0xff]
    %v4587 = vld [vmem:[#allocation28 + $0x788] sm:$0xff]
    %v4588 = vld [vmem:[#allocation28 + $0x790] sm:$0xff]
    %v4589 = vld [vmem:[#allocation28 + $0x798] sm:$0xff]
    %v4590 = vld [vmem:[#allocation28 + $0x7a0] sm:$0xff]
    %v4591 = vld [vmem:[#allocation28 + $0x7a8] sm:$0xff]
    %v4592 = vld [vmem:[#allocation28 + $0x7b0] sm:$0xff]
    %v4593 = vld [vmem:[#allocation28 + $0x7b8] sm:$0xff]
    %v4594 = vld [vmem:[#allocation28 + $0x7c0] sm:$0xff]
    %v4595 = vld [vmem:[#allocation28 + $0x7c8] sm:$0xff]
    %v4596 = vld [vmem:[#allocation28 + $0x7d0] sm:$0xff]
    %v4597 = vld [vmem:[#allocation28 + $0x7d8] sm:$0xff]
    %v4598 = vld [vmem:[#allocation28 + $0x7e0] sm:$0xff]
    %v4599 = vld [vmem:[#allocation28 + $0x7e8] sm:$0xff]
    %v4600 = vld [vmem:[#allocation28 + $0x7f0] sm:$0xff]
    %v4601 = vld [vmem:[#allocation28 + $0x7f8] sm:$0xff]
    %v4602 = vld [vmem:[#allocation28 + $0x800] sm:$0xff]
    %v4603 = vld [vmem:[#allocation28 + $0x808] sm:$0xff]
    %v4604 = vld [vmem:[#allocation28 + $0x810] sm:$0xff]
    %v4605 = vld [vmem:[#allocation28 + $0x818] sm:$0xff]
    %v4606 = vld [vmem:[#allocation28 + $0x820] sm:$0xff]
    %v4607 = vld [vmem:[#allocation28 + $0x828] sm:$0xff]
    %v4608 = vld [vmem:[#allocation28 + $0x830] sm:$0xff]
    %v4609 = vld [vmem:[#allocation28 + $0x838] sm:$0xff]
    %v4610 = vld [vmem:[#allocation28 + $0x840] sm:$0xff]
    %v4611 = vld [vmem:[#allocation28 + $0x848] sm:$0xff]
    %v4612 = vld [vmem:[#allocation28 + $0x850] sm:$0xff]
    %v4613 = vld [vmem:[#allocation28 + $0x858] sm:$0xff]
    %v4614 = vld [vmem:[#allocation28 + $0x860] sm:$0xff]
    %v4615 = vld [vmem:[#allocation28 + $0x868] sm:$0xff]
    %v4616 = vld [vmem:[#allocation28 + $0x870] sm:$0xff]
    %v4617 = vld [vmem:[#allocation28 + $0x878] sm:$0xff]
    %v4618 = vld [vmem:[#allocation28 + $0x880] sm:$0xff]
    %v4619 = vld [vmem:[#allocation28 + $0x888] sm:$0xff]
    %v4620 = vld [vmem:[#allocation28 + $0x890] sm:$0xff]
    %v4621 = vld [vmem:[#allocation28 + $0x898] sm:$0xff]
    %v4622 = vld [vmem:[#allocation28 + $0x8a0] sm:$0xff]
    %v4623 = vld [vmem:[#allocation28 + $0x8a8] sm:$0xff]
    %v4624 = vld [vmem:[#allocation28 + $0x8b0] sm:$0xff]
    %v4625 = vld [vmem:[#allocation28 + $0x8b8] sm:$0xff]
    %v4626 = vld [vmem:[#allocation28 + $0x8c0] sm:$0xff]
    %v4627 = vld [vmem:[#allocation28 + $0x8c8] sm:$0xff]
    %v4628 = vld [vmem:[#allocation28 + $0x8d0] sm:$0xff]
    %v4629 = vld [vmem:[#allocation28 + $0x8d8] sm:$0xff]
    %v4630 = vld [vmem:[#allocation28 + $0x8e0] sm:$0xff]
    %v4631 = vld [vmem:[#allocation28 + $0x8e8] sm:$0xff]
    %v4632 = vld [vmem:[#allocation28 + $0x8f0] sm:$0xff]
    %v4633 = vld [vmem:[#allocation28 + $0x8f8] sm:$0xff]
    %v4634 = vpack.c.bf16 %v4291, %v4291
    %v4635 = vpack.c.bf16 %v4292, %v4292
    %v4636 = vpack.c.bf16 %v4293, %v4293
    %v4637 = vpack.c.bf16 %v4294, %v4294
    %v4638 = vpack.c.bf16 %v4295, %v4295
    %v4639 = vpack.c.bf16 %v4296, %v4296
    %v4640 = vpack.c.bf16 %v4298, %v4298
    %v4641 = vpack.c.bf16 %v4299, %v4299
    %v4642 = vpack.c.bf16 %v4300, %v4300
    %v4643 = vpack.c.bf16 %v4301, %v4301
    %v4644 = vpack.c.bf16 %v4302, %v4302
    %v4645 = vpack.c.bf16 %v4303, %v4303
    %v4646 = vpack.c.bf16 %v4305, %v4305
    %v4647 = vpack.c.bf16 %v4306, %v4306
    %v4648 = vpack.c.bf16 %v4307, %v4307
    %v4649 = vpack.c.bf16 %v4308, %v4308
    %v4650 = vpack.c.bf16 %v4309, %v4309
    %v4651 = vpack.c.bf16 %v4310, %v4310
    %v4652 = vpack.c.bf16 %v4312, %v4312
    %v4653 = vpack.c.bf16 %v4313, %v4313
    %v4654 = vpack.c.bf16 %v4314, %v4314
    %v4655 = vpack.c.bf16 %v4315, %v4315
    %v4656 = vpack.c.bf16 %v4316, %v4316
    %v4657 = vpack.c.bf16 %v4317, %v4317
    %v4658 = vpack.c.bf16 %v4319, %v4319
    %v4659 = vpack.c.bf16 %v4320, %v4320
    %v4660 = vpack.c.bf16 %v4321, %v4321
    %v4661 = vpack.c.bf16 %v4322, %v4322
    %v4662 = vpack.c.bf16 %v4323, %v4323
    %v4663 = vpack.c.bf16 %v4324, %v4324
    %v4664 = vpack.c.bf16 %v4326, %v4326
    %v4665 = vpack.c.bf16 %v4327, %v4327
    %v4666 = vpack.c.bf16 %v4328, %v4328
    %v4667 = vpack.c.bf16 %v4329, %v4329
    %v4668 = vpack.c.bf16 %v4330, %v4330
    %v4669 = vpack.c.bf16 %v4331, %v4331
    %v4670 = vpack.c.bf16 %v4333, %v4333
    %v4671 = vpack.c.bf16 %v4334, %v4334
    %v4672 = vpack.c.bf16 %v4335, %v4335
    %v4673 = vpack.c.bf16 %v4336, %v4336
    %v4674 = vpack.c.bf16 %v4337, %v4337
    %v4675 = vpack.c.bf16 %v4338, %v4338
    %v4676 = vpack.c.bf16 %v4340, %v4340
    %v4677 = vpack.c.bf16 %v4341, %v4341
    %v4678 = vpack.c.bf16 %v4342, %v4342
    %v4679 = vpack.c.bf16 %v4343, %v4343
    %v4680 = vpack.c.bf16 %v4344, %v4344
    %v4681 = vpack.c.bf16 %v4345, %v4345
    %v4682 = vld [vmem:[#allocation29] sm:$0x3f]
    %v4684 = vlaneseq
    %v4685 = vshrl.u32 %v4684, 7
    %v4686 = vsub.s32 0, %v4685
    %v4687 = vrot.slane %v4682, %v4686
    %v4688 = vlaneseq
    %v4689 = vshrl.u32 %v4688, 7
    %v4690 = vsub.s32 1, %v4689
    %v4691 = vrot.slane %v4682, %v4690
    %v4692 = vlaneseq
    %v4693 = vshrl.u32 %v4692, 7
    %v4694 = vsub.s32 2, %v4693
    %v4695 = vrot.slane %v4682, %v4694
    %v4696 = vlaneseq
    %v4697 = vshrl.u32 %v4696, 7
    %v4698 = vsub.s32 3, %v4697
    %v4699 = vrot.slane %v4682, %v4698
    %v4700 = vlaneseq
    %v4701 = vshrl.u32 %v4700, 7
    %v4702 = vsub.s32 4, %v4701
    %v4703 = vrot.slane %v4682, %v4702
    %v4704 = vlaneseq
    %v4705 = vshrl.u32 %v4704, 7
    %v4706 = vsub.s32 5, %v4705
    %v4707 = vrot.slane %v4682, %v4706
    %v4762 = vunpack.c.l.b16 %v4634
    %v4763 = vunpack.c.l.b16 %v4635
    %v4764 = vunpack.c.l.b16 %v4636
    %v4765 = vunpack.c.l.b16 %v4637
    %v4766 = vunpack.c.l.b16 %v4638
    %v4767 = vunpack.c.l.b16 %v4639
    %v4768 = vunpack.c.l.b16 %v4640
    %v4769 = vunpack.c.l.b16 %v4641
    %v4770 = vunpack.c.l.b16 %v4642
    %v4771 = vunpack.c.l.b16 %v4643
    %v4772 = vunpack.c.l.b16 %v4644
    %v4773 = vunpack.c.l.b16 %v4645
    %v4774 = vunpack.c.l.b16 %v4646
    %v4775 = vunpack.c.l.b16 %v4647
    %v4776 = vunpack.c.l.b16 %v4648
    %v4777 = vunpack.c.l.b16 %v4649
    %v4778 = vunpack.c.l.b16 %v4650
    %v4779 = vunpack.c.l.b16 %v4651
    %v4780 = vunpack.c.l.b16 %v4652
    %v4781 = vunpack.c.l.b16 %v4653
    %v4782 = vunpack.c.l.b16 %v4654
    %v4783 = vunpack.c.l.b16 %v4655
    %v4784 = vunpack.c.l.b16 %v4656
    %v4785 = vunpack.c.l.b16 %v4657
    %v4786 = vunpack.c.l.b16 %v4658
    %v4787 = vunpack.c.l.b16 %v4659
    %v4788 = vunpack.c.l.b16 %v4660
    %v4789 = vunpack.c.l.b16 %v4661
    %v4790 = vunpack.c.l.b16 %v4662
    %v4791 = vunpack.c.l.b16 %v4663
    %v4792 = vunpack.c.l.b16 %v4664
    %v4793 = vunpack.c.l.b16 %v4665
    %v4794 = vunpack.c.l.b16 %v4666
    %v4795 = vunpack.c.l.b16 %v4667
    %v4796 = vunpack.c.l.b16 %v4668
    %v4797 = vunpack.c.l.b16 %v4669
    %v4798 = vunpack.c.l.b16 %v4670
    %v4799 = vunpack.c.l.b16 %v4671
    %v4800 = vunpack.c.l.b16 %v4672
    %v4801 = vunpack.c.l.b16 %v4673
    %v4802 = vunpack.c.l.b16 %v4674
    %v4803 = vunpack.c.l.b16 %v4675
    %v4804 = vunpack.c.l.b16 %v4676
    %v4805 = vunpack.c.l.b16 %v4677
    %v4806 = vunpack.c.l.b16 %v4678
    %v4807 = vunpack.c.l.b16 %v4679
    %v4808 = vunpack.c.l.b16 %v4680
    %v4809 = vunpack.c.l.b16 %v4681
    %vm4810 = vcmask 1041409
    %v4811 = vsel %vm4810, %v4768, %v4762
    %vm4812 = vcmask 1042434
    %v4813 = vsel %vm4812, %v4774, %v4811
    %vm4814 = vcmask 1043459
    %v4815 = vsel %vm4814, %v4780, %v4813
    %vm4816 = vcmask 1044484
    %v4817 = vsel %vm4816, %v4786, %v4815
    %vm4818 = vcmask 1045509
    %v4819 = vsel %vm4818, %v4792, %v4817
    %vm4820 = vcmask 1046534
    %v4821 = vsel %vm4820, %v4798, %v4819
    %vm4822 = vcmask 1047559
    %v4823 = vsel %vm4822, %v4804, %v4821
    %v4824 = vsel %vm4810, %v4769, %v4763
    %v4825 = vsel %vm4812, %v4775, %v4824
    %v4826 = vsel %vm4814, %v4781, %v4825
    %v4827 = vsel %vm4816, %v4787, %v4826
    %v4828 = vsel %vm4818, %v4793, %v4827
    %v4829 = vsel %vm4820, %v4799, %v4828
    %v4830 = vsel %vm4822, %v4805, %v4829
    %v4831 = vsel %vm4810, %v4770, %v4764
    %v4832 = vsel %vm4812, %v4776, %v4831
    %v4833 = vsel %vm4814, %v4782, %v4832
    %v4834 = vsel %vm4816, %v4788, %v4833
    %v4835 = vsel %vm4818, %v4794, %v4834
    %v4836 = vsel %vm4820, %v4800, %v4835
    %v4837 = vsel %vm4822, %v4806, %v4836
    %v4838 = vsel %vm4810, %v4771, %v4765
    %v4839 = vsel %vm4812, %v4777, %v4838
    %v4840 = vsel %vm4814, %v4783, %v4839
    %v4841 = vsel %vm4816, %v4789, %v4840
    %v4842 = vsel %vm4818, %v4795, %v4841
    %v4843 = vsel %vm4820, %v4801, %v4842
    %v4844 = vsel %vm4822, %v4807, %v4843
    %v4845 = vsel %vm4810, %v4772, %v4766
    %v4846 = vsel %vm4812, %v4778, %v4845
    %v4847 = vsel %vm4814, %v4784, %v4846
    %v4848 = vsel %vm4816, %v4790, %v4847
    %v4849 = vsel %vm4818, %v4796, %v4848
    %v4850 = vsel %vm4820, %v4802, %v4849
    %v4851 = vsel %vm4822, %v4808, %v4850
    %v4852 = vsel %vm4810, %v4773, %v4767
    %v4853 = vsel %vm4812, %v4779, %v4852
    %v4854 = vsel %vm4814, %v4785, %v4853
    %v4855 = vsel %vm4816, %v4791, %v4854
    %v4856 = vsel %vm4818, %v4797, %v4855
    %v4857 = vsel %vm4820, %v4803, %v4856
    %v4858 = vsel %vm4822, %v4809, %v4857
    %v4859 = vpack.c.b16 %v4823, %v4823
    %v4860 = vpack.c.b16 %v4830, %v4830
    %v4861 = vpack.c.b16 %v4837, %v4837
    %v4862 = vpack.c.b16 %v4844, %v4844
    %v4863 = vpack.c.b16 %v4851, %v4851
    %v4864 = vpack.c.b16 %v4858, %v4858
    %v5159 = vunpack.c.l.b16 %v4346
    %v5160 = vunpack.c.h.b16 %v4346
    %v5161 = vunpack.c.l.b16 %v4347
    %v5162 = vunpack.c.h.b16 %v4347
    %v5163 = vunpack.c.l.b16 %v4348
    %v5164 = vunpack.c.h.b16 %v4348
    %v5165 = vunpack.c.l.b16 %v4349
    %v5166 = vunpack.c.h.b16 %v4349
    %v5167 = vunpack.c.l.b16 %v4350
    %v5168 = vunpack.c.h.b16 %v4350
    %v5169 = vunpack.c.l.b16 %v4351
    %v5170 = vunpack.c.h.b16 %v4351
    %v5171 = vunpack.c.l.b16 %v4352
    %v5172 = vunpack.c.h.b16 %v4352
    %v5173 = vunpack.c.l.b16 %v4353
    %v5174 = vunpack.c.h.b16 %v4353
    %v5175 = vunpack.c.l.b16 %v4354
    %v5176 = vunpack.c.h.b16 %v4354
    %v5177 = vunpack.c.l.b16 %v4355
    %v5178 = vunpack.c.h.b16 %v4355
    %v5179 = vunpack.c.l.b16 %v4356
    %v5180 = vunpack.c.h.b16 %v4356
    %v5181 = vunpack.c.l.b16 %v4357
    %v5182 = vunpack.c.h.b16 %v4357
    %v5183 = vunpack.c.l.b16 %v4358
    %v5184 = vunpack.c.h.b16 %v4358
    %v5185 = vunpack.c.l.b16 %v4359
    %v5186 = vunpack.c.h.b16 %v4359
    %v5187 = vunpack.c.l.b16 %v4360
    %v5188 = vunpack.c.h.b16 %v4360
    %v5189 = vunpack.c.l.b16 %v4361
    %v5190 = vunpack.c.h.b16 %v4361
    %v5191 = vunpack.c.l.b16 %v4362
    %v5192 = vunpack.c.h.b16 %v4362
    %v5193 = vunpack.c.l.b16 %v4363
    %v5194 = vunpack.c.h.b16 %v4363
    %v5195 = vunpack.c.l.b16 %v4364
    %v5196 = vunpack.c.h.b16 %v4364
    %v5197 = vunpack.c.l.b16 %v4365
    %v5198 = vunpack.c.h.b16 %v4365
    %v5199 = vunpack.c.l.b16 %v4366
    %v5200 = vunpack.c.h.b16 %v4366
    %v5201 = vunpack.c.l.b16 %v4367
    %v5202 = vunpack.c.h.b16 %v4367
    %v5203 = vunpack.c.l.b16 %v4368
    %v5204 = vunpack.c.h.b16 %v4368
    %v5205 = vunpack.c.l.b16 %v4369
    %v5206 = vunpack.c.h.b16 %v4369
    %v5207 = vunpack.c.l.b16 %v4370
    %v5208 = vunpack.c.h.b16 %v4370
    %v5209 = vunpack.c.l.b16 %v4371
    %v5210 = vunpack.c.h.b16 %v4371
    %v5211 = vunpack.c.l.b16 %v4372
    %v5212 = vunpack.c.h.b16 %v4372
    %v5213 = vunpack.c.l.b16 %v4373
    %v5214 = vunpack.c.h.b16 %v4373
    %v5215 = vunpack.c.l.b16 %v4374
    %v5216 = vunpack.c.h.b16 %v4374
    %v5217 = vunpack.c.l.b16 %v4375
    %v5218 = vunpack.c.h.b16 %v4375
    %v5219 = vunpack.c.l.b16 %v4376
    %v5220 = vunpack.c.h.b16 %v4376
    %v5221 = vunpack.c.l.b16 %v4377
    %v5222 = vunpack.c.h.b16 %v4377
    %v5223 = vunpack.c.l.b16 %v4378
    %v5224 = vunpack.c.h.b16 %v4378
    %v5225 = vunpack.c.l.b16 %v4379
    %v5226 = vunpack.c.h.b16 %v4379
    %v5227 = vunpack.c.l.b16 %v4380
    %v5228 = vunpack.c.h.b16 %v4380
    %v5229 = vunpack.c.l.b16 %v4381
    %v5230 = vunpack.c.h.b16 %v4381
    %v5231 = vunpack.c.l.b16 %v4382
    %v5232 = vunpack.c.h.b16 %v4382
    %v5233 = vunpack.c.l.b16 %v4383
    %v5234 = vunpack.c.h.b16 %v4383
    %v5235 = vunpack.c.l.b16 %v4384
    %v5236 = vunpack.c.h.b16 %v4384
    %v5237 = vunpack.c.l.b16 %v4385
    %v5238 = vunpack.c.h.b16 %v4385
    %v5239 = vunpack.c.l.b16 %v4386
    %v5240 = vunpack.c.h.b16 %v4386
    %v5241 = vunpack.c.l.b16 %v4387
    %v5242 = vunpack.c.h.b16 %v4387
    %v5243 = vunpack.c.l.b16 %v4388
    %v5244 = vunpack.c.h.b16 %v4388
    %v5245 = vunpack.c.l.b16 %v4389
    %v5246 = vunpack.c.h.b16 %v4389
    %v5247 = vunpack.c.l.b16 %v4390
    %v5248 = vunpack.c.h.b16 %v4390
    %v5249 = vunpack.c.l.b16 %v4391
    %v5250 = vunpack.c.h.b16 %v4391
    %v5251 = vunpack.c.l.b16 %v4392
    %v5252 = vunpack.c.h.b16 %v4392
    %v5253 = vunpack.c.l.b16 %v4393
    %v5254 = vunpack.c.h.b16 %v4393
    %v5255 = vunpack.c.l.b16 %v4394
    %v5256 = vunpack.c.h.b16 %v4394
    %v5257 = vunpack.c.l.b16 %v4395
    %v5258 = vunpack.c.h.b16 %v4395
    %v5259 = vunpack.c.l.b16 %v4396
    %v5260 = vunpack.c.h.b16 %v4396
    %v5261 = vunpack.c.l.b16 %v4397
    %v5262 = vunpack.c.h.b16 %v4397
    %v5263 = vunpack.c.l.b16 %v4398
    %v5264 = vunpack.c.h.b16 %v4398
    %v5265 = vunpack.c.l.b16 %v4399
    %v5266 = vunpack.c.h.b16 %v4399
    %v5267 = vunpack.c.l.b16 %v4400
    %v5268 = vunpack.c.h.b16 %v4400
    %v5269 = vunpack.c.l.b16 %v4401
    %v5270 = vunpack.c.h.b16 %v4401
    %v5271 = vunpack.c.l.b16 %v4402
    %v5272 = vunpack.c.h.b16 %v4402
    %v5273 = vunpack.c.l.b16 %v4403
    %v5274 = vunpack.c.h.b16 %v4403
    %v5275 = vunpack.c.l.b16 %v4404
    %v5276 = vunpack.c.h.b16 %v4404
    %v5277 = vunpack.c.l.b16 %v4405
    %v5278 = vunpack.c.h.b16 %v4405
    %v5279 = vunpack.c.l.b16 %v4406
    %v5280 = vunpack.c.h.b16 %v4406
    %v5281 = vunpack.c.l.b16 %v4407
    %v5282 = vunpack.c.h.b16 %v4407
    %v5283 = vunpack.c.l.b16 %v4408
    %v5284 = vunpack.c.h.b16 %v4408
    %v5285 = vunpack.c.l.b16 %v4409
    %v5286 = vunpack.c.h.b16 %v4409
    %v5287 = vunpack.c.l.b16 %v4410
    %v5288 = vunpack.c.h.b16 %v4410
    %v5289 = vunpack.c.l.b16 %v4411
    %v5290 = vunpack.c.h.b16 %v4411
    %v5291 = vunpack.c.l.b16 %v4412
    %v5292 = vunpack.c.h.b16 %v4412
    %v5293 = vunpack.c.l.b16 %v4413
    %v5294 = vunpack.c.h.b16 %v4413
    %v5295 = vunpack.c.l.b16 %v4414
    %v5296 = vunpack.c.h.b16 %v4414
    %v5297 = vunpack.c.l.b16 %v4415
    %v5298 = vunpack.c.h.b16 %v4415
    %v5299 = vunpack.c.l.b16 %v4416
    %v5300 = vunpack.c.h.b16 %v4416
    %v5301 = vunpack.c.l.b16 %v4417
    %v5302 = vunpack.c.h.b16 %v4417
    %v5303 = vunpack.c.l.b16 %v4418
    %v5304 = vunpack.c.h.b16 %v4418
    %v5305 = vunpack.c.l.b16 %v4419
    %v5306 = vunpack.c.h.b16 %v4419
    %v5307 = vunpack.c.l.b16 %v4420
    %v5308 = vunpack.c.h.b16 %v4420
    %v5309 = vunpack.c.l.b16 %v4421
    %v5310 = vunpack.c.h.b16 %v4421
    %v5311 = vunpack.c.l.b16 %v4422
    %v5312 = vunpack.c.h.b16 %v4422
    %v5313 = vunpack.c.l.b16 %v4423
    %v5314 = vunpack.c.h.b16 %v4423
    %v5315 = vunpack.c.l.b16 %v4424
    %v5316 = vunpack.c.h.b16 %v4424
    %v5317 = vunpack.c.l.b16 %v4425
    %v5318 = vunpack.c.h.b16 %v4425
    %v5319 = vunpack.c.l.b16 %v4426
    %v5320 = vunpack.c.h.b16 %v4426
    %v5321 = vunpack.c.l.b16 %v4427
    %v5322 = vunpack.c.h.b16 %v4427
    %v5323 = vunpack.c.l.b16 %v4428
    %v5324 = vunpack.c.h.b16 %v4428
    %v5325 = vunpack.c.l.b16 %v4429
    %v5326 = vunpack.c.h.b16 %v4429
    %v5327 = vunpack.c.l.b16 %v4430
    %v5328 = vunpack.c.h.b16 %v4430
    %v5329 = vunpack.c.l.b16 %v4431
    %v5330 = vunpack.c.h.b16 %v4431
    %v5331 = vunpack.c.l.b16 %v4432
    %v5332 = vunpack.c.h.b16 %v4432
    %v5333 = vunpack.c.l.b16 %v4433
    %v5334 = vunpack.c.h.b16 %v4433
    %v5335 = vunpack.c.l.b16 %v4434
    %v5336 = vunpack.c.h.b16 %v4434
    %v5337 = vunpack.c.l.b16 %v4435
    %v5338 = vunpack.c.h.b16 %v4435
    %v5339 = vunpack.c.l.b16 %v4436
    %v5340 = vunpack.c.h.b16 %v4436
    %v5341 = vunpack.c.l.b16 %v4437
    %v5342 = vunpack.c.h.b16 %v4437
    %v5343 = vunpack.c.l.b16 %v4438
    %v5344 = vunpack.c.h.b16 %v4438
    %v5345 = vunpack.c.l.b16 %v4439
    %v5346 = vunpack.c.h.b16 %v4439
    %v5347 = vunpack.c.l.b16 %v4440
    %v5348 = vunpack.c.h.b16 %v4440
    %v5349 = vunpack.c.l.b16 %v4441
    %v5350 = vunpack.c.h.b16 %v4441
    %v5351 = vunpack.c.l.b16 %v4442
    %v5352 = vunpack.c.h.b16 %v4442
    %v5353 = vunpack.c.l.b16 %v4443
    %v5354 = vunpack.c.h.b16 %v4443
    %v5355 = vunpack.c.l.b16 %v4444
    %v5356 = vunpack.c.h.b16 %v4444
    %v5357 = vunpack.c.l.b16 %v4445
    %v5358 = vunpack.c.h.b16 %v4445
    %v5359 = vunpack.c.l.b16 %v4446
    %v5360 = vunpack.c.h.b16 %v4446
    %v5361 = vunpack.c.l.b16 %v4447
    %v5362 = vunpack.c.h.b16 %v4447
    %v5363 = vunpack.c.l.b16 %v4448
    %v5364 = vunpack.c.h.b16 %v4448
    %v5365 = vunpack.c.l.b16 %v4449
    %v5366 = vunpack.c.h.b16 %v4449
    %v5367 = vunpack.c.l.b16 %v4450
    %v5368 = vunpack.c.h.b16 %v4450
    %v5369 = vunpack.c.l.b16 %v4451
    %v5370 = vunpack.c.h.b16 %v4451
    %v5371 = vunpack.c.l.b16 %v4452
    %v5372 = vunpack.c.h.b16 %v4452
    %v5373 = vunpack.c.l.b16 %v4453
    %v5374 = vunpack.c.h.b16 %v4453
    %v5375 = vunpack.c.l.b16 %v4454
    %v5376 = vunpack.c.h.b16 %v4454
    %v5377 = vunpack.c.l.b16 %v4455
    %v5378 = vunpack.c.h.b16 %v4455
    %v5379 = vunpack.c.l.b16 %v4456
    %v5380 = vunpack.c.h.b16 %v4456
    %v5381 = vunpack.c.l.b16 %v4457
    %v5382 = vunpack.c.h.b16 %v4457
    %v5383 = vunpack.c.l.b16 %v4458
    %v5384 = vunpack.c.h.b16 %v4458
    %v5385 = vunpack.c.l.b16 %v4459
    %v5386 = vunpack.c.h.b16 %v4459
    %v5387 = vunpack.c.l.b16 %v4460
    %v5388 = vunpack.c.h.b16 %v4460
    %v5389 = vunpack.c.l.b16 %v4461
    %v5390 = vunpack.c.h.b16 %v4461
    %v5391 = vunpack.c.l.b16 %v4462
    %v5392 = vunpack.c.h.b16 %v4462
    %v5393 = vunpack.c.l.b16 %v4463
    %v5394 = vunpack.c.h.b16 %v4463
    %v5395 = vunpack.c.l.b16 %v4464
    %v5396 = vunpack.c.h.b16 %v4464
    %v5397 = vunpack.c.l.b16 %v4465
    %v5398 = vunpack.c.h.b16 %v4465
    %v5399 = vunpack.c.l.b16 %v4466
    %v5400 = vunpack.c.h.b16 %v4466
    %v5401 = vunpack.c.l.b16 %v4467
    %v5402 = vunpack.c.h.b16 %v4467
    %v5403 = vunpack.c.l.b16 %v4468
    %v5404 = vunpack.c.h.b16 %v4468
    %v5405 = vunpack.c.l.b16 %v4469
    %v5406 = vunpack.c.h.b16 %v4469
    %v5407 = vunpack.c.l.b16 %v4470
    %v5408 = vunpack.c.h.b16 %v4470
    %v5409 = vunpack.c.l.b16 %v4471
    %v5410 = vunpack.c.h.b16 %v4471
    %v5411 = vunpack.c.l.b16 %v4472
    %v5412 = vunpack.c.h.b16 %v4472
    %v5413 = vunpack.c.l.b16 %v4473
    %v5414 = vunpack.c.h.b16 %v4473
    %v5415 = vunpack.c.l.b16 %v4474
    %v5416 = vunpack.c.h.b16 %v4474
    %v5417 = vunpack.c.l.b16 %v4475
    %v5418 = vunpack.c.h.b16 %v4475
    %v5419 = vunpack.c.l.b16 %v4476
    %v5420 = vunpack.c.h.b16 %v4476
    %v5421 = vunpack.c.l.b16 %v4477
    %v5422 = vunpack.c.h.b16 %v4477
    %v5423 = vunpack.c.l.b16 %v4478
    %v5424 = vunpack.c.h.b16 %v4478
    %v5425 = vunpack.c.l.b16 %v4479
    %v5426 = vunpack.c.h.b16 %v4479
    %v5427 = vunpack.c.l.b16 %v4480
    %v5428 = vunpack.c.h.b16 %v4480
    %v5429 = vunpack.c.l.b16 %v4481
    %v5430 = vunpack.c.h.b16 %v4481
    %v5431 = vunpack.c.l.b16 %v4482
    %v5432 = vunpack.c.h.b16 %v4482
    %v5433 = vunpack.c.l.b16 %v4483
    %v5434 = vunpack.c.h.b16 %v4483
    %v5435 = vunpack.c.l.b16 %v4484
    %v5436 = vunpack.c.h.b16 %v4484
    %v5437 = vunpack.c.l.b16 %v4485
    %v5438 = vunpack.c.h.b16 %v4485
    %v5439 = vunpack.c.l.b16 %v4486
    %v5440 = vunpack.c.h.b16 %v4486
    %v5441 = vunpack.c.l.b16 %v4487
    %v5442 = vunpack.c.h.b16 %v4487
    %v5443 = vunpack.c.l.b16 %v4488
    %v5444 = vunpack.c.h.b16 %v4488
    %v5445 = vunpack.c.l.b16 %v4489
    %v5446 = vunpack.c.h.b16 %v4489
    %v5447 = vunpack.c.l.b16 %v4490
    %v5448 = vunpack.c.h.b16 %v4490
    %v5449 = vunpack.c.l.b16 %v4491
    %v5450 = vunpack.c.h.b16 %v4491
    %v5451 = vunpack.c.l.b16 %v4492
    %v5452 = vunpack.c.h.b16 %v4492
    %v5453 = vunpack.c.l.b16 %v4493
    %v5454 = vunpack.c.h.b16 %v4493
    %v5455 = vunpack.c.l.b16 %v4494
    %v5456 = vunpack.c.h.b16 %v4494
    %v5457 = vunpack.c.l.b16 %v4495
    %v5458 = vunpack.c.h.b16 %v4495
    %v5459 = vunpack.c.l.b16 %v4496
    %v5460 = vunpack.c.h.b16 %v4496
    %v5461 = vunpack.c.l.b16 %v4497
    %v5462 = vunpack.c.h.b16 %v4497
    %v5463 = vunpack.c.l.b16 %v4498
    %v5464 = vunpack.c.h.b16 %v4498
    %v5465 = vunpack.c.l.b16 %v4499
    %v5466 = vunpack.c.h.b16 %v4499
    %v5467 = vunpack.c.l.b16 %v4500
    %v5468 = vunpack.c.h.b16 %v4500
    %v5469 = vunpack.c.l.b16 %v4501
    %v5470 = vunpack.c.h.b16 %v4501
    %v5471 = vunpack.c.l.b16 %v4502
    %v5472 = vunpack.c.h.b16 %v4502
    %v5473 = vunpack.c.l.b16 %v4503
    %v5474 = vunpack.c.h.b16 %v4503
    %v5475 = vunpack.c.l.b16 %v4504
    %v5476 = vunpack.c.h.b16 %v4504
    %v5477 = vunpack.c.l.b16 %v4505
    %v5478 = vunpack.c.h.b16 %v4505
    %v5479 = vunpack.c.l.b16 %v4506
    %v5480 = vunpack.c.h.b16 %v4506
    %v5481 = vunpack.c.l.b16 %v4507
    %v5482 = vunpack.c.h.b16 %v4507
    %v5483 = vunpack.c.l.b16 %v4508
    %v5484 = vunpack.c.h.b16 %v4508
    %v5485 = vunpack.c.l.b16 %v4509
    %v5486 = vunpack.c.h.b16 %v4509
    %v5487 = vunpack.c.l.b16 %v4510
    %v5488 = vunpack.c.h.b16 %v4510
    %v5489 = vunpack.c.l.b16 %v4511
    %v5490 = vunpack.c.h.b16 %v4511
    %v5491 = vunpack.c.l.b16 %v4512
    %v5492 = vunpack.c.h.b16 %v4512
    %v5493 = vunpack.c.l.b16 %v4513
    %v5494 = vunpack.c.h.b16 %v4513
    %v5495 = vunpack.c.l.b16 %v4514
    %v5496 = vunpack.c.h.b16 %v4514
    %v5497 = vunpack.c.l.b16 %v4515
    %v5498 = vunpack.c.h.b16 %v4515
    %v5499 = vunpack.c.l.b16 %v4516
    %v5500 = vunpack.c.h.b16 %v4516
    %v5501 = vunpack.c.l.b16 %v4517
    %v5502 = vunpack.c.h.b16 %v4517
    %v5503 = vunpack.c.l.b16 %v4518
    %v5504 = vunpack.c.h.b16 %v4518
    %v5505 = vunpack.c.l.b16 %v4519
    %v5506 = vunpack.c.h.b16 %v4519
    %v5507 = vunpack.c.l.b16 %v4520
    %v5508 = vunpack.c.h.b16 %v4520
    %v5509 = vunpack.c.l.b16 %v4521
    %v5510 = vunpack.c.h.b16 %v4521
    %v5511 = vunpack.c.l.b16 %v4522
    %v5512 = vunpack.c.h.b16 %v4522
    %v5513 = vunpack.c.l.b16 %v4523
    %v5514 = vunpack.c.h.b16 %v4523
    %v5515 = vunpack.c.l.b16 %v4524
    %v5516 = vunpack.c.h.b16 %v4524
    %v5517 = vunpack.c.l.b16 %v4525
    %v5518 = vunpack.c.h.b16 %v4525
    %v5519 = vunpack.c.l.b16 %v4526
    %v5520 = vunpack.c.h.b16 %v4526
    %v5521 = vunpack.c.l.b16 %v4527
    %v5522 = vunpack.c.h.b16 %v4527
    %v5523 = vunpack.c.l.b16 %v4528
    %v5524 = vunpack.c.h.b16 %v4528
    %v5525 = vunpack.c.l.b16 %v4529
    %v5526 = vunpack.c.h.b16 %v4529
    %v5527 = vunpack.c.l.b16 %v4530
    %v5528 = vunpack.c.h.b16 %v4530
    %v5529 = vunpack.c.l.b16 %v4531
    %v5530 = vunpack.c.h.b16 %v4531
    %v5531 = vunpack.c.l.b16 %v4532
    %v5532 = vunpack.c.h.b16 %v4532
    %v5533 = vunpack.c.l.b16 %v4533
    %v5534 = vunpack.c.h.b16 %v4533
    %v5535 = vunpack.c.l.b16 %v4534
    %v5536 = vunpack.c.h.b16 %v4534
    %v5537 = vunpack.c.l.b16 %v4535
    %v5538 = vunpack.c.h.b16 %v4535
    %v5539 = vunpack.c.l.b16 %v4536
    %v5540 = vunpack.c.h.b16 %v4536
    %v5541 = vunpack.c.l.b16 %v4537
    %v5542 = vunpack.c.h.b16 %v4537
    %v5543 = vunpack.c.l.b16 %v4538
    %v5544 = vunpack.c.h.b16 %v4538
    %v5545 = vunpack.c.l.b16 %v4539
    %v5546 = vunpack.c.h.b16 %v4539
    %v5547 = vunpack.c.l.b16 %v4540
    %v5548 = vunpack.c.h.b16 %v4540
    %v5549 = vunpack.c.l.b16 %v4541
    %v5550 = vunpack.c.h.b16 %v4541
    %v5551 = vunpack.c.l.b16 %v4542
    %v5552 = vunpack.c.h.b16 %v4542
    %v5553 = vunpack.c.l.b16 %v4543
    %v5554 = vunpack.c.h.b16 %v4543
    %v5555 = vunpack.c.l.b16 %v4544
    %v5556 = vunpack.c.h.b16 %v4544
    %v5557 = vunpack.c.l.b16 %v4545
    %v5558 = vunpack.c.h.b16 %v4545
    %v5559 = vunpack.c.l.b16 %v4546
    %v5560 = vunpack.c.h.b16 %v4546
    %v5561 = vunpack.c.l.b16 %v4547
    %v5562 = vunpack.c.h.b16 %v4547
    %v5563 = vunpack.c.l.b16 %v4548
    %v5564 = vunpack.c.h.b16 %v4548
    %v5565 = vunpack.c.l.b16 %v4549
    %v5566 = vunpack.c.h.b16 %v4549
    %v5567 = vunpack.c.l.b16 %v4550
    %v5568 = vunpack.c.h.b16 %v4550
    %v5569 = vunpack.c.l.b16 %v4551
    %v5570 = vunpack.c.h.b16 %v4551
    %v5571 = vunpack.c.l.b16 %v4552
    %v5572 = vunpack.c.h.b16 %v4552
    %v5573 = vunpack.c.l.b16 %v4553
    %v5574 = vunpack.c.h.b16 %v4553
    %v5575 = vunpack.c.l.b16 %v4554
    %v5576 = vunpack.c.h.b16 %v4554
    %v5577 = vunpack.c.l.b16 %v4555
    %v5578 = vunpack.c.h.b16 %v4555
    %v5579 = vunpack.c.l.b16 %v4556
    %v5580 = vunpack.c.h.b16 %v4556
    %v5581 = vunpack.c.l.b16 %v4557
    %v5582 = vunpack.c.h.b16 %v4557
    %v5583 = vunpack.c.l.b16 %v4558
    %v5584 = vunpack.c.h.b16 %v4558
    %v5585 = vunpack.c.l.b16 %v4559
    %v5586 = vunpack.c.h.b16 %v4559
    %v5587 = vunpack.c.l.b16 %v4560
    %v5588 = vunpack.c.h.b16 %v4560
    %v5589 = vunpack.c.l.b16 %v4561
    %v5590 = vunpack.c.h.b16 %v4561
    %v5591 = vunpack.c.l.b16 %v4562
    %v5592 = vunpack.c.h.b16 %v4562
    %v5593 = vunpack.c.l.b16 %v4563
    %v5594 = vunpack.c.h.b16 %v4563
    %v5595 = vunpack.c.l.b16 %v4564
    %v5596 = vunpack.c.h.b16 %v4564
    %v5597 = vunpack.c.l.b16 %v4565
    %v5598 = vunpack.c.h.b16 %v4565
    %v5599 = vunpack.c.l.b16 %v4566
    %v5600 = vunpack.c.h.b16 %v4566
    %v5601 = vunpack.c.l.b16 %v4567
    %v5602 = vunpack.c.h.b16 %v4567
    %v5603 = vunpack.c.l.b16 %v4568
    %v5604 = vunpack.c.h.b16 %v4568
    %v5605 = vunpack.c.l.b16 %v4569
    %v5606 = vunpack.c.h.b16 %v4569
    %v5607 = vunpack.c.l.b16 %v4570
    %v5608 = vunpack.c.h.b16 %v4570
    %v5609 = vunpack.c.l.b16 %v4571
    %v5610 = vunpack.c.h.b16 %v4571
    %v5611 = vunpack.c.l.b16 %v4572
    %v5612 = vunpack.c.h.b16 %v4572
    %v5613 = vunpack.c.l.b16 %v4573
    %v5614 = vunpack.c.h.b16 %v4573
    %v5615 = vunpack.c.l.b16 %v4574
    %v5616 = vunpack.c.h.b16 %v4574
    %v5617 = vunpack.c.l.b16 %v4575
    %v5618 = vunpack.c.h.b16 %v4575
    %v5619 = vunpack.c.l.b16 %v4576
    %v5620 = vunpack.c.h.b16 %v4576
    %v5621 = vunpack.c.l.b16 %v4577
    %v5622 = vunpack.c.h.b16 %v4577
    %v5623 = vunpack.c.l.b16 %v4578
    %v5624 = vunpack.c.h.b16 %v4578
    %v5625 = vunpack.c.l.b16 %v4579
    %v5626 = vunpack.c.h.b16 %v4579
    %v5627 = vunpack.c.l.b16 %v4580
    %v5628 = vunpack.c.h.b16 %v4580
    %v5629 = vunpack.c.l.b16 %v4581
    %v5630 = vunpack.c.h.b16 %v4581
    %v5631 = vunpack.c.l.b16 %v4582
    %v5632 = vunpack.c.h.b16 %v4582
    %v5633 = vunpack.c.l.b16 %v4583
    %v5634 = vunpack.c.h.b16 %v4583
    %v5635 = vunpack.c.l.b16 %v4584
    %v5636 = vunpack.c.h.b16 %v4584
    %v5637 = vunpack.c.l.b16 %v4585
    %v5638 = vunpack.c.h.b16 %v4585
    %v5639 = vunpack.c.l.b16 %v4586
    %v5640 = vunpack.c.h.b16 %v4586
    %v5641 = vunpack.c.l.b16 %v4587
    %v5642 = vunpack.c.h.b16 %v4587
    %v5643 = vunpack.c.l.b16 %v4588
    %v5644 = vunpack.c.h.b16 %v4588
    %v5645 = vunpack.c.l.b16 %v4589
    %v5646 = vunpack.c.h.b16 %v4589
    %v5647 = vunpack.c.l.b16 %v4590
    %v5648 = vunpack.c.h.b16 %v4590
    %v5649 = vunpack.c.l.b16 %v4591
    %v5650 = vunpack.c.h.b16 %v4591
    %v5651 = vunpack.c.l.b16 %v4592
    %v5652 = vunpack.c.h.b16 %v4592
    %v5653 = vunpack.c.l.b16 %v4593
    %v5654 = vunpack.c.h.b16 %v4593
    %v5655 = vunpack.c.l.b16 %v4594
    %v5656 = vunpack.c.h.b16 %v4594
    %v5657 = vunpack.c.l.b16 %v4595
    %v5658 = vunpack.c.h.b16 %v4595
    %v5659 = vunpack.c.l.b16 %v4596
    %v5660 = vunpack.c.h.b16 %v4596
    %v5661 = vunpack.c.l.b16 %v4597
    %v5662 = vunpack.c.h.b16 %v4597
    %v5663 = vunpack.c.l.b16 %v4598
    %v5664 = vunpack.c.h.b16 %v4598
    %v5665 = vunpack.c.l.b16 %v4599
    %v5666 = vunpack.c.h.b16 %v4599
    %v5667 = vunpack.c.l.b16 %v4600
    %v5668 = vunpack.c.h.b16 %v4600
    %v5669 = vunpack.c.l.b16 %v4601
    %v5670 = vunpack.c.h.b16 %v4601
    %v5671 = vunpack.c.l.b16 %v4602
    %v5672 = vunpack.c.h.b16 %v4602
    %v5673 = vunpack.c.l.b16 %v4603
    %v5674 = vunpack.c.h.b16 %v4603
    %v5675 = vunpack.c.l.b16 %v4604
    %v5676 = vunpack.c.h.b16 %v4604
    %v5677 = vunpack.c.l.b16 %v4605
    %v5678 = vunpack.c.h.b16 %v4605
    %v5679 = vunpack.c.l.b16 %v4606
    %v5680 = vunpack.c.h.b16 %v4606
    %v5681 = vunpack.c.l.b16 %v4607
    %v5682 = vunpack.c.h.b16 %v4607
    %v5683 = vunpack.c.l.b16 %v4608
    %v5684 = vunpack.c.h.b16 %v4608
    %v5685 = vunpack.c.l.b16 %v4609
    %v5686 = vunpack.c.h.b16 %v4609
    %v5687 = vunpack.c.l.b16 %v4610
    %v5688 = vunpack.c.h.b16 %v4610
    %v5689 = vunpack.c.l.b16 %v4611
    %v5690 = vunpack.c.h.b16 %v4611
    %v5691 = vunpack.c.l.b16 %v4612
    %v5692 = vunpack.c.h.b16 %v4612
    %v5693 = vunpack.c.l.b16 %v4613
    %v5694 = vunpack.c.h.b16 %v4613
    %v5695 = vunpack.c.l.b16 %v4614
    %v5696 = vunpack.c.h.b16 %v4614
    %v5697 = vunpack.c.l.b16 %v4615
    %v5698 = vunpack.c.h.b16 %v4615
    %v5699 = vunpack.c.l.b16 %v4616
    %v5700 = vunpack.c.h.b16 %v4616
    %v5701 = vunpack.c.l.b16 %v4617
    %v5702 = vunpack.c.h.b16 %v4617
    %v5703 = vunpack.c.l.b16 %v4618
    %v5704 = vunpack.c.h.b16 %v4618
    %v5705 = vunpack.c.l.b16 %v4619
    %v5706 = vunpack.c.h.b16 %v4619
    %v5707 = vunpack.c.l.b16 %v4620
    %v5708 = vunpack.c.h.b16 %v4620
    %v5709 = vunpack.c.l.b16 %v4621
    %v5710 = vunpack.c.h.b16 %v4621
    %v5711 = vunpack.c.l.b16 %v4622
    %v5712 = vunpack.c.h.b16 %v4622
    %v5713 = vunpack.c.l.b16 %v4623
    %v5714 = vunpack.c.h.b16 %v4623
    %v5715 = vunpack.c.l.b16 %v4624
    %v5716 = vunpack.c.h.b16 %v4624
    %v5717 = vunpack.c.l.b16 %v4625
    %v5718 = vunpack.c.h.b16 %v4625
    %v5719 = vunpack.c.l.b16 %v4626
    %v5720 = vunpack.c.h.b16 %v4626
    %v5721 = vunpack.c.l.b16 %v4627
    %v5722 = vunpack.c.h.b16 %v4627
    %v5723 = vunpack.c.l.b16 %v4628
    %v5724 = vunpack.c.h.b16 %v4628
    %v5725 = vunpack.c.l.b16 %v4629
    %v5726 = vunpack.c.h.b16 %v4629
    %v5727 = vunpack.c.l.b16 %v4630
    %v5728 = vunpack.c.h.b16 %v4630
    %v5729 = vunpack.c.l.b16 %v4631
    %v5730 = vunpack.c.h.b16 %v4631
    %v5731 = vunpack.c.l.b16 %v4632
    %v5732 = vunpack.c.h.b16 %v4632
    %v5733 = vunpack.c.l.b16 %v4633
    %v5734 = vunpack.c.h.b16 %v4633
    %v5735 = vpack.c.b16 %v5165, %v5159
    %v5736 = vpack.c.b16 %v5166, %v5160
    %v5737 = vpack.c.b16 %v5167, %v5161
    %v5738 = vpack.c.b16 %v5168, %v5162
    %v5739 = vpack.c.b16 %v5169, %v5163
    %v5740 = vpack.c.b16 %v5170, %v5164
    %v5741 = vpack.c.b16 %v5177, %v5171
    %v5742 = vpack.c.b16 %v5178, %v5172
    %v5743 = vpack.c.b16 %v5179, %v5173
    %v5744 = vpack.c.b16 %v5180, %v5174
    %v5745 = vpack.c.b16 %v5181, %v5175
    %v5746 = vpack.c.b16 %v5182, %v5176
    %v5747 = vpack.c.b16 %v5189, %v5183
    %v5748 = vpack.c.b16 %v5190, %v5184
    %v5749 = vpack.c.b16 %v5191, %v5185
    %v5750 = vpack.c.b16 %v5192, %v5186
    %v5751 = vpack.c.b16 %v5193, %v5187
    %v5752 = vpack.c.b16 %v5194, %v5188
    %v5753 = vpack.c.b16 %v5201, %v5195
    %v5754 = vpack.c.b16 %v5202, %v5196
    %v5755 = vpack.c.b16 %v5203, %v5197
    %v5756 = vpack.c.b16 %v5204, %v5198
    %v5757 = vpack.c.b16 %v5205, %v5199
    %v5758 = vpack.c.b16 %v5206, %v5200
    %v5759 = vpack.c.b16 %v5213, %v5207
    %v5760 = vpack.c.b16 %v5214, %v5208
    %v5761 = vpack.c.b16 %v5215, %v5209
    %v5762 = vpack.c.b16 %v5216, %v5210
    %v5763 = vpack.c.b16 %v5217, %v5211
    %v5764 = vpack.c.b16 %v5218, %v5212
    %v5765 = vpack.c.b16 %v5225, %v5219
    %v5766 = vpack.c.b16 %v5226, %v5220
    %v5767 = vpack.c.b16 %v5227, %v5221
    %v5768 = vpack.c.b16 %v5228, %v5222
    %v5769 = vpack.c.b16 %v5229, %v5223
    %v5770 = vpack.c.b16 %v5230, %v5224
    %v5771 = vpack.c.b16 %v5237, %v5231
    %v5772 = vpack.c.b16 %v5238, %v5232
    %v5773 = vpack.c.b16 %v5239, %v5233
    %v5774 = vpack.c.b16 %v5240, %v5234
    %v5775 = vpack.c.b16 %v5241, %v5235
    %v5776 = vpack.c.b16 %v5242, %v5236
    %v5777 = vpack.c.b16 %v5249, %v5243
    %v5778 = vpack.c.b16 %v5250, %v5244
    %v5779 = vpack.c.b16 %v5251, %v5245
    %v5780 = vpack.c.b16 %v5252, %v5246
    %v5781 = vpack.c.b16 %v5253, %v5247
    %v5782 = vpack.c.b16 %v5254, %v5248
    %v5783 = vpack.c.b16 %v5261, %v5255
    %v5784 = vpack.c.b16 %v5262, %v5256
    %v5785 = vpack.c.b16 %v5263, %v5257
    %v5786 = vpack.c.b16 %v5264, %v5258
    %v5787 = vpack.c.b16 %v5265, %v5259
    %v5788 = vpack.c.b16 %v5266, %v5260
    %v5789 = vpack.c.b16 %v5273, %v5267
    %v5790 = vpack.c.b16 %v5274, %v5268
    %v5791 = vpack.c.b16 %v5275, %v5269
    %v5792 = vpack.c.b16 %v5276, %v5270
    %v5793 = vpack.c.b16 %v5277, %v5271
    %v5794 = vpack.c.b16 %v5278, %v5272
    %v5795 = vpack.c.b16 %v5285, %v5279
    %v5796 = vpack.c.b16 %v5286, %v5280
    %v5797 = vpack.c.b16 %v5287, %v5281
    %v5798 = vpack.c.b16 %v5288, %v5282
    %v5799 = vpack.c.b16 %v5289, %v5283
    %v5800 = vpack.c.b16 %v5290, %v5284
    %v5801 = vpack.c.b16 %v5297, %v5291
    %v5802 = vpack.c.b16 %v5298, %v5292
    %v5803 = vpack.c.b16 %v5299, %v5293
    %v5804 = vpack.c.b16 %v5300, %v5294
    %v5805 = vpack.c.b16 %v5301, %v5295
    %v5806 = vpack.c.b16 %v5302, %v5296
    %v5807 = vpack.c.b16 %v5309, %v5303
    %v5808 = vpack.c.b16 %v5310, %v5304
    %v5809 = vpack.c.b16 %v5311, %v5305
    %v5810 = vpack.c.b16 %v5312, %v5306
    %v5811 = vpack.c.b16 %v5313, %v5307
    %v5812 = vpack.c.b16 %v5314, %v5308
    %v5813 = vpack.c.b16 %v5321, %v5315
    %v5814 = vpack.c.b16 %v5322, %v5316
    %v5815 = vpack.c.b16 %v5323, %v5317
    %v5816 = vpack.c.b16 %v5324, %v5318
    %v5817 = vpack.c.b16 %v5325, %v5319
    %v5818 = vpack.c.b16 %v5326, %v5320
    %v5819 = vpack.c.b16 %v5333, %v5327
    %v5820 = vpack.c.b16 %v5334, %v5328
    %v5821 = vpack.c.b16 %v5335, %v5329
    %v5822 = vpack.c.b16 %v5336, %v5330
    %v5823 = vpack.c.b16 %v5337, %v5331
    %v5824 = vpack.c.b16 %v5338, %v5332
    %v5825 = vpack.c.b16 %v5345, %v5339
    %v5826 = vpack.c.b16 %v5346, %v5340
    %v5827 = vpack.c.b16 %v5347, %v5341
    %v5828 = vpack.c.b16 %v5348, %v5342
    %v5829 = vpack.c.b16 %v5349, %v5343
    %v5830 = vpack.c.b16 %v5350, %v5344
    %v5831 = vpack.c.b16 %v5357, %v5351
    %v5832 = vpack.c.b16 %v5358, %v5352
    %v5833 = vpack.c.b16 %v5359, %v5353
    %v5834 = vpack.c.b16 %v5360, %v5354
    %v5835 = vpack.c.b16 %v5361, %v5355
    %v5836 = vpack.c.b16 %v5362, %v5356
    %v5837 = vpack.c.b16 %v5369, %v5363
    %v5838 = vpack.c.b16 %v5370, %v5364
    %v5839 = vpack.c.b16 %v5371, %v5365
    %v5840 = vpack.c.b16 %v5372, %v5366
    %v5841 = vpack.c.b16 %v5373, %v5367
    %v5842 = vpack.c.b16 %v5374, %v5368
    %v5843 = vpack.c.b16 %v5381, %v5375
    %v5844 = vpack.c.b16 %v5382, %v5376
    %v5845 = vpack.c.b16 %v5383, %v5377
    %v5846 = vpack.c.b16 %v5384, %v5378
    %v5847 = vpack.c.b16 %v5385, %v5379
    %v5848 = vpack.c.b16 %v5386, %v5380
    %v5849 = vpack.c.b16 %v5393, %v5387
    %v5850 = vpack.c.b16 %v5394, %v5388
    %v5851 = vpack.c.b16 %v5395, %v5389
    %v5852 = vpack.c.b16 %v5396, %v5390
    %v5853 = vpack.c.b16 %v5397, %v5391
    %v5854 = vpack.c.b16 %v5398, %v5392
    %v5855 = vpack.c.b16 %v5405, %v5399
    %v5856 = vpack.c.b16 %v5406, %v5400
    %v5857 = vpack.c.b16 %v5407, %v5401
    %v5858 = vpack.c.b16 %v5408, %v5402
    %v5859 = vpack.c.b16 %v5409, %v5403
    %v5860 = vpack.c.b16 %v5410, %v5404
    %v5861 = vpack.c.b16 %v5417, %v5411
    %v5862 = vpack.c.b16 %v5418, %v5412
    %v5863 = vpack.c.b16 %v5419, %v5413
    %v5864 = vpack.c.b16 %v5420, %v5414
    %v5865 = vpack.c.b16 %v5421, %v5415
    %v5866 = vpack.c.b16 %v5422, %v5416
    %v5867 = vpack.c.b16 %v5429, %v5423
    %v5868 = vpack.c.b16 %v5430, %v5424
    %v5869 = vpack.c.b16 %v5431, %v5425
    %v5870 = vpack.c.b16 %v5432, %v5426
    %v5871 = vpack.c.b16 %v5433, %v5427
    %v5872 = vpack.c.b16 %v5434, %v5428
    %v5873 = vpack.c.b16 %v5441, %v5435
    %v5874 = vpack.c.b16 %v5442, %v5436
    %v5875 = vpack.c.b16 %v5443, %v5437
    %v5876 = vpack.c.b16 %v5444, %v5438
    %v5877 = vpack.c.b16 %v5445, %v5439
    %v5878 = vpack.c.b16 %v5446, %v5440
    %v5879 = vpack.c.b16 %v5453, %v5447
    %v5880 = vpack.c.b16 %v5454, %v5448
    %v5881 = vpack.c.b16 %v5455, %v5449
    %v5882 = vpack.c.b16 %v5456, %v5450
    %v5883 = vpack.c.b16 %v5457, %v5451
    %v5884 = vpack.c.b16 %v5458, %v5452
    %v5885 = vpack.c.b16 %v5465, %v5459
    %v5886 = vpack.c.b16 %v5466, %v5460
    %v5887 = vpack.c.b16 %v5467, %v5461
    %v5888 = vpack.c.b16 %v5468, %v5462
    %v5889 = vpack.c.b16 %v5469, %v5463
    %v5890 = vpack.c.b16 %v5470, %v5464
    %v5891 = vpack.c.b16 %v5477, %v5471
    %v5892 = vpack.c.b16 %v5478, %v5472
    %v5893 = vpack.c.b16 %v5479, %v5473
    %v5894 = vpack.c.b16 %v5480, %v5474
    %v5895 = vpack.c.b16 %v5481, %v5475
    %v5896 = vpack.c.b16 %v5482, %v5476
    %v5897 = vpack.c.b16 %v5489, %v5483
    %v5898 = vpack.c.b16 %v5490, %v5484
    %v5899 = vpack.c.b16 %v5491, %v5485
    %v5900 = vpack.c.b16 %v5492, %v5486
    %v5901 = vpack.c.b16 %v5493, %v5487
    %v5902 = vpack.c.b16 %v5494, %v5488
    %v5903 = vpack.c.b16 %v5501, %v5495
    %v5904 = vpack.c.b16 %v5502, %v5496
    %v5905 = vpack.c.b16 %v5503, %v5497
    %v5906 = vpack.c.b16 %v5504, %v5498
    %v5907 = vpack.c.b16 %v5505, %v5499
    %v5908 = vpack.c.b16 %v5506, %v5500
    %v5909 = vpack.c.b16 %v5513, %v5507
    %v5910 = vpack.c.b16 %v5514, %v5508
    %v5911 = vpack.c.b16 %v5515, %v5509
    %v5912 = vpack.c.b16 %v5516, %v5510
    %v5913 = vpack.c.b16 %v5517, %v5511
    %v5914 = vpack.c.b16 %v5518, %v5512
    %v5915 = vpack.c.b16 %v5525, %v5519
    %v5916 = vpack.c.b16 %v5526, %v5520
    %v5917 = vpack.c.b16 %v5527, %v5521
    %v5918 = vpack.c.b16 %v5528, %v5522
    %v5919 = vpack.c.b16 %v5529, %v5523
    %v5920 = vpack.c.b16 %v5530, %v5524
    %v5921 = vpack.c.b16 %v5537, %v5531
    %v5922 = vpack.c.b16 %v5538, %v5532
    %v5923 = vpack.c.b16 %v5539, %v5533
    %v5924 = vpack.c.b16 %v5540, %v5534
    %v5925 = vpack.c.b16 %v5541, %v5535
    %v5926 = vpack.c.b16 %v5542, %v5536
    %v5927 = vpack.c.b16 %v5549, %v5543
    %v5928 = vpack.c.b16 %v5550, %v5544
    %v5929 = vpack.c.b16 %v5551, %v5545
    %v5930 = vpack.c.b16 %v5552, %v5546
    %v5931 = vpack.c.b16 %v5553, %v5547
    %v5932 = vpack.c.b16 %v5554, %v5548
    %v5933 = vpack.c.b16 %v5561, %v5555
    %v5934 = vpack.c.b16 %v5562, %v5556
    %v5935 = vpack.c.b16 %v5563, %v5557
    %v5936 = vpack.c.b16 %v5564, %v5558
    %v5937 = vpack.c.b16 %v5565, %v5559
    %v5938 = vpack.c.b16 %v5566, %v5560
    %v5939 = vpack.c.b16 %v5573, %v5567
    %v5940 = vpack.c.b16 %v5574, %v5568
    %v5941 = vpack.c.b16 %v5575, %v5569
    %v5942 = vpack.c.b16 %v5576, %v5570
    %v5943 = vpack.c.b16 %v5577, %v5571
    %v5944 = vpack.c.b16 %v5578, %v5572
    %v5945 = vpack.c.b16 %v5585, %v5579
    %v5946 = vpack.c.b16 %v5586, %v5580
    %v5947 = vpack.c.b16 %v5587, %v5581
    %v5948 = vpack.c.b16 %v5588, %v5582
    %v5949 = vpack.c.b16 %v5589, %v5583
    %v5950 = vpack.c.b16 %v5590, %v5584
    %v5951 = vpack.c.b16 %v5597, %v5591
    %v5952 = vpack.c.b16 %v5598, %v5592
    %v5953 = vpack.c.b16 %v5599, %v5593
    %v5954 = vpack.c.b16 %v5600, %v5594
    %v5955 = vpack.c.b16 %v5601, %v5595
    %v5956 = vpack.c.b16 %v5602, %v5596
    %v5957 = vpack.c.b16 %v5609, %v5603
    %v5958 = vpack.c.b16 %v5610, %v5604
    %v5959 = vpack.c.b16 %v5611, %v5605
    %v5960 = vpack.c.b16 %v5612, %v5606
    %v5961 = vpack.c.b16 %v5613, %v5607
    %v5962 = vpack.c.b16 %v5614, %v5608
    %v5963 = vpack.c.b16 %v5621, %v5615
    %v5964 = vpack.c.b16 %v5622, %v5616
    %v5965 = vpack.c.b16 %v5623, %v5617
    %v5966 = vpack.c.b16 %v5624, %v5618
    %v5967 = vpack.c.b16 %v5625, %v5619
    %v5968 = vpack.c.b16 %v5626, %v5620
    %v5969 = vpack.c.b16 %v5633, %v5627
    %v5970 = vpack.c.b16 %v5634, %v5628
    %v5971 = vpack.c.b16 %v5635, %v5629
    %v5972 = vpack.c.b16 %v5636, %v5630
    %v5973 = vpack.c.b16 %v5637, %v5631
    %v5974 = vpack.c.b16 %v5638, %v5632
    %v5975 = vpack.c.b16 %v5645, %v5639
    %v5976 = vpack.c.b16 %v5646, %v5640
    %v5977 = vpack.c.b16 %v5647, %v5641
    %v5978 = vpack.c.b16 %v5648, %v5642
    %v5979 = vpack.c.b16 %v5649, %v5643
    %v5980 = vpack.c.b16 %v5650, %v5644
    %v5981 = vpack.c.b16 %v5657, %v5651
    %v5982 = vpack.c.b16 %v5658, %v5652
    %v5983 = vpack.c.b16 %v5659, %v5653
    %v5984 = vpack.c.b16 %v5660, %v5654
    %v5985 = vpack.c.b16 %v5661, %v5655
    %v5986 = vpack.c.b16 %v5662, %v5656
    %v5987 = vpack.c.b16 %v5669, %v5663
    %v5988 = vpack.c.b16 %v5670, %v5664
    %v5989 = vpack.c.b16 %v5671, %v5665
    %v5990 = vpack.c.b16 %v5672, %v5666
    %v5991 = vpack.c.b16 %v5673, %v5667
    %v5992 = vpack.c.b16 %v5674, %v5668
    %v5993 = vpack.c.b16 %v5681, %v5675
    %v5994 = vpack.c.b16 %v5682, %v5676
    %v5995 = vpack.c.b16 %v5683, %v5677
    %v5996 = vpack.c.b16 %v5684, %v5678
    %v5997 = vpack.c.b16 %v5685, %v5679
    %v5998 = vpack.c.b16 %v5686, %v5680
    %v5999 = vpack.c.b16 %v5693, %v5687
    %v6000 = vpack.c.b16 %v5694, %v5688
    %v6001 = vpack.c.b16 %v5695, %v5689
    %v6002 = vpack.c.b16 %v5696, %v5690
    %v6003 = vpack.c.b16 %v5697, %v5691
    %v6004 = vpack.c.b16 %v5698, %v5692
    %v6005 = vpack.c.b16 %v5705, %v5699
    %v6006 = vpack.c.b16 %v5706, %v5700
    %v6007 = vpack.c.b16 %v5707, %v5701
    %v6008 = vpack.c.b16 %v5708, %v5702
    %v6009 = vpack.c.b16 %v5709, %v5703
    %v6010 = vpack.c.b16 %v5710, %v5704
    %v6011 = vpack.c.b16 %v5717, %v5711
    %v6012 = vpack.c.b16 %v5718, %v5712
    %v6013 = vpack.c.b16 %v5719, %v5713
    %v6014 = vpack.c.b16 %v5720, %v5714
    %v6015 = vpack.c.b16 %v5721, %v5715
    %v6016 = vpack.c.b16 %v5722, %v5716
    %v6017 = vpack.c.b16 %v5729, %v5723
    %v6018 = vpack.c.b16 %v5730, %v5724
    %v6019 = vpack.c.b16 %v5731, %v5725
    %v6020 = vpack.c.b16 %v5732, %v5726
    %v6021 = vpack.c.b16 %v5733, %v5727
    %v6022 = vpack.c.b16 %v5734, %v5728
    %6311 = vmatprep.subr.bf16.mxu0 %v5778
    %6312 = vmatpush1.bf16.msra.mxu0 %v5777
    %6313 = vmatprep.subr.bf16.mxu0 %v5772
    %6314 = vmatpush1.bf16.msra.mxu0 %v5771
    %6315 = vmatprep.subr.bf16.mxu0 %v5766
    %6316 = vmatpush1.bf16.msra.mxu0 %v5765
    %6317 = vmatprep.subr.bf16.mxu0 %v5760
    %6318 = vmatpush1.bf16.msra.mxu0 %v5759
    %6319 = vmatprep.subr.bf16.mxu0 %v5754
    %6320 = vmatpush1.bf16.msra.mxu0 %v5753
    %6321 = vmatprep.subr.bf16.mxu0 %v5748
    %6322 = vmatpush1.bf16.msra.mxu0 %v5747
    %6323 = vmatprep.subr.bf16.mxu0 %v5742
    %6324 = vmatpush1.bf16.msra.mxu0 %v5741
    %6325 = vmatprep.subr.bf16.mxu0 %v5736
    %6326 = vmatpush1.bf16.msra.mxu0 %v5735
    %6327 = vmatprep.subr.bf16.mxu0 %v5826
    %6328 = vmatpush2.bf16.msra.mxu0 %v5825
    %6329 = vmatprep.subr.bf16.mxu0 %v5820
    %6330 = vmatpush2.bf16.msra.mxu0 %v5819
    %6331 = vmatprep.subr.bf16.mxu0 %v5814
    %6332 = vmatpush2.bf16.msra.mxu0 %v5813
    %6333 = vmatprep.subr.bf16.mxu0 %v5808
    %6334 = vmatpush2.bf16.msra.mxu0 %v5807
    %6335 = vmatprep.subr.bf16.mxu0 %v5802
    %6336 = vmatpush2.bf16.msra.mxu0 %v5801
    %6337 = vmatprep.subr.bf16.mxu0 %v5796
    %6338 = vmatpush2.bf16.msra.mxu0 %v5795
    %6339 = vmatprep.subr.bf16.mxu0 %v5790
    %6340 = vmatpush2.bf16.msra.mxu0 %v5789
    %6341 = vmatprep.subr.bf16.mxu0 %v5784
    %6342 = vmatpush2.bf16.msra.mxu0 %v5783
    %6343 = vmatprep.mubr.bf16.mxu0 %v4860
    %6344 = vmatmul.mubr.bf16.gmra.mxu0 %v4859
    %v6345 = vpop.f32.mrf.mxu0
    %v6346 = vadd.f32 %v4687, %v6345
    %v6347 = vpop.f32.mrf.mxu0
    %v6348 = vadd.f32 %v4691, %v6347
    %v6349 = vpop.f32.mrf.mxu0
    %v6350 = vpop.f32.mrf.mxu0
    %6351 = vdwg.mxu0
    %6352 = vmatprep.subr.bf16.mxu0 %v5874
    %6353 = vmatpush1.bf16.msra.mxu0 %v5873
    %6354 = vmatprep.subr.bf16.mxu0 %v5868
    %6355 = vmatpush1.bf16.msra.mxu0 %v5867
    %6356 = vmatprep.subr.bf16.mxu0 %v5862
    %6357 = vmatpush1.bf16.msra.mxu0 %v5861
    %6358 = vmatprep.subr.bf16.mxu0 %v5856
    %6359 = vmatpush1.bf16.msra.mxu0 %v5855
    %6360 = vmatprep.subr.bf16.mxu0 %v5850
    %6361 = vmatpush1.bf16.msra.mxu0 %v5849
    %6362 = vmatprep.subr.bf16.mxu0 %v5844
    %6363 = vmatpush1.bf16.msra.mxu0 %v5843
    %6364 = vmatprep.subr.bf16.mxu0 %v5838
    %6365 = vmatpush1.bf16.msra.mxu0 %v5837
    %6366 = vmatprep.subr.bf16.mxu0 %v5832
    %6367 = vmatpush1.bf16.msra.mxu0 %v5831
    %6368 = vmatprep.subr.bf16.mxu0 %v5922
    %6369 = vmatpush2.bf16.msra.mxu0 %v5921
    %6370 = vmatprep.subr.bf16.mxu0 %v5916
    %6371 = vmatpush2.bf16.msra.mxu0 %v5915
    %6372 = vmatprep.subr.bf16.mxu0 %v5910
    %6373 = vmatpush2.bf16.msra.mxu0 %v5909
    %6374 = vmatprep.subr.bf16.mxu0 %v5904
    %6375 = vmatpush2.bf16.msra.mxu0 %v5903
    %6376 = vmatprep.subr.bf16.mxu0 %v5898
    %6377 = vmatpush2.bf16.msra.mxu0 %v5897
    %6378 = vmatprep.subr.bf16.mxu0 %v5892
    %6379 = vmatpush2.bf16.msra.mxu0 %v5891
    %6380 = vmatprep.subr.bf16.mxu0 %v5886
    %6381 = vmatpush2.bf16.msra.mxu0 %v5885
    %6382 = vmatprep.subr.bf16.mxu0 %v5880
    %6383 = vmatpush2.bf16.msra.mxu0 %v5879
    %6384 = vmatprep.mubr.bf16.mxu0 %v4862
    %6385 = vmatmul.mubr.bf16.gmra.mxu0 %v4861
    %v6386 = vpop.f32.mrf.mxu0
    %v6387 = vadd.f32 %v6346, %v6386
    %v6388 = vpop.f32.mrf.mxu0
    %v6389 = vadd.f32 %v6348, %v6388
    %v6390 = vpop.f32.mrf.mxu0
    %v6391 = vpop.f32.mrf.mxu0
    %6392 = vdwg.mxu0
    %6393 = vmatprep.subr.bf16.mxu0 %v5970
    %6394 = vmatpush1.bf16.msra.mxu0 %v5969
    %6395 = vmatprep.subr.bf16.mxu0 %v5964
    %6396 = vmatpush1.bf16.msra.mxu0 %v5963
    %6397 = vmatprep.subr.bf16.mxu0 %v5958
    %6398 = vmatpush1.bf16.msra.mxu0 %v5957
    %6399 = vmatprep.subr.bf16.mxu0 %v5952
    %6400 = vmatpush1.bf16.msra.mxu0 %v5951
    %6401 = vmatprep.subr.bf16.mxu0 %v5946
    %6402 = vmatpush1.bf16.msra.mxu0 %v5945
    %6403 = vmatprep.subr.bf16.mxu0 %v5940
    %6404 = vmatpush1.bf16.msra.mxu0 %v5939
    %6405 = vmatprep.subr.bf16.mxu0 %v5934
    %6406 = vmatpush1.bf16.msra.mxu0 %v5933
    %6407 = vmatprep.subr.bf16.mxu0 %v5928
    %6408 = vmatpush1.bf16.msra.mxu0 %v5927
    %6409 = vmatprep.subr.bf16.mxu0 %v6018
    %6410 = vmatpush2.bf16.msra.mxu0 %v6017
    %6411 = vmatprep.subr.bf16.mxu0 %v6012
    %6412 = vmatpush2.bf16.msra.mxu0 %v6011
    %6413 = vmatprep.subr.bf16.mxu0 %v6006
    %6414 = vmatpush2.bf16.msra.mxu0 %v6005
    %6415 = vmatprep.subr.bf16.mxu0 %v6000
    %6416 = vmatpush2.bf16.msra.mxu0 %v5999
    %6417 = vmatprep.subr.bf16.mxu0 %v5994
    %6418 = vmatpush2.bf16.msra.mxu0 %v5993
    %6419 = vmatprep.subr.bf16.mxu0 %v5988
    %6420 = vmatpush2.bf16.msra.mxu0 %v5987
    %6421 = vmatprep.subr.bf16.mxu0 %v5982
    %6422 = vmatpush2.bf16.msra.mxu0 %v5981
    %6423 = vmatprep.subr.bf16.mxu0 %v5976
    %6424 = vmatpush2.bf16.msra.mxu0 %v5975
    %6425 = vmatprep.mubr.bf16.mxu0 %v4864
    %6426 = vmatmul.mubr.bf16.gmra.mxu0 %v4863
    %v6427 = vpop.f32.mrf.mxu0
    %v6428 = vadd.f32 %v6387, %v6427
    %v6429 = vpop.f32.mrf.mxu0
    %v6430 = vadd.f32 %v6389, %v6429
    %v6431 = vpop.f32.mrf.mxu0
    %v6432 = vpop.f32.mrf.mxu0
    %6433 = vdwg.mxu0
    %6434 = vmatprep.subr.bf16.mxu0 %v5780
    %6435 = vmatpush1.bf16.msra.mxu0 %v5779
    %6436 = vmatprep.subr.bf16.mxu0 %v5774
    %6437 = vmatpush1.bf16.msra.mxu0 %v5773
    %6438 = vmatprep.subr.bf16.mxu0 %v5768
    %6439 = vmatpush1.bf16.msra.mxu0 %v5767
    %6440 = vmatprep.subr.bf16.mxu0 %v5762
    %6441 = vmatpush1.bf16.msra.mxu0 %v5761
    %6442 = vmatprep.subr.bf16.mxu0 %v5756
    %6443 = vmatpush1.bf16.msra.mxu0 %v5755
    %6444 = vmatprep.subr.bf16.mxu0 %v5750
    %6445 = vmatpush1.bf16.msra.mxu0 %v5749
    %6446 = vmatprep.subr.bf16.mxu0 %v5744
    %6447 = vmatpush1.bf16.msra.mxu0 %v5743
    %6448 = vmatprep.subr.bf16.mxu0 %v5738
    %6449 = vmatpush1.bf16.msra.mxu0 %v5737
    %6450 = vmatprep.subr.bf16.mxu0 %v5828
    %6451 = vmatpush2.bf16.msra.mxu0 %v5827
    %6452 = vmatprep.subr.bf16.mxu0 %v5822
    %6453 = vmatpush2.bf16.msra.mxu0 %v5821
    %6454 = vmatprep.subr.bf16.mxu0 %v5816
    %6455 = vmatpush2.bf16.msra.mxu0 %v5815
    %6456 = vmatprep.subr.bf16.mxu0 %v5810
    %6457 = vmatpush2.bf16.msra.mxu0 %v5809
    %6458 = vmatprep.subr.bf16.mxu0 %v5804
    %6459 = vmatpush2.bf16.msra.mxu0 %v5803
    %6460 = vmatprep.subr.bf16.mxu0 %v5798
    %6461 = vmatpush2.bf16.msra.mxu0 %v5797
    %6462 = vmatprep.subr.bf16.mxu0 %v5792
    %6463 = vmatpush2.bf16.msra.mxu0 %v5791
    %6464 = vmatprep.subr.bf16.mxu0 %v5786
    %6465 = vmatpush2.bf16.msra.mxu0 %v5785
    %6466 = vmatprep.mubr.bf16.mxu0 %v4860
    %6467 = vmatmul.mubr.bf16.gmra.mxu0 %v4859
    %v6468 = vpop.f32.mrf.mxu0
    %v6469 = vadd.f32 %v4695, %v6468
    %v6470 = vpop.f32.mrf.mxu0
    %v6471 = vadd.f32 %v4699, %v6470
    %v6472 = vpop.f32.mrf.mxu0
    %v6473 = vpop.f32.mrf.mxu0
    %6474 = vdwg.mxu0
    %6475 = vmatprep.subr.bf16.mxu0 %v5876
    %6476 = vmatpush1.bf16.msra.mxu0 %v5875
    %6477 = vmatprep.subr.bf16.mxu0 %v5870
    %6478 = vmatpush1.bf16.msra.mxu0 %v5869
    %6479 = vmatprep.subr.bf16.mxu0 %v5864
    %6480 = vmatpush1.bf16.msra.mxu0 %v5863
    %6481 = vmatprep.subr.bf16.mxu0 %v5858
    %6482 = vmatpush1.bf16.msra.mxu0 %v5857
    %6483 = vmatprep.subr.bf16.mxu0 %v5852
    %6484 = vmatpush1.bf16.msra.mxu0 %v5851
    %6485 = vmatprep.subr.bf16.mxu0 %v5846
    %6486 = vmatpush1.bf16.msra.mxu0 %v5845
    %6487 = vmatprep.subr.bf16.mxu0 %v5840
    %6488 = vmatpush1.bf16.msra.mxu0 %v5839
    %6489 = vmatprep.subr.bf16.mxu0 %v5834
    %6490 = vmatpush1.bf16.msra.mxu0 %v5833
    %6491 = vmatprep.subr.bf16.mxu0 %v5924
    %6492 = vmatpush2.bf16.msra.mxu0 %v5923
    %6493 = vmatprep.subr.bf16.mxu0 %v5918
    %6494 = vmatpush2.bf16.msra.mxu0 %v5917
    %6495 = vmatprep.subr.bf16.mxu0 %v5912
    %6496 = vmatpush2.bf16.msra.mxu0 %v5911
    %6497 = vmatprep.subr.bf16.mxu0 %v5906
    %6498 = vmatpush2.bf16.msra.mxu0 %v5905
    %6499 = vmatprep.subr.bf16.mxu0 %v5900
    %6500 = vmatpush2.bf16.msra.mxu0 %v5899
    %6501 = vmatprep.subr.bf16.mxu0 %v5894
    %6502 = vmatpush2.bf16.msra.mxu0 %v5893
    %6503 = vmatprep.subr.bf16.mxu0 %v5888
    %6504 = vmatpush2.bf16.msra.mxu0 %v5887
    %6505 = vmatprep.subr.bf16.mxu0 %v5882
    %6506 = vmatpush2.bf16.msra.mxu0 %v5881
    %6507 = vmatprep.mubr.bf16.mxu0 %v4862
    %6508 = vmatmul.mubr.bf16.gmra.mxu0 %v4861
    %v6509 = vpop.f32.mrf.mxu0
    %v6510 = vadd.f32 %v6469, %v6509
    %v6511 = vpop.f32.mrf.mxu0
    %v6512 = vadd.f32 %v6471, %v6511
    %v6513 = vpop.f32.mrf.mxu0
    %v6514 = vpop.f32.mrf.mxu0
    %6515 = vdwg.mxu0
    %6516 = vmatprep.subr.bf16.mxu0 %v5972
    %6517 = vmatpush1.bf16.msra.mxu0 %v5971
    %6518 = vmatprep.subr.bf16.mxu0 %v5966
    %6519 = vmatpush1.bf16.msra.mxu0 %v5965
    %6520 = vmatprep.subr.bf16.mxu0 %v5960
    %6521 = vmatpush1.bf16.msra.mxu0 %v5959
    %6522 = vmatprep.subr.bf16.mxu0 %v5954
    %6523 = vmatpush1.bf16.msra.mxu0 %v5953
    %6524 = vmatprep.subr.bf16.mxu0 %v5948
    %6525 = vmatpush1.bf16.msra.mxu0 %v5947
    %6526 = vmatprep.subr.bf16.mxu0 %v5942
    %6527 = vmatpush1.bf16.msra.mxu0 %v5941
    %6528 = vmatprep.subr.bf16.mxu0 %v5936
    %6529 = vmatpush1.bf16.msra.mxu0 %v5935
    %6530 = vmatprep.subr.bf16.mxu0 %v5930
    %6531 = vmatpush1.bf16.msra.mxu0 %v5929
    %6532 = vmatprep.subr.bf16.mxu0 %v6020
    %6533 = vmatpush2.bf16.msra.mxu0 %v6019
    %6534 = vmatprep.subr.bf16.mxu0 %v6014
    %6535 = vmatpush2.bf16.msra.mxu0 %v6013
    %6536 = vmatprep.subr.bf16.mxu0 %v6008
    %6537 = vmatpush2.bf16.msra.mxu0 %v6007
    %6538 = vmatprep.subr.bf16.mxu0 %v6002
    %6539 = vmatpush2.bf16.msra.mxu0 %v6001
    %6540 = vmatprep.subr.bf16.mxu0 %v5996
    %6541 = vmatpush2.bf16.msra.mxu0 %v5995
    %6542 = vmatprep.subr.bf16.mxu0 %v5990
    %6543 = vmatpush2.bf16.msra.mxu0 %v5989
    %6544 = vmatprep.subr.bf16.mxu0 %v5984
    %6545 = vmatpush2.bf16.msra.mxu0 %v5983
    %6546 = vmatprep.subr.bf16.mxu0 %v5978
    %6547 = vmatpush2.bf16.msra.mxu0 %v5977
    %6548 = vmatprep.mubr.bf16.mxu0 %v4864
    %6549 = vmatmul.mubr.bf16.gmra.mxu0 %v4863
    %v6550 = vpop.f32.mrf.mxu0
    %v6551 = vadd.f32 %v6510, %v6550
    %v6552 = vpop.f32.mrf.mxu0
    %v6553 = vadd.f32 %v6512, %v6552
    %v6554 = vpop.f32.mrf.mxu0
    %v6555 = vpop.f32.mrf.mxu0
    %6556 = vdwg.mxu0
    %6557 = vmatprep.subr.bf16.mxu0 %v5782
    %6558 = vmatpush1.bf16.msra.mxu0 %v5781
    %6559 = vmatprep.subr.bf16.mxu0 %v5776
    %6560 = vmatpush1.bf16.msra.mxu0 %v5775
    %6561 = vmatprep.subr.bf16.mxu0 %v5770
    %6562 = vmatpush1.bf16.msra.mxu0 %v5769
    %6563 = vmatprep.subr.bf16.mxu0 %v5764
    %6564 = vmatpush1.bf16.msra.mxu0 %v5763
    %6565 = vmatprep.subr.bf16.mxu0 %v5758
    %6566 = vmatpush1.bf16.msra.mxu0 %v5757
    %6567 = vmatprep.subr.bf16.mxu0 %v5752
    %6568 = vmatpush1.bf16.msra.mxu0 %v5751
    %6569 = vmatprep.subr.bf16.mxu0 %v5746
    %6570 = vmatpush1.bf16.msra.mxu0 %v5745
    %6571 = vmatprep.subr.bf16.mxu0 %v5740
    %6572 = vmatpush1.bf16.msra.mxu0 %v5739
    %6573 = vmatprep.subr.bf16.mxu0 %v5830
    %6574 = vmatpush2.bf16.msra.mxu0 %v5829
    %6575 = vmatprep.subr.bf16.mxu0 %v5824
    %6576 = vmatpush2.bf16.msra.mxu0 %v5823
    %6577 = vmatprep.subr.bf16.mxu0 %v5818
    %6578 = vmatpush2.bf16.msra.mxu0 %v5817
    %6579 = vmatprep.subr.bf16.mxu0 %v5812
    %6580 = vmatpush2.bf16.msra.mxu0 %v5811
    %6581 = vmatprep.subr.bf16.mxu0 %v5806
    %6582 = vmatpush2.bf16.msra.mxu0 %v5805
    %6583 = vmatprep.subr.bf16.mxu0 %v5800
    %6584 = vmatpush2.bf16.msra.mxu0 %v5799
    %6585 = vmatprep.subr.bf16.mxu0 %v5794
    %6586 = vmatpush2.bf16.msra.mxu0 %v5793
    %6587 = vmatprep.subr.bf16.mxu0 %v5788
    %6588 = vmatpush2.bf16.msra.mxu0 %v5787
    %6589 = vmatprep.mubr.bf16.mxu0 %v4860
    %6590 = vmatmul.mubr.bf16.gmra.mxu0 %v4859
    %v6591 = vpop.f32.mrf.mxu0
    %v6592 = vadd.f32 %v4703, %v6591
    %v6593 = vpop.f32.mrf.mxu0
    %v6594 = vadd.f32 %v4707, %v6593
    %v6595 = vpop.f32.mrf.mxu0
    %v6596 = vpop.f32.mrf.mxu0
    %6597 = vdwg.mxu0
    %6598 = vmatprep.subr.bf16.mxu0 %v5878
    %6599 = vmatpush1.bf16.msra.mxu0 %v5877
    %6600 = vmatprep.subr.bf16.mxu0 %v5872
    %6601 = vmatpush1.bf16.msra.mxu0 %v5871
    %6602 = vmatprep.subr.bf16.mxu0 %v5866
    %6603 = vmatpush1.bf16.msra.mxu0 %v5865
    %6604 = vmatprep.subr.bf16.mxu0 %v5860
    %6605 = vmatpush1.bf16.msra.mxu0 %v5859
    %6606 = vmatprep.subr.bf16.mxu0 %v5854
    %6607 = vmatpush1.bf16.msra.mxu0 %v5853
    %6608 = vmatprep.subr.bf16.mxu0 %v5848
    %6609 = vmatpush1.bf16.msra.mxu0 %v5847
    %6610 = vmatprep.subr.bf16.mxu0 %v5842
    %6611 = vmatpush1.bf16.msra.mxu0 %v5841
    %6612 = vmatprep.subr.bf16.mxu0 %v5836
    %6613 = vmatpush1.bf16.msra.mxu0 %v5835
    %6614 = vmatprep.subr.bf16.mxu0 %v5926
    %6615 = vmatpush2.bf16.msra.mxu0 %v5925
    %6616 = vmatprep.subr.bf16.mxu0 %v5920
    %6617 = vmatpush2.bf16.msra.mxu0 %v5919
    %6618 = vmatprep.subr.bf16.mxu0 %v5914
    %6619 = vmatpush2.bf16.msra.mxu0 %v5913
    %6620 = vmatprep.subr.bf16.mxu0 %v5908
    %6621 = vmatpush2.bf16.msra.mxu0 %v5907
    %6622 = vmatprep.subr.bf16.mxu0 %v5902
    %6623 = vmatpush2.bf16.msra.mxu0 %v5901
    %6624 = vmatprep.subr.bf16.mxu0 %v5896
    %6625 = vmatpush2.bf16.msra.mxu0 %v5895
    %6626 = vmatprep.subr.bf16.mxu0 %v5890
    %6627 = vmatpush2.bf16.msra.mxu0 %v5889
    %6628 = vmatprep.subr.bf16.mxu0 %v5884
    %6629 = vmatpush2.bf16.msra.mxu0 %v5883
    %6630 = vmatprep.mubr.bf16.mxu0 %v4862
    %6631 = vmatmul.mubr.bf16.gmra.mxu0 %v4861
    %v6632 = vpop.f32.mrf.mxu0
    %v6633 = vadd.f32 %v6592, %v6632
    %v6634 = vpop.f32.mrf.mxu0
    %v6635 = vadd.f32 %v6594, %v6634
    %v6636 = vpop.f32.mrf.mxu0
    %v6637 = vpop.f32.mrf.mxu0
    %6638 = vdwg.mxu0
    %6639 = vmatprep.subr.bf16.mxu0 %v5974
    %6640 = vmatpush1.bf16.msra.mxu0 %v5973
    %6641 = vmatprep.subr.bf16.mxu0 %v5968
    %6642 = vmatpush1.bf16.msra.mxu0 %v5967
    %6643 = vmatprep.subr.bf16.mxu0 %v5962
    %6644 = vmatpush1.bf16.msra.mxu0 %v5961
    %6645 = vmatprep.subr.bf16.mxu0 %v5956
    %6646 = vmatpush1.bf16.msra.mxu0 %v5955
    %6647 = vmatprep.subr.bf16.mxu0 %v5950
    %6648 = vmatpush1.bf16.msra.mxu0 %v5949
    %6649 = vmatprep.subr.bf16.mxu0 %v5944
    %6650 = vmatpush1.bf16.msra.mxu0 %v5943
    %6651 = vmatprep.subr.bf16.mxu0 %v5938
    %6652 = vmatpush1.bf16.msra.mxu0 %v5937
    %6653 = vmatprep.subr.bf16.mxu0 %v5932
    %6654 = vmatpush1.bf16.msra.mxu0 %v5931
    %6655 = vmatprep.subr.bf16.mxu0 %v6022
    %6656 = vmatpush2.bf16.msra.mxu0 %v6021
    %6657 = vmatprep.subr.bf16.mxu0 %v6016
    %6658 = vmatpush2.bf16.msra.mxu0 %v6015
    %6659 = vmatprep.subr.bf16.mxu0 %v6010
    %6660 = vmatpush2.bf16.msra.mxu0 %v6009
    %6661 = vmatprep.subr.bf16.mxu0 %v6004
    %6662 = vmatpush2.bf16.msra.mxu0 %v6003
    %6663 = vmatprep.subr.bf16.mxu0 %v5998
    %6664 = vmatpush2.bf16.msra.mxu0 %v5997
    %6665 = vmatprep.subr.bf16.mxu0 %v5992
    %6666 = vmatpush2.bf16.msra.mxu0 %v5991
    %6667 = vmatprep.subr.bf16.mxu0 %v5986
    %6668 = vmatpush2.bf16.msra.mxu0 %v5985
    %6669 = vmatprep.subr.bf16.mxu0 %v5980
    %6670 = vmatpush2.bf16.msra.mxu0 %v5979
    %6671 = vmatprep.mubr.bf16.mxu0 %v4864
    %6672 = vmatmul.mubr.bf16.gmra.mxu0 %v4863
    %v6673 = vpop.f32.mrf.mxu0
    %v6674 = vadd.f32 %v6633, %v6673
    %v6675 = vpop.f32.mrf.mxu0
    %v6676 = vadd.f32 %v6635, %v6675
    %v6677 = vpop.f32.mrf.mxu0
    %v6678 = vpop.f32.mrf.mxu0
    %6679 = vdwg.mxu0
    %v6680 = vtanh.pop %v6428
    %v6681 = vtanh.pop %v6430
    %v6682 = vtanh.pop %v6551
    %v6683 = vtanh.pop %v6553
    %v6684 = vtanh.pop %v6674
    %v6685 = vtanh.pop %v6676
    %v6686 = vld [vmem:[#allocation31] sm:$0xff]
    %v6687 = vld [vmem:[#allocation31 + $0x8] sm:$0xff]
    %v6688 = vld [vmem:[#allocation31 + $0x10] sm:$0xff]
    %v6689 = vld [vmem:[#allocation31 + $0x18] sm:$0xff]
    %v6690 = vld [vmem:[#allocation31 + $0x20] sm:$0xff]
    %v6691 = vld [vmem:[#allocation31 + $0x28] sm:$0xff]
    %v6692 = vld [vmem:[#allocation31 + $0x30] sm:$0xff]
    %v6693 = vld [vmem:[#allocation31 + $0x38] sm:$0xff]
    %v6694 = vld [vmem:[#allocation31 + $0x40] sm:$0xff]
    %v6695 = vld [vmem:[#allocation31 + $0x48] sm:$0xff]
    %v6696 = vld [vmem:[#allocation31 + $0x50] sm:$0xff]
    %v6697 = vld [vmem:[#allocation31 + $0x58] sm:$0xff]
    %v6698 = vld [vmem:[#allocation31 + $0x60] sm:$0xff]
    %v6699 = vld [vmem:[#allocation31 + $0x68] sm:$0xff]
    %v6700 = vld [vmem:[#allocation31 + $0x70] sm:$0xff]
    %v6701 = vld [vmem:[#allocation31 + $0x78] sm:$0xff]
    %v6702 = vld [vmem:[#allocation31 + $0x80] sm:$0xff]
    %v6703 = vld [vmem:[#allocation31 + $0x88] sm:$0xff]
    %v6704 = vld [vmem:[#allocation31 + $0x90] sm:$0xff]
    %v6705 = vld [vmem:[#allocation31 + $0x98] sm:$0xff]
    %v6706 = vld [vmem:[#allocation31 + $0xa0] sm:$0xff]
    %v6707 = vld [vmem:[#allocation31 + $0xa8] sm:$0xff]
    %v6708 = vld [vmem:[#allocation31 + $0xb0] sm:$0xff]
    %v6709 = vld [vmem:[#allocation31 + $0xb8] sm:$0xff]
    %v6710 = vld [vmem:[#allocation31 + $0xc0] sm:$0xff]
    %v6711 = vld [vmem:[#allocation31 + $0xc8] sm:$0xff]
    %v6712 = vld [vmem:[#allocation31 + $0xd0] sm:$0xff]
    %v6713 = vld [vmem:[#allocation31 + $0xd8] sm:$0xff]
    %v6714 = vld [vmem:[#allocation31 + $0xe0] sm:$0xff]
    %v6715 = vld [vmem:[#allocation31 + $0xe8] sm:$0xff]
    %v6716 = vld [vmem:[#allocation31 + $0xf0] sm:$0xff]
    %v6717 = vld [vmem:[#allocation31 + $0xf8] sm:$0xff]
    %v6718 = vld [vmem:[#allocation31 + $0x100] sm:$0xff]
    %v6719 = vld [vmem:[#allocation31 + $0x108] sm:$0xff]
    %v6720 = vld [vmem:[#allocation31 + $0x110] sm:$0xff]
    %v6721 = vld [vmem:[#allocation31 + $0x118] sm:$0xff]
    %v6722 = vld [vmem:[#allocation31 + $0x120] sm:$0xff]
    %v6723 = vld [vmem:[#allocation31 + $0x128] sm:$0xff]
    %v6724 = vld [vmem:[#allocation31 + $0x130] sm:$0xff]
    %v6725 = vld [vmem:[#allocation31 + $0x138] sm:$0xff]
    %v6726 = vld [vmem:[#allocation31 + $0x140] sm:$0xff]
    %v6727 = vld [vmem:[#allocation31 + $0x148] sm:$0xff]
    %v6728 = vld [vmem:[#allocation31 + $0x150] sm:$0xff]
    %v6729 = vld [vmem:[#allocation31 + $0x158] sm:$0xff]
    %v6730 = vld [vmem:[#allocation31 + $0x160] sm:$0xff]
    %v6731 = vld [vmem:[#allocation31 + $0x168] sm:$0xff]
    %v6732 = vld [vmem:[#allocation31 + $0x170] sm:$0xff]
    %v6733 = vld [vmem:[#allocation31 + $0x178] sm:$0xff]
    %v6734 = vld [vmem:[#allocation31 + $0x180] sm:$0xff]
    %v6735 = vld [vmem:[#allocation31 + $0x188] sm:$0xff]
    %v6736 = vld [vmem:[#allocation31 + $0x190] sm:$0xff]
    %v6737 = vld [vmem:[#allocation31 + $0x198] sm:$0xff]
    %v6738 = vld [vmem:[#allocation31 + $0x1a0] sm:$0xff]
    %v6739 = vld [vmem:[#allocation31 + $0x1a8] sm:$0xff]
    %v6740 = vld [vmem:[#allocation31 + $0x1b0] sm:$0xff]
    %v6741 = vld [vmem:[#allocation31 + $0x1b8] sm:$0xff]
    %v6742 = vld [vmem:[#allocation31 + $0x1c0] sm:$0xff]
    %v6743 = vld [vmem:[#allocation31 + $0x1c8] sm:$0xff]
    %v6744 = vld [vmem:[#allocation31 + $0x1d0] sm:$0xff]
    %v6745 = vld [vmem:[#allocation31 + $0x1d8] sm:$0xff]
    %v6746 = vld [vmem:[#allocation31 + $0x1e0] sm:$0xff]
    %v6747 = vld [vmem:[#allocation31 + $0x1e8] sm:$0xff]
    %v6748 = vld [vmem:[#allocation31 + $0x1f0] sm:$0xff]
    %v6749 = vld [vmem:[#allocation31 + $0x1f8] sm:$0xff]
    %v6750 = vld [vmem:[#allocation31 + $0x200] sm:$0xff]
    %v6751 = vld [vmem:[#allocation31 + $0x208] sm:$0xff]
    %v6752 = vld [vmem:[#allocation31 + $0x210] sm:$0xff]
    %v6753 = vld [vmem:[#allocation31 + $0x218] sm:$0xff]
    %v6754 = vld [vmem:[#allocation31 + $0x220] sm:$0xff]
    %v6755 = vld [vmem:[#allocation31 + $0x228] sm:$0xff]
    %v6756 = vld [vmem:[#allocation31 + $0x230] sm:$0xff]
    %v6757 = vld [vmem:[#allocation31 + $0x238] sm:$0xff]
    %v6758 = vld [vmem:[#allocation31 + $0x240] sm:$0xff]
    %v6759 = vld [vmem:[#allocation31 + $0x248] sm:$0xff]
    %v6760 = vld [vmem:[#allocation31 + $0x250] sm:$0xff]
    %v6761 = vld [vmem:[#allocation31 + $0x258] sm:$0xff]
    %v6762 = vld [vmem:[#allocation31 + $0x260] sm:$0xff]
    %v6763 = vld [vmem:[#allocation31 + $0x268] sm:$0xff]
    %v6764 = vld [vmem:[#allocation31 + $0x270] sm:$0xff]
    %v6765 = vld [vmem:[#allocation31 + $0x278] sm:$0xff]
    %v6766 = vld [vmem:[#allocation31 + $0x280] sm:$0xff]
    %v6767 = vld [vmem:[#allocation31 + $0x288] sm:$0xff]
    %v6768 = vld [vmem:[#allocation31 + $0x290] sm:$0xff]
    %v6769 = vld [vmem:[#allocation31 + $0x298] sm:$0xff]
    %v6770 = vld [vmem:[#allocation31 + $0x2a0] sm:$0xff]
    %v6771 = vld [vmem:[#allocation31 + $0x2a8] sm:$0xff]
    %v6772 = vld [vmem:[#allocation31 + $0x2b0] sm:$0xff]
    %v6773 = vld [vmem:[#allocation31 + $0x2b8] sm:$0xff]
    %v6774 = vld [vmem:[#allocation31 + $0x2c0] sm:$0xff]
    %v6775 = vld [vmem:[#allocation31 + $0x2c8] sm:$0xff]
    %v6776 = vld [vmem:[#allocation31 + $0x2d0] sm:$0xff]
    %v6777 = vld [vmem:[#allocation31 + $0x2d8] sm:$0xff]
    %v6778 = vld [vmem:[#allocation31 + $0x2e0] sm:$0xff]
    %v6779 = vld [vmem:[#allocation31 + $0x2e8] sm:$0xff]
    %v6780 = vld [vmem:[#allocation31 + $0x2f0] sm:$0xff]
    %v6781 = vld [vmem:[#allocation31 + $0x2f8] sm:$0xff]
    %v6782 = vld [vmem:[#allocation31 + $0x300] sm:$0xff]
    %v6783 = vld [vmem:[#allocation31 + $0x308] sm:$0xff]
    %v6784 = vld [vmem:[#allocation31 + $0x310] sm:$0xff]
    %v6785 = vld [vmem:[#allocation31 + $0x318] sm:$0xff]
    %v6786 = vld [vmem:[#allocation31 + $0x320] sm:$0xff]
    %v6787 = vld [vmem:[#allocation31 + $0x328] sm:$0xff]
    %v6788 = vld [vmem:[#allocation31 + $0x330] sm:$0xff]
    %v6789 = vld [vmem:[#allocation31 + $0x338] sm:$0xff]
    %v6790 = vld [vmem:[#allocation31 + $0x340] sm:$0xff]
    %v6791 = vld [vmem:[#allocation31 + $0x348] sm:$0xff]
    %v6792 = vld [vmem:[#allocation31 + $0x350] sm:$0xff]
    %v6793 = vld [vmem:[#allocation31 + $0x358] sm:$0xff]
    %v6794 = vld [vmem:[#allocation31 + $0x360] sm:$0xff]
    %v6795 = vld [vmem:[#allocation31 + $0x368] sm:$0xff]
    %v6796 = vld [vmem:[#allocation31 + $0x370] sm:$0xff]
    %v6797 = vld [vmem:[#allocation31 + $0x378] sm:$0xff]
    %v6798 = vld [vmem:[#allocation31 + $0x380] sm:$0xff]
    %v6799 = vld [vmem:[#allocation31 + $0x388] sm:$0xff]
    %v6800 = vld [vmem:[#allocation31 + $0x390] sm:$0xff]
    %v6801 = vld [vmem:[#allocation31 + $0x398] sm:$0xff]
    %v6802 = vld [vmem:[#allocation31 + $0x3a0] sm:$0xff]
    %v6803 = vld [vmem:[#allocation31 + $0x3a8] sm:$0xff]
    %v6804 = vld [vmem:[#allocation31 + $0x3b0] sm:$0xff]
    %v6805 = vld [vmem:[#allocation31 + $0x3b8] sm:$0xff]
    %v6806 = vld [vmem:[#allocation31 + $0x3c0] sm:$0xff]
    %v6807 = vld [vmem:[#allocation31 + $0x3c8] sm:$0xff]
    %v6808 = vld [vmem:[#allocation31 + $0x3d0] sm:$0xff]
    %v6809 = vld [vmem:[#allocation31 + $0x3d8] sm:$0xff]
    %v6810 = vld [vmem:[#allocation31 + $0x3e0] sm:$0xff]
    %v6811 = vld [vmem:[#allocation31 + $0x3e8] sm:$0xff]
    %v6812 = vld [vmem:[#allocation31 + $0x3f0] sm:$0xff]
    %v6813 = vld [vmem:[#allocation31 + $0x3f8] sm:$0xff]
    %v6814 = vld [vmem:[#allocation31 + $0x400] sm:$0xff]
    %v6815 = vld [vmem:[#allocation31 + $0x408] sm:$0xff]
    %v6816 = vld [vmem:[#allocation31 + $0x410] sm:$0xff]
    %v6817 = vld [vmem:[#allocation31 + $0x418] sm:$0xff]
    %v6818 = vld [vmem:[#allocation31 + $0x420] sm:$0xff]
    %v6819 = vld [vmem:[#allocation31 + $0x428] sm:$0xff]
    %v6820 = vld [vmem:[#allocation31 + $0x430] sm:$0xff]
    %v6821 = vld [vmem:[#allocation31 + $0x438] sm:$0xff]
    %v6822 = vld [vmem:[#allocation31 + $0x440] sm:$0xff]
    %v6823 = vld [vmem:[#allocation31 + $0x448] sm:$0xff]
    %v6824 = vld [vmem:[#allocation31 + $0x450] sm:$0xff]
    %v6825 = vld [vmem:[#allocation31 + $0x458] sm:$0xff]
    %v6826 = vld [vmem:[#allocation31 + $0x460] sm:$0xff]
    %v6827 = vld [vmem:[#allocation31 + $0x468] sm:$0xff]
    %v6828 = vld [vmem:[#allocation31 + $0x470] sm:$0xff]
    %v6829 = vld [vmem:[#allocation31 + $0x478] sm:$0xff]
    %v6830 = vld [vmem:[#allocation31 + $0x480] sm:$0xff]
    %v6831 = vld [vmem:[#allocation31 + $0x488] sm:$0xff]
    %v6832 = vld [vmem:[#allocation31 + $0x490] sm:$0xff]
    %v6833 = vld [vmem:[#allocation31 + $0x498] sm:$0xff]
    %v6834 = vld [vmem:[#allocation31 + $0x4a0] sm:$0xff]
    %v6835 = vld [vmem:[#allocation31 + $0x4a8] sm:$0xff]
    %v6836 = vld [vmem:[#allocation31 + $0x4b0] sm:$0xff]
    %v6837 = vld [vmem:[#allocation31 + $0x4b8] sm:$0xff]
    %v6838 = vld [vmem:[#allocation31 + $0x4c0] sm:$0xff]
    %v6839 = vld [vmem:[#allocation31 + $0x4c8] sm:$0xff]
    %v6840 = vld [vmem:[#allocation31 + $0x4d0] sm:$0xff]
    %v6841 = vld [vmem:[#allocation31 + $0x4d8] sm:$0xff]
    %v6842 = vld [vmem:[#allocation31 + $0x4e0] sm:$0xff]
    %v6843 = vld [vmem:[#allocation31 + $0x4e8] sm:$0xff]
    %v6844 = vld [vmem:[#allocation31 + $0x4f0] sm:$0xff]
    %v6845 = vld [vmem:[#allocation31 + $0x4f8] sm:$0xff]
    %v6846 = vld [vmem:[#allocation31 + $0x500] sm:$0xff]
    %v6847 = vld [vmem:[#allocation31 + $0x508] sm:$0xff]
    %v6848 = vld [vmem:[#allocation31 + $0x510] sm:$0xff]
    %v6849 = vld [vmem:[#allocation31 + $0x518] sm:$0xff]
    %v6850 = vld [vmem:[#allocation31 + $0x520] sm:$0xff]
    %v6851 = vld [vmem:[#allocation31 + $0x528] sm:$0xff]
    %v6852 = vld [vmem:[#allocation31 + $0x530] sm:$0xff]
    %v6853 = vld [vmem:[#allocation31 + $0x538] sm:$0xff]
    %v6854 = vld [vmem:[#allocation31 + $0x540] sm:$0xff]
    %v6855 = vld [vmem:[#allocation31 + $0x548] sm:$0xff]
    %v6856 = vld [vmem:[#allocation31 + $0x550] sm:$0xff]
    %v6857 = vld [vmem:[#allocation31 + $0x558] sm:$0xff]
    %v6858 = vld [vmem:[#allocation31 + $0x560] sm:$0xff]
    %v6859 = vld [vmem:[#allocation31 + $0x568] sm:$0xff]
    %v6860 = vld [vmem:[#allocation31 + $0x570] sm:$0xff]
    %v6861 = vld [vmem:[#allocation31 + $0x578] sm:$0xff]
    %v6862 = vld [vmem:[#allocation31 + $0x580] sm:$0xff]
    %v6863 = vld [vmem:[#allocation31 + $0x588] sm:$0xff]
    %v6864 = vld [vmem:[#allocation31 + $0x590] sm:$0xff]
    %v6865 = vld [vmem:[#allocation31 + $0x598] sm:$0xff]
    %v6866 = vld [vmem:[#allocation31 + $0x5a0] sm:$0xff]
    %v6867 = vld [vmem:[#allocation31 + $0x5a8] sm:$0xff]
    %v6868 = vld [vmem:[#allocation31 + $0x5b0] sm:$0xff]
    %v6869 = vld [vmem:[#allocation31 + $0x5b8] sm:$0xff]
    %v6870 = vld [vmem:[#allocation31 + $0x5c0] sm:$0xff]
    %v6871 = vld [vmem:[#allocation31 + $0x5c8] sm:$0xff]
    %v6872 = vld [vmem:[#allocation31 + $0x5d0] sm:$0xff]
    %v6873 = vld [vmem:[#allocation31 + $0x5d8] sm:$0xff]
    %v6874 = vld [vmem:[#allocation31 + $0x5e0] sm:$0xff]
    %v6875 = vld [vmem:[#allocation31 + $0x5e8] sm:$0xff]
    %v6876 = vld [vmem:[#allocation31 + $0x5f0] sm:$0xff]
    %v6877 = vld [vmem:[#allocation31 + $0x5f8] sm:$0xff]
    %v6878 = vpack.c.bf16 %v6680, %v6680
    %v6879 = vpack.c.bf16 %v6681, %v6681
    %v6880 = vpack.c.bf16 %v6682, %v6682
    %v6881 = vpack.c.bf16 %v6683, %v6683
    %v6882 = vpack.c.bf16 %v6684, %v6684
    %v6883 = vpack.c.bf16 %v6685, %v6685
    %v6884 = vld [vmem:[#allocation32] sm:$0xff]
    %v6885 = vld [vmem:[#allocation32 + $0x8] sm:$0xff]
    %v6886 = vld [vmem:[#allocation32 + $0x10] sm:$0xff]
    %v6887 = vld [vmem:[#allocation32 + $0x18] sm:$0xff]
    %v6888 = vld [vmem:[#allocation32 + $0x20] sm:$0xff]
    %v6889 = vld [vmem:[#allocation32 + $0x28] sm:$0xff]
    %v6890 = vld [vmem:[#allocation32 + $0x30] sm:$0xff]
    %v6891 = vld [vmem:[#allocation32 + $0x38] sm:$0xff]
    %v6892 = vld [vmem:[#allocation32 + $0x40] sm:$0xff]
    %v6893 = vld [vmem:[#allocation32 + $0x48] sm:$0xff]
    %v6894 = vld [vmem:[#allocation32 + $0x50] sm:$0xff]
    %v6895 = vld [vmem:[#allocation32 + $0x58] sm:$0xff]
    %v6896 = vld [vmem:[#allocation32 + $0x60] sm:$0xff]
    %v6897 = vld [vmem:[#allocation32 + $0x68] sm:$0xff]
    %v6898 = vld [vmem:[#allocation32 + $0x70] sm:$0xff]
    %v6899 = vld [vmem:[#allocation32 + $0x78] sm:$0xff]
    %v6900 = vld [vmem:[#allocation32 + $0x80] sm:$0xff]
    %v6901 = vld [vmem:[#allocation32 + $0x88] sm:$0xff]
    %v6902 = vld [vmem:[#allocation32 + $0x90] sm:$0xff]
    %v6903 = vld [vmem:[#allocation32 + $0x98] sm:$0xff]
    %v6904 = vld [vmem:[#allocation32 + $0xa0] sm:$0xff]
    %v6905 = vld [vmem:[#allocation32 + $0xa8] sm:$0xff]
    %v6906 = vld [vmem:[#allocation32 + $0xb0] sm:$0xff]
    %v6907 = vld [vmem:[#allocation32 + $0xb8] sm:$0xff]
    %v6908 = vld [vmem:[#allocation32 + $0xc0] sm:$0xff]
    %v6909 = vld [vmem:[#allocation32 + $0xc8] sm:$0xff]
    %v6910 = vld [vmem:[#allocation32 + $0xd0] sm:$0xff]
    %v6911 = vld [vmem:[#allocation32 + $0xd8] sm:$0xff]
    %v6912 = vld [vmem:[#allocation32 + $0xe0] sm:$0xff]
    %v6913 = vld [vmem:[#allocation32 + $0xe8] sm:$0xff]
    %v6914 = vld [vmem:[#allocation32 + $0xf0] sm:$0xff]
    %v6915 = vld [vmem:[#allocation32 + $0xf8] sm:$0xff]
    %v6916 = vld [vmem:[#allocation32 + $0x100] sm:$0xff]
    %v6917 = vld [vmem:[#allocation32 + $0x108] sm:$0xff]
    %v6918 = vld [vmem:[#allocation32 + $0x110] sm:$0xff]
    %v6919 = vld [vmem:[#allocation32 + $0x118] sm:$0xff]
    %v6920 = vld [vmem:[#allocation32 + $0x120] sm:$0xff]
    %v6921 = vld [vmem:[#allocation32 + $0x128] sm:$0xff]
    %v6922 = vld [vmem:[#allocation32 + $0x130] sm:$0xff]
    %v6923 = vld [vmem:[#allocation32 + $0x138] sm:$0xff]
    %v6924 = vld [vmem:[#allocation32 + $0x140] sm:$0xff]
    %v6925 = vld [vmem:[#allocation32 + $0x148] sm:$0xff]
    %v6926 = vld [vmem:[#allocation32 + $0x150] sm:$0xff]
    %v6927 = vld [vmem:[#allocation32 + $0x158] sm:$0xff]
    %v6928 = vld [vmem:[#allocation32 + $0x160] sm:$0xff]
    %v6929 = vld [vmem:[#allocation32 + $0x168] sm:$0xff]
    %v6930 = vld [vmem:[#allocation32 + $0x170] sm:$0xff]
    %v6931 = vld [vmem:[#allocation32 + $0x178] sm:$0xff]
    %v6932 = vld [vmem:[#allocation32 + $0x180] sm:$0xff]
    %v6933 = vld [vmem:[#allocation32 + $0x188] sm:$0xff]
    %v6934 = vld [vmem:[#allocation32 + $0x190] sm:$0xff]
    %v6935 = vld [vmem:[#allocation32 + $0x198] sm:$0xff]
    %v6936 = vld [vmem:[#allocation32 + $0x1a0] sm:$0xff]
    %v6937 = vld [vmem:[#allocation32 + $0x1a8] sm:$0xff]
    %v6938 = vld [vmem:[#allocation32 + $0x1b0] sm:$0xff]
    %v6939 = vld [vmem:[#allocation32 + $0x1b8] sm:$0xff]
    %v6940 = vld [vmem:[#allocation32 + $0x1c0] sm:$0xff]
    %v6941 = vld [vmem:[#allocation32 + $0x1c8] sm:$0xff]
    %v6942 = vld [vmem:[#allocation32 + $0x1d0] sm:$0xff]
    %v6943 = vld [vmem:[#allocation32 + $0x1d8] sm:$0xff]
    %v6944 = vld [vmem:[#allocation32 + $0x1e0] sm:$0xff]
    %v6945 = vld [vmem:[#allocation32 + $0x1e8] sm:$0xff]
    %v6946 = vld [vmem:[#allocation32 + $0x1f0] sm:$0xff]
    %v6947 = vld [vmem:[#allocation32 + $0x1f8] sm:$0xff]
    %v6948 = vld [vmem:[#allocation32 + $0x200] sm:$0xff]
    %v6949 = vld [vmem:[#allocation32 + $0x208] sm:$0xff]
    %v6950 = vld [vmem:[#allocation32 + $0x210] sm:$0xff]
    %v6951 = vld [vmem:[#allocation32 + $0x218] sm:$0xff]
    %v6952 = vld [vmem:[#allocation32 + $0x220] sm:$0xff]
    %v6953 = vld [vmem:[#allocation32 + $0x228] sm:$0xff]
    %v6954 = vld [vmem:[#allocation32 + $0x230] sm:$0xff]
    %v6955 = vld [vmem:[#allocation32 + $0x238] sm:$0xff]
    %v6956 = vld [vmem:[#allocation32 + $0x240] sm:$0xff]
    %v6957 = vld [vmem:[#allocation32 + $0x248] sm:$0xff]
    %v6958 = vld [vmem:[#allocation32 + $0x250] sm:$0xff]
    %v6959 = vld [vmem:[#allocation32 + $0x258] sm:$0xff]
    %v6960 = vld [vmem:[#allocation32 + $0x260] sm:$0xff]
    %v6961 = vld [vmem:[#allocation32 + $0x268] sm:$0xff]
    %v6962 = vld [vmem:[#allocation32 + $0x270] sm:$0xff]
    %v6963 = vld [vmem:[#allocation32 + $0x278] sm:$0xff]
    %v6964 = vld [vmem:[#allocation32 + $0x280] sm:$0xff]
    %v6965 = vld [vmem:[#allocation32 + $0x288] sm:$0xff]
    %v6966 = vld [vmem:[#allocation32 + $0x290] sm:$0xff]
    %v6967 = vld [vmem:[#allocation32 + $0x298] sm:$0xff]
    %v6968 = vld [vmem:[#allocation32 + $0x2a0] sm:$0xff]
    %v6969 = vld [vmem:[#allocation32 + $0x2a8] sm:$0xff]
    %v6970 = vld [vmem:[#allocation32 + $0x2b0] sm:$0xff]
    %v6971 = vld [vmem:[#allocation32 + $0x2b8] sm:$0xff]
    %v6972 = vld [vmem:[#allocation32 + $0x2c0] sm:$0xff]
    %v6973 = vld [vmem:[#allocation32 + $0x2c8] sm:$0xff]
    %v6974 = vld [vmem:[#allocation32 + $0x2d0] sm:$0xff]
    %v6975 = vld [vmem:[#allocation32 + $0x2d8] sm:$0xff]
    %v6976 = vld [vmem:[#allocation32 + $0x2e0] sm:$0xff]
    %v6977 = vld [vmem:[#allocation32 + $0x2e8] sm:$0xff]
    %v6978 = vld [vmem:[#allocation32 + $0x2f0] sm:$0xff]
    %v6979 = vld [vmem:[#allocation32 + $0x2f8] sm:$0xff]
    %v6980 = vld [vmem:[#allocation32 + $0x300] sm:$0xff]
    %v6981 = vld [vmem:[#allocation32 + $0x308] sm:$0xff]
    %v6982 = vld [vmem:[#allocation32 + $0x310] sm:$0xff]
    %v6983 = vld [vmem:[#allocation32 + $0x318] sm:$0xff]
    %v6984 = vld [vmem:[#allocation32 + $0x320] sm:$0xff]
    %v6985 = vld [vmem:[#allocation32 + $0x328] sm:$0xff]
    %v6986 = vld [vmem:[#allocation32 + $0x330] sm:$0xff]
    %v6987 = vld [vmem:[#allocation32 + $0x338] sm:$0xff]
    %v6988 = vld [vmem:[#allocation32 + $0x340] sm:$0xff]
    %v6989 = vld [vmem:[#allocation32 + $0x348] sm:$0xff]
    %v6990 = vld [vmem:[#allocation32 + $0x350] sm:$0xff]
    %v6991 = vld [vmem:[#allocation32 + $0x358] sm:$0xff]
    %v6992 = vld [vmem:[#allocation32 + $0x360] sm:$0xff]
    %v6993 = vld [vmem:[#allocation32 + $0x368] sm:$0xff]
    %v6994 = vld [vmem:[#allocation32 + $0x370] sm:$0xff]
    %v6995 = vld [vmem:[#allocation32 + $0x378] sm:$0xff]
    %v6996 = vld [vmem:[#allocation32 + $0x380] sm:$0xff]
    %v6997 = vld [vmem:[#allocation32 + $0x388] sm:$0xff]
    %v6998 = vld [vmem:[#allocation32 + $0x390] sm:$0xff]
    %v6999 = vld [vmem:[#allocation32 + $0x398] sm:$0xff]
    %v7000 = vld [vmem:[#allocation32 + $0x3a0] sm:$0xff]
    %v7001 = vld [vmem:[#allocation32 + $0x3a8] sm:$0xff]
    %v7002 = vld [vmem:[#allocation32 + $0x3b0] sm:$0xff]
    %v7003 = vld [vmem:[#allocation32 + $0x3b8] sm:$0xff]
    %v7004 = vld [vmem:[#allocation32 + $0x3c0] sm:$0xff]
    %v7005 = vld [vmem:[#allocation32 + $0x3c8] sm:$0xff]
    %v7006 = vld [vmem:[#allocation32 + $0x3d0] sm:$0xff]
    %v7007 = vld [vmem:[#allocation32 + $0x3d8] sm:$0xff]
    %v7008 = vld [vmem:[#allocation32 + $0x3e0] sm:$0xff]
    %v7009 = vld [vmem:[#allocation32 + $0x3e8] sm:$0xff]
    %v7010 = vld [vmem:[#allocation32 + $0x3f0] sm:$0xff]
    %v7011 = vld [vmem:[#allocation32 + $0x3f8] sm:$0xff]
    %v7012 = vpack.c.bf16 %v3665, %v3665
    %v7013 = vpack.c.bf16 %v3667, %v3667
    %v7014 = vpack.c.bf16 %v3747, %v3747
    %v7015 = vpack.c.bf16 %v3749, %v3749
    %v7144 = vunpack.c.l.b16 %v6884
    %v7145 = vunpack.c.h.b16 %v6884
    %v7146 = vunpack.c.l.b16 %v6885
    %v7147 = vunpack.c.h.b16 %v6885
    %v7148 = vunpack.c.l.b16 %v6886
    %v7149 = vunpack.c.h.b16 %v6886
    %v7150 = vunpack.c.l.b16 %v6887
    %v7151 = vunpack.c.h.b16 %v6887
    %v7152 = vunpack.c.l.b16 %v6888
    %v7153 = vunpack.c.h.b16 %v6888
    %v7154 = vunpack.c.l.b16 %v6889
    %v7155 = vunpack.c.h.b16 %v6889
    %v7156 = vunpack.c.l.b16 %v6890
    %v7157 = vunpack.c.h.b16 %v6890
    %v7158 = vunpack.c.l.b16 %v6891
    %v7159 = vunpack.c.h.b16 %v6891
    %v7160 = vunpack.c.l.b16 %v6892
    %v7161 = vunpack.c.h.b16 %v6892
    %v7162 = vunpack.c.l.b16 %v6893
    %v7163 = vunpack.c.h.b16 %v6893
    %v7164 = vunpack.c.l.b16 %v6894
    %v7165 = vunpack.c.h.b16 %v6894
    %v7166 = vunpack.c.l.b16 %v6895
    %v7167 = vunpack.c.h.b16 %v6895
    %v7168 = vunpack.c.l.b16 %v6896
    %v7169 = vunpack.c.h.b16 %v6896
    %v7170 = vunpack.c.l.b16 %v6897
    %v7171 = vunpack.c.h.b16 %v6897
    %v7172 = vunpack.c.l.b16 %v6898
    %v7173 = vunpack.c.h.b16 %v6898
    %v7174 = vunpack.c.l.b16 %v6899
    %v7175 = vunpack.c.h.b16 %v6899
    %v7176 = vunpack.c.l.b16 %v6900
    %v7177 = vunpack.c.h.b16 %v6900
    %v7178 = vunpack.c.l.b16 %v6901
    %v7179 = vunpack.c.h.b16 %v6901
    %v7180 = vunpack.c.l.b16 %v6902
    %v7181 = vunpack.c.h.b16 %v6902
    %v7182 = vunpack.c.l.b16 %v6903
    %v7183 = vunpack.c.h.b16 %v6903
    %v7184 = vunpack.c.l.b16 %v6904
    %v7185 = vunpack.c.h.b16 %v6904
    %v7186 = vunpack.c.l.b16 %v6905
    %v7187 = vunpack.c.h.b16 %v6905
    %v7188 = vunpack.c.l.b16 %v6906
    %v7189 = vunpack.c.h.b16 %v6906
    %v7190 = vunpack.c.l.b16 %v6907
    %v7191 = vunpack.c.h.b16 %v6907
    %v7192 = vunpack.c.l.b16 %v6908
    %v7193 = vunpack.c.h.b16 %v6908
    %v7194 = vunpack.c.l.b16 %v6909
    %v7195 = vunpack.c.h.b16 %v6909
    %v7196 = vunpack.c.l.b16 %v6910
    %v7197 = vunpack.c.h.b16 %v6910
    %v7198 = vunpack.c.l.b16 %v6911
    %v7199 = vunpack.c.h.b16 %v6911
    %v7200 = vunpack.c.l.b16 %v6912
    %v7201 = vunpack.c.h.b16 %v6912
    %v7202 = vunpack.c.l.b16 %v6913
    %v7203 = vunpack.c.h.b16 %v6913
    %v7204 = vunpack.c.l.b16 %v6914
    %v7205 = vunpack.c.h.b16 %v6914
    %v7206 = vunpack.c.l.b16 %v6915
    %v7207 = vunpack.c.h.b16 %v6915
    %v7208 = vunpack.c.l.b16 %v6916
    %v7209 = vunpack.c.h.b16 %v6916
    %v7210 = vunpack.c.l.b16 %v6917
    %v7211 = vunpack.c.h.b16 %v6917
    %v7212 = vunpack.c.l.b16 %v6918
    %v7213 = vunpack.c.h.b16 %v6918
    %v7214 = vunpack.c.l.b16 %v6919
    %v7215 = vunpack.c.h.b16 %v6919
    %v7216 = vunpack.c.l.b16 %v6920
    %v7217 = vunpack.c.h.b16 %v6920
    %v7218 = vunpack.c.l.b16 %v6921
    %v7219 = vunpack.c.h.b16 %v6921
    %v7220 = vunpack.c.l.b16 %v6922
    %v7221 = vunpack.c.h.b16 %v6922
    %v7222 = vunpack.c.l.b16 %v6923
    %v7223 = vunpack.c.h.b16 %v6923
    %v7224 = vunpack.c.l.b16 %v6924
    %v7225 = vunpack.c.h.b16 %v6924
    %v7226 = vunpack.c.l.b16 %v6925
    %v7227 = vunpack.c.h.b16 %v6925
    %v7228 = vunpack.c.l.b16 %v6926
    %v7229 = vunpack.c.h.b16 %v6926
    %v7230 = vunpack.c.l.b16 %v6927
    %v7231 = vunpack.c.h.b16 %v6927
    %v7232 = vunpack.c.l.b16 %v6928
    %v7233 = vunpack.c.h.b16 %v6928
    %v7234 = vunpack.c.l.b16 %v6929
    %v7235 = vunpack.c.h.b16 %v6929
    %v7236 = vunpack.c.l.b16 %v6930
    %v7237 = vunpack.c.h.b16 %v6930
    %v7238 = vunpack.c.l.b16 %v6931
    %v7239 = vunpack.c.h.b16 %v6931
    %v7240 = vunpack.c.l.b16 %v6932
    %v7241 = vunpack.c.h.b16 %v6932
    %v7242 = vunpack.c.l.b16 %v6933
    %v7243 = vunpack.c.h.b16 %v6933
    %v7244 = vunpack.c.l.b16 %v6934
    %v7245 = vunpack.c.h.b16 %v6934
    %v7246 = vunpack.c.l.b16 %v6935
    %v7247 = vunpack.c.h.b16 %v6935
    %v7248 = vunpack.c.l.b16 %v6936
    %v7249 = vunpack.c.h.b16 %v6936
    %v7250 = vunpack.c.l.b16 %v6937
    %v7251 = vunpack.c.h.b16 %v6937
    %v7252 = vunpack.c.l.b16 %v6938
    %v7253 = vunpack.c.h.b16 %v6938
    %v7254 = vunpack.c.l.b16 %v6939
    %v7255 = vunpack.c.h.b16 %v6939
    %v7256 = vunpack.c.l.b16 %v6940
    %v7257 = vunpack.c.h.b16 %v6940
    %v7258 = vunpack.c.l.b16 %v6941
    %v7259 = vunpack.c.h.b16 %v6941
    %v7260 = vunpack.c.l.b16 %v6942
    %v7261 = vunpack.c.h.b16 %v6942
    %v7262 = vunpack.c.l.b16 %v6943
    %v7263 = vunpack.c.h.b16 %v6943
    %v7264 = vunpack.c.l.b16 %v6944
    %v7265 = vunpack.c.h.b16 %v6944
    %v7266 = vunpack.c.l.b16 %v6945
    %v7267 = vunpack.c.h.b16 %v6945
    %v7268 = vunpack.c.l.b16 %v6946
    %v7269 = vunpack.c.h.b16 %v6946
    %v7270 = vunpack.c.l.b16 %v6947
    %v7271 = vunpack.c.h.b16 %v6947
    %v7272 = vunpack.c.l.b16 %v6948
    %v7273 = vunpack.c.h.b16 %v6948
    %v7274 = vunpack.c.l.b16 %v6949
    %v7275 = vunpack.c.h.b16 %v6949
    %v7276 = vunpack.c.l.b16 %v6950
    %v7277 = vunpack.c.h.b16 %v6950
    %v7278 = vunpack.c.l.b16 %v6951
    %v7279 = vunpack.c.h.b16 %v6951
    %v7280 = vunpack.c.l.b16 %v6952
    %v7281 = vunpack.c.h.b16 %v6952
    %v7282 = vunpack.c.l.b16 %v6953
    %v7283 = vunpack.c.h.b16 %v6953
    %v7284 = vunpack.c.l.b16 %v6954
    %v7285 = vunpack.c.h.b16 %v6954
    %v7286 = vunpack.c.l.b16 %v6955
    %v7287 = vunpack.c.h.b16 %v6955
    %v7288 = vunpack.c.l.b16 %v6956
    %v7289 = vunpack.c.h.b16 %v6956
    %v7290 = vunpack.c.l.b16 %v6957
    %v7291 = vunpack.c.h.b16 %v6957
    %v7292 = vunpack.c.l.b16 %v6958
    %v7293 = vunpack.c.h.b16 %v6958
    %v7294 = vunpack.c.l.b16 %v6959
    %v7295 = vunpack.c.h.b16 %v6959
    %v7296 = vunpack.c.l.b16 %v6960
    %v7297 = vunpack.c.h.b16 %v6960
    %v7298 = vunpack.c.l.b16 %v6961
    %v7299 = vunpack.c.h.b16 %v6961
    %v7300 = vunpack.c.l.b16 %v6962
    %v7301 = vunpack.c.h.b16 %v6962
    %v7302 = vunpack.c.l.b16 %v6963
    %v7303 = vunpack.c.h.b16 %v6963
    %v7304 = vunpack.c.l.b16 %v6964
    %v7305 = vunpack.c.h.b16 %v6964
    %v7306 = vunpack.c.l.b16 %v6965
    %v7307 = vunpack.c.h.b16 %v6965
    %v7308 = vunpack.c.l.b16 %v6966
    %v7309 = vunpack.c.h.b16 %v6966
    %v7310 = vunpack.c.l.b16 %v6967
    %v7311 = vunpack.c.h.b16 %v6967
    %v7312 = vunpack.c.l.b16 %v6968
    %v7313 = vunpack.c.h.b16 %v6968
    %v7314 = vunpack.c.l.b16 %v6969
    %v7315 = vunpack.c.h.b16 %v6969
    %v7316 = vunpack.c.l.b16 %v6970
    %v7317 = vunpack.c.h.b16 %v6970
    %v7318 = vunpack.c.l.b16 %v6971
    %v7319 = vunpack.c.h.b16 %v6971
    %v7320 = vunpack.c.l.b16 %v6972
    %v7321 = vunpack.c.h.b16 %v6972
    %v7322 = vunpack.c.l.b16 %v6973
    %v7323 = vunpack.c.h.b16 %v6973
    %v7324 = vunpack.c.l.b16 %v6974
    %v7325 = vunpack.c.h.b16 %v6974
    %v7326 = vunpack.c.l.b16 %v6975
    %v7327 = vunpack.c.h.b16 %v6975
    %v7328 = vunpack.c.l.b16 %v6976
    %v7329 = vunpack.c.h.b16 %v6976
    %v7330 = vunpack.c.l.b16 %v6977
    %v7331 = vunpack.c.h.b16 %v6977
    %v7332 = vunpack.c.l.b16 %v6978
    %v7333 = vunpack.c.h.b16 %v6978
    %v7334 = vunpack.c.l.b16 %v6979
    %v7335 = vunpack.c.h.b16 %v6979
    %v7336 = vunpack.c.l.b16 %v6980
    %v7337 = vunpack.c.h.b16 %v6980
    %v7338 = vunpack.c.l.b16 %v6981
    %v7339 = vunpack.c.h.b16 %v6981
    %v7340 = vunpack.c.l.b16 %v6982
    %v7341 = vunpack.c.h.b16 %v6982
    %v7342 = vunpack.c.l.b16 %v6983
    %v7343 = vunpack.c.h.b16 %v6983
    %v7344 = vunpack.c.l.b16 %v6984
    %v7345 = vunpack.c.h.b16 %v6984
    %v7346 = vunpack.c.l.b16 %v6985
    %v7347 = vunpack.c.h.b16 %v6985
    %v7348 = vunpack.c.l.b16 %v6986
    %v7349 = vunpack.c.h.b16 %v6986
    %v7350 = vunpack.c.l.b16 %v6987
    %v7351 = vunpack.c.h.b16 %v6987
    %v7352 = vunpack.c.l.b16 %v6988
    %v7353 = vunpack.c.h.b16 %v6988
    %v7354 = vunpack.c.l.b16 %v6989
    %v7355 = vunpack.c.h.b16 %v6989
    %v7356 = vunpack.c.l.b16 %v6990
    %v7357 = vunpack.c.h.b16 %v6990
    %v7358 = vunpack.c.l.b16 %v6991
    %v7359 = vunpack.c.h.b16 %v6991
    %v7360 = vunpack.c.l.b16 %v6992
    %v7361 = vunpack.c.h.b16 %v6992
    %v7362 = vunpack.c.l.b16 %v6993
    %v7363 = vunpack.c.h.b16 %v6993
    %v7364 = vunpack.c.l.b16 %v6994
    %v7365 = vunpack.c.h.b16 %v6994
    %v7366 = vunpack.c.l.b16 %v6995
    %v7367 = vunpack.c.h.b16 %v6995
    %v7368 = vunpack.c.l.b16 %v6996
    %v7369 = vunpack.c.h.b16 %v6996
    %v7370 = vunpack.c.l.b16 %v6997
    %v7371 = vunpack.c.h.b16 %v6997
    %v7372 = vunpack.c.l.b16 %v6998
    %v7373 = vunpack.c.h.b16 %v6998
    %v7374 = vunpack.c.l.b16 %v6999
    %v7375 = vunpack.c.h.b16 %v6999
    %v7376 = vunpack.c.l.b16 %v7000
    %v7377 = vunpack.c.h.b16 %v7000
    %v7378 = vunpack.c.l.b16 %v7001
    %v7379 = vunpack.c.h.b16 %v7001
    %v7380 = vunpack.c.l.b16 %v7002
    %v7381 = vunpack.c.h.b16 %v7002
    %v7382 = vunpack.c.l.b16 %v7003
    %v7383 = vunpack.c.h.b16 %v7003
    %v7384 = vunpack.c.l.b16 %v7004
    %v7385 = vunpack.c.h.b16 %v7004
    %v7386 = vunpack.c.l.b16 %v7005
    %v7387 = vunpack.c.h.b16 %v7005
    %v7388 = vunpack.c.l.b16 %v7006
    %v7389 = vunpack.c.h.b16 %v7006
    %v7390 = vunpack.c.l.b16 %v7007
    %v7391 = vunpack.c.h.b16 %v7007
    %v7392 = vunpack.c.l.b16 %v7008
    %v7393 = vunpack.c.h.b16 %v7008
    %v7394 = vunpack.c.l.b16 %v7009
    %v7395 = vunpack.c.h.b16 %v7009
    %v7396 = vunpack.c.l.b16 %v7010
    %v7397 = vunpack.c.h.b16 %v7010
    %v7398 = vunpack.c.l.b16 %v7011
    %v7399 = vunpack.c.h.b16 %v7011
    %v7400 = vpack.c.b16 %v7148, %v7144
    %v7401 = vpack.c.b16 %v7149, %v7145
    %v7402 = vpack.c.b16 %v7150, %v7146
    %v7403 = vpack.c.b16 %v7151, %v7147
    %v7404 = vpack.c.b16 %v7156, %v7152
    %v7405 = vpack.c.b16 %v7157, %v7153
    %v7406 = vpack.c.b16 %v7158, %v7154
    %v7407 = vpack.c.b16 %v7159, %v7155
    %v7408 = vpack.c.b16 %v7164, %v7160
    %v7409 = vpack.c.b16 %v7165, %v7161
    %v7410 = vpack.c.b16 %v7166, %v7162
    %v7411 = vpack.c.b16 %v7167, %v7163
    %v7412 = vpack.c.b16 %v7172, %v7168
    %v7413 = vpack.c.b16 %v7173, %v7169
    %v7414 = vpack.c.b16 %v7174, %v7170
    %v7415 = vpack.c.b16 %v7175, %v7171
    %v7416 = vpack.c.b16 %v7180, %v7176
    %v7417 = vpack.c.b16 %v7181, %v7177
    %v7418 = vpack.c.b16 %v7182, %v7178
    %v7419 = vpack.c.b16 %v7183, %v7179
    %v7420 = vpack.c.b16 %v7188, %v7184
    %v7421 = vpack.c.b16 %v7189, %v7185
    %v7422 = vpack.c.b16 %v7190, %v7186
    %v7423 = vpack.c.b16 %v7191, %v7187
    %v7424 = vpack.c.b16 %v7196, %v7192
    %v7425 = vpack.c.b16 %v7197, %v7193
    %v7426 = vpack.c.b16 %v7198, %v7194
    %v7427 = vpack.c.b16 %v7199, %v7195
    %v7428 = vpack.c.b16 %v7204, %v7200
    %v7429 = vpack.c.b16 %v7205, %v7201
    %v7430 = vpack.c.b16 %v7206, %v7202
    %v7431 = vpack.c.b16 %v7207, %v7203
    %v7432 = vpack.c.b16 %v7212, %v7208
    %v7433 = vpack.c.b16 %v7213, %v7209
    %v7434 = vpack.c.b16 %v7214, %v7210
    %v7435 = vpack.c.b16 %v7215, %v7211
    %v7436 = vpack.c.b16 %v7220, %v7216
    %v7437 = vpack.c.b16 %v7221, %v7217
    %v7438 = vpack.c.b16 %v7222, %v7218
    %v7439 = vpack.c.b16 %v7223, %v7219
    %v7440 = vpack.c.b16 %v7228, %v7224
    %v7441 = vpack.c.b16 %v7229, %v7225
    %v7442 = vpack.c.b16 %v7230, %v7226
    %v7443 = vpack.c.b16 %v7231, %v7227
    %v7444 = vpack.c.b16 %v7236, %v7232
    %v7445 = vpack.c.b16 %v7237, %v7233
    %v7446 = vpack.c.b16 %v7238, %v7234
    %v7447 = vpack.c.b16 %v7239, %v7235
    %v7448 = vpack.c.b16 %v7244, %v7240
    %v7449 = vpack.c.b16 %v7245, %v7241
    %v7450 = vpack.c.b16 %v7246, %v7242
    %v7451 = vpack.c.b16 %v7247, %v7243
    %v7452 = vpack.c.b16 %v7252, %v7248
    %v7453 = vpack.c.b16 %v7253, %v7249
    %v7454 = vpack.c.b16 %v7254, %v7250
    %v7455 = vpack.c.b16 %v7255, %v7251
    %v7456 = vpack.c.b16 %v7260, %v7256
    %v7457 = vpack.c.b16 %v7261, %v7257
    %v7458 = vpack.c.b16 %v7262, %v7258
    %v7459 = vpack.c.b16 %v7263, %v7259
    %v7460 = vpack.c.b16 %v7268, %v7264
    %v7461 = vpack.c.b16 %v7269, %v7265
    %v7462 = vpack.c.b16 %v7270, %v7266
    %v7463 = vpack.c.b16 %v7271, %v7267
    %v7464 = vpack.c.b16 %v7276, %v7272
    %v7465 = vpack.c.b16 %v7277, %v7273
    %v7466 = vpack.c.b16 %v7278, %v7274
    %v7467 = vpack.c.b16 %v7279, %v7275
    %v7468 = vpack.c.b16 %v7284, %v7280
    %v7469 = vpack.c.b16 %v7285, %v7281
    %v7470 = vpack.c.b16 %v7286, %v7282
    %v7471 = vpack.c.b16 %v7287, %v7283
    %v7472 = vpack.c.b16 %v7292, %v7288
    %v7473 = vpack.c.b16 %v7293, %v7289
    %v7474 = vpack.c.b16 %v7294, %v7290
    %v7475 = vpack.c.b16 %v7295, %v7291
    %v7476 = vpack.c.b16 %v7300, %v7296
    %v7477 = vpack.c.b16 %v7301, %v7297
    %v7478 = vpack.c.b16 %v7302, %v7298
    %v7479 = vpack.c.b16 %v7303, %v7299
    %v7480 = vpack.c.b16 %v7308, %v7304
    %v7481 = vpack.c.b16 %v7309, %v7305
    %v7482 = vpack.c.b16 %v7310, %v7306
    %v7483 = vpack.c.b16 %v7311, %v7307
    %v7484 = vpack.c.b16 %v7316, %v7312
    %v7485 = vpack.c.b16 %v7317, %v7313
    %v7486 = vpack.c.b16 %v7318, %v7314
    %v7487 = vpack.c.b16 %v7319, %v7315
    %v7488 = vpack.c.b16 %v7324, %v7320
    %v7489 = vpack.c.b16 %v7325, %v7321
    %v7490 = vpack.c.b16 %v7326, %v7322
    %v7491 = vpack.c.b16 %v7327, %v7323
    %v7492 = vpack.c.b16 %v7332, %v7328
    %v7493 = vpack.c.b16 %v7333, %v7329
    %v7494 = vpack.c.b16 %v7334, %v7330
    %v7495 = vpack.c.b16 %v7335, %v7331
    %v7496 = vpack.c.b16 %v7340, %v7336
    %v7497 = vpack.c.b16 %v7341, %v7337
    %v7498 = vpack.c.b16 %v7342, %v7338
    %v7499 = vpack.c.b16 %v7343, %v7339
    %v7500 = vpack.c.b16 %v7348, %v7344
    %v7501 = vpack.c.b16 %v7349, %v7345
    %v7502 = vpack.c.b16 %v7350, %v7346
    %v7503 = vpack.c.b16 %v7351, %v7347
    %v7504 = vpack.c.b16 %v7356, %v7352
    %v7505 = vpack.c.b16 %v7357, %v7353
    %v7506 = vpack.c.b16 %v7358, %v7354
    %v7507 = vpack.c.b16 %v7359, %v7355
    %v7508 = vpack.c.b16 %v7364, %v7360
    %v7509 = vpack.c.b16 %v7365, %v7361
    %v7510 = vpack.c.b16 %v7366, %v7362
    %v7511 = vpack.c.b16 %v7367, %v7363
    %v7512 = vpack.c.b16 %v7372, %v7368
    %v7513 = vpack.c.b16 %v7373, %v7369
    %v7514 = vpack.c.b16 %v7374, %v7370
    %v7515 = vpack.c.b16 %v7375, %v7371
    %v7516 = vpack.c.b16 %v7380, %v7376
    %v7517 = vpack.c.b16 %v7381, %v7377
    %v7518 = vpack.c.b16 %v7382, %v7378
    %v7519 = vpack.c.b16 %v7383, %v7379
    %v7520 = vpack.c.b16 %v7388, %v7384
    %v7521 = vpack.c.b16 %v7389, %v7385
    %v7522 = vpack.c.b16 %v7390, %v7386
    %v7523 = vpack.c.b16 %v7391, %v7387
    %v7524 = vpack.c.b16 %v7396, %v7392
    %v7525 = vpack.c.b16 %v7397, %v7393
    %v7526 = vpack.c.b16 %v7398, %v7394
    %v7527 = vpack.c.b16 %v7399, %v7395
    %7656 = vmatprep.subr.bf16.mxu0 %v7429
    %7657 = vmatpush1.bf16.msra.mxu0 %v7428
    %7658 = vmatprep.subr.bf16.mxu0 %v7425
    %7659 = vmatpush1.bf16.msra.mxu0 %v7424
    %7660 = vmatprep.subr.bf16.mxu0 %v7421
    %7661 = vmatpush1.bf16.msra.mxu0 %v7420
    %7662 = vmatprep.subr.bf16.mxu0 %v7417
    %7663 = vmatpush1.bf16.msra.mxu0 %v7416
    %7664 = vmatprep.subr.bf16.mxu0 %v7413
    %7665 = vmatpush1.bf16.msra.mxu0 %v7412
    %7666 = vmatprep.subr.bf16.mxu0 %v7409
    %7667 = vmatpush1.bf16.msra.mxu0 %v7408
    %7668 = vmatprep.subr.bf16.mxu0 %v7405
    %7669 = vmatpush1.bf16.msra.mxu0 %v7404
    %7670 = vmatprep.subr.bf16.mxu0 %v7401
    %7671 = vmatpush1.bf16.msra.mxu0 %v7400
    %7672 = vmatprep.subr.bf16.mxu0 %v7461
    %7673 = vmatpush2.bf16.msra.mxu0 %v7460
    %7674 = vmatprep.subr.bf16.mxu0 %v7457
    %7675 = vmatpush2.bf16.msra.mxu0 %v7456
    %7676 = vmatprep.subr.bf16.mxu0 %v7453
    %7677 = vmatpush2.bf16.msra.mxu0 %v7452
    %7678 = vmatprep.subr.bf16.mxu0 %v7449
    %7679 = vmatpush2.bf16.msra.mxu0 %v7448
    %7680 = vmatprep.subr.bf16.mxu0 %v7445
    %7681 = vmatpush2.bf16.msra.mxu0 %v7444
    %7682 = vmatprep.subr.bf16.mxu0 %v7441
    %7683 = vmatpush2.bf16.msra.mxu0 %v7440
    %7684 = vmatprep.subr.bf16.mxu0 %v7437
    %7685 = vmatpush2.bf16.msra.mxu0 %v7436
    %7686 = vmatprep.subr.bf16.mxu0 %v7433
    %7687 = vmatpush2.bf16.msra.mxu0 %v7432
    %7688 = vmatprep.mubr.bf16.mxu0 %v7013
    %7689 = vmatmul.mubr.bf16.gmra.mxu0 %v7012
    %v7690 = vpop.f32.mrf.mxu0
    %v7691 = vadd.f32 0.0, %v7690
    %v7692 = vpop.f32.mrf.mxu0
    %v7693 = vadd.f32 0.0, %v7692
    %v7694 = vpop.f32.mrf.mxu0
    %v7695 = vpop.f32.mrf.mxu0
    %7696 = vdwg.mxu0
    %7697 = vmatprep.subr.bf16.mxu0 %v7493
    %7698 = vmatpush1.bf16.msra.mxu0 %v7492
    %7699 = vmatprep.subr.bf16.mxu0 %v7489
    %7700 = vmatpush1.bf16.msra.mxu0 %v7488
    %7701 = vmatprep.subr.bf16.mxu0 %v7485
    %7702 = vmatpush1.bf16.msra.mxu0 %v7484
    %7703 = vmatprep.subr.bf16.mxu0 %v7481
    %7704 = vmatpush1.bf16.msra.mxu0 %v7480
    %7705 = vmatprep.subr.bf16.mxu0 %v7477
    %7706 = vmatpush1.bf16.msra.mxu0 %v7476
    %7707 = vmatprep.subr.bf16.mxu0 %v7473
    %7708 = vmatpush1.bf16.msra.mxu0 %v7472
    %7709 = vmatprep.subr.bf16.mxu0 %v7469
    %7710 = vmatpush1.bf16.msra.mxu0 %v7468
    %7711 = vmatprep.subr.bf16.mxu0 %v7465
    %7712 = vmatpush1.bf16.msra.mxu0 %v7464
    %7713 = vmatprep.subr.bf16.mxu0 %v7525
    %7714 = vmatpush2.bf16.msra.mxu0 %v7524
    %7715 = vmatprep.subr.bf16.mxu0 %v7521
    %7716 = vmatpush2.bf16.msra.mxu0 %v7520
    %7717 = vmatprep.subr.bf16.mxu0 %v7517
    %7718 = vmatpush2.bf16.msra.mxu0 %v7516
    %7719 = vmatprep.subr.bf16.mxu0 %v7513
    %7720 = vmatpush2.bf16.msra.mxu0 %v7512
    %7721 = vmatprep.subr.bf16.mxu0 %v7509
    %7722 = vmatpush2.bf16.msra.mxu0 %v7508
    %7723 = vmatprep.subr.bf16.mxu0 %v7505
    %7724 = vmatpush2.bf16.msra.mxu0 %v7504
    %7725 = vmatprep.subr.bf16.mxu0 %v7501
    %7726 = vmatpush2.bf16.msra.mxu0 %v7500
    %7727 = vmatprep.subr.bf16.mxu0 %v7497
    %7728 = vmatpush2.bf16.msra.mxu0 %v7496
    %7729 = vmatprep.mubr.bf16.mxu0 %v7015
    %7730 = vmatmul.mubr.bf16.gmra.mxu0 %v7014
    %v7731 = vpop.f32.mrf.mxu0
    %v7732 = vadd.f32 %v7691, %v7731
    %v7733 = vpop.f32.mrf.mxu0
    %v7734 = vadd.f32 %v7693, %v7733
    %v7735 = vpop.f32.mrf.mxu0
    %v7736 = vpop.f32.mrf.mxu0
    %7737 = vdwg.mxu0
    %7738 = vmatprep.subr.bf16.mxu0 %v7431
    %7739 = vmatpush1.bf16.msra.mxu0 %v7430
    %7740 = vmatprep.subr.bf16.mxu0 %v7427
    %7741 = vmatpush1.bf16.msra.mxu0 %v7426
    %7742 = vmatprep.subr.bf16.mxu0 %v7423
    %7743 = vmatpush1.bf16.msra.mxu0 %v7422
    %7744 = vmatprep.subr.bf16.mxu0 %v7419
    %7745 = vmatpush1.bf16.msra.mxu0 %v7418
    %7746 = vmatprep.subr.bf16.mxu0 %v7415
    %7747 = vmatpush1.bf16.msra.mxu0 %v7414
    %7748 = vmatprep.subr.bf16.mxu0 %v7411
    %7749 = vmatpush1.bf16.msra.mxu0 %v7410
    %7750 = vmatprep.subr.bf16.mxu0 %v7407
    %7751 = vmatpush1.bf16.msra.mxu0 %v7406
    %7752 = vmatprep.subr.bf16.mxu0 %v7403
    %7753 = vmatpush1.bf16.msra.mxu0 %v7402
    %7754 = vmatprep.subr.bf16.mxu0 %v7463
    %7755 = vmatpush2.bf16.msra.mxu0 %v7462
    %7756 = vmatprep.subr.bf16.mxu0 %v7459
    %7757 = vmatpush2.bf16.msra.mxu0 %v7458
    %7758 = vmatprep.subr.bf16.mxu0 %v7455
    %7759 = vmatpush2.bf16.msra.mxu0 %v7454
    %7760 = vmatprep.subr.bf16.mxu0 %v7451
    %7761 = vmatpush2.bf16.msra.mxu0 %v7450
    %7762 = vmatprep.subr.bf16.mxu0 %v7447
    %7763 = vmatpush2.bf16.msra.mxu0 %v7446
    %7764 = vmatprep.subr.bf16.mxu0 %v7443
    %7765 = vmatpush2.bf16.msra.mxu0 %v7442
    %7766 = vmatprep.subr.bf16.mxu0 %v7439
    %7767 = vmatpush2.bf16.msra.mxu0 %v7438
    %7768 = vmatprep.subr.bf16.mxu0 %v7435
    %7769 = vmatpush2.bf16.msra.mxu0 %v7434
    %7770 = vmatprep.mubr.bf16.mxu0 %v7013
    %7771 = vmatmul.mubr.bf16.gmra.mxu0 %v7012
    %v7772 = vpop.f32.mrf.mxu0
    %v7773 = vadd.f32 0.0, %v7772
    %v7774 = vpop.f32.mrf.mxu0
    %v7775 = vadd.f32 0.0, %v7774
    %v7776 = vpop.f32.mrf.mxu0
    %v7777 = vpop.f32.mrf.mxu0
    %7778 = vdwg.mxu0
    %7779 = vmatprep.subr.bf16.mxu0 %v7495
    %7780 = vmatpush1.bf16.msra.mxu0 %v7494
    %7781 = vmatprep.subr.bf16.mxu0 %v7491
    %7782 = vmatpush1.bf16.msra.mxu0 %v7490
    %7783 = vmatprep.subr.bf16.mxu0 %v7487
    %7784 = vmatpush1.bf16.msra.mxu0 %v7486
    %7785 = vmatprep.subr.bf16.mxu0 %v7483
    %7786 = vmatpush1.bf16.msra.mxu0 %v7482
    %7787 = vmatprep.subr.bf16.mxu0 %v7479
    %7788 = vmatpush1.bf16.msra.mxu0 %v7478
    %7789 = vmatprep.subr.bf16.mxu0 %v7475
    %7790 = vmatpush1.bf16.msra.mxu0 %v7474
    %7791 = vmatprep.subr.bf16.mxu0 %v7471
    %7792 = vmatpush1.bf16.msra.mxu0 %v7470
    %7793 = vmatprep.subr.bf16.mxu0 %v7467
    %7794 = vmatpush1.bf16.msra.mxu0 %v7466
    %7795 = vmatprep.subr.bf16.mxu0 %v7527
    %7796 = vmatpush2.bf16.msra.mxu0 %v7526
    %7797 = vmatprep.subr.bf16.mxu0 %v7523
    %7798 = vmatpush2.bf16.msra.mxu0 %v7522
    %7799 = vmatprep.subr.bf16.mxu0 %v7519
    %7800 = vmatpush2.bf16.msra.mxu0 %v7518
    %7801 = vmatprep.subr.bf16.mxu0 %v7515
    %7802 = vmatpush2.bf16.msra.mxu0 %v7514
    %7803 = vmatprep.subr.bf16.mxu0 %v7511
    %7804 = vmatpush2.bf16.msra.mxu0 %v7510
    %7805 = vmatprep.subr.bf16.mxu0 %v7507
    %7806 = vmatpush2.bf16.msra.mxu0 %v7506
    %7807 = vmatprep.subr.bf16.mxu0 %v7503
    %7808 = vmatpush2.bf16.msra.mxu0 %v7502
    %7809 = vmatprep.subr.bf16.mxu0 %v7499
    %7810 = vmatpush2.bf16.msra.mxu0 %v7498
    %7811 = vmatprep.mubr.bf16.mxu0 %v7015
    %7812 = vmatmul.mubr.bf16.gmra.mxu0 %v7014
    %v7813 = vpop.f32.mrf.mxu0
    %v7814 = vadd.f32 %v7773, %v7813
    %v7815 = vpop.f32.mrf.mxu0
    %v7816 = vadd.f32 %v7775, %v7815
    %v7817 = vpop.f32.mrf.mxu0
    %v7818 = vpop.f32.mrf.mxu0
    %7819 = vdwg.mxu0
    %v8012 = vunpack.c.l.b16 %v6686
    %v8013 = vunpack.c.h.b16 %v6686
    %v8014 = vunpack.c.l.b16 %v6687
    %v8015 = vunpack.c.h.b16 %v6687
    %v8016 = vunpack.c.l.b16 %v6688
    %v8017 = vunpack.c.h.b16 %v6688
    %v8018 = vunpack.c.l.b16 %v6689
    %v8019 = vunpack.c.h.b16 %v6689
    %v8020 = vunpack.c.l.b16 %v6690
    %v8021 = vunpack.c.h.b16 %v6690
    %v8022 = vunpack.c.l.b16 %v6691
    %v8023 = vunpack.c.h.b16 %v6691
    %v8024 = vunpack.c.l.b16 %v6692
    %v8025 = vunpack.c.h.b16 %v6692
    %v8026 = vunpack.c.l.b16 %v6693
    %v8027 = vunpack.c.h.b16 %v6693
    %v8028 = vunpack.c.l.b16 %v6694
    %v8029 = vunpack.c.h.b16 %v6694
    %v8030 = vunpack.c.l.b16 %v6695
    %v8031 = vunpack.c.h.b16 %v6695
    %v8032 = vunpack.c.l.b16 %v6696
    %v8033 = vunpack.c.h.b16 %v6696
    %v8034 = vunpack.c.l.b16 %v6697
    %v8035 = vunpack.c.h.b16 %v6697
    %v8036 = vunpack.c.l.b16 %v6698
    %v8037 = vunpack.c.h.b16 %v6698
    %v8038 = vunpack.c.l.b16 %v6699
    %v8039 = vunpack.c.h.b16 %v6699
    %v8040 = vunpack.c.l.b16 %v6700
    %v8041 = vunpack.c.h.b16 %v6700
    %v8042 = vunpack.c.l.b16 %v6701
    %v8043 = vunpack.c.h.b16 %v6701
    %v8044 = vunpack.c.l.b16 %v6702
    %v8045 = vunpack.c.h.b16 %v6702
    %v8046 = vunpack.c.l.b16 %v6703
    %v8047 = vunpack.c.h.b16 %v6703
    %v8048 = vunpack.c.l.b16 %v6704
    %v8049 = vunpack.c.h.b16 %v6704
    %v8050 = vunpack.c.l.b16 %v6705
    %v8051 = vunpack.c.h.b16 %v6705
    %v8052 = vunpack.c.l.b16 %v6706
    %v8053 = vunpack.c.h.b16 %v6706
    %v8054 = vunpack.c.l.b16 %v6707
    %v8055 = vunpack.c.h.b16 %v6707
    %v8056 = vunpack.c.l.b16 %v6708
    %v8057 = vunpack.c.h.b16 %v6708
    %v8058 = vunpack.c.l.b16 %v6709
    %v8059 = vunpack.c.h.b16 %v6709
    %v8060 = vunpack.c.l.b16 %v6710
    %v8061 = vunpack.c.h.b16 %v6710
    %v8062 = vunpack.c.l.b16 %v6711
    %v8063 = vunpack.c.h.b16 %v6711
    %v8064 = vunpack.c.l.b16 %v6712
    %v8065 = vunpack.c.h.b16 %v6712
    %v8066 = vunpack.c.l.b16 %v6713
    %v8067 = vunpack.c.h.b16 %v6713
    %v8068 = vunpack.c.l.b16 %v6714
    %v8069 = vunpack.c.h.b16 %v6714
    %v8070 = vunpack.c.l.b16 %v6715
    %v8071 = vunpack.c.h.b16 %v6715
    %v8072 = vunpack.c.l.b16 %v6716
    %v8073 = vunpack.c.h.b16 %v6716
    %v8074 = vunpack.c.l.b16 %v6717
    %v8075 = vunpack.c.h.b16 %v6717
    %v8076 = vunpack.c.l.b16 %v6718
    %v8077 = vunpack.c.h.b16 %v6718
    %v8078 = vunpack.c.l.b16 %v6719
    %v8079 = vunpack.c.h.b16 %v6719
    %v8080 = vunpack.c.l.b16 %v6720
    %v8081 = vunpack.c.h.b16 %v6720
    %v8082 = vunpack.c.l.b16 %v6721
    %v8083 = vunpack.c.h.b16 %v6721
    %v8084 = vunpack.c.l.b16 %v6722
    %v8085 = vunpack.c.h.b16 %v6722
    %v8086 = vunpack.c.l.b16 %v6723
    %v8087 = vunpack.c.h.b16 %v6723
    %v8088 = vunpack.c.l.b16 %v6724
    %v8089 = vunpack.c.h.b16 %v6724
    %v8090 = vunpack.c.l.b16 %v6725
    %v8091 = vunpack.c.h.b16 %v6725
    %v8092 = vunpack.c.l.b16 %v6726
    %v8093 = vunpack.c.h.b16 %v6726
    %v8094 = vunpack.c.l.b16 %v6727
    %v8095 = vunpack.c.h.b16 %v6727
    %v8096 = vunpack.c.l.b16 %v6728
    %v8097 = vunpack.c.h.b16 %v6728
    %v8098 = vunpack.c.l.b16 %v6729
    %v8099 = vunpack.c.h.b16 %v6729
    %v8100 = vunpack.c.l.b16 %v6730
    %v8101 = vunpack.c.h.b16 %v6730
    %v8102 = vunpack.c.l.b16 %v6731
    %v8103 = vunpack.c.h.b16 %v6731
    %v8104 = vunpack.c.l.b16 %v6732
    %v8105 = vunpack.c.h.b16 %v6732
    %v8106 = vunpack.c.l.b16 %v6733
    %v8107 = vunpack.c.h.b16 %v6733
    %v8108 = vunpack.c.l.b16 %v6734
    %v8109 = vunpack.c.h.b16 %v6734
    %v8110 = vunpack.c.l.b16 %v6735
    %v8111 = vunpack.c.h.b16 %v6735
    %v8112 = vunpack.c.l.b16 %v6736
    %v8113 = vunpack.c.h.b16 %v6736
    %v8114 = vunpack.c.l.b16 %v6737
    %v8115 = vunpack.c.h.b16 %v6737
    %v8116 = vunpack.c.l.b16 %v6738
    %v8117 = vunpack.c.h.b16 %v6738
    %v8118 = vunpack.c.l.b16 %v6739
    %v8119 = vunpack.c.h.b16 %v6739
    %v8120 = vunpack.c.l.b16 %v6740
    %v8121 = vunpack.c.h.b16 %v6740
    %v8122 = vunpack.c.l.b16 %v6741
    %v8123 = vunpack.c.h.b16 %v6741
    %v8124 = vunpack.c.l.b16 %v6742
    %v8125 = vunpack.c.h.b16 %v6742
    %v8126 = vunpack.c.l.b16 %v6743
    %v8127 = vunpack.c.h.b16 %v6743
    %v8128 = vunpack.c.l.b16 %v6744
    %v8129 = vunpack.c.h.b16 %v6744
    %v8130 = vunpack.c.l.b16 %v6745
    %v8131 = vunpack.c.h.b16 %v6745
    %v8132 = vunpack.c.l.b16 %v6746
    %v8133 = vunpack.c.h.b16 %v6746
    %v8134 = vunpack.c.l.b16 %v6747
    %v8135 = vunpack.c.h.b16 %v6747
    %v8136 = vunpack.c.l.b16 %v6748
    %v8137 = vunpack.c.h.b16 %v6748
    %v8138 = vunpack.c.l.b16 %v6749
    %v8139 = vunpack.c.h.b16 %v6749
    %v8140 = vunpack.c.l.b16 %v6750
    %v8141 = vunpack.c.h.b16 %v6750
    %v8142 = vunpack.c.l.b16 %v6751
    %v8143 = vunpack.c.h.b16 %v6751
    %v8144 = vunpack.c.l.b16 %v6752
    %v8145 = vunpack.c.h.b16 %v6752
    %v8146 = vunpack.c.l.b16 %v6753
    %v8147 = vunpack.c.h.b16 %v6753
    %v8148 = vunpack.c.l.b16 %v6754
    %v8149 = vunpack.c.h.b16 %v6754
    %v8150 = vunpack.c.l.b16 %v6755
    %v8151 = vunpack.c.h.b16 %v6755
    %v8152 = vunpack.c.l.b16 %v6756
    %v8153 = vunpack.c.h.b16 %v6756
    %v8154 = vunpack.c.l.b16 %v6757
    %v8155 = vunpack.c.h.b16 %v6757
    %v8156 = vunpack.c.l.b16 %v6758
    %v8157 = vunpack.c.h.b16 %v6758
    %v8158 = vunpack.c.l.b16 %v6759
    %v8159 = vunpack.c.h.b16 %v6759
    %v8160 = vunpack.c.l.b16 %v6760
    %v8161 = vunpack.c.h.b16 %v6760
    %v8162 = vunpack.c.l.b16 %v6761
    %v8163 = vunpack.c.h.b16 %v6761
    %v8164 = vunpack.c.l.b16 %v6762
    %v8165 = vunpack.c.h.b16 %v6762
    %v8166 = vunpack.c.l.b16 %v6763
    %v8167 = vunpack.c.h.b16 %v6763
    %v8168 = vunpack.c.l.b16 %v6764
    %v8169 = vunpack.c.h.b16 %v6764
    %v8170 = vunpack.c.l.b16 %v6765
    %v8171 = vunpack.c.h.b16 %v6765
    %v8172 = vunpack.c.l.b16 %v6766
    %v8173 = vunpack.c.h.b16 %v6766
    %v8174 = vunpack.c.l.b16 %v6767
    %v8175 = vunpack.c.h.b16 %v6767
    %v8176 = vunpack.c.l.b16 %v6768
    %v8177 = vunpack.c.h.b16 %v6768
    %v8178 = vunpack.c.l.b16 %v6769
    %v8179 = vunpack.c.h.b16 %v6769
    %v8180 = vunpack.c.l.b16 %v6770
    %v8181 = vunpack.c.h.b16 %v6770
    %v8182 = vunpack.c.l.b16 %v6771
    %v8183 = vunpack.c.h.b16 %v6771
    %v8184 = vunpack.c.l.b16 %v6772
    %v8185 = vunpack.c.h.b16 %v6772
    %v8186 = vunpack.c.l.b16 %v6773
    %v8187 = vunpack.c.h.b16 %v6773
    %v8188 = vunpack.c.l.b16 %v6774
    %v8189 = vunpack.c.h.b16 %v6774
    %v8190 = vunpack.c.l.b16 %v6775
    %v8191 = vunpack.c.h.b16 %v6775
    %v8192 = vunpack.c.l.b16 %v6776
    %v8193 = vunpack.c.h.b16 %v6776
    %v8194 = vunpack.c.l.b16 %v6777
    %v8195 = vunpack.c.h.b16 %v6777
    %v8196 = vunpack.c.l.b16 %v6778
    %v8197 = vunpack.c.h.b16 %v6778
    %v8198 = vunpack.c.l.b16 %v6779
    %v8199 = vunpack.c.h.b16 %v6779
    %v8200 = vunpack.c.l.b16 %v6780
    %v8201 = vunpack.c.h.b16 %v6780
    %v8202 = vunpack.c.l.b16 %v6781
    %v8203 = vunpack.c.h.b16 %v6781
    %v8204 = vunpack.c.l.b16 %v6782
    %v8205 = vunpack.c.h.b16 %v6782
    %v8206 = vunpack.c.l.b16 %v6783
    %v8207 = vunpack.c.h.b16 %v6783
    %v8208 = vunpack.c.l.b16 %v6784
    %v8209 = vunpack.c.h.b16 %v6784
    %v8210 = vunpack.c.l.b16 %v6785
    %v8211 = vunpack.c.h.b16 %v6785
    %v8212 = vunpack.c.l.b16 %v6786
    %v8213 = vunpack.c.h.b16 %v6786
    %v8214 = vunpack.c.l.b16 %v6787
    %v8215 = vunpack.c.h.b16 %v6787
    %v8216 = vunpack.c.l.b16 %v6788
    %v8217 = vunpack.c.h.b16 %v6788
    %v8218 = vunpack.c.l.b16 %v6789
    %v8219 = vunpack.c.h.b16 %v6789
    %v8220 = vunpack.c.l.b16 %v6790
    %v8221 = vunpack.c.h.b16 %v6790
    %v8222 = vunpack.c.l.b16 %v6791
    %v8223 = vunpack.c.h.b16 %v6791
    %v8224 = vunpack.c.l.b16 %v6792
    %v8225 = vunpack.c.h.b16 %v6792
    %v8226 = vunpack.c.l.b16 %v6793
    %v8227 = vunpack.c.h.b16 %v6793
    %v8228 = vunpack.c.l.b16 %v6794
    %v8229 = vunpack.c.h.b16 %v6794
    %v8230 = vunpack.c.l.b16 %v6795
    %v8231 = vunpack.c.h.b16 %v6795
    %v8232 = vunpack.c.l.b16 %v6796
    %v8233 = vunpack.c.h.b16 %v6796
    %v8234 = vunpack.c.l.b16 %v6797
    %v8235 = vunpack.c.h.b16 %v6797
    %v8236 = vunpack.c.l.b16 %v6798
    %v8237 = vunpack.c.h.b16 %v6798
    %v8238 = vunpack.c.l.b16 %v6799
    %v8239 = vunpack.c.h.b16 %v6799
    %v8240 = vunpack.c.l.b16 %v6800
    %v8241 = vunpack.c.h.b16 %v6800
    %v8242 = vunpack.c.l.b16 %v6801
    %v8243 = vunpack.c.h.b16 %v6801
    %v8244 = vunpack.c.l.b16 %v6802
    %v8245 = vunpack.c.h.b16 %v6802
    %v8246 = vunpack.c.l.b16 %v6803
    %v8247 = vunpack.c.h.b16 %v6803
    %v8248 = vunpack.c.l.b16 %v6804
    %v8249 = vunpack.c.h.b16 %v6804
    %v8250 = vunpack.c.l.b16 %v6805
    %v8251 = vunpack.c.h.b16 %v6805
    %v8252 = vunpack.c.l.b16 %v6806
    %v8253 = vunpack.c.h.b16 %v6806
    %v8254 = vunpack.c.l.b16 %v6807
    %v8255 = vunpack.c.h.b16 %v6807
    %v8256 = vunpack.c.l.b16 %v6808
    %v8257 = vunpack.c.h.b16 %v6808
    %v8258 = vunpack.c.l.b16 %v6809
    %v8259 = vunpack.c.h.b16 %v6809
    %v8260 = vunpack.c.l.b16 %v6810
    %v8261 = vunpack.c.h.b16 %v6810
    %v8262 = vunpack.c.l.b16 %v6811
    %v8263 = vunpack.c.h.b16 %v6811
    %v8264 = vunpack.c.l.b16 %v6812
    %v8265 = vunpack.c.h.b16 %v6812
    %v8266 = vunpack.c.l.b16 %v6813
    %v8267 = vunpack.c.h.b16 %v6813
    %v8268 = vunpack.c.l.b16 %v6814
    %v8269 = vunpack.c.h.b16 %v6814
    %v8270 = vunpack.c.l.b16 %v6815
    %v8271 = vunpack.c.h.b16 %v6815
    %v8272 = vunpack.c.l.b16 %v6816
    %v8273 = vunpack.c.h.b16 %v6816
    %v8274 = vunpack.c.l.b16 %v6817
    %v8275 = vunpack.c.h.b16 %v6817
    %v8276 = vunpack.c.l.b16 %v6818
    %v8277 = vunpack.c.h.b16 %v6818
    %v8278 = vunpack.c.l.b16 %v6819
    %v8279 = vunpack.c.h.b16 %v6819
    %v8280 = vunpack.c.l.b16 %v6820
    %v8281 = vunpack.c.h.b16 %v6820
    %v8282 = vunpack.c.l.b16 %v6821
    %v8283 = vunpack.c.h.b16 %v6821
    %v8284 = vunpack.c.l.b16 %v6822
    %v8285 = vunpack.c.h.b16 %v6822
    %v8286 = vunpack.c.l.b16 %v6823
    %v8287 = vunpack.c.h.b16 %v6823
    %v8288 = vunpack.c.l.b16 %v6824
    %v8289 = vunpack.c.h.b16 %v6824
    %v8290 = vunpack.c.l.b16 %v6825
    %v8291 = vunpack.c.h.b16 %v6825
    %v8292 = vunpack.c.l.b16 %v6826
    %v8293 = vunpack.c.h.b16 %v6826
    %v8294 = vunpack.c.l.b16 %v6827
    %v8295 = vunpack.c.h.b16 %v6827
    %v8296 = vunpack.c.l.b16 %v6828
    %v8297 = vunpack.c.h.b16 %v6828
    %v8298 = vunpack.c.l.b16 %v6829
    %v8299 = vunpack.c.h.b16 %v6829
    %v8300 = vunpack.c.l.b16 %v6830
    %v8301 = vunpack.c.h.b16 %v6830
    %v8302 = vunpack.c.l.b16 %v6831
    %v8303 = vunpack.c.h.b16 %v6831
    %v8304 = vunpack.c.l.b16 %v6832
    %v8305 = vunpack.c.h.b16 %v6832
    %v8306 = vunpack.c.l.b16 %v6833
    %v8307 = vunpack.c.h.b16 %v6833
    %v8308 = vunpack.c.l.b16 %v6834
    %v8309 = vunpack.c.h.b16 %v6834
    %v8310 = vunpack.c.l.b16 %v6835
    %v8311 = vunpack.c.h.b16 %v6835
    %v8312 = vunpack.c.l.b16 %v6836
    %v8313 = vunpack.c.h.b16 %v6836
    %v8314 = vunpack.c.l.b16 %v6837
    %v8315 = vunpack.c.h.b16 %v6837
    %v8316 = vunpack.c.l.b16 %v6838
    %v8317 = vunpack.c.h.b16 %v6838
    %v8318 = vunpack.c.l.b16 %v6839
    %v8319 = vunpack.c.h.b16 %v6839
    %v8320 = vunpack.c.l.b16 %v6840
    %v8321 = vunpack.c.h.b16 %v6840
    %v8322 = vunpack.c.l.b16 %v6841
    %v8323 = vunpack.c.h.b16 %v6841
    %v8324 = vunpack.c.l.b16 %v6842
    %v8325 = vunpack.c.h.b16 %v6842
    %v8326 = vunpack.c.l.b16 %v6843
    %v8327 = vunpack.c.h.b16 %v6843
    %v8328 = vunpack.c.l.b16 %v6844
    %v8329 = vunpack.c.h.b16 %v6844
    %v8330 = vunpack.c.l.b16 %v6845
    %v8331 = vunpack.c.h.b16 %v6845
    %v8332 = vunpack.c.l.b16 %v6846
    %v8333 = vunpack.c.h.b16 %v6846
    %v8334 = vunpack.c.l.b16 %v6847
    %v8335 = vunpack.c.h.b16 %v6847
    %v8336 = vunpack.c.l.b16 %v6848
    %v8337 = vunpack.c.h.b16 %v6848
    %v8338 = vunpack.c.l.b16 %v6849
    %v8339 = vunpack.c.h.b16 %v6849
    %v8340 = vunpack.c.l.b16 %v6850
    %v8341 = vunpack.c.h.b16 %v6850
    %v8342 = vunpack.c.l.b16 %v6851
    %v8343 = vunpack.c.h.b16 %v6851
    %v8344 = vunpack.c.l.b16 %v6852
    %v8345 = vunpack.c.h.b16 %v6852
    %v8346 = vunpack.c.l.b16 %v6853
    %v8347 = vunpack.c.h.b16 %v6853
    %v8348 = vunpack.c.l.b16 %v6854
    %v8349 = vunpack.c.h.b16 %v6854
    %v8350 = vunpack.c.l.b16 %v6855
    %v8351 = vunpack.c.h.b16 %v6855
    %v8352 = vunpack.c.l.b16 %v6856
    %v8353 = vunpack.c.h.b16 %v6856
    %v8354 = vunpack.c.l.b16 %v6857
    %v8355 = vunpack.c.h.b16 %v6857
    %v8356 = vunpack.c.l.b16 %v6858
    %v8357 = vunpack.c.h.b16 %v6858
    %v8358 = vunpack.c.l.b16 %v6859
    %v8359 = vunpack.c.h.b16 %v6859
    %v8360 = vunpack.c.l.b16 %v6860
    %v8361 = vunpack.c.h.b16 %v6860
    %v8362 = vunpack.c.l.b16 %v6861
    %v8363 = vunpack.c.h.b16 %v6861
    %v8364 = vunpack.c.l.b16 %v6862
    %v8365 = vunpack.c.h.b16 %v6862
    %v8366 = vunpack.c.l.b16 %v6863
    %v8367 = vunpack.c.h.b16 %v6863
    %v8368 = vunpack.c.l.b16 %v6864
    %v8369 = vunpack.c.h.b16 %v6864
    %v8370 = vunpack.c.l.b16 %v6865
    %v8371 = vunpack.c.h.b16 %v6865
    %v8372 = vunpack.c.l.b16 %v6866
    %v8373 = vunpack.c.h.b16 %v6866
    %v8374 = vunpack.c.l.b16 %v6867
    %v8375 = vunpack.c.h.b16 %v6867
    %v8376 = vunpack.c.l.b16 %v6868
    %v8377 = vunpack.c.h.b16 %v6868
    %v8378 = vunpack.c.l.b16 %v6869
    %v8379 = vunpack.c.h.b16 %v6869
    %v8380 = vunpack.c.l.b16 %v6870
    %v8381 = vunpack.c.h.b16 %v6870
    %v8382 = vunpack.c.l.b16 %v6871
    %v8383 = vunpack.c.h.b16 %v6871
    %v8384 = vunpack.c.l.b16 %v6872
    %v8385 = vunpack.c.h.b16 %v6872
    %v8386 = vunpack.c.l.b16 %v6873
    %v8387 = vunpack.c.h.b16 %v6873
    %v8388 = vunpack.c.l.b16 %v6874
    %v8389 = vunpack.c.h.b16 %v6874
    %v8390 = vunpack.c.l.b16 %v6875
    %v8391 = vunpack.c.h.b16 %v6875
    %v8392 = vunpack.c.l.b16 %v6876
    %v8393 = vunpack.c.h.b16 %v6876
    %v8394 = vunpack.c.l.b16 %v6877
    %v8395 = vunpack.c.h.b16 %v6877
    %v8396 = vpack.c.b16 %v8016, %v8012
    %v8397 = vpack.c.b16 %v8017, %v8013
    %v8398 = vpack.c.b16 %v8018, %v8014
    %v8399 = vpack.c.b16 %v8019, %v8015
    %v8400 = vpack.c.b16 %v8024, %v8020
    %v8401 = vpack.c.b16 %v8025, %v8021
    %v8402 = vpack.c.b16 %v8026, %v8022
    %v8403 = vpack.c.b16 %v8027, %v8023
    %v8404 = vpack.c.b16 %v8032, %v8028
    %v8405 = vpack.c.b16 %v8033, %v8029
    %v8406 = vpack.c.b16 %v8034, %v8030
    %v8407 = vpack.c.b16 %v8035, %v8031
    %v8408 = vpack.c.b16 %v8040, %v8036
    %v8409 = vpack.c.b16 %v8041, %v8037
    %v8410 = vpack.c.b16 %v8042, %v8038
    %v8411 = vpack.c.b16 %v8043, %v8039
    %v8412 = vpack.c.b16 %v8048, %v8044
    %v8413 = vpack.c.b16 %v8049, %v8045
    %v8414 = vpack.c.b16 %v8050, %v8046
    %v8415 = vpack.c.b16 %v8051, %v8047
    %v8416 = vpack.c.b16 %v8056, %v8052
    %v8417 = vpack.c.b16 %v8057, %v8053
    %v8418 = vpack.c.b16 %v8058, %v8054
    %v8419 = vpack.c.b16 %v8059, %v8055
    %v8420 = vpack.c.b16 %v8064, %v8060
    %v8421 = vpack.c.b16 %v8065, %v8061
    %v8422 = vpack.c.b16 %v8066, %v8062
    %v8423 = vpack.c.b16 %v8067, %v8063
    %v8424 = vpack.c.b16 %v8072, %v8068
    %v8425 = vpack.c.b16 %v8073, %v8069
    %v8426 = vpack.c.b16 %v8074, %v8070
    %v8427 = vpack.c.b16 %v8075, %v8071
    %v8428 = vpack.c.b16 %v8080, %v8076
    %v8429 = vpack.c.b16 %v8081, %v8077
    %v8430 = vpack.c.b16 %v8082, %v8078
    %v8431 = vpack.c.b16 %v8083, %v8079
    %v8432 = vpack.c.b16 %v8088, %v8084
    %v8433 = vpack.c.b16 %v8089, %v8085
    %v8434 = vpack.c.b16 %v8090, %v8086
    %v8435 = vpack.c.b16 %v8091, %v8087
    %v8436 = vpack.c.b16 %v8096, %v8092
    %v8437 = vpack.c.b16 %v8097, %v8093
    %v8438 = vpack.c.b16 %v8098, %v8094
    %v8439 = vpack.c.b16 %v8099, %v8095
    %v8440 = vpack.c.b16 %v8104, %v8100
    %v8441 = vpack.c.b16 %v8105, %v8101
    %v8442 = vpack.c.b16 %v8106, %v8102
    %v8443 = vpack.c.b16 %v8107, %v8103
    %v8444 = vpack.c.b16 %v8112, %v8108
    %v8445 = vpack.c.b16 %v8113, %v8109
    %v8446 = vpack.c.b16 %v8114, %v8110
    %v8447 = vpack.c.b16 %v8115, %v8111
    %v8448 = vpack.c.b16 %v8120, %v8116
    %v8449 = vpack.c.b16 %v8121, %v8117
    %v8450 = vpack.c.b16 %v8122, %v8118
    %v8451 = vpack.c.b16 %v8123, %v8119
    %v8452 = vpack.c.b16 %v8128, %v8124
    %v8453 = vpack.c.b16 %v8129, %v8125
    %v8454 = vpack.c.b16 %v8130, %v8126
    %v8455 = vpack.c.b16 %v8131, %v8127
    %v8456 = vpack.c.b16 %v8136, %v8132
    %v8457 = vpack.c.b16 %v8137, %v8133
    %v8458 = vpack.c.b16 %v8138, %v8134
    %v8459 = vpack.c.b16 %v8139, %v8135
    %v8460 = vpack.c.b16 %v8144, %v8140
    %v8461 = vpack.c.b16 %v8145, %v8141
    %v8462 = vpack.c.b16 %v8146, %v8142
    %v8463 = vpack.c.b16 %v8147, %v8143
    %v8464 = vpack.c.b16 %v8152, %v8148
    %v8465 = vpack.c.b16 %v8153, %v8149
    %v8466 = vpack.c.b16 %v8154, %v8150
    %v8467 = vpack.c.b16 %v8155, %v8151
    %v8468 = vpack.c.b16 %v8160, %v8156
    %v8469 = vpack.c.b16 %v8161, %v8157
    %v8470 = vpack.c.b16 %v8162, %v8158
    %v8471 = vpack.c.b16 %v8163, %v8159
    %v8472 = vpack.c.b16 %v8168, %v8164
    %v8473 = vpack.c.b16 %v8169, %v8165
    %v8474 = vpack.c.b16 %v8170, %v8166
    %v8475 = vpack.c.b16 %v8171, %v8167
    %v8476 = vpack.c.b16 %v8176, %v8172
    %v8477 = vpack.c.b16 %v8177, %v8173
    %v8478 = vpack.c.b16 %v8178, %v8174
    %v8479 = vpack.c.b16 %v8179, %v8175
    %v8480 = vpack.c.b16 %v8184, %v8180
    %v8481 = vpack.c.b16 %v8185, %v8181
    %v8482 = vpack.c.b16 %v8186, %v8182
    %v8483 = vpack.c.b16 %v8187, %v8183
    %v8484 = vpack.c.b16 %v8192, %v8188
    %v8485 = vpack.c.b16 %v8193, %v8189
    %v8486 = vpack.c.b16 %v8194, %v8190
    %v8487 = vpack.c.b16 %v8195, %v8191
    %v8488 = vpack.c.b16 %v8200, %v8196
    %v8489 = vpack.c.b16 %v8201, %v8197
    %v8490 = vpack.c.b16 %v8202, %v8198
    %v8491 = vpack.c.b16 %v8203, %v8199
    %v8492 = vpack.c.b16 %v8208, %v8204
    %v8493 = vpack.c.b16 %v8209, %v8205
    %v8494 = vpack.c.b16 %v8210, %v8206
    %v8495 = vpack.c.b16 %v8211, %v8207
    %v8496 = vpack.c.b16 %v8216, %v8212
    %v8497 = vpack.c.b16 %v8217, %v8213
    %v8498 = vpack.c.b16 %v8218, %v8214
    %v8499 = vpack.c.b16 %v8219, %v8215
    %v8500 = vpack.c.b16 %v8224, %v8220
    %v8501 = vpack.c.b16 %v8225, %v8221
    %v8502 = vpack.c.b16 %v8226, %v8222
    %v8503 = vpack.c.b16 %v8227, %v8223
    %v8504 = vpack.c.b16 %v8232, %v8228
    %v8505 = vpack.c.b16 %v8233, %v8229
    %v8506 = vpack.c.b16 %v8234, %v8230
    %v8507 = vpack.c.b16 %v8235, %v8231
    %v8508 = vpack.c.b16 %v8240, %v8236
    %v8509 = vpack.c.b16 %v8241, %v8237
    %v8510 = vpack.c.b16 %v8242, %v8238
    %v8511 = vpack.c.b16 %v8243, %v8239
    %v8512 = vpack.c.b16 %v8248, %v8244
    %v8513 = vpack.c.b16 %v8249, %v8245
    %v8514 = vpack.c.b16 %v8250, %v8246
    %v8515 = vpack.c.b16 %v8251, %v8247
    %v8516 = vpack.c.b16 %v8256, %v8252
    %v8517 = vpack.c.b16 %v8257, %v8253
    %v8518 = vpack.c.b16 %v8258, %v8254
    %v8519 = vpack.c.b16 %v8259, %v8255
    %v8520 = vpack.c.b16 %v8264, %v8260
    %v8521 = vpack.c.b16 %v8265, %v8261
    %v8522 = vpack.c.b16 %v8266, %v8262
    %v8523 = vpack.c.b16 %v8267, %v8263
    %v8524 = vpack.c.b16 %v8272, %v8268
    %v8525 = vpack.c.b16 %v8273, %v8269
    %v8526 = vpack.c.b16 %v8274, %v8270
    %v8527 = vpack.c.b16 %v8275, %v8271
    %v8528 = vpack.c.b16 %v8280, %v8276
    %v8529 = vpack.c.b16 %v8281, %v8277
    %v8530 = vpack.c.b16 %v8282, %v8278
    %v8531 = vpack.c.b16 %v8283, %v8279
    %v8532 = vpack.c.b16 %v8288, %v8284
    %v8533 = vpack.c.b16 %v8289, %v8285
    %v8534 = vpack.c.b16 %v8290, %v8286
    %v8535 = vpack.c.b16 %v8291, %v8287
    %v8536 = vpack.c.b16 %v8296, %v8292
    %v8537 = vpack.c.b16 %v8297, %v8293
    %v8538 = vpack.c.b16 %v8298, %v8294
    %v8539 = vpack.c.b16 %v8299, %v8295
    %v8540 = vpack.c.b16 %v8304, %v8300
    %v8541 = vpack.c.b16 %v8305, %v8301
    %v8542 = vpack.c.b16 %v8306, %v8302
    %v8543 = vpack.c.b16 %v8307, %v8303
    %v8544 = vpack.c.b16 %v8312, %v8308
    %v8545 = vpack.c.b16 %v8313, %v8309
    %v8546 = vpack.c.b16 %v8314, %v8310
    %v8547 = vpack.c.b16 %v8315, %v8311
    %v8548 = vpack.c.b16 %v8320, %v8316
    %v8549 = vpack.c.b16 %v8321, %v8317
    %v8550 = vpack.c.b16 %v8322, %v8318
    %v8551 = vpack.c.b16 %v8323, %v8319
    %v8552 = vpack.c.b16 %v8328, %v8324
    %v8553 = vpack.c.b16 %v8329, %v8325
    %v8554 = vpack.c.b16 %v8330, %v8326
    %v8555 = vpack.c.b16 %v8331, %v8327
    %v8556 = vpack.c.b16 %v8336, %v8332
    %v8557 = vpack.c.b16 %v8337, %v8333
    %v8558 = vpack.c.b16 %v8338, %v8334
    %v8559 = vpack.c.b16 %v8339, %v8335
    %v8560 = vpack.c.b16 %v8344, %v8340
    %v8561 = vpack.c.b16 %v8345, %v8341
    %v8562 = vpack.c.b16 %v8346, %v8342
    %v8563 = vpack.c.b16 %v8347, %v8343
    %v8564 = vpack.c.b16 %v8352, %v8348
    %v8565 = vpack.c.b16 %v8353, %v8349
    %v8566 = vpack.c.b16 %v8354, %v8350
    %v8567 = vpack.c.b16 %v8355, %v8351
    %v8568 = vpack.c.b16 %v8360, %v8356
    %v8569 = vpack.c.b16 %v8361, %v8357
    %v8570 = vpack.c.b16 %v8362, %v8358
    %v8571 = vpack.c.b16 %v8363, %v8359
    %v8572 = vpack.c.b16 %v8368, %v8364
    %v8573 = vpack.c.b16 %v8369, %v8365
    %v8574 = vpack.c.b16 %v8370, %v8366
    %v8575 = vpack.c.b16 %v8371, %v8367
    %v8576 = vpack.c.b16 %v8376, %v8372
    %v8577 = vpack.c.b16 %v8377, %v8373
    %v8578 = vpack.c.b16 %v8378, %v8374
    %v8579 = vpack.c.b16 %v8379, %v8375
    %v8580 = vpack.c.b16 %v8384, %v8380
    %v8581 = vpack.c.b16 %v8385, %v8381
    %v8582 = vpack.c.b16 %v8386, %v8382
    %v8583 = vpack.c.b16 %v8387, %v8383
    %v8584 = vpack.c.b16 %v8392, %v8388
    %v8585 = vpack.c.b16 %v8393, %v8389
    %v8586 = vpack.c.b16 %v8394, %v8390
    %v8587 = vpack.c.b16 %v8395, %v8391
    %8780 = vmatprep.subr.bf16.mxu0 %v8425
    %8781 = vmatpush1.bf16.msra.mxu0 %v8424
    %8782 = vmatprep.subr.bf16.mxu0 %v8421
    %8783 = vmatpush1.bf16.msra.mxu0 %v8420
    %8784 = vmatprep.subr.bf16.mxu0 %v8417
    %8785 = vmatpush1.bf16.msra.mxu0 %v8416
    %8786 = vmatprep.subr.bf16.mxu0 %v8413
    %8787 = vmatpush1.bf16.msra.mxu0 %v8412
    %8788 = vmatprep.subr.bf16.mxu0 %v8409
    %8789 = vmatpush1.bf16.msra.mxu0 %v8408
    %8790 = vmatprep.subr.bf16.mxu0 %v8405
    %8791 = vmatpush1.bf16.msra.mxu0 %v8404
    %8792 = vmatprep.subr.bf16.mxu0 %v8401
    %8793 = vmatpush1.bf16.msra.mxu0 %v8400
    %8794 = vmatprep.subr.bf16.mxu0 %v8397
    %8795 = vmatpush1.bf16.msra.mxu0 %v8396
    %8796 = vmatprep.subr.bf16.mxu0 %v8457
    %8797 = vmatpush2.bf16.msra.mxu0 %v8456
    %8798 = vmatprep.subr.bf16.mxu0 %v8453
    %8799 = vmatpush2.bf16.msra.mxu0 %v8452
    %8800 = vmatprep.subr.bf16.mxu0 %v8449
    %8801 = vmatpush2.bf16.msra.mxu0 %v8448
    %8802 = vmatprep.subr.bf16.mxu0 %v8445
    %8803 = vmatpush2.bf16.msra.mxu0 %v8444
    %8804 = vmatprep.subr.bf16.mxu0 %v8441
    %8805 = vmatpush2.bf16.msra.mxu0 %v8440
    %8806 = vmatprep.subr.bf16.mxu0 %v8437
    %8807 = vmatpush2.bf16.msra.mxu0 %v8436
    %8808 = vmatprep.subr.bf16.mxu0 %v8433
    %8809 = vmatpush2.bf16.msra.mxu0 %v8432
    %8810 = vmatprep.subr.bf16.mxu0 %v8429
    %8811 = vmatpush2.bf16.msra.mxu0 %v8428
    %8812 = vmatprep.mubr.bf16.mxu0 %v6879
    %8813 = vmatmul.mubr.bf16.gmra.mxu0 %v6878
    %v8814 = vpop.f32.mrf.mxu0
    %v8815 = vadd.f32 %v7732, %v8814
    %v8816 = vpop.f32.mrf.mxu0
    %v8817 = vadd.f32 %v7734, %v8816
    %v8818 = vpop.f32.mrf.mxu0
    %v8819 = vpop.f32.mrf.mxu0
    %8820 = vdwg.mxu0
    %8821 = vmatprep.subr.bf16.mxu0 %v8489
    %8822 = vmatpush1.bf16.msra.mxu0 %v8488
    %8823 = vmatprep.subr.bf16.mxu0 %v8485
    %8824 = vmatpush1.bf16.msra.mxu0 %v8484
    %8825 = vmatprep.subr.bf16.mxu0 %v8481
    %8826 = vmatpush1.bf16.msra.mxu0 %v8480
    %8827 = vmatprep.subr.bf16.mxu0 %v8477
    %8828 = vmatpush1.bf16.msra.mxu0 %v8476
    %8829 = vmatprep.subr.bf16.mxu0 %v8473
    %8830 = vmatpush1.bf16.msra.mxu0 %v8472
    %8831 = vmatprep.subr.bf16.mxu0 %v8469
    %8832 = vmatpush1.bf16.msra.mxu0 %v8468
    %8833 = vmatprep.subr.bf16.mxu0 %v8465
    %8834 = vmatpush1.bf16.msra.mxu0 %v8464
    %8835 = vmatprep.subr.bf16.mxu0 %v8461
    %8836 = vmatpush1.bf16.msra.mxu0 %v8460
    %8837 = vmatprep.subr.bf16.mxu0 %v8521
    %8838 = vmatpush2.bf16.msra.mxu0 %v8520
    %8839 = vmatprep.subr.bf16.mxu0 %v8517
    %8840 = vmatpush2.bf16.msra.mxu0 %v8516
    %8841 = vmatprep.subr.bf16.mxu0 %v8513
    %8842 = vmatpush2.bf16.msra.mxu0 %v8512
    %8843 = vmatprep.subr.bf16.mxu0 %v8509
    %8844 = vmatpush2.bf16.msra.mxu0 %v8508
    %8845 = vmatprep.subr.bf16.mxu0 %v8505
    %8846 = vmatpush2.bf16.msra.mxu0 %v8504
    %8847 = vmatprep.subr.bf16.mxu0 %v8501
    %8848 = vmatpush2.bf16.msra.mxu0 %v8500
    %8849 = vmatprep.subr.bf16.mxu0 %v8497
    %8850 = vmatpush2.bf16.msra.mxu0 %v8496
    %8851 = vmatprep.subr.bf16.mxu0 %v8493
    %8852 = vmatpush2.bf16.msra.mxu0 %v8492
    %8853 = vmatprep.mubr.bf16.mxu0 %v6881
    %8854 = vmatmul.mubr.bf16.gmra.mxu0 %v6880
    %v8855 = vpop.f32.mrf.mxu0
    %v8856 = vadd.f32 %v8815, %v8855
    %v8857 = vpop.f32.mrf.mxu0
    %v8858 = vadd.f32 %v8817, %v8857
    %v8859 = vpop.f32.mrf.mxu0
    %v8860 = vpop.f32.mrf.mxu0
    %8861 = vdwg.mxu0
    %8862 = vmatprep.subr.bf16.mxu0 %v8553
    %8863 = vmatpush1.bf16.msra.mxu0 %v8552
    %8864 = vmatprep.subr.bf16.mxu0 %v8549
    %8865 = vmatpush1.bf16.msra.mxu0 %v8548
    %8866 = vmatprep.subr.bf16.mxu0 %v8545
    %8867 = vmatpush1.bf16.msra.mxu0 %v8544
    %8868 = vmatprep.subr.bf16.mxu0 %v8541
    %8869 = vmatpush1.bf16.msra.mxu0 %v8540
    %8870 = vmatprep.subr.bf16.mxu0 %v8537
    %8871 = vmatpush1.bf16.msra.mxu0 %v8536
    %8872 = vmatprep.subr.bf16.mxu0 %v8533
    %8873 = vmatpush1.bf16.msra.mxu0 %v8532
    %8874 = vmatprep.subr.bf16.mxu0 %v8529
    %8875 = vmatpush1.bf16.msra.mxu0 %v8528
    %8876 = vmatprep.subr.bf16.mxu0 %v8525
    %8877 = vmatpush1.bf16.msra.mxu0 %v8524
    %8878 = vmatprep.subr.bf16.mxu0 %v8585
    %8879 = vmatpush2.bf16.msra.mxu0 %v8584
    %8880 = vmatprep.subr.bf16.mxu0 %v8581
    %8881 = vmatpush2.bf16.msra.mxu0 %v8580
    %8882 = vmatprep.subr.bf16.mxu0 %v8577
    %8883 = vmatpush2.bf16.msra.mxu0 %v8576
    %8884 = vmatprep.subr.bf16.mxu0 %v8573
    %8885 = vmatpush2.bf16.msra.mxu0 %v8572
    %8886 = vmatprep.subr.bf16.mxu0 %v8569
    %8887 = vmatpush2.bf16.msra.mxu0 %v8568
    %8888 = vmatprep.subr.bf16.mxu0 %v8565
    %8889 = vmatpush2.bf16.msra.mxu0 %v8564
    %8890 = vmatprep.subr.bf16.mxu0 %v8561
    %8891 = vmatpush2.bf16.msra.mxu0 %v8560
    %8892 = vmatprep.subr.bf16.mxu0 %v8557
    %8893 = vmatpush2.bf16.msra.mxu0 %v8556
    %8894 = vmatprep.mubr.bf16.mxu0 %v6883
    %8895 = vmatmul.mubr.bf16.gmra.mxu0 %v6882
    %v8896 = vpop.f32.mrf.mxu0
    %v8897 = vadd.f32 %v8856, %v8896
    %v8898 = vpop.f32.mrf.mxu0
    %v8899 = vadd.f32 %v8858, %v8898
    %v8900 = vpop.f32.mrf.mxu0
    %v8901 = vpop.f32.mrf.mxu0
    %8902 = vdwg.mxu0
    %8903 = vmatprep.subr.bf16.mxu0 %v8427
    %8904 = vmatpush1.bf16.msra.mxu0 %v8426
    %8905 = vmatprep.subr.bf16.mxu0 %v8423
    %8906 = vmatpush1.bf16.msra.mxu0 %v8422
    %8907 = vmatprep.subr.bf16.mxu0 %v8419
    %8908 = vmatpush1.bf16.msra.mxu0 %v8418
    %8909 = vmatprep.subr.bf16.mxu0 %v8415
    %8910 = vmatpush1.bf16.msra.mxu0 %v8414
    %8911 = vmatprep.subr.bf16.mxu0 %v8411
    %8912 = vmatpush1.bf16.msra.mxu0 %v8410
    %8913 = vmatprep.subr.bf16.mxu0 %v8407
    %8914 = vmatpush1.bf16.msra.mxu0 %v8406
    %8915 = vmatprep.subr.bf16.mxu0 %v8403
    %8916 = vmatpush1.bf16.msra.mxu0 %v8402
    %8917 = vmatprep.subr.bf16.mxu0 %v8399
    %8918 = vmatpush1.bf16.msra.mxu0 %v8398
    %8919 = vmatprep.subr.bf16.mxu0 %v8459
    %8920 = vmatpush2.bf16.msra.mxu0 %v8458
    %8921 = vmatprep.subr.bf16.mxu0 %v8455
    %8922 = vmatpush2.bf16.msra.mxu0 %v8454
    %8923 = vmatprep.subr.bf16.mxu0 %v8451
    %8924 = vmatpush2.bf16.msra.mxu0 %v8450
    %8925 = vmatprep.subr.bf16.mxu0 %v8447
    %8926 = vmatpush2.bf16.msra.mxu0 %v8446
    %8927 = vmatprep.subr.bf16.mxu0 %v8443
    %8928 = vmatpush2.bf16.msra.mxu0 %v8442
    %8929 = vmatprep.subr.bf16.mxu0 %v8439
    %8930 = vmatpush2.bf16.msra.mxu0 %v8438
    %8931 = vmatprep.subr.bf16.mxu0 %v8435
    %8932 = vmatpush2.bf16.msra.mxu0 %v8434
    %8933 = vmatprep.subr.bf16.mxu0 %v8431
    %8934 = vmatpush2.bf16.msra.mxu0 %v8430
    %8935 = vmatprep.mubr.bf16.mxu0 %v6879
    %8936 = vmatmul.mubr.bf16.gmra.mxu0 %v6878
    %v8937 = vpop.f32.mrf.mxu0
    %v8938 = vadd.f32 %v7814, %v8937
    %v8939 = vpop.f32.mrf.mxu0
    %v8940 = vadd.f32 %v7816, %v8939
    %v8941 = vpop.f32.mrf.mxu0
    %v8942 = vpop.f32.mrf.mxu0
    %8943 = vdwg.mxu0
    %8944 = vmatprep.subr.bf16.mxu0 %v8491
    %8945 = vmatpush1.bf16.msra.mxu0 %v8490
    %8946 = vmatprep.subr.bf16.mxu0 %v8487
    %8947 = vmatpush1.bf16.msra.mxu0 %v8486
    %8948 = vmatprep.subr.bf16.mxu0 %v8483
    %8949 = vmatpush1.bf16.msra.mxu0 %v8482
    %8950 = vmatprep.subr.bf16.mxu0 %v8479
    %8951 = vmatpush1.bf16.msra.mxu0 %v8478
    %8952 = vmatprep.subr.bf16.mxu0 %v8475
    %8953 = vmatpush1.bf16.msra.mxu0 %v8474
    %8954 = vmatprep.subr.bf16.mxu0 %v8471
    %8955 = vmatpush1.bf16.msra.mxu0 %v8470
    %8956 = vmatprep.subr.bf16.mxu0 %v8467
    %8957 = vmatpush1.bf16.msra.mxu0 %v8466
    %8958 = vmatprep.subr.bf16.mxu0 %v8463
    %8959 = vmatpush1.bf16.msra.mxu0 %v8462
    %8960 = vmatprep.subr.bf16.mxu0 %v8523
    %8961 = vmatpush2.bf16.msra.mxu0 %v8522
    %8962 = vmatprep.subr.bf16.mxu0 %v8519
    %8963 = vmatpush2.bf16.msra.mxu0 %v8518
    %8964 = vmatprep.subr.bf16.mxu0 %v8515
    %8965 = vmatpush2.bf16.msra.mxu0 %v8514
    %8966 = vmatprep.subr.bf16.mxu0 %v8511
    %8967 = vmatpush2.bf16.msra.mxu0 %v8510
    %8968 = vmatprep.subr.bf16.mxu0 %v8507
    %8969 = vmatpush2.bf16.msra.mxu0 %v8506
    %8970 = vmatprep.subr.bf16.mxu0 %v8503
    %8971 = vmatpush2.bf16.msra.mxu0 %v8502
    %8972 = vmatprep.subr.bf16.mxu0 %v8499
    %8973 = vmatpush2.bf16.msra.mxu0 %v8498
    %8974 = vmatprep.subr.bf16.mxu0 %v8495
    %8975 = vmatpush2.bf16.msra.mxu0 %v8494
    %8976 = vmatprep.mubr.bf16.mxu0 %v6881
    %8977 = vmatmul.mubr.bf16.gmra.mxu0 %v6880
    %v8978 = vpop.f32.mrf.mxu0
    %v8979 = vadd.f32 %v8938, %v8978
    %v8980 = vpop.f32.mrf.mxu0
    %v8981 = vadd.f32 %v8940, %v8980
    %v8982 = vpop.f32.mrf.mxu0
    %v8983 = vpop.f32.mrf.mxu0
    %8984 = vdwg.mxu0
    %8985 = vmatprep.subr.bf16.mxu0 %v8555
    %8986 = vmatpush1.bf16.msra.mxu0 %v8554
    %8987 = vmatprep.subr.bf16.mxu0 %v8551
    %8988 = vmatpush1.bf16.msra.mxu0 %v8550
    %8989 = vmatprep.subr.bf16.mxu0 %v8547
    %8990 = vmatpush1.bf16.msra.mxu0 %v8546
    %8991 = vmatprep.subr.bf16.mxu0 %v8543
    %8992 = vmatpush1.bf16.msra.mxu0 %v8542
    %8993 = vmatprep.subr.bf16.mxu0 %v8539
    %8994 = vmatpush1.bf16.msra.mxu0 %v8538
    %8995 = vmatprep.subr.bf16.mxu0 %v8535
    %8996 = vmatpush1.bf16.msra.mxu0 %v8534
    %8997 = vmatprep.subr.bf16.mxu0 %v8531
    %8998 = vmatpush1.bf16.msra.mxu0 %v8530
    %8999 = vmatprep.subr.bf16.mxu0 %v8527
    %9000 = vmatpush1.bf16.msra.mxu0 %v8526
    %9001 = vmatprep.subr.bf16.mxu0 %v8587
    %9002 = vmatpush2.bf16.msra.mxu0 %v8586
    %9003 = vmatprep.subr.bf16.mxu0 %v8583
    %9004 = vmatpush2.bf16.msra.mxu0 %v8582
    %9005 = vmatprep.subr.bf16.mxu0 %v8579
    %9006 = vmatpush2.bf16.msra.mxu0 %v8578
    %9007 = vmatprep.subr.bf16.mxu0 %v8575
    %9008 = vmatpush2.bf16.msra.mxu0 %v8574
    %9009 = vmatprep.subr.bf16.mxu0 %v8571
    %9010 = vmatpush2.bf16.msra.mxu0 %v8570
    %9011 = vmatprep.subr.bf16.mxu0 %v8567
    %9012 = vmatpush2.bf16.msra.mxu0 %v8566
    %9013 = vmatprep.subr.bf16.mxu0 %v8563
    %9014 = vmatpush2.bf16.msra.mxu0 %v8562
    %9015 = vmatprep.subr.bf16.mxu0 %v8559
    %9016 = vmatpush2.bf16.msra.mxu0 %v8558
    %9017 = vmatprep.mubr.bf16.mxu0 %v6883
    %9018 = vmatmul.mubr.bf16.gmra.mxu0 %v6882
    %v9019 = vpop.f32.mrf.mxu0
    %v9020 = vadd.f32 %v8979, %v9019
    %v9021 = vpop.f32.mrf.mxu0
    %v9022 = vadd.f32 %v8981, %v9021
    %v9023 = vpop.f32.mrf.mxu0
    %v9024 = vpop.f32.mrf.mxu0
    %9025 = vdwg.mxu0
    %v9026 = vld [vmem:[#allocation34] sm:$0xf]
    %v9028 = vlaneseq
    %v9029 = vshrl.u32 %v9028, 7
    %v9030 = vsub.s32 0, %v9029
    %v9031 = vrot.slane %v9026, %v9030
    %v9032 = vlaneseq
    %v9033 = vshrl.u32 %v9032, 7
    %v9034 = vsub.s32 1, %v9033
    %v9035 = vrot.slane %v9026, %v9034
    %v9036 = vlaneseq
    %v9037 = vshrl.u32 %v9036, 7
    %v9038 = vsub.s32 2, %v9037
    %v9039 = vrot.slane %v9026, %v9038
    %v9040 = vlaneseq
    %v9041 = vshrl.u32 %v9040, 7
    %v9042 = vsub.s32 3, %v9041
    %v9043 = vrot.slane %v9026, %v9042
    %v9048 = vadd.f32 %v8897, %v9031
    %v9049 = vadd.f32 %v8899, %v9035
    %v9050 = vadd.f32 %v9020, %v9039
    %v9051 = vadd.f32 %v9022, %v9043
    %v9052 = vmax.f32 %v9048, 0.0
    %v9053 = vmax.f32 %v9049, 0.0
    %v9054 = vmax.f32 %v9050, 0.0
    %v9055 = vmax.f32 %v9051, 0.0
    %v9056 = vld [vmem:[#allocation7] sm:$0xff]
    %v9057 = vld [vmem:[#allocation7 + $0x8] sm:$0xff]
    %v9058 = vld [vmem:[#allocation7 + $0x10] sm:$0xff]
    %v9059 = vld [vmem:[#allocation7 + $0x18] sm:$0xff]
    %v9060 = vld [vmem:[#allocation35] sm:$0xff]
    %v9061 = vld [vmem:[#allocation35 + $0x8] sm:$0xff]
    %v9062 = vld [vmem:[#allocation35 + $0x10] sm:$0xff]
    %v9063 = vld [vmem:[#allocation35 + $0x18] sm:$0xff]
    %v9064 = vld [vmem:[#allocation35 + $0x20] sm:$0xff]
    %v9065 = vld [vmem:[#allocation35 + $0x28] sm:$0xff]
    %v9066 = vld [vmem:[#allocation35 + $0x30] sm:$0xff]
    %v9067 = vld [vmem:[#allocation35 + $0x38] sm:$0xff]
    %v9068 = vld [vmem:[#allocation35 + $0x40] sm:$0xff]
    %v9069 = vld [vmem:[#allocation35 + $0x48] sm:$0xff]
    %v9070 = vld [vmem:[#allocation35 + $0x50] sm:$0xff]
    %v9071 = vld [vmem:[#allocation35 + $0x58] sm:$0xff]
    %v9072 = vld [vmem:[#allocation35 + $0x60] sm:$0xff]
    %v9073 = vld [vmem:[#allocation35 + $0x68] sm:$0xff]
    %v9074 = vld [vmem:[#allocation35 + $0x70] sm:$0xff]
    %v9075 = vld [vmem:[#allocation35 + $0x78] sm:$0xff]
    %v9076 = vld [vmem:[#allocation35 + $0x80] sm:$0xff]
    %v9077 = vld [vmem:[#allocation35 + $0x88] sm:$0xff]
    %v9078 = vld [vmem:[#allocation35 + $0x90] sm:$0xff]
    %v9079 = vld [vmem:[#allocation35 + $0x98] sm:$0xff]
    %v9080 = vld [vmem:[#allocation35 + $0xa0] sm:$0xff]
    %v9081 = vld [vmem:[#allocation35 + $0xa8] sm:$0xff]
    %v9082 = vld [vmem:[#allocation35 + $0xb0] sm:$0xff]
    %v9083 = vld [vmem:[#allocation35 + $0xb8] sm:$0xff]
    %v9084 = vld [vmem:[#allocation35 + $0xc0] sm:$0xff]
    %v9085 = vld [vmem:[#allocation35 + $0xc8] sm:$0xff]
    %v9086 = vld [vmem:[#allocation35 + $0xd0] sm:$0xff]
    %v9087 = vld [vmem:[#allocation35 + $0xd8] sm:$0xff]
    %v9088 = vld [vmem:[#allocation35 + $0xe0] sm:$0xff]
    %v9089 = vld [vmem:[#allocation35 + $0xe8] sm:$0xff]
    %v9090 = vld [vmem:[#allocation35 + $0xf0] sm:$0xff]
    %v9091 = vld [vmem:[#allocation35 + $0xf8] sm:$0xff]
    %v9092 = vld [vmem:[#allocation35 + $0x100] sm:$0xff]
    %v9093 = vld [vmem:[#allocation35 + $0x108] sm:$0xff]
    %v9094 = vld [vmem:[#allocation35 + $0x110] sm:$0xff]
    %v9095 = vld [vmem:[#allocation35 + $0x118] sm:$0xff]
    %v9096 = vld [vmem:[#allocation35 + $0x120] sm:$0xff]
    %v9097 = vld [vmem:[#allocation35 + $0x128] sm:$0xff]
    %v9098 = vld [vmem:[#allocation35 + $0x130] sm:$0xff]
    %v9099 = vld [vmem:[#allocation35 + $0x138] sm:$0xff]
    %v9100 = vld [vmem:[#allocation35 + $0x140] sm:$0xff]
    %v9101 = vld [vmem:[#allocation35 + $0x148] sm:$0xff]
    %v9102 = vld [vmem:[#allocation35 + $0x150] sm:$0xff]
    %v9103 = vld [vmem:[#allocation35 + $0x158] sm:$0xff]
    %v9104 = vld [vmem:[#allocation35 + $0x160] sm:$0xff]
    %v9105 = vld [vmem:[#allocation35 + $0x168] sm:$0xff]
    %v9106 = vld [vmem:[#allocation35 + $0x170] sm:$0xff]
    %v9107 = vld [vmem:[#allocation35 + $0x178] sm:$0xff]
    %v9108 = vld [vmem:[#allocation35 + $0x180] sm:$0xff]
    %v9109 = vld [vmem:[#allocation35 + $0x188] sm:$0xff]
    %v9110 = vld [vmem:[#allocation35 + $0x190] sm:$0xff]
    %v9111 = vld [vmem:[#allocation35 + $0x198] sm:$0xff]
    %v9112 = vld [vmem:[#allocation35 + $0x1a0] sm:$0xff]
    %v9113 = vld [vmem:[#allocation35 + $0x1a8] sm:$0xff]
    %v9114 = vld [vmem:[#allocation35 + $0x1b0] sm:$0xff]
    %v9115 = vld [vmem:[#allocation35 + $0x1b8] sm:$0xff]
    %v9116 = vld [vmem:[#allocation35 + $0x1c0] sm:$0xff]
    %v9117 = vld [vmem:[#allocation35 + $0x1c8] sm:$0xff]
    %v9118 = vld [vmem:[#allocation35 + $0x1d0] sm:$0xff]
    %v9119 = vld [vmem:[#allocation35 + $0x1d8] sm:$0xff]
    %v9120 = vld [vmem:[#allocation35 + $0x1e0] sm:$0xff]
    %v9121 = vld [vmem:[#allocation35 + $0x1e8] sm:$0xff]
    %v9122 = vld [vmem:[#allocation35 + $0x1f0] sm:$0xff]
    %v9123 = vld [vmem:[#allocation35 + $0x1f8] sm:$0xff]
    %v9124 = vld [vmem:[#allocation37] sm:$0x3]
    %v9125 = vld [vmem:[#allocation38] sm:$0xff]
    %v9126 = vld [vmem:[#allocation38 + $0x8] sm:$0xff]
    %v9127 = vld [vmem:[#allocation38 + $0x10] sm:$0xff]
    %v9128 = vld [vmem:[#allocation38 + $0x18] sm:$0xff]
    %v9129 = vld [vmem:[#allocation38 + $0x20] sm:$0xff]
    %v9130 = vld [vmem:[#allocation38 + $0x28] sm:$0xff]
    %v9131 = vld [vmem:[#allocation38 + $0x30] sm:$0xff]
    %v9132 = vld [vmem:[#allocation38 + $0x38] sm:$0xff]
    %v9133 = vld [vmem:[#allocation38 + $0x40] sm:$0xff]
    %v9134 = vld [vmem:[#allocation38 + $0x48] sm:$0xff]
    %v9135 = vld [vmem:[#allocation38 + $0x50] sm:$0xff]
    %v9136 = vld [vmem:[#allocation38 + $0x58] sm:$0xff]
    %v9137 = vld [vmem:[#allocation38 + $0x60] sm:$0xff]
    %v9138 = vld [vmem:[#allocation38 + $0x68] sm:$0xff]
    %v9139 = vld [vmem:[#allocation38 + $0x70] sm:$0xff]
    %v9140 = vld [vmem:[#allocation38 + $0x78] sm:$0xff]
    %v9141 = vld [vmem:[#allocation38 + $0x80] sm:$0xff]
    %v9142 = vld [vmem:[#allocation38 + $0x88] sm:$0xff]
    %v9143 = vld [vmem:[#allocation38 + $0x90] sm:$0xff]
    %v9144 = vld [vmem:[#allocation38 + $0x98] sm:$0xff]
    %v9145 = vld [vmem:[#allocation38 + $0xa0] sm:$0xff]
    %v9146 = vld [vmem:[#allocation38 + $0xa8] sm:$0xff]
    %v9147 = vld [vmem:[#allocation38 + $0xb0] sm:$0xff]
    %v9148 = vld [vmem:[#allocation38 + $0xb8] sm:$0xff]
    %v9149 = vld [vmem:[#allocation38 + $0xc0] sm:$0xff]
    %v9150 = vld [vmem:[#allocation38 + $0xc8] sm:$0xff]
    %v9151 = vld [vmem:[#allocation38 + $0xd0] sm:$0xff]
    %v9152 = vld [vmem:[#allocation38 + $0xd8] sm:$0xff]
    %v9153 = vld [vmem:[#allocation38 + $0xe0] sm:$0xff]
    %v9154 = vld [vmem:[#allocation38 + $0xe8] sm:$0xff]
    %v9155 = vld [vmem:[#allocation38 + $0xf0] sm:$0xff]
    %v9156 = vld [vmem:[#allocation38 + $0xf8] sm:$0xff]
    %v9157 = vld [vmem:[#allocation38 + $0x100] sm:$0xff]
    %v9158 = vld [vmem:[#allocation38 + $0x108] sm:$0xff]
    %v9159 = vld [vmem:[#allocation38 + $0x110] sm:$0xff]
    %v9160 = vld [vmem:[#allocation38 + $0x118] sm:$0xff]
    %v9161 = vld [vmem:[#allocation38 + $0x120] sm:$0xff]
    %v9162 = vld [vmem:[#allocation38 + $0x128] sm:$0xff]
    %v9163 = vld [vmem:[#allocation38 + $0x130] sm:$0xff]
    %v9164 = vld [vmem:[#allocation38 + $0x138] sm:$0xff]
    %v9165 = vld [vmem:[#allocation38 + $0x140] sm:$0xff]
    %v9166 = vld [vmem:[#allocation38 + $0x148] sm:$0xff]
    %v9167 = vld [vmem:[#allocation38 + $0x150] sm:$0xff]
    %v9168 = vld [vmem:[#allocation38 + $0x158] sm:$0xff]
    %v9169 = vld [vmem:[#allocation38 + $0x160] sm:$0xff]
    %v9170 = vld [vmem:[#allocation38 + $0x168] sm:$0xff]
    %v9171 = vld [vmem:[#allocation38 + $0x170] sm:$0xff]
    %v9172 = vld [vmem:[#allocation38 + $0x178] sm:$0xff]
    %v9173 = vld [vmem:[#allocation38 + $0x180] sm:$0xff]
    %v9174 = vld [vmem:[#allocation38 + $0x188] sm:$0xff]
    %v9175 = vld [vmem:[#allocation38 + $0x190] sm:$0xff]
    %v9176 = vld [vmem:[#allocation38 + $0x198] sm:$0xff]
    %v9177 = vld [vmem:[#allocation38 + $0x1a0] sm:$0xff]
    %v9178 = vld [vmem:[#allocation38 + $0x1a8] sm:$0xff]
    %v9179 = vld [vmem:[#allocation38 + $0x1b0] sm:$0xff]
    %v9180 = vld [vmem:[#allocation38 + $0x1b8] sm:$0xff]
    %v9181 = vld [vmem:[#allocation38 + $0x1c0] sm:$0xff]
    %v9182 = vld [vmem:[#allocation38 + $0x1c8] sm:$0xff]
    %v9183 = vld [vmem:[#allocation38 + $0x1d0] sm:$0xff]
    %v9184 = vld [vmem:[#allocation38 + $0x1d8] sm:$0xff]
    %v9185 = vld [vmem:[#allocation38 + $0x1e0] sm:$0xff]
    %v9186 = vld [vmem:[#allocation38 + $0x1e8] sm:$0xff]
    %v9187 = vld [vmem:[#allocation38 + $0x1f0] sm:$0xff]
    %v9188 = vld [vmem:[#allocation38 + $0x1f8] sm:$0xff]
    %v9189 = vld [vmem:[#allocation40] sm:$0x3]
    %v9190 = vld [vmem:[#allocation41] sm:$0xff]
    %v9191 = vld [vmem:[#allocation41 + $0x8] sm:$0xff]
    %v9192 = vld [vmem:[#allocation41 + $0x10] sm:$0xff]
    %v9193 = vld [vmem:[#allocation41 + $0x18] sm:$0xff]
    %v9194 = vld [vmem:[#allocation41 + $0x20] sm:$0xff]
    %v9195 = vld [vmem:[#allocation41 + $0x28] sm:$0xff]
    %v9196 = vld [vmem:[#allocation41 + $0x30] sm:$0xff]
    %v9197 = vld [vmem:[#allocation41 + $0x38] sm:$0xff]
    %v9198 = vld [vmem:[#allocation41 + $0x40] sm:$0xff]
    %v9199 = vld [vmem:[#allocation41 + $0x48] sm:$0xff]
    %v9200 = vld [vmem:[#allocation41 + $0x50] sm:$0xff]
    %v9201 = vld [vmem:[#allocation41 + $0x58] sm:$0xff]
    %v9202 = vld [vmem:[#allocation41 + $0x60] sm:$0xff]
    %v9203 = vld [vmem:[#allocation41 + $0x68] sm:$0xff]
    %v9204 = vld [vmem:[#allocation41 + $0x70] sm:$0xff]
    %v9205 = vld [vmem:[#allocation41 + $0x78] sm:$0xff]
    %v9206 = vld [vmem:[#allocation41 + $0x80] sm:$0xff]
    %v9207 = vld [vmem:[#allocation41 + $0x88] sm:$0xff]
    %v9208 = vld [vmem:[#allocation41 + $0x90] sm:$0xff]
    %v9209 = vld [vmem:[#allocation41 + $0x98] sm:$0xff]
    %v9210 = vld [vmem:[#allocation41 + $0xa0] sm:$0xff]
    %v9211 = vld [vmem:[#allocation41 + $0xa8] sm:$0xff]
    %v9212 = vld [vmem:[#allocation41 + $0xb0] sm:$0xff]
    %v9213 = vld [vmem:[#allocation41 + $0xb8] sm:$0xff]
    %v9214 = vld [vmem:[#allocation41 + $0xc0] sm:$0xff]
    %v9215 = vld [vmem:[#allocation41 + $0xc8] sm:$0xff]
    %v9216 = vld [vmem:[#allocation41 + $0xd0] sm:$0xff]
    %v9217 = vld [vmem:[#allocation41 + $0xd8] sm:$0xff]
    %v9218 = vld [vmem:[#allocation41 + $0xe0] sm:$0xff]
    %v9219 = vld [vmem:[#allocation41 + $0xe8] sm:$0xff]
    %v9220 = vld [vmem:[#allocation41 + $0xf0] sm:$0xff]
    %v9221 = vld [vmem:[#allocation41 + $0xf8] sm:$0xff]
    %v9222 = vld [vmem:[#allocation41 + $0x100] sm:$0xff]
    %v9223 = vld [vmem:[#allocation41 + $0x108] sm:$0xff]
    %v9224 = vld [vmem:[#allocation41 + $0x110] sm:$0xff]
    %v9225 = vld [vmem:[#allocation41 + $0x118] sm:$0xff]
    %v9226 = vld [vmem:[#allocation41 + $0x120] sm:$0xff]
    %v9227 = vld [vmem:[#allocation41 + $0x128] sm:$0xff]
    %v9228 = vld [vmem:[#allocation41 + $0x130] sm:$0xff]
    %v9229 = vld [vmem:[#allocation41 + $0x138] sm:$0xff]
    %v9230 = vld [vmem:[#allocation41 + $0x140] sm:$0xff]
    %v9231 = vld [vmem:[#allocation41 + $0x148] sm:$0xff]
    %v9232 = vld [vmem:[#allocation41 + $0x150] sm:$0xff]
    %v9233 = vld [vmem:[#allocation41 + $0x158] sm:$0xff]
    %v9234 = vld [vmem:[#allocation41 + $0x160] sm:$0xff]
    %v9235 = vld [vmem:[#allocation41 + $0x168] sm:$0xff]
    %v9236 = vld [vmem:[#allocation41 + $0x170] sm:$0xff]
    %v9237 = vld [vmem:[#allocation41 + $0x178] sm:$0xff]
    %v9238 = vld [vmem:[#allocation41 + $0x180] sm:$0xff]
    %v9239 = vld [vmem:[#allocation41 + $0x188] sm:$0xff]
    %v9240 = vld [vmem:[#allocation41 + $0x190] sm:$0xff]
    %v9241 = vld [vmem:[#allocation41 + $0x198] sm:$0xff]
    %v9242 = vld [vmem:[#allocation41 + $0x1a0] sm:$0xff]
    %v9243 = vld [vmem:[#allocation41 + $0x1a8] sm:$0xff]
    %v9244 = vld [vmem:[#allocation41 + $0x1b0] sm:$0xff]
    %v9245 = vld [vmem:[#allocation41 + $0x1b8] sm:$0xff]
    %v9246 = vld [vmem:[#allocation41 + $0x1c0] sm:$0xff]
    %v9247 = vld [vmem:[#allocation41 + $0x1c8] sm:$0xff]
    %v9248 = vld [vmem:[#allocation41 + $0x1d0] sm:$0xff]
    %v9249 = vld [vmem:[#allocation41 + $0x1d8] sm:$0xff]
    %v9250 = vld [vmem:[#allocation41 + $0x1e0] sm:$0xff]
    %v9251 = vld [vmem:[#allocation41 + $0x1e8] sm:$0xff]
    %v9252 = vld [vmem:[#allocation41 + $0x1f0] sm:$0xff]
    %v9253 = vld [vmem:[#allocation41 + $0x1f8] sm:$0xff]
    %v9254 = vld [vmem:[#allocation43] sm:$0xf]
    %v9255 = vld [vmem:[#allocation44] sm:$0xf]
    %v9256 = vld [vmem:[#allocation46] sm:$0xf]
    %v9257 = vld [vmem:[#allocation47] sm:$0xff]
    %v9258 = vld [vmem:[#allocation47 + $0x8] sm:$0xff]
    %v9259 = vld [vmem:[#allocation47 + $0x10] sm:$0xff]
    %v9260 = vld [vmem:[#allocation47 + $0x18] sm:$0xff]
    %v9261 = vld [vmem:[#allocation47 + $0x20] sm:$0xff]
    %v9262 = vld [vmem:[#allocation47 + $0x28] sm:$0xff]
    %v9263 = vld [vmem:[#allocation47 + $0x30] sm:$0xff]
    %v9264 = vld [vmem:[#allocation47 + $0x38] sm:$0xff]
    %v9265 = vld [vmem:[#allocation47 + $0x40] sm:$0xff]
    %v9266 = vld [vmem:[#allocation47 + $0x48] sm:$0xff]
    %v9267 = vld [vmem:[#allocation47 + $0x50] sm:$0xff]
    %v9268 = vld [vmem:[#allocation47 + $0x58] sm:$0xff]
    %v9269 = vld [vmem:[#allocation47 + $0x60] sm:$0xff]
    %v9270 = vld [vmem:[#allocation47 + $0x68] sm:$0xff]
    %v9271 = vld [vmem:[#allocation47 + $0x70] sm:$0xff]
    %v9272 = vld [vmem:[#allocation47 + $0x78] sm:$0xff]
    %v9273 = vld [vmem:[#allocation47 + $0x80] sm:$0xff]
    %v9274 = vld [vmem:[#allocation47 + $0x88] sm:$0xff]
    %v9275 = vld [vmem:[#allocation47 + $0x90] sm:$0xff]
    %v9276 = vld [vmem:[#allocation47 + $0x98] sm:$0xff]
    %v9277 = vld [vmem:[#allocation47 + $0xa0] sm:$0xff]
    %v9278 = vld [vmem:[#allocation47 + $0xa8] sm:$0xff]
    %v9279 = vld [vmem:[#allocation47 + $0xb0] sm:$0xff]
    %v9280 = vld [vmem:[#allocation47 + $0xb8] sm:$0xff]
    %v9281 = vld [vmem:[#allocation47 + $0xc0] sm:$0xff]
    %v9282 = vld [vmem:[#allocation47 + $0xc8] sm:$0xff]
    %v9283 = vld [vmem:[#allocation47 + $0xd0] sm:$0xff]
    %v9284 = vld [vmem:[#allocation47 + $0xd8] sm:$0xff]
    %v9285 = vld [vmem:[#allocation47 + $0xe0] sm:$0xff]
    %v9286 = vld [vmem:[#allocation47 + $0xe8] sm:$0xff]
    %v9287 = vld [vmem:[#allocation47 + $0xf0] sm:$0xff]
    %v9288 = vld [vmem:[#allocation47 + $0xf8] sm:$0xff]
    %v9289 = vld [vmem:[#allocation47 + $0x100] sm:$0xff]
    %v9290 = vld [vmem:[#allocation47 + $0x108] sm:$0xff]
    %v9291 = vld [vmem:[#allocation47 + $0x110] sm:$0xff]
    %v9292 = vld [vmem:[#allocation47 + $0x118] sm:$0xff]
    %v9293 = vld [vmem:[#allocation47 + $0x120] sm:$0xff]
    %v9294 = vld [vmem:[#allocation47 + $0x128] sm:$0xff]
    %v9295 = vld [vmem:[#allocation47 + $0x130] sm:$0xff]
    %v9296 = vld [vmem:[#allocation47 + $0x138] sm:$0xff]
    %v9297 = vld [vmem:[#allocation47 + $0x140] sm:$0xff]
    %v9298 = vld [vmem:[#allocation47 + $0x148] sm:$0xff]
    %v9299 = vld [vmem:[#allocation47 + $0x150] sm:$0xff]
    %v9300 = vld [vmem:[#allocation47 + $0x158] sm:$0xff]
    %v9301 = vld [vmem:[#allocation47 + $0x160] sm:$0xff]
    %v9302 = vld [vmem:[#allocation47 + $0x168] sm:$0xff]
    %v9303 = vld [vmem:[#allocation47 + $0x170] sm:$0xff]
    %v9304 = vld [vmem:[#allocation47 + $0x178] sm:$0xff]
    %v9305 = vld [vmem:[#allocation47 + $0x180] sm:$0xff]
    %v9306 = vld [vmem:[#allocation47 + $0x188] sm:$0xff]
    %v9307 = vld [vmem:[#allocation47 + $0x190] sm:$0xff]
    %v9308 = vld [vmem:[#allocation47 + $0x198] sm:$0xff]
    %v9309 = vld [vmem:[#allocation47 + $0x1a0] sm:$0xff]
    %v9310 = vld [vmem:[#allocation47 + $0x1a8] sm:$0xff]
    %v9311 = vld [vmem:[#allocation47 + $0x1b0] sm:$0xff]
    %v9312 = vld [vmem:[#allocation47 + $0x1b8] sm:$0xff]
    %v9313 = vld [vmem:[#allocation47 + $0x1c0] sm:$0xff]
    %v9314 = vld [vmem:[#allocation47 + $0x1c8] sm:$0xff]
    %v9315 = vld [vmem:[#allocation47 + $0x1d0] sm:$0xff]
    %v9316 = vld [vmem:[#allocation47 + $0x1d8] sm:$0xff]
    %v9317 = vld [vmem:[#allocation47 + $0x1e0] sm:$0xff]
    %v9318 = vld [vmem:[#allocation47 + $0x1e8] sm:$0xff]
    %v9319 = vld [vmem:[#allocation47 + $0x1f0] sm:$0xff]
    %v9320 = vld [vmem:[#allocation47 + $0x1f8] sm:$0xff]
    %v9321 = vld [vmem:[#allocation47 + $0x200] sm:$0xff]
    %v9322 = vld [vmem:[#allocation47 + $0x208] sm:$0xff]
    %v9323 = vld [vmem:[#allocation47 + $0x210] sm:$0xff]
    %v9324 = vld [vmem:[#allocation47 + $0x218] sm:$0xff]
    %v9325 = vld [vmem:[#allocation47 + $0x220] sm:$0xff]
    %v9326 = vld [vmem:[#allocation47 + $0x228] sm:$0xff]
    %v9327 = vld [vmem:[#allocation47 + $0x230] sm:$0xff]
    %v9328 = vld [vmem:[#allocation47 + $0x238] sm:$0xff]
    %v9329 = vld [vmem:[#allocation47 + $0x240] sm:$0xff]
    %v9330 = vld [vmem:[#allocation47 + $0x248] sm:$0xff]
    %v9331 = vld [vmem:[#allocation47 + $0x250] sm:$0xff]
    %v9332 = vld [vmem:[#allocation47 + $0x258] sm:$0xff]
    %v9333 = vld [vmem:[#allocation47 + $0x260] sm:$0xff]
    %v9334 = vld [vmem:[#allocation47 + $0x268] sm:$0xff]
    %v9335 = vld [vmem:[#allocation47 + $0x270] sm:$0xff]
    %v9336 = vld [vmem:[#allocation47 + $0x278] sm:$0xff]
    %v9337 = vld [vmem:[#allocation47 + $0x280] sm:$0xff]
    %v9338 = vld [vmem:[#allocation47 + $0x288] sm:$0xff]
    %v9339 = vld [vmem:[#allocation47 + $0x290] sm:$0xff]
    %v9340 = vld [vmem:[#allocation47 + $0x298] sm:$0xff]
    %v9341 = vld [vmem:[#allocation47 + $0x2a0] sm:$0xff]
    %v9342 = vld [vmem:[#allocation47 + $0x2a8] sm:$0xff]
    %v9343 = vld [vmem:[#allocation47 + $0x2b0] sm:$0xff]
    %v9344 = vld [vmem:[#allocation47 + $0x2b8] sm:$0xff]
    %v9345 = vld [vmem:[#allocation47 + $0x2c0] sm:$0xff]
    %v9346 = vld [vmem:[#allocation47 + $0x2c8] sm:$0xff]
    %v9347 = vld [vmem:[#allocation47 + $0x2d0] sm:$0xff]
    %v9348 = vld [vmem:[#allocation47 + $0x2d8] sm:$0xff]
    %v9349 = vld [vmem:[#allocation47 + $0x2e0] sm:$0xff]
    %v9350 = vld [vmem:[#allocation47 + $0x2e8] sm:$0xff]
    %v9351 = vld [vmem:[#allocation47 + $0x2f0] sm:$0xff]
    %v9352 = vld [vmem:[#allocation47 + $0x2f8] sm:$0xff]
    %v9353 = vld [vmem:[#allocation47 + $0x300] sm:$0xff]
    %v9354 = vld [vmem:[#allocation47 + $0x308] sm:$0xff]
    %v9355 = vld [vmem:[#allocation47 + $0x310] sm:$0xff]
    %v9356 = vld [vmem:[#allocation47 + $0x318] sm:$0xff]
    %v9357 = vld [vmem:[#allocation47 + $0x320] sm:$0xff]
    %v9358 = vld [vmem:[#allocation47 + $0x328] sm:$0xff]
    %v9359 = vld [vmem:[#allocation47 + $0x330] sm:$0xff]
    %v9360 = vld [vmem:[#allocation47 + $0x338] sm:$0xff]
    %v9361 = vld [vmem:[#allocation47 + $0x340] sm:$0xff]
    %v9362 = vld [vmem:[#allocation47 + $0x348] sm:$0xff]
    %v9363 = vld [vmem:[#allocation47 + $0x350] sm:$0xff]
    %v9364 = vld [vmem:[#allocation47 + $0x358] sm:$0xff]
    %v9365 = vld [vmem:[#allocation47 + $0x360] sm:$0xff]
    %v9366 = vld [vmem:[#allocation47 + $0x368] sm:$0xff]
    %v9367 = vld [vmem:[#allocation47 + $0x370] sm:$0xff]
    %v9368 = vld [vmem:[#allocation47 + $0x378] sm:$0xff]
    %v9369 = vld [vmem:[#allocation47 + $0x380] sm:$0xff]
    %v9370 = vld [vmem:[#allocation47 + $0x388] sm:$0xff]
    %v9371 = vld [vmem:[#allocation47 + $0x390] sm:$0xff]
    %v9372 = vld [vmem:[#allocation47 + $0x398] sm:$0xff]
    %v9373 = vld [vmem:[#allocation47 + $0x3a0] sm:$0xff]
    %v9374 = vld [vmem:[#allocation47 + $0x3a8] sm:$0xff]
    %v9375 = vld [vmem:[#allocation47 + $0x3b0] sm:$0xff]
    %v9376 = vld [vmem:[#allocation47 + $0x3b8] sm:$0xff]
    %v9377 = vld [vmem:[#allocation47 + $0x3c0] sm:$0xff]
    %v9378 = vld [vmem:[#allocation47 + $0x3c8] sm:$0xff]
    %v9379 = vld [vmem:[#allocation47 + $0x3d0] sm:$0xff]
    %v9380 = vld [vmem:[#allocation47 + $0x3d8] sm:$0xff]
    %v9381 = vld [vmem:[#allocation47 + $0x3e0] sm:$0xff]
    %v9382 = vld [vmem:[#allocation47 + $0x3e8] sm:$0xff]
    %v9383 = vld [vmem:[#allocation47 + $0x3f0] sm:$0xff]
    %v9384 = vld [vmem:[#allocation47 + $0x3f8] sm:$0xff]
    %v9385 = vld [vmem:[#allocation49] sm:$0xf]
    %v9386 = vpack.c.bf16 %v9052, %v9052
    %v9387 = vpack.c.bf16 %v9053, %v9053
    %v9388 = vpack.c.bf16 %v9054, %v9054
    %v9389 = vpack.c.bf16 %v9055, %v9055
    %v9391 = vlaneseq
    %v9392 = vshrl.u32 %v9391, 7
    %v9393 = vsub.s32 0, %v9392
    %v9394 = vrot.slane %v9124, %v9393
    %v9395 = vlaneseq
    %v9396 = vshrl.u32 %v9395, 7
    %v9397 = vsub.s32 1, %v9396
    %v9398 = vrot.slane %v9124, %v9397
    %v9465 = vunpack.c.l.b16 %v9060
    %v9466 = vunpack.c.h.b16 %v9060
    %v9467 = vunpack.c.l.b16 %v9061
    %v9468 = vunpack.c.h.b16 %v9061
    %v9469 = vunpack.c.l.b16 %v9062
    %v9470 = vunpack.c.h.b16 %v9062
    %v9471 = vunpack.c.l.b16 %v9063
    %v9472 = vunpack.c.h.b16 %v9063
    %v9473 = vunpack.c.l.b16 %v9064
    %v9474 = vunpack.c.h.b16 %v9064
    %v9475 = vunpack.c.l.b16 %v9065
    %v9476 = vunpack.c.h.b16 %v9065
    %v9477 = vunpack.c.l.b16 %v9066
    %v9478 = vunpack.c.h.b16 %v9066
    %v9479 = vunpack.c.l.b16 %v9067
    %v9480 = vunpack.c.h.b16 %v9067
    %v9481 = vunpack.c.l.b16 %v9068
    %v9482 = vunpack.c.h.b16 %v9068
    %v9483 = vunpack.c.l.b16 %v9069
    %v9484 = vunpack.c.h.b16 %v9069
    %v9485 = vunpack.c.l.b16 %v9070
    %v9486 = vunpack.c.h.b16 %v9070
    %v9487 = vunpack.c.l.b16 %v9071
    %v9488 = vunpack.c.h.b16 %v9071
    %v9489 = vunpack.c.l.b16 %v9072
    %v9490 = vunpack.c.h.b16 %v9072
    %v9491 = vunpack.c.l.b16 %v9073
    %v9492 = vunpack.c.h.b16 %v9073
    %v9493 = vunpack.c.l.b16 %v9074
    %v9494 = vunpack.c.h.b16 %v9074
    %v9495 = vunpack.c.l.b16 %v9075
    %v9496 = vunpack.c.h.b16 %v9075
    %v9497 = vunpack.c.l.b16 %v9076
    %v9498 = vunpack.c.h.b16 %v9076
    %v9499 = vunpack.c.l.b16 %v9077
    %v9500 = vunpack.c.h.b16 %v9077
    %v9501 = vunpack.c.l.b16 %v9078
    %v9502 = vunpack.c.h.b16 %v9078
    %v9503 = vunpack.c.l.b16 %v9079
    %v9504 = vunpack.c.h.b16 %v9079
    %v9505 = vunpack.c.l.b16 %v9080
    %v9506 = vunpack.c.h.b16 %v9080
    %v9507 = vunpack.c.l.b16 %v9081
    %v9508 = vunpack.c.h.b16 %v9081
    %v9509 = vunpack.c.l.b16 %v9082
    %v9510 = vunpack.c.h.b16 %v9082
    %v9511 = vunpack.c.l.b16 %v9083
    %v9512 = vunpack.c.h.b16 %v9083
    %v9513 = vunpack.c.l.b16 %v9084
    %v9514 = vunpack.c.h.b16 %v9084
    %v9515 = vunpack.c.l.b16 %v9085
    %v9516 = vunpack.c.h.b16 %v9085
    %v9517 = vunpack.c.l.b16 %v9086
    %v9518 = vunpack.c.h.b16 %v9086
    %v9519 = vunpack.c.l.b16 %v9087
    %v9520 = vunpack.c.h.b16 %v9087
    %v9521 = vunpack.c.l.b16 %v9088
    %v9522 = vunpack.c.h.b16 %v9088
    %v9523 = vunpack.c.l.b16 %v9089
    %v9524 = vunpack.c.h.b16 %v9089
    %v9525 = vunpack.c.l.b16 %v9090
    %v9526 = vunpack.c.h.b16 %v9090
    %v9527 = vunpack.c.l.b16 %v9091
    %v9528 = vunpack.c.h.b16 %v9091
    %v9529 = vunpack.c.l.b16 %v9092
    %v9530 = vunpack.c.h.b16 %v9092
    %v9531 = vunpack.c.l.b16 %v9093
    %v9532 = vunpack.c.h.b16 %v9093
    %v9533 = vunpack.c.l.b16 %v9094
    %v9534 = vunpack.c.h.b16 %v9094
    %v9535 = vunpack.c.l.b16 %v9095
    %v9536 = vunpack.c.h.b16 %v9095
    %v9537 = vunpack.c.l.b16 %v9096
    %v9538 = vunpack.c.h.b16 %v9096
    %v9539 = vunpack.c.l.b16 %v9097
    %v9540 = vunpack.c.h.b16 %v9097
    %v9541 = vunpack.c.l.b16 %v9098
    %v9542 = vunpack.c.h.b16 %v9098
    %v9543 = vunpack.c.l.b16 %v9099
    %v9544 = vunpack.c.h.b16 %v9099
    %v9545 = vunpack.c.l.b16 %v9100
    %v9546 = vunpack.c.h.b16 %v9100
    %v9547 = vunpack.c.l.b16 %v9101
    %v9548 = vunpack.c.h.b16 %v9101
    %v9549 = vunpack.c.l.b16 %v9102
    %v9550 = vunpack.c.h.b16 %v9102
    %v9551 = vunpack.c.l.b16 %v9103
    %v9552 = vunpack.c.h.b16 %v9103
    %v9553 = vunpack.c.l.b16 %v9104
    %v9554 = vunpack.c.h.b16 %v9104
    %v9555 = vunpack.c.l.b16 %v9105
    %v9556 = vunpack.c.h.b16 %v9105
    %v9557 = vunpack.c.l.b16 %v9106
    %v9558 = vunpack.c.h.b16 %v9106
    %v9559 = vunpack.c.l.b16 %v9107
    %v9560 = vunpack.c.h.b16 %v9107
    %v9561 = vunpack.c.l.b16 %v9108
    %v9562 = vunpack.c.h.b16 %v9108
    %v9563 = vunpack.c.l.b16 %v9109
    %v9564 = vunpack.c.h.b16 %v9109
    %v9565 = vunpack.c.l.b16 %v9110
    %v9566 = vunpack.c.h.b16 %v9110
    %v9567 = vunpack.c.l.b16 %v9111
    %v9568 = vunpack.c.h.b16 %v9111
    %v9569 = vunpack.c.l.b16 %v9112
    %v9570 = vunpack.c.h.b16 %v9112
    %v9571 = vunpack.c.l.b16 %v9113
    %v9572 = vunpack.c.h.b16 %v9113
    %v9573 = vunpack.c.l.b16 %v9114
    %v9574 = vunpack.c.h.b16 %v9114
    %v9575 = vunpack.c.l.b16 %v9115
    %v9576 = vunpack.c.h.b16 %v9115
    %v9577 = vunpack.c.l.b16 %v9116
    %v9578 = vunpack.c.h.b16 %v9116
    %v9579 = vunpack.c.l.b16 %v9117
    %v9580 = vunpack.c.h.b16 %v9117
    %v9581 = vunpack.c.l.b16 %v9118
    %v9582 = vunpack.c.h.b16 %v9118
    %v9583 = vunpack.c.l.b16 %v9119
    %v9584 = vunpack.c.h.b16 %v9119
    %v9585 = vunpack.c.l.b16 %v9120
    %v9586 = vunpack.c.h.b16 %v9120
    %v9587 = vunpack.c.l.b16 %v9121
    %v9588 = vunpack.c.h.b16 %v9121
    %v9589 = vunpack.c.l.b16 %v9122
    %v9590 = vunpack.c.h.b16 %v9122
    %v9591 = vunpack.c.l.b16 %v9123
    %v9592 = vunpack.c.h.b16 %v9123
    %v9593 = vpack.c.b16 %v9467, %v9465
    %v9594 = vpack.c.b16 %v9468, %v9466
    %v9595 = vpack.c.b16 %v9471, %v9469
    %v9596 = vpack.c.b16 %v9472, %v9470
    %v9597 = vpack.c.b16 %v9475, %v9473
    %v9598 = vpack.c.b16 %v9476, %v9474
    %v9599 = vpack.c.b16 %v9479, %v9477
    %v9600 = vpack.c.b16 %v9480, %v9478
    %v9601 = vpack.c.b16 %v9483, %v9481
    %v9602 = vpack.c.b16 %v9484, %v9482
    %v9603 = vpack.c.b16 %v9487, %v9485
    %v9604 = vpack.c.b16 %v9488, %v9486
    %v9605 = vpack.c.b16 %v9491, %v9489
    %v9606 = vpack.c.b16 %v9492, %v9490
    %v9607 = vpack.c.b16 %v9495, %v9493
    %v9608 = vpack.c.b16 %v9496, %v9494
    %v9609 = vpack.c.b16 %v9499, %v9497
    %v9610 = vpack.c.b16 %v9500, %v9498
    %v9611 = vpack.c.b16 %v9503, %v9501
    %v9612 = vpack.c.b16 %v9504, %v9502
    %v9613 = vpack.c.b16 %v9507, %v9505
    %v9614 = vpack.c.b16 %v9508, %v9506
    %v9615 = vpack.c.b16 %v9511, %v9509
    %v9616 = vpack.c.b16 %v9512, %v9510
    %v9617 = vpack.c.b16 %v9515, %v9513
    %v9618 = vpack.c.b16 %v9516, %v9514
    %v9619 = vpack.c.b16 %v9519, %v9517
    %v9620 = vpack.c.b16 %v9520, %v9518
    %v9621 = vpack.c.b16 %v9523, %v9521
    %v9622 = vpack.c.b16 %v9524, %v9522
    %v9623 = vpack.c.b16 %v9527, %v9525
    %v9624 = vpack.c.b16 %v9528, %v9526
    %v9625 = vpack.c.b16 %v9531, %v9529
    %v9626 = vpack.c.b16 %v9532, %v9530
    %v9627 = vpack.c.b16 %v9535, %v9533
    %v9628 = vpack.c.b16 %v9536, %v9534
    %v9629 = vpack.c.b16 %v9539, %v9537
    %v9630 = vpack.c.b16 %v9540, %v9538
    %v9631 = vpack.c.b16 %v9543, %v9541
    %v9632 = vpack.c.b16 %v9544, %v9542
    %v9633 = vpack.c.b16 %v9547, %v9545
    %v9634 = vpack.c.b16 %v9548, %v9546
    %v9635 = vpack.c.b16 %v9551, %v9549
    %v9636 = vpack.c.b16 %v9552, %v9550
    %v9637 = vpack.c.b16 %v9555, %v9553
    %v9638 = vpack.c.b16 %v9556, %v9554
    %v9639 = vpack.c.b16 %v9559, %v9557
    %v9640 = vpack.c.b16 %v9560, %v9558
    %v9641 = vpack.c.b16 %v9563, %v9561
    %v9642 = vpack.c.b16 %v9564, %v9562
    %v9643 = vpack.c.b16 %v9567, %v9565
    %v9644 = vpack.c.b16 %v9568, %v9566
    %v9645 = vpack.c.b16 %v9571, %v9569
    %v9646 = vpack.c.b16 %v9572, %v9570
    %v9647 = vpack.c.b16 %v9575, %v9573
    %v9648 = vpack.c.b16 %v9576, %v9574
    %v9649 = vpack.c.b16 %v9579, %v9577
    %v9650 = vpack.c.b16 %v9580, %v9578
    %v9651 = vpack.c.b16 %v9583, %v9581
    %v9652 = vpack.c.b16 %v9584, %v9582
    %v9653 = vpack.c.b16 %v9587, %v9585
    %v9654 = vpack.c.b16 %v9588, %v9586
    %v9655 = vpack.c.b16 %v9591, %v9589
    %v9656 = vpack.c.b16 %v9592, %v9590
    %9721 = vmatprep.subr.bf16.mxu0 %v9608
    %9722 = vmatpush1.bf16.msra.mxu0 %v9607
    %9723 = vmatprep.subr.bf16.mxu0 %v9606
    %9724 = vmatpush1.bf16.msra.mxu0 %v9605
    %9725 = vmatprep.subr.bf16.mxu0 %v9604
    %9726 = vmatpush1.bf16.msra.mxu0 %v9603
    %9727 = vmatprep.subr.bf16.mxu0 %v9602
    %9728 = vmatpush1.bf16.msra.mxu0 %v9601
    %9729 = vmatprep.subr.bf16.mxu0 %v9600
    %9730 = vmatpush1.bf16.msra.mxu0 %v9599
    %9731 = vmatprep.subr.bf16.mxu0 %v9598
    %9732 = vmatpush1.bf16.msra.mxu0 %v9597
    %9733 = vmatprep.subr.bf16.mxu0 %v9596
    %9734 = vmatpush1.bf16.msra.mxu0 %v9595
    %9735 = vmatprep.subr.bf16.mxu0 %v9594
    %9736 = vmatpush1.bf16.msra.mxu0 %v9593
    %9737 = vmatprep.subr.bf16.mxu0 %v9624
    %9738 = vmatpush2.bf16.msra.mxu0 %v9623
    %9739 = vmatprep.subr.bf16.mxu0 %v9622
    %9740 = vmatpush2.bf16.msra.mxu0 %v9621
    %9741 = vmatprep.subr.bf16.mxu0 %v9620
    %9742 = vmatpush2.bf16.msra.mxu0 %v9619
    %9743 = vmatprep.subr.bf16.mxu0 %v9618
    %9744 = vmatpush2.bf16.msra.mxu0 %v9617
    %9745 = vmatprep.subr.bf16.mxu0 %v9616
    %9746 = vmatpush2.bf16.msra.mxu0 %v9615
    %9747 = vmatprep.subr.bf16.mxu0 %v9614
    %9748 = vmatpush2.bf16.msra.mxu0 %v9613
    %9749 = vmatprep.subr.bf16.mxu0 %v9612
    %9750 = vmatpush2.bf16.msra.mxu0 %v9611
    %9751 = vmatprep.subr.bf16.mxu0 %v9610
    %9752 = vmatpush2.bf16.msra.mxu0 %v9609
    %9753 = vmatprep.mubr.bf16.mxu0 %v9387
    %9754 = vmatmul.mubr.bf16.gmra.mxu0 %v9386
    %v9755 = vpop.f32.mrf.mxu0
    %v9756 = vadd.f32 %v9394, %v9755
    %v9757 = vpop.f32.mrf.mxu0
    %v9758 = vadd.f32 %v9398, %v9757
    %v9759 = vpop.f32.mrf.mxu0
    %v9760 = vpop.f32.mrf.mxu0
    %9761 = vdwg.mxu0
    %9762 = vmatprep.subr.bf16.mxu0 %v9640
    %9763 = vmatpush1.bf16.msra.mxu0 %v9639
    %9764 = vmatprep.subr.bf16.mxu0 %v9638
    %9765 = vmatpush1.bf16.msra.mxu0 %v9637
    %9766 = vmatprep.subr.bf16.mxu0 %v9636
    %9767 = vmatpush1.bf16.msra.mxu0 %v9635
    %9768 = vmatprep.subr.bf16.mxu0 %v9634
    %9769 = vmatpush1.bf16.msra.mxu0 %v9633
    %9770 = vmatprep.subr.bf16.mxu0 %v9632
    %9771 = vmatpush1.bf16.msra.mxu0 %v9631
    %9772 = vmatprep.subr.bf16.mxu0 %v9630
    %9773 = vmatpush1.bf16.msra.mxu0 %v9629
    %9774 = vmatprep.subr.bf16.mxu0 %v9628
    %9775 = vmatpush1.bf16.msra.mxu0 %v9627
    %9776 = vmatprep.subr.bf16.mxu0 %v9626
    %9777 = vmatpush1.bf16.msra.mxu0 %v9625
    %9778 = vmatprep.subr.bf16.mxu0 %v9656
    %9779 = vmatpush2.bf16.msra.mxu0 %v9655
    %9780 = vmatprep.subr.bf16.mxu0 %v9654
    %9781 = vmatpush2.bf16.msra.mxu0 %v9653
    %9782 = vmatprep.subr.bf16.mxu0 %v9652
    %9783 = vmatpush2.bf16.msra.mxu0 %v9651
    %9784 = vmatprep.subr.bf16.mxu0 %v9650
    %9785 = vmatpush2.bf16.msra.mxu0 %v9649
    %9786 = vmatprep.subr.bf16.mxu0 %v9648
    %9787 = vmatpush2.bf16.msra.mxu0 %v9647
    %9788 = vmatprep.subr.bf16.mxu0 %v9646
    %9789 = vmatpush2.bf16.msra.mxu0 %v9645
    %9790 = vmatprep.subr.bf16.mxu0 %v9644
    %9791 = vmatpush2.bf16.msra.mxu0 %v9643
    %9792 = vmatprep.subr.bf16.mxu0 %v9642
    %9793 = vmatpush2.bf16.msra.mxu0 %v9641
    %9794 = vmatprep.mubr.bf16.mxu0 %v9389
    %9795 = vmatmul.mubr.bf16.gmra.mxu0 %v9388
    %v9796 = vpop.f32.mrf.mxu0
    %v9797 = vadd.f32 %v9756, %v9796
    %v9798 = vpop.f32.mrf.mxu0
    %v9799 = vadd.f32 %v9758, %v9798
    %v9800 = vpop.f32.mrf.mxu0
    %v9801 = vpop.f32.mrf.mxu0
    %9802 = vdwg.mxu0
    %v9803 = vpack.c.bf16 %v9056, %v9056
    %v9804 = vpack.c.bf16 %v9057, %v9057
    %v9805 = vpack.c.bf16 %v9058, %v9058
    %v9806 = vpack.c.bf16 %v9059, %v9059
    %v9808 = vlaneseq
    %v9809 = vshrl.u32 %v9808, 7
    %v9810 = vsub.s32 0, %v9809
    %v9811 = vrot.slane %v9189, %v9810
    %v9812 = vlaneseq
    %v9813 = vshrl.u32 %v9812, 7
    %v9814 = vsub.s32 1, %v9813
    %v9815 = vrot.slane %v9189, %v9814
    %v9882 = vunpack.c.l.b16 %v9125
    %v9883 = vunpack.c.h.b16 %v9125
    %v9884 = vunpack.c.l.b16 %v9126
    %v9885 = vunpack.c.h.b16 %v9126
    %v9886 = vunpack.c.l.b16 %v9127
    %v9887 = vunpack.c.h.b16 %v9127
    %v9888 = vunpack.c.l.b16 %v9128
    %v9889 = vunpack.c.h.b16 %v9128
    %v9890 = vunpack.c.l.b16 %v9129
    %v9891 = vunpack.c.h.b16 %v9129
    %v9892 = vunpack.c.l.b16 %v9130
    %v9893 = vunpack.c.h.b16 %v9130
    %v9894 = vunpack.c.l.b16 %v9131
    %v9895 = vunpack.c.h.b16 %v9131
    %v9896 = vunpack.c.l.b16 %v9132
    %v9897 = vunpack.c.h.b16 %v9132
    %v9898 = vunpack.c.l.b16 %v9133
    %v9899 = vunpack.c.h.b16 %v9133
    %v9900 = vunpack.c.l.b16 %v9134
    %v9901 = vunpack.c.h.b16 %v9134
    %v9902 = vunpack.c.l.b16 %v9135
    %v9903 = vunpack.c.h.b16 %v9135
    %v9904 = vunpack.c.l.b16 %v9136
    %v9905 = vunpack.c.h.b16 %v9136
    %v9906 = vunpack.c.l.b16 %v9137
    %v9907 = vunpack.c.h.b16 %v9137
    %v9908 = vunpack.c.l.b16 %v9138
    %v9909 = vunpack.c.h.b16 %v9138
    %v9910 = vunpack.c.l.b16 %v9139
    %v9911 = vunpack.c.h.b16 %v9139
    %v9912 = vunpack.c.l.b16 %v9140
    %v9913 = vunpack.c.h.b16 %v9140
    %v9914 = vunpack.c.l.b16 %v9141
    %v9915 = vunpack.c.h.b16 %v9141
    %v9916 = vunpack.c.l.b16 %v9142
    %v9917 = vunpack.c.h.b16 %v9142
    %v9918 = vunpack.c.l.b16 %v9143
    %v9919 = vunpack.c.h.b16 %v9143
    %v9920 = vunpack.c.l.b16 %v9144
    %v9921 = vunpack.c.h.b16 %v9144
    %v9922 = vunpack.c.l.b16 %v9145
    %v9923 = vunpack.c.h.b16 %v9145
    %v9924 = vunpack.c.l.b16 %v9146
    %v9925 = vunpack.c.h.b16 %v9146
    %v9926 = vunpack.c.l.b16 %v9147
    %v9927 = vunpack.c.h.b16 %v9147
    %v9928 = vunpack.c.l.b16 %v9148
    %v9929 = vunpack.c.h.b16 %v9148
    %v9930 = vunpack.c.l.b16 %v9149
    %v9931 = vunpack.c.h.b16 %v9149
    %v9932 = vunpack.c.l.b16 %v9150
    %v9933 = vunpack.c.h.b16 %v9150
    %v9934 = vunpack.c.l.b16 %v9151
    %v9935 = vunpack.c.h.b16 %v9151
    %v9936 = vunpack.c.l.b16 %v9152
    %v9937 = vunpack.c.h.b16 %v9152
    %v9938 = vunpack.c.l.b16 %v9153
    %v9939 = vunpack.c.h.b16 %v9153
    %v9940 = vunpack.c.l.b16 %v9154
    %v9941 = vunpack.c.h.b16 %v9154
    %v9942 = vunpack.c.l.b16 %v9155
    %v9943 = vunpack.c.h.b16 %v9155
    %v9944 = vunpack.c.l.b16 %v9156
    %v9945 = vunpack.c.h.b16 %v9156
    %v9946 = vunpack.c.l.b16 %v9157
    %v9947 = vunpack.c.h.b16 %v9157
    %v9948 = vunpack.c.l.b16 %v9158
    %v9949 = vunpack.c.h.b16 %v9158
    %v9950 = vunpack.c.l.b16 %v9159
    %v9951 = vunpack.c.h.b16 %v9159
    %v9952 = vunpack.c.l.b16 %v9160
    %v9953 = vunpack.c.h.b16 %v9160
    %v9954 = vunpack.c.l.b16 %v9161
    %v9955 = vunpack.c.h.b16 %v9161
    %v9956 = vunpack.c.l.b16 %v9162
    %v9957 = vunpack.c.h.b16 %v9162
    %v9958 = vunpack.c.l.b16 %v9163
    %v9959 = vunpack.c.h.b16 %v9163
    %v9960 = vunpack.c.l.b16 %v9164
    %v9961 = vunpack.c.h.b16 %v9164
    %v9962 = vunpack.c.l.b16 %v9165
    %v9963 = vunpack.c.h.b16 %v9165
    %v9964 = vunpack.c.l.b16 %v9166
    %v9965 = vunpack.c.h.b16 %v9166
    %v9966 = vunpack.c.l.b16 %v9167
    %v9967 = vunpack.c.h.b16 %v9167
    %v9968 = vunpack.c.l.b16 %v9168
    %v9969 = vunpack.c.h.b16 %v9168
    %v9970 = vunpack.c.l.b16 %v9169
    %v9971 = vunpack.c.h.b16 %v9169
    %v9972 = vunpack.c.l.b16 %v9170
    %v9973 = vunpack.c.h.b16 %v9170
    %v9974 = vunpack.c.l.b16 %v9171
    %v9975 = vunpack.c.h.b16 %v9171
    %v9976 = vunpack.c.l.b16 %v9172
    %v9977 = vunpack.c.h.b16 %v9172
    %v9978 = vunpack.c.l.b16 %v9173
    %v9979 = vunpack.c.h.b16 %v9173
    %v9980 = vunpack.c.l.b16 %v9174
    %v9981 = vunpack.c.h.b16 %v9174
    %v9982 = vunpack.c.l.b16 %v9175
    %v9983 = vunpack.c.h.b16 %v9175
    %v9984 = vunpack.c.l.b16 %v9176
    %v9985 = vunpack.c.h.b16 %v9176
    %v9986 = vunpack.c.l.b16 %v9177
    %v9987 = vunpack.c.h.b16 %v9177
    %v9988 = vunpack.c.l.b16 %v9178
    %v9989 = vunpack.c.h.b16 %v9178
    %v9990 = vunpack.c.l.b16 %v9179
    %v9991 = vunpack.c.h.b16 %v9179
    %v9992 = vunpack.c.l.b16 %v9180
    %v9993 = vunpack.c.h.b16 %v9180
    %v9994 = vunpack.c.l.b16 %v9181
    %v9995 = vunpack.c.h.b16 %v9181
    %v9996 = vunpack.c.l.b16 %v9182
    %v9997 = vunpack.c.h.b16 %v9182
    %v9998 = vunpack.c.l.b16 %v9183
    %v9999 = vunpack.c.h.b16 %v9183
    %v10000 = vunpack.c.l.b16 %v9184
    %v10001 = vunpack.c.h.b16 %v9184
    %v10002 = vunpack.c.l.b16 %v9185
    %v10003 = vunpack.c.h.b16 %v9185
    %v10004 = vunpack.c.l.b16 %v9186
    %v10005 = vunpack.c.h.b16 %v9186
    %v10006 = vunpack.c.l.b16 %v9187
    %v10007 = vunpack.c.h.b16 %v9187
    %v10008 = vunpack.c.l.b16 %v9188
    %v10009 = vunpack.c.h.b16 %v9188
    %v10010 = vpack.c.b16 %v9884, %v9882
    %v10011 = vpack.c.b16 %v9885, %v9883
    %v10012 = vpack.c.b16 %v9888, %v9886
    %v10013 = vpack.c.b16 %v9889, %v9887
    %v10014 = vpack.c.b16 %v9892, %v9890
    %v10015 = vpack.c.b16 %v9893, %v9891
    %v10016 = vpack.c.b16 %v9896, %v9894
    %v10017 = vpack.c.b16 %v9897, %v9895
    %v10018 = vpack.c.b16 %v9900, %v9898
    %v10019 = vpack.c.b16 %v9901, %v9899
    %v10020 = vpack.c.b16 %v9904, %v9902
    %v10021 = vpack.c.b16 %v9905, %v9903
    %v10022 = vpack.c.b16 %v9908, %v9906
    %v10023 = vpack.c.b16 %v9909, %v9907
    %v10024 = vpack.c.b16 %v9912, %v9910
    %v10025 = vpack.c.b16 %v9913, %v9911
    %v10026 = vpack.c.b16 %v9916, %v9914
    %v10027 = vpack.c.b16 %v9917, %v9915
    %v10028 = vpack.c.b16 %v9920, %v9918
    %v10029 = vpack.c.b16 %v9921, %v9919
    %v10030 = vpack.c.b16 %v9924, %v9922
    %v10031 = vpack.c.b16 %v9925, %v9923
    %v10032 = vpack.c.b16 %v9928, %v9926
    %v10033 = vpack.c.b16 %v9929, %v9927
    %v10034 = vpack.c.b16 %v9932, %v9930
    %v10035 = vpack.c.b16 %v9933, %v9931
    %v10036 = vpack.c.b16 %v9936, %v9934
    %v10037 = vpack.c.b16 %v9937, %v9935
    %v10038 = vpack.c.b16 %v9940, %v9938
    %v10039 = vpack.c.b16 %v9941, %v9939
    %v10040 = vpack.c.b16 %v9944, %v9942
    %v10041 = vpack.c.b16 %v9945, %v9943
    %v10042 = vpack.c.b16 %v9948, %v9946
    %v10043 = vpack.c.b16 %v9949, %v9947
    %v10044 = vpack.c.b16 %v9952, %v9950
    %v10045 = vpack.c.b16 %v9953, %v9951
    %v10046 = vpack.c.b16 %v9956, %v9954
    %v10047 = vpack.c.b16 %v9957, %v9955
    %v10048 = vpack.c.b16 %v9960, %v9958
    %v10049 = vpack.c.b16 %v9961, %v9959
    %v10050 = vpack.c.b16 %v9964, %v9962
    %v10051 = vpack.c.b16 %v9965, %v9963
    %v10052 = vpack.c.b16 %v9968, %v9966
    %v10053 = vpack.c.b16 %v9969, %v9967
    %v10054 = vpack.c.b16 %v9972, %v9970
    %v10055 = vpack.c.b16 %v9973, %v9971
    %v10056 = vpack.c.b16 %v9976, %v9974
    %v10057 = vpack.c.b16 %v9977, %v9975
    %v10058 = vpack.c.b16 %v9980, %v9978
    %v10059 = vpack.c.b16 %v9981, %v9979
    %v10060 = vpack.c.b16 %v9984, %v9982
    %v10061 = vpack.c.b16 %v9985, %v9983
    %v10062 = vpack.c.b16 %v9988, %v9986
    %v10063 = vpack.c.b16 %v9989, %v9987
    %v10064 = vpack.c.b16 %v9992, %v9990
    %v10065 = vpack.c.b16 %v9993, %v9991
    %v10066 = vpack.c.b16 %v9996, %v9994
    %v10067 = vpack.c.b16 %v9997, %v9995
    %v10068 = vpack.c.b16 %v10000, %v9998
    %v10069 = vpack.c.b16 %v10001, %v9999
    %v10070 = vpack.c.b16 %v10004, %v10002
    %v10071 = vpack.c.b16 %v10005, %v10003
    %v10072 = vpack.c.b16 %v10008, %v10006
    %v10073 = vpack.c.b16 %v10009, %v10007
    %10138 = vmatprep.subr.bf16.mxu0 %v10025
    %10139 = vmatpush1.bf16.msra.mxu0 %v10024
    %10140 = vmatprep.subr.bf16.mxu0 %v10023
    %10141 = vmatpush1.bf16.msra.mxu0 %v10022
    %10142 = vmatprep.subr.bf16.mxu0 %v10021
    %10143 = vmatpush1.bf16.msra.mxu0 %v10020
    %10144 = vmatprep.subr.bf16.mxu0 %v10019
    %10145 = vmatpush1.bf16.msra.mxu0 %v10018
    %10146 = vmatprep.subr.bf16.mxu0 %v10017
    %10147 = vmatpush1.bf16.msra.mxu0 %v10016
    %10148 = vmatprep.subr.bf16.mxu0 %v10015
    %10149 = vmatpush1.bf16.msra.mxu0 %v10014
    %10150 = vmatprep.subr.bf16.mxu0 %v10013
    %10151 = vmatpush1.bf16.msra.mxu0 %v10012
    %10152 = vmatprep.subr.bf16.mxu0 %v10011
    %10153 = vmatpush1.bf16.msra.mxu0 %v10010
    %10154 = vmatprep.subr.bf16.mxu0 %v10041
    %10155 = vmatpush2.bf16.msra.mxu0 %v10040
    %10156 = vmatprep.subr.bf16.mxu0 %v10039
    %10157 = vmatpush2.bf16.msra.mxu0 %v10038
    %10158 = vmatprep.subr.bf16.mxu0 %v10037
    %10159 = vmatpush2.bf16.msra.mxu0 %v10036
    %10160 = vmatprep.subr.bf16.mxu0 %v10035
    %10161 = vmatpush2.bf16.msra.mxu0 %v10034
    %10162 = vmatprep.subr.bf16.mxu0 %v10033
    %10163 = vmatpush2.bf16.msra.mxu0 %v10032
    %10164 = vmatprep.subr.bf16.mxu0 %v10031
    %10165 = vmatpush2.bf16.msra.mxu0 %v10030
    %10166 = vmatprep.subr.bf16.mxu0 %v10029
    %10167 = vmatpush2.bf16.msra.mxu0 %v10028
    %10168 = vmatprep.subr.bf16.mxu0 %v10027
    %10169 = vmatpush2.bf16.msra.mxu0 %v10026
    %10170 = vmatprep.mubr.bf16.mxu0 %v9804
    %10171 = vmatmul.mubr.bf16.gmra.mxu0 %v9803
    %v10172 = vpop.f32.mrf.mxu0
    %v10173 = vadd.f32 %v9811, %v10172
    %v10174 = vpop.f32.mrf.mxu0
    %v10175 = vadd.f32 %v9815, %v10174
    %v10176 = vpop.f32.mrf.mxu0
    %v10177 = vpop.f32.mrf.mxu0
    %10178 = vdwg.mxu0
    %10179 = vmatprep.subr.bf16.mxu0 %v10057
    %10180 = vmatpush1.bf16.msra.mxu0 %v10056
    %10181 = vmatprep.subr.bf16.mxu0 %v10055
    %10182 = vmatpush1.bf16.msra.mxu0 %v10054
    %10183 = vmatprep.subr.bf16.mxu0 %v10053
    %10184 = vmatpush1.bf16.msra.mxu0 %v10052
    %10185 = vmatprep.subr.bf16.mxu0 %v10051
    %10186 = vmatpush1.bf16.msra.mxu0 %v10050
    %10187 = vmatprep.subr.bf16.mxu0 %v10049
    %10188 = vmatpush1.bf16.msra.mxu0 %v10048
    %10189 = vmatprep.subr.bf16.mxu0 %v10047
    %10190 = vmatpush1.bf16.msra.mxu0 %v10046
    %10191 = vmatprep.subr.bf16.mxu0 %v10045
    %10192 = vmatpush1.bf16.msra.mxu0 %v10044
    %10193 = vmatprep.subr.bf16.mxu0 %v10043
    %10194 = vmatpush1.bf16.msra.mxu0 %v10042
    %10195 = vmatprep.subr.bf16.mxu0 %v10073
    %10196 = vmatpush2.bf16.msra.mxu0 %v10072
    %10197 = vmatprep.subr.bf16.mxu0 %v10071
    %10198 = vmatpush2.bf16.msra.mxu0 %v10070
    %10199 = vmatprep.subr.bf16.mxu0 %v10069
    %10200 = vmatpush2.bf16.msra.mxu0 %v10068
    %10201 = vmatprep.subr.bf16.mxu0 %v10067
    %10202 = vmatpush2.bf16.msra.mxu0 %v10066
    %10203 = vmatprep.subr.bf16.mxu0 %v10065
    %10204 = vmatpush2.bf16.msra.mxu0 %v10064
    %10205 = vmatprep.subr.bf16.mxu0 %v10063
    %10206 = vmatpush2.bf16.msra.mxu0 %v10062
    %10207 = vmatprep.subr.bf16.mxu0 %v10061
    %10208 = vmatpush2.bf16.msra.mxu0 %v10060
    %10209 = vmatprep.subr.bf16.mxu0 %v10059
    %10210 = vmatpush2.bf16.msra.mxu0 %v10058
    %10211 = vmatprep.mubr.bf16.mxu0 %v9806
    %10212 = vmatmul.mubr.bf16.gmra.mxu0 %v9805
    %v10213 = vpop.f32.mrf.mxu0
    %v10214 = vadd.f32 %v10173, %v10213
    %v10215 = vpop.f32.mrf.mxu0
    %v10216 = vadd.f32 %v10175, %v10215
    %v10217 = vpop.f32.mrf.mxu0
    %v10218 = vpop.f32.mrf.mxu0
    %10219 = vdwg.mxu0
    %v10220 = vmul.f32 %v9797, %v10214
    %v10221 = vmul.f32 %v9799, %v10216
    %v10222 = vtanh.pop %v10220
    %v10223 = vtanh.pop %v10221
    %v10224 = vpack.c.bf16 %v10222, %v10222
    %v10225 = vpack.c.bf16 %v10223, %v10223
    %v10227 = vlaneseq
    %v10228 = vshrl.u32 %v10227, 7
    %v10229 = vsub.s32 0, %v10228
    %v10230 = vrot.slane %v9254, %v10229
    %v10231 = vlaneseq
    %v10232 = vshrl.u32 %v10231, 7
    %v10233 = vsub.s32 1, %v10232
    %v10234 = vrot.slane %v9254, %v10233
    %v10235 = vlaneseq
    %v10236 = vshrl.u32 %v10235, 7
    %v10237 = vsub.s32 2, %v10236
    %v10238 = vrot.slane %v9254, %v10237
    %v10239 = vlaneseq
    %v10240 = vshrl.u32 %v10239, 7
    %v10241 = vsub.s32 3, %v10240
    %v10242 = vrot.slane %v9254, %v10241
    %v10311 = vunpack.c.l.b16 %v9190
    %v10312 = vunpack.c.h.b16 %v9190
    %v10313 = vunpack.c.l.b16 %v9191
    %v10314 = vunpack.c.h.b16 %v9191
    %v10315 = vunpack.c.l.b16 %v9192
    %v10316 = vunpack.c.h.b16 %v9192
    %v10317 = vunpack.c.l.b16 %v9193
    %v10318 = vunpack.c.h.b16 %v9193
    %v10319 = vunpack.c.l.b16 %v9194
    %v10320 = vunpack.c.h.b16 %v9194
    %v10321 = vunpack.c.l.b16 %v9195
    %v10322 = vunpack.c.h.b16 %v9195
    %v10323 = vunpack.c.l.b16 %v9196
    %v10324 = vunpack.c.h.b16 %v9196
    %v10325 = vunpack.c.l.b16 %v9197
    %v10326 = vunpack.c.h.b16 %v9197
    %v10327 = vunpack.c.l.b16 %v9198
    %v10328 = vunpack.c.h.b16 %v9198
    %v10329 = vunpack.c.l.b16 %v9199
    %v10330 = vunpack.c.h.b16 %v9199
    %v10331 = vunpack.c.l.b16 %v9200
    %v10332 = vunpack.c.h.b16 %v9200
    %v10333 = vunpack.c.l.b16 %v9201
    %v10334 = vunpack.c.h.b16 %v9201
    %v10335 = vunpack.c.l.b16 %v9202
    %v10336 = vunpack.c.h.b16 %v9202
    %v10337 = vunpack.c.l.b16 %v9203
    %v10338 = vunpack.c.h.b16 %v9203
    %v10339 = vunpack.c.l.b16 %v9204
    %v10340 = vunpack.c.h.b16 %v9204
    %v10341 = vunpack.c.l.b16 %v9205
    %v10342 = vunpack.c.h.b16 %v9205
    %v10343 = vunpack.c.l.b16 %v9206
    %v10344 = vunpack.c.h.b16 %v9206
    %v10345 = vunpack.c.l.b16 %v9207
    %v10346 = vunpack.c.h.b16 %v9207
    %v10347 = vunpack.c.l.b16 %v9208
    %v10348 = vunpack.c.h.b16 %v9208
    %v10349 = vunpack.c.l.b16 %v9209
    %v10350 = vunpack.c.h.b16 %v9209
    %v10351 = vunpack.c.l.b16 %v9210
    %v10352 = vunpack.c.h.b16 %v9210
    %v10353 = vunpack.c.l.b16 %v9211
    %v10354 = vunpack.c.h.b16 %v9211
    %v10355 = vunpack.c.l.b16 %v9212
    %v10356 = vunpack.c.h.b16 %v9212
    %v10357 = vunpack.c.l.b16 %v9213
    %v10358 = vunpack.c.h.b16 %v9213
    %v10359 = vunpack.c.l.b16 %v9214
    %v10360 = vunpack.c.h.b16 %v9214
    %v10361 = vunpack.c.l.b16 %v9215
    %v10362 = vunpack.c.h.b16 %v9215
    %v10363 = vunpack.c.l.b16 %v9216
    %v10364 = vunpack.c.h.b16 %v9216
    %v10365 = vunpack.c.l.b16 %v9217
    %v10366 = vunpack.c.h.b16 %v9217
    %v10367 = vunpack.c.l.b16 %v9218
    %v10368 = vunpack.c.h.b16 %v9218
    %v10369 = vunpack.c.l.b16 %v9219
    %v10370 = vunpack.c.h.b16 %v9219
    %v10371 = vunpack.c.l.b16 %v9220
    %v10372 = vunpack.c.h.b16 %v9220
    %v10373 = vunpack.c.l.b16 %v9221
    %v10374 = vunpack.c.h.b16 %v9221
    %v10375 = vunpack.c.l.b16 %v9222
    %v10376 = vunpack.c.h.b16 %v9222
    %v10377 = vunpack.c.l.b16 %v9223
    %v10378 = vunpack.c.h.b16 %v9223
    %v10379 = vunpack.c.l.b16 %v9224
    %v10380 = vunpack.c.h.b16 %v9224
    %v10381 = vunpack.c.l.b16 %v9225
    %v10382 = vunpack.c.h.b16 %v9225
    %v10383 = vunpack.c.l.b16 %v9226
    %v10384 = vunpack.c.h.b16 %v9226
    %v10385 = vunpack.c.l.b16 %v9227
    %v10386 = vunpack.c.h.b16 %v9227
    %v10387 = vunpack.c.l.b16 %v9228
    %v10388 = vunpack.c.h.b16 %v9228
    %v10389 = vunpack.c.l.b16 %v9229
    %v10390 = vunpack.c.h.b16 %v9229
    %v10391 = vunpack.c.l.b16 %v9230
    %v10392 = vunpack.c.h.b16 %v9230
    %v10393 = vunpack.c.l.b16 %v9231
    %v10394 = vunpack.c.h.b16 %v9231
    %v10395 = vunpack.c.l.b16 %v9232
    %v10396 = vunpack.c.h.b16 %v9232
    %v10397 = vunpack.c.l.b16 %v9233
    %v10398 = vunpack.c.h.b16 %v9233
    %v10399 = vunpack.c.l.b16 %v9234
    %v10400 = vunpack.c.h.b16 %v9234
    %v10401 = vunpack.c.l.b16 %v9235
    %v10402 = vunpack.c.h.b16 %v9235
    %v10403 = vunpack.c.l.b16 %v9236
    %v10404 = vunpack.c.h.b16 %v9236
    %v10405 = vunpack.c.l.b16 %v9237
    %v10406 = vunpack.c.h.b16 %v9237
    %v10407 = vunpack.c.l.b16 %v9238
    %v10408 = vunpack.c.h.b16 %v9238
    %v10409 = vunpack.c.l.b16 %v9239
    %v10410 = vunpack.c.h.b16 %v9239
    %v10411 = vunpack.c.l.b16 %v9240
    %v10412 = vunpack.c.h.b16 %v9240
    %v10413 = vunpack.c.l.b16 %v9241
    %v10414 = vunpack.c.h.b16 %v9241
    %v10415 = vunpack.c.l.b16 %v9242
    %v10416 = vunpack.c.h.b16 %v9242
    %v10417 = vunpack.c.l.b16 %v9243
    %v10418 = vunpack.c.h.b16 %v9243
    %v10419 = vunpack.c.l.b16 %v9244
    %v10420 = vunpack.c.h.b16 %v9244
    %v10421 = vunpack.c.l.b16 %v9245
    %v10422 = vunpack.c.h.b16 %v9245
    %v10423 = vunpack.c.l.b16 %v9246
    %v10424 = vunpack.c.h.b16 %v9246
    %v10425 = vunpack.c.l.b16 %v9247
    %v10426 = vunpack.c.h.b16 %v9247
    %v10427 = vunpack.c.l.b16 %v9248
    %v10428 = vunpack.c.h.b16 %v9248
    %v10429 = vunpack.c.l.b16 %v9249
    %v10430 = vunpack.c.h.b16 %v9249
    %v10431 = vunpack.c.l.b16 %v9250
    %v10432 = vunpack.c.h.b16 %v9250
    %v10433 = vunpack.c.l.b16 %v9251
    %v10434 = vunpack.c.h.b16 %v9251
    %v10435 = vunpack.c.l.b16 %v9252
    %v10436 = vunpack.c.h.b16 %v9252
    %v10437 = vunpack.c.l.b16 %v9253
    %v10438 = vunpack.c.h.b16 %v9253
    %v10439 = vpack.c.b16 %v10315, %v10311
    %v10440 = vpack.c.b16 %v10316, %v10312
    %v10441 = vpack.c.b16 %v10317, %v10313
    %v10442 = vpack.c.b16 %v10318, %v10314
    %v10443 = vpack.c.b16 %v10323, %v10319
    %v10444 = vpack.c.b16 %v10324, %v10320
    %v10445 = vpack.c.b16 %v10325, %v10321
    %v10446 = vpack.c.b16 %v10326, %v10322
    %v10447 = vpack.c.b16 %v10331, %v10327
    %v10448 = vpack.c.b16 %v10332, %v10328
    %v10449 = vpack.c.b16 %v10333, %v10329
    %v10450 = vpack.c.b16 %v10334, %v10330
    %v10451 = vpack.c.b16 %v10339, %v10335
    %v10452 = vpack.c.b16 %v10340, %v10336
    %v10453 = vpack.c.b16 %v10341, %v10337
    %v10454 = vpack.c.b16 %v10342, %v10338
    %v10455 = vpack.c.b16 %v10347, %v10343
    %v10456 = vpack.c.b16 %v10348, %v10344
    %v10457 = vpack.c.b16 %v10349, %v10345
    %v10458 = vpack.c.b16 %v10350, %v10346
    %v10459 = vpack.c.b16 %v10355, %v10351
    %v10460 = vpack.c.b16 %v10356, %v10352
    %v10461 = vpack.c.b16 %v10357, %v10353
    %v10462 = vpack.c.b16 %v10358, %v10354
    %v10463 = vpack.c.b16 %v10363, %v10359
    %v10464 = vpack.c.b16 %v10364, %v10360
    %v10465 = vpack.c.b16 %v10365, %v10361
    %v10466 = vpack.c.b16 %v10366, %v10362
    %v10467 = vpack.c.b16 %v10371, %v10367
    %v10468 = vpack.c.b16 %v10372, %v10368
    %v10469 = vpack.c.b16 %v10373, %v10369
    %v10470 = vpack.c.b16 %v10374, %v10370
    %v10471 = vpack.c.b16 %v10379, %v10375
    %v10472 = vpack.c.b16 %v10380, %v10376
    %v10473 = vpack.c.b16 %v10381, %v10377
    %v10474 = vpack.c.b16 %v10382, %v10378
    %v10475 = vpack.c.b16 %v10387, %v10383
    %v10476 = vpack.c.b16 %v10388, %v10384
    %v10477 = vpack.c.b16 %v10389, %v10385
    %v10478 = vpack.c.b16 %v10390, %v10386
    %v10479 = vpack.c.b16 %v10395, %v10391
    %v10480 = vpack.c.b16 %v10396, %v10392
    %v10481 = vpack.c.b16 %v10397, %v10393
    %v10482 = vpack.c.b16 %v10398, %v10394
    %v10483 = vpack.c.b16 %v10403, %v10399
    %v10484 = vpack.c.b16 %v10404, %v10400
    %v10485 = vpack.c.b16 %v10405, %v10401
    %v10486 = vpack.c.b16 %v10406, %v10402
    %v10487 = vpack.c.b16 %v10411, %v10407
    %v10488 = vpack.c.b16 %v10412, %v10408
    %v10489 = vpack.c.b16 %v10413, %v10409
    %v10490 = vpack.c.b16 %v10414, %v10410
    %v10491 = vpack.c.b16 %v10419, %v10415
    %v10492 = vpack.c.b16 %v10420, %v10416
    %v10493 = vpack.c.b16 %v10421, %v10417
    %v10494 = vpack.c.b16 %v10422, %v10418
    %v10495 = vpack.c.b16 %v10427, %v10423
    %v10496 = vpack.c.b16 %v10428, %v10424
    %v10497 = vpack.c.b16 %v10429, %v10425
    %v10498 = vpack.c.b16 %v10430, %v10426
    %v10499 = vpack.c.b16 %v10435, %v10431
    %v10500 = vpack.c.b16 %v10436, %v10432
    %v10501 = vpack.c.b16 %v10437, %v10433
    %v10502 = vpack.c.b16 %v10438, %v10434
    %10567 = vmatprep.subr.bf16.mxu0 %v10468
    %10568 = vmatpush1.bf16.msra.mxu0 %v10467
    %10569 = vmatprep.subr.bf16.mxu0 %v10464
    %10570 = vmatpush1.bf16.msra.mxu0 %v10463
    %10571 = vmatprep.subr.bf16.mxu0 %v10460
    %10572 = vmatpush1.bf16.msra.mxu0 %v10459
    %10573 = vmatprep.subr.bf16.mxu0 %v10456
    %10574 = vmatpush1.bf16.msra.mxu0 %v10455
    %10575 = vmatprep.subr.bf16.mxu0 %v10452
    %10576 = vmatpush1.bf16.msra.mxu0 %v10451
    %10577 = vmatprep.subr.bf16.mxu0 %v10448
    %10578 = vmatpush1.bf16.msra.mxu0 %v10447
    %10579 = vmatprep.subr.bf16.mxu0 %v10444
    %10580 = vmatpush1.bf16.msra.mxu0 %v10443
    %10581 = vmatprep.subr.bf16.mxu0 %v10440
    %10582 = vmatpush1.bf16.msra.mxu0 %v10439
    %10583 = vmatprep.subr.bf16.mxu0 %v10500
    %10584 = vmatpush2.bf16.msra.mxu0 %v10499
    %10585 = vmatprep.subr.bf16.mxu0 %v10496
    %10586 = vmatpush2.bf16.msra.mxu0 %v10495
    %10587 = vmatprep.subr.bf16.mxu0 %v10492
    %10588 = vmatpush2.bf16.msra.mxu0 %v10491
    %10589 = vmatprep.subr.bf16.mxu0 %v10488
    %10590 = vmatpush2.bf16.msra.mxu0 %v10487
    %10591 = vmatprep.subr.bf16.mxu0 %v10484
    %10592 = vmatpush2.bf16.msra.mxu0 %v10483
    %10593 = vmatprep.subr.bf16.mxu0 %v10480
    %10594 = vmatpush2.bf16.msra.mxu0 %v10479
    %10595 = vmatprep.subr.bf16.mxu0 %v10476
    %10596 = vmatpush2.bf16.msra.mxu0 %v10475
    %10597 = vmatprep.subr.bf16.mxu0 %v10472
    %10598 = vmatpush2.bf16.msra.mxu0 %v10471
    %10599 = vmatprep.mubr.bf16.mxu0 %v10225
    %10600 = vmatmul.mubr.bf16.gmra.mxu0 %v10224
    %v10601 = vpop.f32.mrf.mxu0
    %v10602 = vadd.f32 %v10230, %v10601
    %v10603 = vpop.f32.mrf.mxu0
    %v10604 = vadd.f32 %v10234, %v10603
    %v10605 = vpop.f32.mrf.mxu0
    %v10606 = vpop.f32.mrf.mxu0
    %10607 = vdwg.mxu0
    %10608 = vmatprep.subr.bf16.mxu0 %v10470
    %10609 = vmatpush1.bf16.msra.mxu0 %v10469
    %10610 = vmatprep.subr.bf16.mxu0 %v10466
    %10611 = vmatpush1.bf16.msra.mxu0 %v10465
    %10612 = vmatprep.subr.bf16.mxu0 %v10462
    %10613 = vmatpush1.bf16.msra.mxu0 %v10461
    %10614 = vmatprep.subr.bf16.mxu0 %v10458
    %10615 = vmatpush1.bf16.msra.mxu0 %v10457
    %10616 = vmatprep.subr.bf16.mxu0 %v10454
    %10617 = vmatpush1.bf16.msra.mxu0 %v10453
    %10618 = vmatprep.subr.bf16.mxu0 %v10450
    %10619 = vmatpush1.bf16.msra.mxu0 %v10449
    %10620 = vmatprep.subr.bf16.mxu0 %v10446
    %10621 = vmatpush1.bf16.msra.mxu0 %v10445
    %10622 = vmatprep.subr.bf16.mxu0 %v10442
    %10623 = vmatpush1.bf16.msra.mxu0 %v10441
    %10624 = vmatprep.subr.bf16.mxu0 %v10502
    %10625 = vmatpush2.bf16.msra.mxu0 %v10501
    %10626 = vmatprep.subr.bf16.mxu0 %v10498
    %10627 = vmatpush2.bf16.msra.mxu0 %v10497
    %10628 = vmatprep.subr.bf16.mxu0 %v10494
    %10629 = vmatpush2.bf16.msra.mxu0 %v10493
    %10630 = vmatprep.subr.bf16.mxu0 %v10490
    %10631 = vmatpush2.bf16.msra.mxu0 %v10489
    %10632 = vmatprep.subr.bf16.mxu0 %v10486
    %10633 = vmatpush2.bf16.msra.mxu0 %v10485
    %10634 = vmatprep.subr.bf16.mxu0 %v10482
    %10635 = vmatpush2.bf16.msra.mxu0 %v10481
    %10636 = vmatprep.subr.bf16.mxu0 %v10478
    %10637 = vmatpush2.bf16.msra.mxu0 %v10477
    %10638 = vmatprep.subr.bf16.mxu0 %v10474
    %10639 = vmatpush2.bf16.msra.mxu0 %v10473
    %10640 = vmatprep.mubr.bf16.mxu0 %v10225
    %10641 = vmatmul.mubr.bf16.gmra.mxu0 %v10224
    %v10642 = vpop.f32.mrf.mxu0
    %v10643 = vadd.f32 %v10238, %v10642
    %v10644 = vpop.f32.mrf.mxu0
    %v10645 = vadd.f32 %v10242, %v10644
    %v10646 = vpop.f32.mrf.mxu0
    %v10647 = vpop.f32.mrf.mxu0
    %10648 = vdwg.mxu0
    %v10649 = vadd.f32 %v10602, %v10604
    %v10650 = vadd.f32 %v10649, %v10643
    %v10651 = vadd.f32 %v10650, %v10645
    %10652 = vadd.xlane.f32.xlu0 %v10651
    %v10653 = vpop.xlane.xlu0 %10652
    %v10654 = vmul.f32 %v10653, %v2848
    %v10655 = vsub.f32 %v10602, %v10654
    %v10656 = vsub.f32 %v10604, %v10654
    %v10657 = vsub.f32 %v10643, %v10654
    %v10658 = vsub.f32 %v10645, %v10654
    %v10659 = vmul.f32 %v10655, %v10655
    %v10660 = vmul.f32 %v10656, %v10656
    %v10661 = vmul.f32 %v10657, %v10657
    %v10662 = vmul.f32 %v10658, %v10658
    %v10663 = vadd.f32 %v10659, %v10660
    %v10664 = vadd.f32 %v10663, %v10661
    %v10665 = vadd.f32 %v10664, %v10662
    %10666 = vadd.xlane.f32.xlu0 %v10665
    %v10667 = vpop.xlane.xlu0 %10666
    %v10668 = vmul.f32 %v10667, %v2848
    %v10669 = vadd.f32 %v10668, 1e-05
    %v10670 = vrsqrt.pop %v10669
    %v10671 = vmul.f32 %v10655, %v10670
    %v10672 = vmul.f32 %v10656, %v10670
    %v10673 = vmul.f32 %v10657, %v10670
    %v10674 = vmul.f32 %v10658, %v10670
    %v10676 = vlaneseq
    %v10677 = vshrl.u32 %v10676, 7
    %v10678 = vsub.s32 0, %v10677
    %v10679 = vrot.slane %v9255, %v10678
    %v10680 = vlaneseq
    %v10681 = vshrl.u32 %v10680, 7
    %v10682 = vsub.s32 1, %v10681
    %v10683 = vrot.slane %v9255, %v10682
    %v10684 = vlaneseq
    %v10685 = vshrl.u32 %v10684, 7
    %v10686 = vsub.s32 2, %v10685
    %v10687 = vrot.slane %v9255, %v10686
    %v10688 = vlaneseq
    %v10689 = vshrl.u32 %v10688, 7
    %v10690 = vsub.s32 3, %v10689
    %v10691 = vrot.slane %v9255, %v10690
    %v10696 = vmul.f32 %v10671, %v10679
    %v10697 = vmul.f32 %v10672, %v10683
    %v10698 = vmul.f32 %v10673, %v10687
    %v10699 = vmul.f32 %v10674, %v10691
    %v10701 = vlaneseq
    %v10702 = vshrl.u32 %v10701, 7
    %v10703 = vsub.s32 0, %v10702
    %v10704 = vrot.slane %v9256, %v10703
    %v10705 = vlaneseq
    %v10706 = vshrl.u32 %v10705, 7
    %v10707 = vsub.s32 1, %v10706
    %v10708 = vrot.slane %v9256, %v10707
    %v10709 = vlaneseq
    %v10710 = vshrl.u32 %v10709, 7
    %v10711 = vsub.s32 2, %v10710
    %v10712 = vrot.slane %v9256, %v10711
    %v10713 = vlaneseq
    %v10714 = vshrl.u32 %v10713, 7
    %v10715 = vsub.s32 3, %v10714
    %v10716 = vrot.slane %v9256, %v10715
    %v10721 = vadd.f32 %v10696, %v10704
    %v10722 = vadd.f32 %v10697, %v10708
    %v10723 = vadd.f32 %v10698, %v10712
    %v10724 = vadd.f32 %v10699, %v10716
    %v10725 = vmax.f32 %v10721, 0.0
    %v10726 = vmax.f32 %v10722, 0.0
    %v10727 = vmax.f32 %v10723, 0.0
    %v10728 = vmax.f32 %v10724, 0.0
    %v10729 = vpack.c.bf16 %v10725, %v10725
    %v10730 = vpack.c.bf16 %v10726, %v10726
    %v10731 = vpack.c.bf16 %v10727, %v10727
    %v10732 = vpack.c.bf16 %v10728, %v10728
    %v10734 = vlaneseq
    %v10735 = vshrl.u32 %v10734, 7
    %v10736 = vsub.s32 0, %v10735
    %v10737 = vrot.slane %v9385, %v10736
    %v10738 = vlaneseq
    %v10739 = vshrl.u32 %v10738, 7
    %v10740 = vsub.s32 1, %v10739
    %v10741 = vrot.slane %v9385, %v10740
    %v10742 = vlaneseq
    %v10743 = vshrl.u32 %v10742, 7
    %v10744 = vsub.s32 2, %v10743
    %v10745 = vrot.slane %v9385, %v10744
    %v10746 = vlaneseq
    %v10747 = vshrl.u32 %v10746, 7
    %v10748 = vsub.s32 3, %v10747
    %v10749 = vrot.slane %v9385, %v10748
    %v10882 = vunpack.c.l.b16 %v9257
    %v10883 = vunpack.c.h.b16 %v9257
    %v10884 = vunpack.c.l.b16 %v9258
    %v10885 = vunpack.c.h.b16 %v9258
    %v10886 = vunpack.c.l.b16 %v9259
    %v10887 = vunpack.c.h.b16 %v9259
    %v10888 = vunpack.c.l.b16 %v9260
    %v10889 = vunpack.c.h.b16 %v9260
    %v10890 = vunpack.c.l.b16 %v9261
    %v10891 = vunpack.c.h.b16 %v9261
    %v10892 = vunpack.c.l.b16 %v9262
    %v10893 = vunpack.c.h.b16 %v9262
    %v10894 = vunpack.c.l.b16 %v9263
    %v10895 = vunpack.c.h.b16 %v9263
    %v10896 = vunpack.c.l.b16 %v9264
    %v10897 = vunpack.c.h.b16 %v9264
    %v10898 = vunpack.c.l.b16 %v9265
    %v10899 = vunpack.c.h.b16 %v9265
    %v10900 = vunpack.c.l.b16 %v9266
    %v10901 = vunpack.c.h.b16 %v9266
    %v10902 = vunpack.c.l.b16 %v9267
    %v10903 = vunpack.c.h.b16 %v9267
    %v10904 = vunpack.c.l.b16 %v9268
    %v10905 = vunpack.c.h.b16 %v9268
    %v10906 = vunpack.c.l.b16 %v9269
    %v10907 = vunpack.c.h.b16 %v9269
    %v10908 = vunpack.c.l.b16 %v9270
    %v10909 = vunpack.c.h.b16 %v9270
    %v10910 = vunpack.c.l.b16 %v9271
    %v10911 = vunpack.c.h.b16 %v9271
    %v10912 = vunpack.c.l.b16 %v9272
    %v10913 = vunpack.c.h.b16 %v9272
    %v10914 = vunpack.c.l.b16 %v9273
    %v10915 = vunpack.c.h.b16 %v9273
    %v10916 = vunpack.c.l.b16 %v9274
    %v10917 = vunpack.c.h.b16 %v9274
    %v10918 = vunpack.c.l.b16 %v9275
    %v10919 = vunpack.c.h.b16 %v9275
    %v10920 = vunpack.c.l.b16 %v9276
    %v10921 = vunpack.c.h.b16 %v9276
    %v10922 = vunpack.c.l.b16 %v9277
    %v10923 = vunpack.c.h.b16 %v9277
    %v10924 = vunpack.c.l.b16 %v9278
    %v10925 = vunpack.c.h.b16 %v9278
    %v10926 = vunpack.c.l.b16 %v9279
    %v10927 = vunpack.c.h.b16 %v9279
    %v10928 = vunpack.c.l.b16 %v9280
    %v10929 = vunpack.c.h.b16 %v9280
    %v10930 = vunpack.c.l.b16 %v9281
    %v10931 = vunpack.c.h.b16 %v9281
    %v10932 = vunpack.c.l.b16 %v9282
    %v10933 = vunpack.c.h.b16 %v9282
    %v10934 = vunpack.c.l.b16 %v9283
    %v10935 = vunpack.c.h.b16 %v9283
    %v10936 = vunpack.c.l.b16 %v9284
    %v10937 = vunpack.c.h.b16 %v9284
    %v10938 = vunpack.c.l.b16 %v9285
    %v10939 = vunpack.c.h.b16 %v9285
    %v10940 = vunpack.c.l.b16 %v9286
    %v10941 = vunpack.c.h.b16 %v9286
    %v10942 = vunpack.c.l.b16 %v9287
    %v10943 = vunpack.c.h.b16 %v9287
    %v10944 = vunpack.c.l.b16 %v9288
    %v10945 = vunpack.c.h.b16 %v9288
    %v10946 = vunpack.c.l.b16 %v9289
    %v10947 = vunpack.c.h.b16 %v9289
    %v10948 = vunpack.c.l.b16 %v9290
    %v10949 = vunpack.c.h.b16 %v9290
    %v10950 = vunpack.c.l.b16 %v9291
    %v10951 = vunpack.c.h.b16 %v9291
    %v10952 = vunpack.c.l.b16 %v9292
    %v10953 = vunpack.c.h.b16 %v9292
    %v10954 = vunpack.c.l.b16 %v9293
    %v10955 = vunpack.c.h.b16 %v9293
    %v10956 = vunpack.c.l.b16 %v9294
    %v10957 = vunpack.c.h.b16 %v9294
    %v10958 = vunpack.c.l.b16 %v9295
    %v10959 = vunpack.c.h.b16 %v9295
    %v10960 = vunpack.c.l.b16 %v9296
    %v10961 = vunpack.c.h.b16 %v9296
    %v10962 = vunpack.c.l.b16 %v9297
    %v10963 = vunpack.c.h.b16 %v9297
    %v10964 = vunpack.c.l.b16 %v9298
    %v10965 = vunpack.c.h.b16 %v9298
    %v10966 = vunpack.c.l.b16 %v9299
    %v10967 = vunpack.c.h.b16 %v9299
    %v10968 = vunpack.c.l.b16 %v9300
    %v10969 = vunpack.c.h.b16 %v9300
    %v10970 = vunpack.c.l.b16 %v9301
    %v10971 = vunpack.c.h.b16 %v9301
    %v10972 = vunpack.c.l.b16 %v9302
    %v10973 = vunpack.c.h.b16 %v9302
    %v10974 = vunpack.c.l.b16 %v9303
    %v10975 = vunpack.c.h.b16 %v9303
    %v10976 = vunpack.c.l.b16 %v9304
    %v10977 = vunpack.c.h.b16 %v9304
    %v10978 = vunpack.c.l.b16 %v9305
    %v10979 = vunpack.c.h.b16 %v9305
    %v10980 = vunpack.c.l.b16 %v9306
    %v10981 = vunpack.c.h.b16 %v9306
    %v10982 = vunpack.c.l.b16 %v9307
    %v10983 = vunpack.c.h.b16 %v9307
    %v10984 = vunpack.c.l.b16 %v9308
    %v10985 = vunpack.c.h.b16 %v9308
    %v10986 = vunpack.c.l.b16 %v9309
    %v10987 = vunpack.c.h.b16 %v9309
    %v10988 = vunpack.c.l.b16 %v9310
    %v10989 = vunpack.c.h.b16 %v9310
    %v10990 = vunpack.c.l.b16 %v9311
    %v10991 = vunpack.c.h.b16 %v9311
    %v10992 = vunpack.c.l.b16 %v9312
    %v10993 = vunpack.c.h.b16 %v9312
    %v10994 = vunpack.c.l.b16 %v9313
    %v10995 = vunpack.c.h.b16 %v9313
    %v10996 = vunpack.c.l.b16 %v9314
    %v10997 = vunpack.c.h.b16 %v9314
    %v10998 = vunpack.c.l.b16 %v9315
    %v10999 = vunpack.c.h.b16 %v9315
    %v11000 = vunpack.c.l.b16 %v9316
    %v11001 = vunpack.c.h.b16 %v9316
    %v11002 = vunpack.c.l.b16 %v9317
    %v11003 = vunpack.c.h.b16 %v9317
    %v11004 = vunpack.c.l.b16 %v9318
    %v11005 = vunpack.c.h.b16 %v9318
    %v11006 = vunpack.c.l.b16 %v9319
    %v11007 = vunpack.c.h.b16 %v9319
    %v11008 = vunpack.c.l.b16 %v9320
    %v11009 = vunpack.c.h.b16 %v9320
    %v11010 = vunpack.c.l.b16 %v9321
    %v11011 = vunpack.c.h.b16 %v9321
    %v11012 = vunpack.c.l.b16 %v9322
    %v11013 = vunpack.c.h.b16 %v9322
    %v11014 = vunpack.c.l.b16 %v9323
    %v11015 = vunpack.c.h.b16 %v9323
    %v11016 = vunpack.c.l.b16 %v9324
    %v11017 = vunpack.c.h.b16 %v9324
    %v11018 = vunpack.c.l.b16 %v9325
    %v11019 = vunpack.c.h.b16 %v9325
    %v11020 = vunpack.c.l.b16 %v9326
    %v11021 = vunpack.c.h.b16 %v9326
    %v11022 = vunpack.c.l.b16 %v9327
    %v11023 = vunpack.c.h.b16 %v9327
    %v11024 = vunpack.c.l.b16 %v9328
    %v11025 = vunpack.c.h.b16 %v9328
    %v11026 = vunpack.c.l.b16 %v9329
    %v11027 = vunpack.c.h.b16 %v9329
    %v11028 = vunpack.c.l.b16 %v9330
    %v11029 = vunpack.c.h.b16 %v9330
    %v11030 = vunpack.c.l.b16 %v9331
    %v11031 = vunpack.c.h.b16 %v9331
    %v11032 = vunpack.c.l.b16 %v9332
    %v11033 = vunpack.c.h.b16 %v9332
    %v11034 = vunpack.c.l.b16 %v9333
    %v11035 = vunpack.c.h.b16 %v9333
    %v11036 = vunpack.c.l.b16 %v9334
    %v11037 = vunpack.c.h.b16 %v9334
    %v11038 = vunpack.c.l.b16 %v9335
    %v11039 = vunpack.c.h.b16 %v9335
    %v11040 = vunpack.c.l.b16 %v9336
    %v11041 = vunpack.c.h.b16 %v9336
    %v11042 = vunpack.c.l.b16 %v9337
    %v11043 = vunpack.c.h.b16 %v9337
    %v11044 = vunpack.c.l.b16 %v9338
    %v11045 = vunpack.c.h.b16 %v9338
    %v11046 = vunpack.c.l.b16 %v9339
    %v11047 = vunpack.c.h.b16 %v9339
    %v11048 = vunpack.c.l.b16 %v9340
    %v11049 = vunpack.c.h.b16 %v9340
    %v11050 = vunpack.c.l.b16 %v9341
    %v11051 = vunpack.c.h.b16 %v9341
    %v11052 = vunpack.c.l.b16 %v9342
    %v11053 = vunpack.c.h.b16 %v9342
    %v11054 = vunpack.c.l.b16 %v9343
    %v11055 = vunpack.c.h.b16 %v9343
    %v11056 = vunpack.c.l.b16 %v9344
    %v11057 = vunpack.c.h.b16 %v9344
    %v11058 = vunpack.c.l.b16 %v9345
    %v11059 = vunpack.c.h.b16 %v9345
    %v11060 = vunpack.c.l.b16 %v9346
    %v11061 = vunpack.c.h.b16 %v9346
    %v11062 = vunpack.c.l.b16 %v9347
    %v11063 = vunpack.c.h.b16 %v9347
    %v11064 = vunpack.c.l.b16 %v9348
    %v11065 = vunpack.c.h.b16 %v9348
    %v11066 = vunpack.c.l.b16 %v9349
    %v11067 = vunpack.c.h.b16 %v9349
    %v11068 = vunpack.c.l.b16 %v9350
    %v11069 = vunpack.c.h.b16 %v9350
    %v11070 = vunpack.c.l.b16 %v9351
    %v11071 = vunpack.c.h.b16 %v9351
    %v11072 = vunpack.c.l.b16 %v9352
    %v11073 = vunpack.c.h.b16 %v9352
    %v11074 = vunpack.c.l.b16 %v9353
    %v11075 = vunpack.c.h.b16 %v9353
    %v11076 = vunpack.c.l.b16 %v9354
    %v11077 = vunpack.c.h.b16 %v9354
    %v11078 = vunpack.c.l.b16 %v9355
    %v11079 = vunpack.c.h.b16 %v9355
    %v11080 = vunpack.c.l.b16 %v9356
    %v11081 = vunpack.c.h.b16 %v9356
    %v11082 = vunpack.c.l.b16 %v9357
    %v11083 = vunpack.c.h.b16 %v9357
    %v11084 = vunpack.c.l.b16 %v9358
    %v11085 = vunpack.c.h.b16 %v9358
    %v11086 = vunpack.c.l.b16 %v9359
    %v11087 = vunpack.c.h.b16 %v9359
    %v11088 = vunpack.c.l.b16 %v9360
    %v11089 = vunpack.c.h.b16 %v9360
    %v11090 = vunpack.c.l.b16 %v9361
    %v11091 = vunpack.c.h.b16 %v9361
    %v11092 = vunpack.c.l.b16 %v9362
    %v11093 = vunpack.c.h.b16 %v9362
    %v11094 = vunpack.c.l.b16 %v9363
    %v11095 = vunpack.c.h.b16 %v9363
    %v11096 = vunpack.c.l.b16 %v9364
    %v11097 = vunpack.c.h.b16 %v9364
    %v11098 = vunpack.c.l.b16 %v9365
    %v11099 = vunpack.c.h.b16 %v9365
    %v11100 = vunpack.c.l.b16 %v9366
    %v11101 = vunpack.c.h.b16 %v9366
    %v11102 = vunpack.c.l.b16 %v9367
    %v11103 = vunpack.c.h.b16 %v9367
    %v11104 = vunpack.c.l.b16 %v9368
    %v11105 = vunpack.c.h.b16 %v9368
    %v11106 = vunpack.c.l.b16 %v9369
    %v11107 = vunpack.c.h.b16 %v9369
    %v11108 = vunpack.c.l.b16 %v9370
    %v11109 = vunpack.c.h.b16 %v9370
    %v11110 = vunpack.c.l.b16 %v9371
    %v11111 = vunpack.c.h.b16 %v9371
    %v11112 = vunpack.c.l.b16 %v9372
    %v11113 = vunpack.c.h.b16 %v9372
    %v11114 = vunpack.c.l.b16 %v9373
    %v11115 = vunpack.c.h.b16 %v9373
    %v11116 = vunpack.c.l.b16 %v9374
    %v11117 = vunpack.c.h.b16 %v9374
    %v11118 = vunpack.c.l.b16 %v9375
    %v11119 = vunpack.c.h.b16 %v9375
    %v11120 = vunpack.c.l.b16 %v9376
    %v11121 = vunpack.c.h.b16 %v9376
    %v11122 = vunpack.c.l.b16 %v9377
    %v11123 = vunpack.c.h.b16 %v9377
    %v11124 = vunpack.c.l.b16 %v9378
    %v11125 = vunpack.c.h.b16 %v9378
    %v11126 = vunpack.c.l.b16 %v9379
    %v11127 = vunpack.c.h.b16 %v9379
    %v11128 = vunpack.c.l.b16 %v9380
    %v11129 = vunpack.c.h.b16 %v9380
    %v11130 = vunpack.c.l.b16 %v9381
    %v11131 = vunpack.c.h.b16 %v9381
    %v11132 = vunpack.c.l.b16 %v9382
    %v11133 = vunpack.c.h.b16 %v9382
    %v11134 = vunpack.c.l.b16 %v9383
    %v11135 = vunpack.c.h.b16 %v9383
    %v11136 = vunpack.c.l.b16 %v9384
    %v11137 = vunpack.c.h.b16 %v9384
    %v11138 = vpack.c.b16 %v10886, %v10882
    %v11139 = vpack.c.b16 %v10887, %v10883
    %v11140 = vpack.c.b16 %v10888, %v10884
    %v11141 = vpack.c.b16 %v10889, %v10885
    %v11142 = vpack.c.b16 %v10894, %v10890
    %v11143 = vpack.c.b16 %v10895, %v10891
    %v11144 = vpack.c.b16 %v10896, %v10892
    %v11145 = vpack.c.b16 %v10897, %v10893
    %v11146 = vpack.c.b16 %v10902, %v10898
    %v11147 = vpack.c.b16 %v10903, %v10899
    %v11148 = vpack.c.b16 %v10904, %v10900
    %v11149 = vpack.c.b16 %v10905, %v10901
    %v11150 = vpack.c.b16 %v10910, %v10906
    %v11151 = vpack.c.b16 %v10911, %v10907
    %v11152 = vpack.c.b16 %v10912, %v10908
    %v11153 = vpack.c.b16 %v10913, %v10909
    %v11154 = vpack.c.b16 %v10918, %v10914
    %v11155 = vpack.c.b16 %v10919, %v10915
    %v11156 = vpack.c.b16 %v10920, %v10916
    %v11157 = vpack.c.b16 %v10921, %v10917
    %v11158 = vpack.c.b16 %v10926, %v10922
    %v11159 = vpack.c.b16 %v10927, %v10923
    %v11160 = vpack.c.b16 %v10928, %v10924
    %v11161 = vpack.c.b16 %v10929, %v10925
    %v11162 = vpack.c.b16 %v10934, %v10930
    %v11163 = vpack.c.b16 %v10935, %v10931
    %v11164 = vpack.c.b16 %v10936, %v10932
    %v11165 = vpack.c.b16 %v10937, %v10933
    %v11166 = vpack.c.b16 %v10942, %v10938
    %v11167 = vpack.c.b16 %v10943, %v10939
    %v11168 = vpack.c.b16 %v10944, %v10940
    %v11169 = vpack.c.b16 %v10945, %v10941
    %v11170 = vpack.c.b16 %v10950, %v10946
    %v11171 = vpack.c.b16 %v10951, %v10947
    %v11172 = vpack.c.b16 %v10952, %v10948
    %v11173 = vpack.c.b16 %v10953, %v10949
    %v11174 = vpack.c.b16 %v10958, %v10954
    %v11175 = vpack.c.b16 %v10959, %v10955
    %v11176 = vpack.c.b16 %v10960, %v10956
    %v11177 = vpack.c.b16 %v10961, %v10957
    %v11178 = vpack.c.b16 %v10966, %v10962
    %v11179 = vpack.c.b16 %v10967, %v10963
    %v11180 = vpack.c.b16 %v10968, %v10964
    %v11181 = vpack.c.b16 %v10969, %v10965
    %v11182 = vpack.c.b16 %v10974, %v10970
    %v11183 = vpack.c.b16 %v10975, %v10971
    %v11184 = vpack.c.b16 %v10976, %v10972
    %v11185 = vpack.c.b16 %v10977, %v10973
    %v11186 = vpack.c.b16 %v10982, %v10978
    %v11187 = vpack.c.b16 %v10983, %v10979
    %v11188 = vpack.c.b16 %v10984, %v10980
    %v11189 = vpack.c.b16 %v10985, %v10981
    %v11190 = vpack.c.b16 %v10990, %v10986
    %v11191 = vpack.c.b16 %v10991, %v10987
    %v11192 = vpack.c.b16 %v10992, %v10988
    %v11193 = vpack.c.b16 %v10993, %v10989
    %v11194 = vpack.c.b16 %v10998, %v10994
    %v11195 = vpack.c.b16 %v10999, %v10995
    %v11196 = vpack.c.b16 %v11000, %v10996
    %v11197 = vpack.c.b16 %v11001, %v10997
    %v11198 = vpack.c.b16 %v11006, %v11002
    %v11199 = vpack.c.b16 %v11007, %v11003
    %v11200 = vpack.c.b16 %v11008, %v11004
    %v11201 = vpack.c.b16 %v11009, %v11005
    %v11202 = vpack.c.b16 %v11014, %v11010
    %v11203 = vpack.c.b16 %v11015, %v11011
    %v11204 = vpack.c.b16 %v11016, %v11012
    %v11205 = vpack.c.b16 %v11017, %v11013
    %v11206 = vpack.c.b16 %v11022, %v11018
    %v11207 = vpack.c.b16 %v11023, %v11019
    %v11208 = vpack.c.b16 %v11024, %v11020
    %v11209 = vpack.c.b16 %v11025, %v11021
    %v11210 = vpack.c.b16 %v11030, %v11026
    %v11211 = vpack.c.b16 %v11031, %v11027
    %v11212 = vpack.c.b16 %v11032, %v11028
    %v11213 = vpack.c.b16 %v11033, %v11029
    %v11214 = vpack.c.b16 %v11038, %v11034
    %v11215 = vpack.c.b16 %v11039, %v11035
    %v11216 = vpack.c.b16 %v11040, %v11036
    %v11217 = vpack.c.b16 %v11041, %v11037
    %v11218 = vpack.c.b16 %v11046, %v11042
    %v11219 = vpack.c.b16 %v11047, %v11043
    %v11220 = vpack.c.b16 %v11048, %v11044
    %v11221 = vpack.c.b16 %v11049, %v11045
    %v11222 = vpack.c.b16 %v11054, %v11050
    %v11223 = vpack.c.b16 %v11055, %v11051
    %v11224 = vpack.c.b16 %v11056, %v11052
    %v11225 = vpack.c.b16 %v11057, %v11053
    %v11226 = vpack.c.b16 %v11062, %v11058
    %v11227 = vpack.c.b16 %v11063, %v11059
    %v11228 = vpack.c.b16 %v11064, %v11060
    %v11229 = vpack.c.b16 %v11065, %v11061
    %v11230 = vpack.c.b16 %v11070, %v11066
    %v11231 = vpack.c.b16 %v11071, %v11067
    %v11232 = vpack.c.b16 %v11072, %v11068
    %v11233 = vpack.c.b16 %v11073, %v11069
    %v11234 = vpack.c.b16 %v11078, %v11074
    %v11235 = vpack.c.b16 %v11079, %v11075
    %v11236 = vpack.c.b16 %v11080, %v11076
    %v11237 = vpack.c.b16 %v11081, %v11077
    %v11238 = vpack.c.b16 %v11086, %v11082
    %v11239 = vpack.c.b16 %v11087, %v11083
    %v11240 = vpack.c.b16 %v11088, %v11084
    %v11241 = vpack.c.b16 %v11089, %v11085
    %v11242 = vpack.c.b16 %v11094, %v11090
    %v11243 = vpack.c.b16 %v11095, %v11091
    %v11244 = vpack.c.b16 %v11096, %v11092
    %v11245 = vpack.c.b16 %v11097, %v11093
    %v11246 = vpack.c.b16 %v11102, %v11098
    %v11247 = vpack.c.b16 %v11103, %v11099
    %v11248 = vpack.c.b16 %v11104, %v11100
    %v11249 = vpack.c.b16 %v11105, %v11101
    %v11250 = vpack.c.b16 %v11110, %v11106
    %v11251 = vpack.c.b16 %v11111, %v11107
    %v11252 = vpack.c.b16 %v11112, %v11108
    %v11253 = vpack.c.b16 %v11113, %v11109
    %v11254 = vpack.c.b16 %v11118, %v11114
    %v11255 = vpack.c.b16 %v11119, %v11115
    %v11256 = vpack.c.b16 %v11120, %v11116
    %v11257 = vpack.c.b16 %v11121, %v11117
    %v11258 = vpack.c.b16 %v11126, %v11122
    %v11259 = vpack.c.b16 %v11127, %v11123
    %v11260 = vpack.c.b16 %v11128, %v11124
    %v11261 = vpack.c.b16 %v11129, %v11125
    %v11262 = vpack.c.b16 %v11134, %v11130
    %v11263 = vpack.c.b16 %v11135, %v11131
    %v11264 = vpack.c.b16 %v11136, %v11132
    %v11265 = vpack.c.b16 %v11137, %v11133
    %11394 = vmatprep.subr.bf16.mxu0 %v11167
    %11395 = vmatpush1.bf16.msra.mxu0 %v11166
    %11396 = vmatprep.subr.bf16.mxu0 %v11163
    %11397 = vmatpush1.bf16.msra.mxu0 %v11162
    %11398 = vmatprep.subr.bf16.mxu0 %v11159
    %11399 = vmatpush1.bf16.msra.mxu0 %v11158
    %11400 = vmatprep.subr.bf16.mxu0 %v11155
    %11401 = vmatpush1.bf16.msra.mxu0 %v11154
    %11402 = vmatprep.subr.bf16.mxu0 %v11151
    %11403 = vmatpush1.bf16.msra.mxu0 %v11150
    %11404 = vmatprep.subr.bf16.mxu0 %v11147
    %11405 = vmatpush1.bf16.msra.mxu0 %v11146
    %11406 = vmatprep.subr.bf16.mxu0 %v11143
    %11407 = vmatpush1.bf16.msra.mxu0 %v11142
    %11408 = vmatprep.subr.bf16.mxu0 %v11139
    %11409 = vmatpush1.bf16.msra.mxu0 %v11138
    %11410 = vmatprep.subr.bf16.mxu0 %v11199
    %11411 = vmatpush2.bf16.msra.mxu0 %v11198
    %11412 = vmatprep.subr.bf16.mxu0 %v11195
    %11413 = vmatpush2.bf16.msra.mxu0 %v11194
    %11414 = vmatprep.subr.bf16.mxu0 %v11191
    %11415 = vmatpush2.bf16.msra.mxu0 %v11190
    %11416 = vmatprep.subr.bf16.mxu0 %v11187
    %11417 = vmatpush2.bf16.msra.mxu0 %v11186
    %11418 = vmatprep.subr.bf16.mxu0 %v11183
    %11419 = vmatpush2.bf16.msra.mxu0 %v11182
    %11420 = vmatprep.subr.bf16.mxu0 %v11179
    %11421 = vmatpush2.bf16.msra.mxu0 %v11178
    %11422 = vmatprep.subr.bf16.mxu0 %v11175
    %11423 = vmatpush2.bf16.msra.mxu0 %v11174
    %11424 = vmatprep.subr.bf16.mxu0 %v11171
    %11425 = vmatpush2.bf16.msra.mxu0 %v11170
    %11426 = vmatprep.mubr.bf16.mxu0 %v10730
    %11427 = vmatmul.mubr.bf16.gmra.mxu0 %v10729
    %v11428 = vpop.f32.mrf.mxu0
    %v11429 = vadd.f32 %v10737, %v11428
    %v11430 = vpop.f32.mrf.mxu0
    %v11431 = vadd.f32 %v10741, %v11430
    %v11432 = vpop.f32.mrf.mxu0
    %v11433 = vpop.f32.mrf.mxu0
    %11434 = vdwg.mxu0
    %11435 = vmatprep.subr.bf16.mxu0 %v11231
    %11436 = vmatpush1.bf16.msra.mxu0 %v11230
    %11437 = vmatprep.subr.bf16.mxu0 %v11227
    %11438 = vmatpush1.bf16.msra.mxu0 %v11226
    %11439 = vmatprep.subr.bf16.mxu0 %v11223
    %11440 = vmatpush1.bf16.msra.mxu0 %v11222
    %11441 = vmatprep.subr.bf16.mxu0 %v11219
    %11442 = vmatpush1.bf16.msra.mxu0 %v11218
    %11443 = vmatprep.subr.bf16.mxu0 %v11215
    %11444 = vmatpush1.bf16.msra.mxu0 %v11214
    %11445 = vmatprep.subr.bf16.mxu0 %v11211
    %11446 = vmatpush1.bf16.msra.mxu0 %v11210
    %11447 = vmatprep.subr.bf16.mxu0 %v11207
    %11448 = vmatpush1.bf16.msra.mxu0 %v11206
    %11449 = vmatprep.subr.bf16.mxu0 %v11203
    %11450 = vmatpush1.bf16.msra.mxu0 %v11202
    %11451 = vmatprep.subr.bf16.mxu0 %v11263
    %11452 = vmatpush2.bf16.msra.mxu0 %v11262
    %11453 = vmatprep.subr.bf16.mxu0 %v11259
    %11454 = vmatpush2.bf16.msra.mxu0 %v11258
    %11455 = vmatprep.subr.bf16.mxu0 %v11255
    %11456 = vmatpush2.bf16.msra.mxu0 %v11254
    %11457 = vmatprep.subr.bf16.mxu0 %v11251
    %11458 = vmatpush2.bf16.msra.mxu0 %v11250
    %11459 = vmatprep.subr.bf16.mxu0 %v11247
    %11460 = vmatpush2.bf16.msra.mxu0 %v11246
    %11461 = vmatprep.subr.bf16.mxu0 %v11243
    %11462 = vmatpush2.bf16.msra.mxu0 %v11242
    %11463 = vmatprep.subr.bf16.mxu0 %v11239
    %11464 = vmatpush2.bf16.msra.mxu0 %v11238
    %11465 = vmatprep.subr.bf16.mxu0 %v11235
    %11466 = vmatpush2.bf16.msra.mxu0 %v11234
    %11467 = vmatprep.mubr.bf16.mxu0 %v10732
    %11468 = vmatmul.mubr.bf16.gmra.mxu0 %v10731
    %v11469 = vpop.f32.mrf.mxu0
    %v11470 = vadd.f32 %v11429, %v11469
    %v11471 = vpop.f32.mrf.mxu0
    %v11472 = vadd.f32 %v11431, %v11471
    %v11473 = vpop.f32.mrf.mxu0
    %v11474 = vpop.f32.mrf.mxu0
    %11475 = vdwg.mxu0
    %11476 = vmatprep.subr.bf16.mxu0 %v11169
    %11477 = vmatpush1.bf16.msra.mxu0 %v11168
    %11478 = vmatprep.subr.bf16.mxu0 %v11165
    %11479 = vmatpush1.bf16.msra.mxu0 %v11164
    %11480 = vmatprep.subr.bf16.mxu0 %v11161
    %11481 = vmatpush1.bf16.msra.mxu0 %v11160
    %11482 = vmatprep.subr.bf16.mxu0 %v11157
    %11483 = vmatpush1.bf16.msra.mxu0 %v11156
    %11484 = vmatprep.subr.bf16.mxu0 %v11153
    %11485 = vmatpush1.bf16.msra.mxu0 %v11152
    %11486 = vmatprep.subr.bf16.mxu0 %v11149
    %11487 = vmatpush1.bf16.msra.mxu0 %v11148
    %11488 = vmatprep.subr.bf16.mxu0 %v11145
    %11489 = vmatpush1.bf16.msra.mxu0 %v11144
    %11490 = vmatprep.subr.bf16.mxu0 %v11141
    %11491 = vmatpush1.bf16.msra.mxu0 %v11140
    %11492 = vmatprep.subr.bf16.mxu0 %v11201
    %11493 = vmatpush2.bf16.msra.mxu0 %v11200
    %11494 = vmatprep.subr.bf16.mxu0 %v11197
    %11495 = vmatpush2.bf16.msra.mxu0 %v11196
    %11496 = vmatprep.subr.bf16.mxu0 %v11193
    %11497 = vmatpush2.bf16.msra.mxu0 %v11192
    %11498 = vmatprep.subr.bf16.mxu0 %v11189
    %11499 = vmatpush2.bf16.msra.mxu0 %v11188
    %11500 = vmatprep.subr.bf16.mxu0 %v11185
    %11501 = vmatpush2.bf16.msra.mxu0 %v11184
    %11502 = vmatprep.subr.bf16.mxu0 %v11181
    %11503 = vmatpush2.bf16.msra.mxu0 %v11180
    %11504 = vmatprep.subr.bf16.mxu0 %v11177
    %11505 = vmatpush2.bf16.msra.mxu0 %v11176
    %11506 = vmatprep.subr.bf16.mxu0 %v11173
    %11507 = vmatpush2.bf16.msra.mxu0 %v11172
    %11508 = vmatprep.mubr.bf16.mxu0 %v10730
    %11509 = vmatmul.mubr.bf16.gmra.mxu0 %v10729
    %v11510 = vpop.f32.mrf.mxu0
    %v11511 = vadd.f32 %v10745, %v11510
    %v11512 = vpop.f32.mrf.mxu0
    %v11513 = vadd.f32 %v10749, %v11512
    %v11514 = vpop.f32.mrf.mxu0
    %v11515 = vpop.f32.mrf.mxu0
    %11516 = vdwg.mxu0
    %11517 = vmatprep.subr.bf16.mxu0 %v11233
    %11518 = vmatpush1.bf16.msra.mxu0 %v11232
    %11519 = vmatprep.subr.bf16.mxu0 %v11229
    %11520 = vmatpush1.bf16.msra.mxu0 %v11228
    %11521 = vmatprep.subr.bf16.mxu0 %v11225
    %11522 = vmatpush1.bf16.msra.mxu0 %v11224
    %11523 = vmatprep.subr.bf16.mxu0 %v11221
    %11524 = vmatpush1.bf16.msra.mxu0 %v11220
    %11525 = vmatprep.subr.bf16.mxu0 %v11217
    %11526 = vmatpush1.bf16.msra.mxu0 %v11216
    %11527 = vmatprep.subr.bf16.mxu0 %v11213
    %11528 = vmatpush1.bf16.msra.mxu0 %v11212
    %11529 = vmatprep.subr.bf16.mxu0 %v11209
    %11530 = vmatpush1.bf16.msra.mxu0 %v11208
    %11531 = vmatprep.subr.bf16.mxu0 %v11205
    %11532 = vmatpush1.bf16.msra.mxu0 %v11204
    %11533 = vmatprep.subr.bf16.mxu0 %v11265
    %11534 = vmatpush2.bf16.msra.mxu0 %v11264
    %11535 = vmatprep.subr.bf16.mxu0 %v11261
    %11536 = vmatpush2.bf16.msra.mxu0 %v11260
    %11537 = vmatprep.subr.bf16.mxu0 %v11257
    %11538 = vmatpush2.bf16.msra.mxu0 %v11256
    %11539 = vmatprep.subr.bf16.mxu0 %v11253
    %11540 = vmatpush2.bf16.msra.mxu0 %v11252
    %11541 = vmatprep.subr.bf16.mxu0 %v11249
    %11542 = vmatpush2.bf16.msra.mxu0 %v11248
    %11543 = vmatprep.subr.bf16.mxu0 %v11245
    %11544 = vmatpush2.bf16.msra.mxu0 %v11244
    %11545 = vmatprep.subr.bf16.mxu0 %v11241
    %11546 = vmatpush2.bf16.msra.mxu0 %v11240
    %11547 = vmatprep.subr.bf16.mxu0 %v11237
    %11548 = vmatpush2.bf16.msra.mxu0 %v11236
    %11549 = vmatprep.mubr.bf16.mxu0 %v10732
    %11550 = vmatmul.mubr.bf16.gmra.mxu0 %v10731
    %v11551 = vpop.f32.mrf.mxu0
    %v11552 = vadd.f32 %v11511, %v11551
    %v11553 = vpop.f32.mrf.mxu0
    %v11554 = vadd.f32 %v11513, %v11553
    %v11555 = vpop.f32.mrf.mxu0
    %v11556 = vpop.f32.mrf.mxu0
    %11557 = vdwg.mxu0
    %v11558 = vld [vmem:[#allocation50] sm:$0xff]
    %v11559 = vld [vmem:[#allocation50 + $0x8] sm:$0xff]
    %v11560 = vld [vmem:[#allocation50 + $0x10] sm:$0xff]
    %v11561 = vld [vmem:[#allocation50 + $0x18] sm:$0xff]
    %v11562 = vld [vmem:[#allocation50 + $0x20] sm:$0xff]
    %v11563 = vld [vmem:[#allocation50 + $0x28] sm:$0xff]
    %v11564 = vld [vmem:[#allocation50 + $0x30] sm:$0xff]
    %v11565 = vld [vmem:[#allocation50 + $0x38] sm:$0xff]
    %v11566 = vld [vmem:[#allocation50 + $0x40] sm:$0xff]
    %v11567 = vld [vmem:[#allocation50 + $0x48] sm:$0xff]
    %v11568 = vld [vmem:[#allocation50 + $0x50] sm:$0xff]
    %v11569 = vld [vmem:[#allocation50 + $0x58] sm:$0xff]
    %v11570 = vld [vmem:[#allocation50 + $0x60] sm:$0xff]
    %v11571 = vld [vmem:[#allocation50 + $0x68] sm:$0xff]
    %v11572 = vld [vmem:[#allocation50 + $0x70] sm:$0xff]
    %v11573 = vld [vmem:[#allocation50 + $0x78] sm:$0xff]
    %v11574 = vld [vmem:[#allocation50 + $0x80] sm:$0xff]
    %v11575 = vld [vmem:[#allocation50 + $0x88] sm:$0xff]
    %v11576 = vld [vmem:[#allocation50 + $0x90] sm:$0xff]
    %v11577 = vld [vmem:[#allocation50 + $0x98] sm:$0xff]
    %v11578 = vld [vmem:[#allocation50 + $0xa0] sm:$0xff]
    %v11579 = vld [vmem:[#allocation50 + $0xa8] sm:$0xff]
    %v11580 = vld [vmem:[#allocation50 + $0xb0] sm:$0xff]
    %v11581 = vld [vmem:[#allocation50 + $0xb8] sm:$0xff]
    %v11582 = vld [vmem:[#allocation50 + $0xc0] sm:$0xff]
    %v11583 = vld [vmem:[#allocation50 + $0xc8] sm:$0xff]
    %v11584 = vld [vmem:[#allocation50 + $0xd0] sm:$0xff]
    %v11585 = vld [vmem:[#allocation50 + $0xd8] sm:$0xff]
    %v11586 = vld [vmem:[#allocation50 + $0xe0] sm:$0xff]
    %v11587 = vld [vmem:[#allocation50 + $0xe8] sm:$0xff]
    %v11588 = vld [vmem:[#allocation50 + $0xf0] sm:$0xff]
    %v11589 = vld [vmem:[#allocation50 + $0xf8] sm:$0xff]
    %v11590 = vld [vmem:[#allocation50 + $0x100] sm:$0xff]
    %v11591 = vld [vmem:[#allocation50 + $0x108] sm:$0xff]
    %v11592 = vld [vmem:[#allocation50 + $0x110] sm:$0xff]
    %v11593 = vld [vmem:[#allocation50 + $0x118] sm:$0xff]
    %v11594 = vld [vmem:[#allocation50 + $0x120] sm:$0xff]
    %v11595 = vld [vmem:[#allocation50 + $0x128] sm:$0xff]
    %v11596 = vld [vmem:[#allocation50 + $0x130] sm:$0xff]
    %v11597 = vld [vmem:[#allocation50 + $0x138] sm:$0xff]
    %v11598 = vld [vmem:[#allocation50 + $0x140] sm:$0xff]
    %v11599 = vld [vmem:[#allocation50 + $0x148] sm:$0xff]
    %v11600 = vld [vmem:[#allocation50 + $0x150] sm:$0xff]
    %v11601 = vld [vmem:[#allocation50 + $0x158] sm:$0xff]
    %v11602 = vld [vmem:[#allocation50 + $0x160] sm:$0xff]
    %v11603 = vld [vmem:[#allocation50 + $0x168] sm:$0xff]
    %v11604 = vld [vmem:[#allocation50 + $0x170] sm:$0xff]
    %v11605 = vld [vmem:[#allocation50 + $0x178] sm:$0xff]
    %v11606 = vld [vmem:[#allocation50 + $0x180] sm:$0xff]
    %v11607 = vld [vmem:[#allocation50 + $0x188] sm:$0xff]
    %v11608 = vld [vmem:[#allocation50 + $0x190] sm:$0xff]
    %v11609 = vld [vmem:[#allocation50 + $0x198] sm:$0xff]
    %v11610 = vld [vmem:[#allocation50 + $0x1a0] sm:$0xff]
    %v11611 = vld [vmem:[#allocation50 + $0x1a8] sm:$0xff]
    %v11612 = vld [vmem:[#allocation50 + $0x1b0] sm:$0xff]
    %v11613 = vld [vmem:[#allocation50 + $0x1b8] sm:$0xff]
    %v11614 = vld [vmem:[#allocation50 + $0x1c0] sm:$0xff]
    %v11615 = vld [vmem:[#allocation50 + $0x1c8] sm:$0xff]
    %v11616 = vld [vmem:[#allocation50 + $0x1d0] sm:$0xff]
    %v11617 = vld [vmem:[#allocation50 + $0x1d8] sm:$0xff]
    %v11618 = vld [vmem:[#allocation50 + $0x1e0] sm:$0xff]
    %v11619 = vld [vmem:[#allocation50 + $0x1e8] sm:$0xff]
    %v11620 = vld [vmem:[#allocation50 + $0x1f0] sm:$0xff]
    %v11621 = vld [vmem:[#allocation50 + $0x1f8] sm:$0xff]
    %v11622 = vpack.c.bf16 %v11470, %v11470
    %v11623 = vpack.c.bf16 %v11472, %v11472
    %v11624 = vpack.c.bf16 %v11552, %v11552
    %v11625 = vpack.c.bf16 %v11554, %v11554
    %v11626 = vld [vmem:[#allocation52] sm:$0x3]
    %v11628 = vlaneseq
    %v11629 = vshrl.u32 %v11628, 7
    %v11630 = vsub.s32 0, %v11629
    %v11631 = vrot.slane %v11626, %v11630
    %v11632 = vlaneseq
    %v11633 = vshrl.u32 %v11632, 7
    %v11634 = vsub.s32 1, %v11633
    %v11635 = vrot.slane %v11626, %v11634
    %v11702 = vunpack.c.l.b16 %v11558
    %v11703 = vunpack.c.h.b16 %v11558
    %v11704 = vunpack.c.l.b16 %v11559
    %v11705 = vunpack.c.h.b16 %v11559
    %v11706 = vunpack.c.l.b16 %v11560
    %v11707 = vunpack.c.h.b16 %v11560
    %v11708 = vunpack.c.l.b16 %v11561
    %v11709 = vunpack.c.h.b16 %v11561
    %v11710 = vunpack.c.l.b16 %v11562
    %v11711 = vunpack.c.h.b16 %v11562
    %v11712 = vunpack.c.l.b16 %v11563
    %v11713 = vunpack.c.h.b16 %v11563
    %v11714 = vunpack.c.l.b16 %v11564
    %v11715 = vunpack.c.h.b16 %v11564
    %v11716 = vunpack.c.l.b16 %v11565
    %v11717 = vunpack.c.h.b16 %v11565
    %v11718 = vunpack.c.l.b16 %v11566
    %v11719 = vunpack.c.h.b16 %v11566
    %v11720 = vunpack.c.l.b16 %v11567
    %v11721 = vunpack.c.h.b16 %v11567
    %v11722 = vunpack.c.l.b16 %v11568
    %v11723 = vunpack.c.h.b16 %v11568
    %v11724 = vunpack.c.l.b16 %v11569
    %v11725 = vunpack.c.h.b16 %v11569
    %v11726 = vunpack.c.l.b16 %v11570
    %v11727 = vunpack.c.h.b16 %v11570
    %v11728 = vunpack.c.l.b16 %v11571
    %v11729 = vunpack.c.h.b16 %v11571
    %v11730 = vunpack.c.l.b16 %v11572
    %v11731 = vunpack.c.h.b16 %v11572
    %v11732 = vunpack.c.l.b16 %v11573
    %v11733 = vunpack.c.h.b16 %v11573
    %v11734 = vunpack.c.l.b16 %v11574
    %v11735 = vunpack.c.h.b16 %v11574
    %v11736 = vunpack.c.l.b16 %v11575
    %v11737 = vunpack.c.h.b16 %v11575
    %v11738 = vunpack.c.l.b16 %v11576
    %v11739 = vunpack.c.h.b16 %v11576
    %v11740 = vunpack.c.l.b16 %v11577
    %v11741 = vunpack.c.h.b16 %v11577
    %v11742 = vunpack.c.l.b16 %v11578
    %v11743 = vunpack.c.h.b16 %v11578
    %v11744 = vunpack.c.l.b16 %v11579
    %v11745 = vunpack.c.h.b16 %v11579
    %v11746 = vunpack.c.l.b16 %v11580
    %v11747 = vunpack.c.h.b16 %v11580
    %v11748 = vunpack.c.l.b16 %v11581
    %v11749 = vunpack.c.h.b16 %v11581
    %v11750 = vunpack.c.l.b16 %v11582
    %v11751 = vunpack.c.h.b16 %v11582
    %v11752 = vunpack.c.l.b16 %v11583
    %v11753 = vunpack.c.h.b16 %v11583
    %v11754 = vunpack.c.l.b16 %v11584
    %v11755 = vunpack.c.h.b16 %v11584
    %v11756 = vunpack.c.l.b16 %v11585
    %v11757 = vunpack.c.h.b16 %v11585
    %v11758 = vunpack.c.l.b16 %v11586
    %v11759 = vunpack.c.h.b16 %v11586
    %v11760 = vunpack.c.l.b16 %v11587
    %v11761 = vunpack.c.h.b16 %v11587
    %v11762 = vunpack.c.l.b16 %v11588
    %v11763 = vunpack.c.h.b16 %v11588
    %v11764 = vunpack.c.l.b16 %v11589
    %v11765 = vunpack.c.h.b16 %v11589
    %v11766 = vunpack.c.l.b16 %v11590
    %v11767 = vunpack.c.h.b16 %v11590
    %v11768 = vunpack.c.l.b16 %v11591
    %v11769 = vunpack.c.h.b16 %v11591
    %v11770 = vunpack.c.l.b16 %v11592
    %v11771 = vunpack.c.h.b16 %v11592
    %v11772 = vunpack.c.l.b16 %v11593
    %v11773 = vunpack.c.h.b16 %v11593
    %v11774 = vunpack.c.l.b16 %v11594
    %v11775 = vunpack.c.h.b16 %v11594
    %v11776 = vunpack.c.l.b16 %v11595
    %v11777 = vunpack.c.h.b16 %v11595
    %v11778 = vunpack.c.l.b16 %v11596
    %v11779 = vunpack.c.h.b16 %v11596
    %v11780 = vunpack.c.l.b16 %v11597
    %v11781 = vunpack.c.h.b16 %v11597
    %v11782 = vunpack.c.l.b16 %v11598
    %v11783 = vunpack.c.h.b16 %v11598
    %v11784 = vunpack.c.l.b16 %v11599
    %v11785 = vunpack.c.h.b16 %v11599
    %v11786 = vunpack.c.l.b16 %v11600
    %v11787 = vunpack.c.h.b16 %v11600
    %v11788 = vunpack.c.l.b16 %v11601
    %v11789 = vunpack.c.h.b16 %v11601
    %v11790 = vunpack.c.l.b16 %v11602
    %v11791 = vunpack.c.h.b16 %v11602
    %v11792 = vunpack.c.l.b16 %v11603
    %v11793 = vunpack.c.h.b16 %v11603
    %v11794 = vunpack.c.l.b16 %v11604
    %v11795 = vunpack.c.h.b16 %v11604
    %v11796 = vunpack.c.l.b16 %v11605
    %v11797 = vunpack.c.h.b16 %v11605
    %v11798 = vunpack.c.l.b16 %v11606
    %v11799 = vunpack.c.h.b16 %v11606
    %v11800 = vunpack.c.l.b16 %v11607
    %v11801 = vunpack.c.h.b16 %v11607
    %v11802 = vunpack.c.l.b16 %v11608
    %v11803 = vunpack.c.h.b16 %v11608
    %v11804 = vunpack.c.l.b16 %v11609
    %v11805 = vunpack.c.h.b16 %v11609
    %v11806 = vunpack.c.l.b16 %v11610
    %v11807 = vunpack.c.h.b16 %v11610
    %v11808 = vunpack.c.l.b16 %v11611
    %v11809 = vunpack.c.h.b16 %v11611
    %v11810 = vunpack.c.l.b16 %v11612
    %v11811 = vunpack.c.h.b16 %v11612
    %v11812 = vunpack.c.l.b16 %v11613
    %v11813 = vunpack.c.h.b16 %v11613
    %v11814 = vunpack.c.l.b16 %v11614
    %v11815 = vunpack.c.h.b16 %v11614
    %v11816 = vunpack.c.l.b16 %v11615
    %v11817 = vunpack.c.h.b16 %v11615
    %v11818 = vunpack.c.l.b16 %v11616
    %v11819 = vunpack.c.h.b16 %v11616
    %v11820 = vunpack.c.l.b16 %v11617
    %v11821 = vunpack.c.h.b16 %v11617
    %v11822 = vunpack.c.l.b16 %v11618
    %v11823 = vunpack.c.h.b16 %v11618
    %v11824 = vunpack.c.l.b16 %v11619
    %v11825 = vunpack.c.h.b16 %v11619
    %v11826 = vunpack.c.l.b16 %v11620
    %v11827 = vunpack.c.h.b16 %v11620
    %v11828 = vunpack.c.l.b16 %v11621
    %v11829 = vunpack.c.h.b16 %v11621
    %v11830 = vpack.c.b16 %v11704, %v11702
    %v11831 = vpack.c.b16 %v11705, %v11703
    %v11832 = vpack.c.b16 %v11708, %v11706
    %v11833 = vpack.c.b16 %v11709, %v11707
    %v11834 = vpack.c.b16 %v11712, %v11710
    %v11835 = vpack.c.b16 %v11713, %v11711
    %v11836 = vpack.c.b16 %v11716, %v11714
    %v11837 = vpack.c.b16 %v11717, %v11715
    %v11838 = vpack.c.b16 %v11720, %v11718
    %v11839 = vpack.c.b16 %v11721, %v11719
    %v11840 = vpack.c.b16 %v11724, %v11722
    %v11841 = vpack.c.b16 %v11725, %v11723
    %v11842 = vpack.c.b16 %v11728, %v11726
    %v11843 = vpack.c.b16 %v11729, %v11727
    %v11844 = vpack.c.b16 %v11732, %v11730
    %v11845 = vpack.c.b16 %v11733, %v11731
    %v11846 = vpack.c.b16 %v11736, %v11734
    %v11847 = vpack.c.b16 %v11737, %v11735
    %v11848 = vpack.c.b16 %v11740, %v11738
    %v11849 = vpack.c.b16 %v11741, %v11739
    %v11850 = vpack.c.b16 %v11744, %v11742
    %v11851 = vpack.c.b16 %v11745, %v11743
    %v11852 = vpack.c.b16 %v11748, %v11746
    %v11853 = vpack.c.b16 %v11749, %v11747
    %v11854 = vpack.c.b16 %v11752, %v11750
    %v11855 = vpack.c.b16 %v11753, %v11751
    %v11856 = vpack.c.b16 %v11756, %v11754
    %v11857 = vpack.c.b16 %v11757, %v11755
    %v11858 = vpack.c.b16 %v11760, %v11758
    %v11859 = vpack.c.b16 %v11761, %v11759
    %v11860 = vpack.c.b16 %v11764, %v11762
    %v11861 = vpack.c.b16 %v11765, %v11763
    %v11862 = vpack.c.b16 %v11768, %v11766
    %v11863 = vpack.c.b16 %v11769, %v11767
    %v11864 = vpack.c.b16 %v11772, %v11770
    %v11865 = vpack.c.b16 %v11773, %v11771
    %v11866 = vpack.c.b16 %v11776, %v11774
    %v11867 = vpack.c.b16 %v11777, %v11775
    %v11868 = vpack.c.b16 %v11780, %v11778
    %v11869 = vpack.c.b16 %v11781, %v11779
    %v11870 = vpack.c.b16 %v11784, %v11782
    %v11871 = vpack.c.b16 %v11785, %v11783
    %v11872 = vpack.c.b16 %v11788, %v11786
    %v11873 = vpack.c.b16 %v11789, %v11787
    %v11874 = vpack.c.b16 %v11792, %v11790
    %v11875 = vpack.c.b16 %v11793, %v11791
    %v11876 = vpack.c.b16 %v11796, %v11794
    %v11877 = vpack.c.b16 %v11797, %v11795
    %v11878 = vpack.c.b16 %v11800, %v11798
    %v11879 = vpack.c.b16 %v11801, %v11799
    %v11880 = vpack.c.b16 %v11804, %v11802
    %v11881 = vpack.c.b16 %v11805, %v11803
    %v11882 = vpack.c.b16 %v11808, %v11806
    %v11883 = vpack.c.b16 %v11809, %v11807
    %v11884 = vpack.c.b16 %v11812, %v11810
    %v11885 = vpack.c.b16 %v11813, %v11811
    %v11886 = vpack.c.b16 %v11816, %v11814
    %v11887 = vpack.c.b16 %v11817, %v11815
    %v11888 = vpack.c.b16 %v11820, %v11818
    %v11889 = vpack.c.b16 %v11821, %v11819
    %v11890 = vpack.c.b16 %v11824, %v11822
    %v11891 = vpack.c.b16 %v11825, %v11823
    %v11892 = vpack.c.b16 %v11828, %v11826
    %v11893 = vpack.c.b16 %v11829, %v11827
    %11958 = vmatprep.subr.bf16.mxu0 %v11845
    %11959 = vmatpush1.bf16.msra.mxu0 %v11844
    %11960 = vmatprep.subr.bf16.mxu0 %v11843
    %11961 = vmatpush1.bf16.msra.mxu0 %v11842
    %11962 = vmatprep.subr.bf16.mxu0 %v11841
    %11963 = vmatpush1.bf16.msra.mxu0 %v11840
    %11964 = vmatprep.subr.bf16.mxu0 %v11839
    %11965 = vmatpush1.bf16.msra.mxu0 %v11838
    %11966 = vmatprep.subr.bf16.mxu0 %v11837
    %11967 = vmatpush1.bf16.msra.mxu0 %v11836
    %11968 = vmatprep.subr.bf16.mxu0 %v11835
    %11969 = vmatpush1.bf16.msra.mxu0 %v11834
    %11970 = vmatprep.subr.bf16.mxu0 %v11833
    %11971 = vmatpush1.bf16.msra.mxu0 %v11832
    %11972 = vmatprep.subr.bf16.mxu0 %v11831
    %11973 = vmatpush1.bf16.msra.mxu0 %v11830
    %11974 = vmatprep.subr.bf16.mxu0 %v11861
    %11975 = vmatpush2.bf16.msra.mxu0 %v11860
    %11976 = vmatprep.subr.bf16.mxu0 %v11859
    %11977 = vmatpush2.bf16.msra.mxu0 %v11858
    %11978 = vmatprep.subr.bf16.mxu0 %v11857
    %11979 = vmatpush2.bf16.msra.mxu0 %v11856
    %11980 = vmatprep.subr.bf16.mxu0 %v11855
    %11981 = vmatpush2.bf16.msra.mxu0 %v11854
    %11982 = vmatprep.subr.bf16.mxu0 %v11853
    %11983 = vmatpush2.bf16.msra.mxu0 %v11852
    %11984 = vmatprep.subr.bf16.mxu0 %v11851
    %11985 = vmatpush2.bf16.msra.mxu0 %v11850
    %11986 = vmatprep.subr.bf16.mxu0 %v11849
    %11987 = vmatpush2.bf16.msra.mxu0 %v11848
    %11988 = vmatprep.subr.bf16.mxu0 %v11847
    %11989 = vmatpush2.bf16.msra.mxu0 %v11846
    %11990 = vmatprep.mubr.bf16.mxu0 %v11623
    %11991 = vmatmul.mubr.bf16.gmra.mxu0 %v11622
    %v11992 = vpop.f32.mrf.mxu0
    %v11993 = vadd.f32 %v11631, %v11992
    %v11994 = vpop.f32.mrf.mxu0
    %v11995 = vadd.f32 %v11635, %v11994
    %v11996 = vpop.f32.mrf.mxu0
    %v11997 = vpop.f32.mrf.mxu0
    %11998 = vdwg.mxu0
    %11999 = vmatprep.subr.bf16.mxu0 %v11877
    %12000 = vmatpush1.bf16.msra.mxu0 %v11876
    %12001 = vmatprep.subr.bf16.mxu0 %v11875
    %12002 = vmatpush1.bf16.msra.mxu0 %v11874
    %12003 = vmatprep.subr.bf16.mxu0 %v11873
    %12004 = vmatpush1.bf16.msra.mxu0 %v11872
    %12005 = vmatprep.subr.bf16.mxu0 %v11871
    %12006 = vmatpush1.bf16.msra.mxu0 %v11870
    %12007 = vmatprep.subr.bf16.mxu0 %v11869
    %12008 = vmatpush1.bf16.msra.mxu0 %v11868
    %12009 = vmatprep.subr.bf16.mxu0 %v11867
    %12010 = vmatpush1.bf16.msra.mxu0 %v11866
    %12011 = vmatprep.subr.bf16.mxu0 %v11865
    %12012 = vmatpush1.bf16.msra.mxu0 %v11864
    %12013 = vmatprep.subr.bf16.mxu0 %v11863
    %12014 = vmatpush1.bf16.msra.mxu0 %v11862
    %12015 = vmatprep.subr.bf16.mxu0 %v11893
    %12016 = vmatpush2.bf16.msra.mxu0 %v11892
    %12017 = vmatprep.subr.bf16.mxu0 %v11891
    %12018 = vmatpush2.bf16.msra.mxu0 %v11890
    %12019 = vmatprep.subr.bf16.mxu0 %v11889
    %12020 = vmatpush2.bf16.msra.mxu0 %v11888
    %12021 = vmatprep.subr.bf16.mxu0 %v11887
    %12022 = vmatpush2.bf16.msra.mxu0 %v11886
    %12023 = vmatprep.subr.bf16.mxu0 %v11885
    %12024 = vmatpush2.bf16.msra.mxu0 %v11884
    %12025 = vmatprep.subr.bf16.mxu0 %v11883
    %12026 = vmatpush2.bf16.msra.mxu0 %v11882
    %12027 = vmatprep.subr.bf16.mxu0 %v11881
    %12028 = vmatpush2.bf16.msra.mxu0 %v11880
    %12029 = vmatprep.subr.bf16.mxu0 %v11879
    %12030 = vmatpush2.bf16.msra.mxu0 %v11878
    %12031 = vmatprep.mubr.bf16.mxu0 %v11625
    %12032 = vmatmul.mubr.bf16.gmra.mxu0 %v11624
    %v12033 = vpop.f32.mrf.mxu0
    %v12034 = vadd.f32 %v11993, %v12033
    %v12035 = vpop.f32.mrf.mxu0
    %v12036 = vadd.f32 %v11995, %v12035
    %v12037 = vpop.f32.mrf.mxu0
    %v12038 = vpop.f32.mrf.mxu0
    %12039 = vdwg.mxu0
    %v12040 = vmax.f32 %v12034, 0.0
    %v12041 = vmax.f32 %v12036, 0.0
    %v12042 = vld [vmem:[#allocation53] sm:$0xf]
    %v12043 = vld [vmem:[#allocation53 + $0x4] sm:$0xf]
    %v12044 = vld [vmem:[#allocation53 + $0x8] sm:$0xf]
    %v12045 = vld [vmem:[#allocation53 + $0xc] sm:$0xf]
    %v12046 = vld [vmem:[#allocation53 + $0x10] sm:$0xf]
    %v12047 = vld [vmem:[#allocation53 + $0x14] sm:$0xf]
    %v12048 = vld [vmem:[#allocation53 + $0x18] sm:$0xf]
    %v12049 = vld [vmem:[#allocation53 + $0x1c] sm:$0xf]
    %v12050 = vld [vmem:[#allocation53 + $0x20] sm:$0xf]
    %v12051 = vld [vmem:[#allocation53 + $0x24] sm:$0xf]
    %v12052 = vld [vmem:[#allocation53 + $0x28] sm:$0xf]
    %v12053 = vld [vmem:[#allocation53 + $0x2c] sm:$0xf]
    %v12054 = vld [vmem:[#allocation53 + $0x30] sm:$0xf]
    %v12055 = vld [vmem:[#allocation53 + $0x34] sm:$0xf]
    %v12056 = vld [vmem:[#allocation53 + $0x38] sm:$0xf]
    %v12057 = vld [vmem:[#allocation53 + $0x3c] sm:$0xf]
    %v12058 = vld [vmem:[#allocation53 + $0x40] sm:$0xf]
    %v12059 = vld [vmem:[#allocation53 + $0x44] sm:$0xf]
    %v12060 = vld [vmem:[#allocation53 + $0x48] sm:$0xf]
    %v12061 = vld [vmem:[#allocation53 + $0x4c] sm:$0xf]
    %v12062 = vld [vmem:[#allocation53 + $0x50] sm:$0xf]
    %v12063 = vld [vmem:[#allocation53 + $0x54] sm:$0xf]
    %v12064 = vld [vmem:[#allocation53 + $0x58] sm:$0xf]
    %v12065 = vld [vmem:[#allocation53 + $0x5c] sm:$0xf]
    %v12066 = vld [vmem:[#allocation53 + $0x60] sm:$0xf]
    %v12067 = vld [vmem:[#allocation53 + $0x64] sm:$0xf]
    %v12068 = vld [vmem:[#allocation53 + $0x68] sm:$0xf]
    %v12069 = vld [vmem:[#allocation53 + $0x6c] sm:$0xf]
    %v12070 = vld [vmem:[#allocation53 + $0x70] sm:$0xf]
    %v12071 = vld [vmem:[#allocation53 + $0x74] sm:$0xf]
    %v12072 = vld [vmem:[#allocation53 + $0x78] sm:$0xf]
    %v12073 = vld [vmem:[#allocation53 + $0x7c] sm:$0xf]
    %v12074 = vpack.c.bf16 %v12040, %v12040
    %v12075 = vpack.c.bf16 %v12041, %v12041
    %v12076 = vld [vmem:[#allocation55] sm:$0x1]
    %v12078 = vlaneseq
    %v12079 = vshrl.u32 %v12078, 7
    %v12080 = vsub.s32 0, %v12079
    %v12081 = vrot.slane %v12076, %v12080
    %v12115 = vunpack.c.l.b16 %v12042
    %v12116 = vunpack.c.l.b16 %v12043
    %v12117 = vunpack.c.l.b16 %v12044
    %v12118 = vunpack.c.l.b16 %v12045
    %v12119 = vunpack.c.l.b16 %v12046
    %v12120 = vunpack.c.l.b16 %v12047
    %v12121 = vunpack.c.l.b16 %v12048
    %v12122 = vunpack.c.l.b16 %v12049
    %v12123 = vunpack.c.l.b16 %v12050
    %v12124 = vunpack.c.l.b16 %v12051
    %v12125 = vunpack.c.l.b16 %v12052
    %v12126 = vunpack.c.l.b16 %v12053
    %v12127 = vunpack.c.l.b16 %v12054
    %v12128 = vunpack.c.l.b16 %v12055
    %v12129 = vunpack.c.l.b16 %v12056
    %v12130 = vunpack.c.l.b16 %v12057
    %v12131 = vunpack.c.l.b16 %v12058
    %v12132 = vunpack.c.l.b16 %v12059
    %v12133 = vunpack.c.l.b16 %v12060
    %v12134 = vunpack.c.l.b16 %v12061
    %v12135 = vunpack.c.l.b16 %v12062
    %v12136 = vunpack.c.l.b16 %v12063
    %v12137 = vunpack.c.l.b16 %v12064
    %v12138 = vunpack.c.l.b16 %v12065
    %v12139 = vunpack.c.l.b16 %v12066
    %v12140 = vunpack.c.l.b16 %v12067
    %v12141 = vunpack.c.l.b16 %v12068
    %v12142 = vunpack.c.l.b16 %v12069
    %v12143 = vunpack.c.l.b16 %v12070
    %v12144 = vunpack.c.l.b16 %v12071
    %v12145 = vunpack.c.l.b16 %v12072
    %v12146 = vunpack.c.l.b16 %v12073
    %v12147 = vpack.c.b16 %v12116, %v12115
    %v12148 = vpack.c.b16 %v12118, %v12117
    %v12149 = vpack.c.b16 %v12120, %v12119
    %v12150 = vpack.c.b16 %v12122, %v12121
    %v12151 = vpack.c.b16 %v12124, %v12123
    %v12152 = vpack.c.b16 %v12126, %v12125
    %v12153 = vpack.c.b16 %v12128, %v12127
    %v12154 = vpack.c.b16 %v12130, %v12129
    %v12155 = vpack.c.b16 %v12132, %v12131
    %v12156 = vpack.c.b16 %v12134, %v12133
    %v12157 = vpack.c.b16 %v12136, %v12135
    %v12158 = vpack.c.b16 %v12138, %v12137
    %v12159 = vpack.c.b16 %v12140, %v12139
    %v12160 = vpack.c.b16 %v12142, %v12141
    %v12161 = vpack.c.b16 %v12144, %v12143
    %v12162 = vpack.c.b16 %v12146, %v12145
    %12179 = vmatprep.subr.bf16.mxu0 0
    %12180 = vmatpush1.bf16.msra.mxu0 %v12154
    %12181 = vmatprep.subr.bf16.mxu0 0
    %12182 = vmatpush1.bf16.msra.mxu0 %v12153
    %12183 = vmatprep.subr.bf16.mxu0 0
    %12184 = vmatpush1.bf16.msra.mxu0 %v12152
    %12185 = vmatprep.subr.bf16.mxu0 0
    %12186 = vmatpush1.bf16.msra.mxu0 %v12151
    %12187 = vmatprep.subr.bf16.mxu0 0
    %12188 = vmatpush1.bf16.msra.mxu0 %v12150
    %12189 = vmatprep.subr.bf16.mxu0 0
    %12190 = vmatpush1.bf16.msra.mxu0 %v12149
    %12191 = vmatprep.subr.bf16.mxu0 0
    %12192 = vmatpush1.bf16.msra.mxu0 %v12148
    %12193 = vmatprep.subr.bf16.mxu0 0
    %12194 = vmatpush1.bf16.msra.mxu0 %v12147
    %12195 = vmatprep.subr.bf16.mxu0 0
    %12196 = vmatpush2.bf16.msra.mxu0 %v12162
    %12197 = vmatprep.subr.bf16.mxu0 0
    %12198 = vmatpush2.bf16.msra.mxu0 %v12161
    %12199 = vmatprep.subr.bf16.mxu0 0
    %12200 = vmatpush2.bf16.msra.mxu0 %v12160
    %12201 = vmatprep.subr.bf16.mxu0 0
    %12202 = vmatpush2.bf16.msra.mxu0 %v12159
    %12203 = vmatprep.subr.bf16.mxu0 0
    %12204 = vmatpush2.bf16.msra.mxu0 %v12158
    %12205 = vmatprep.subr.bf16.mxu0 0
    %12206 = vmatpush2.bf16.msra.mxu0 %v12157
    %12207 = vmatprep.subr.bf16.mxu0 0
    %12208 = vmatpush2.bf16.msra.mxu0 %v12156
    %12209 = vmatprep.subr.bf16.mxu0 0
    %12210 = vmatpush2.bf16.msra.mxu0 %v12155
    %12211 = vmatprep.mubr.bf16.mxu0 %v12075
    %12212 = vmatmul.mubr.bf16.gmra.mxu0 %v12074
    %v12213 = vpop.f32.mrf.mxu0
    %v12214 = vadd.f32 %v12081, %v12213
    %v12215 = vpop.f32.mrf.mxu0
    %v12216 = vpop.f32.mrf.mxu0
    %v12217 = vpop.f32.mrf.mxu0
    %12218 = vdwg.mxu0
    %v12219 = vxor.u32 %v12214, 2147483648
    %v12220 = vmul.f32 %v12219, 1.442695
    %v12221 = vpow.pop %v12220
    %v12222 = vadd.f32 %v12221, 1.0
    %v12223 = vrcp.pop %v12222
    %v12224 = vmul.f32 1.0, %v12223
    %12225 = vst [vmem:[#allocation56] sm:$0xff] %v12224
    // Predicated region
    $region286: #{tpu_custom_call.1} parent=1 // pred_check
      _
    $region287: #{tpu_custom_call.1} parent=1 // pred_check_branch
      %12227 = sbr.rel (0) target = $region289
    $region288: #{tpu_custom_call.1} parent=1 // pred_region
      %s12229 = ssub.s32 128, 128
      %12230 = vsyncadd [#allocation4], %s12229
      %s12232 = sshll.u32 [#allocation56], 4
      %s12233 = int_to_ptr.vmem [resolvable:$true] %s12232
      %12235 = dma.vmem_to_hbm [thread:$0]  %s12233, 128, %s73, [#allocation4]
    $region289: #{tpu_custom_call.1} parent=1 // pred_fallthru
      _
    // Predicated region
    $region290: #{tpu_custom_call.1} parent=1 // pred_check
      _
    $region291: #{tpu_custom_call.1} parent=1 // pred_check_branch
      %12237 = sbr.rel (0) target = $region293
    $region292: #{tpu_custom_call.1} parent=1 // pred_region
      %12238 = dma.done [#allocation4], 128
    $region293: #{tpu_custom_call.1} parent=1 // pred_fallthru
      _
    %12239 = vsyncpa [#allocation3], 1
    %12240 = vsyncpa [#allocation6], 1
    %12241 = vsyncpa [#allocation9], 1
    %12242 = vsyncpa [#allocation12], 1
    %12243 = vsyncpa [#allocation15], 1
    %12244 = vsyncpa [#allocation18], 1
    %12245 = vsyncpa [#allocation21], 1
    %12246 = vsyncpa [#allocation24], 1
    %12247 = vsyncpa [#allocation27], 1
    %12248 = vsyncpa [#allocation30], 1
    %12249 = vsyncpa [#allocation33], 1
    %12250 = vsyncpa [#allocation36], 1
    %12251 = vsyncpa [#allocation39], 1
    %12252 = vsyncpa [#allocation42], 1
    %12253 = vsyncpa [#allocation45], 1
    %12254 = vsyncpa [#allocation48], 1
    %12255 = vsyncpa [#allocation51], 1
    %12256 = vsyncpa [#allocation54], 1
    %12257 = vsyncpa [#allocation4], 1

</llo_original>
